<compile_context>
chip_gen: v7x
topology: tpu7x:2x2x1
jax: 0.10.0
libtpu: 0.0.40
codegen_flags: <defaults>
</compile_context>

<pallas_src>
import functools

import numpy as np
import jax
import jax.numpy as jnp
from jax import lax
from jax.experimental import pallas as pl
from jax.experimental.pallas import tpu as pltpu


# ------------------------------------------------------------------ fused per-task kernel
def _make_task_kernel(Ns, Q, D, H, C, S, update_step, base_lr):
    inv_ns = 1.0 / float(Ns)
    inv_q = 1.0 / float(Q)

    def forward(x, w1, b1, w2, b2):
        # z = x @ W1 + b1 ; logits = relu(z) @ W2 + b2
        z = jnp.dot(x, w1, preferred_element_type=jnp.float32) + b1
        h = jnp.maximum(z, 0.0)
        logits = jnp.dot(h, w2, preferred_element_type=jnp.float32) + b2
        return logits, z, h

    def xent(logits, onehot, labels, inv_n):
        # fused mean softmax cross-entropy, argmax-correct count and dlogits = (p - onehot)/N
        m = jnp.max(logits, axis=-1, keepdims=True)
        e = jnp.exp(logits - m)
        s = jnp.sum(e, axis=-1, keepdims=True)
        p = e / s
        lse = jnp.log(s) + m
        loss_rows = lse - jnp.sum(onehot * logits, axis=-1, keepdims=True)     # (N, 1)
        loss11 = jnp.sum(loss_rows, axis=0, keepdims=True) * inv_n             # (1, 1)
        dlogits = (p - onehot) * inv_n                                         # (N, C)
        ids = lax.broadcasted_iota(jnp.int32, logits.shape, 1)
        is_max = logits == m
        pred = jnp.min(jnp.where(is_max, ids, logits.shape[-1]),
                       axis=-1, keepdims=True)                                 # (N, 1)
        correct11 = jnp.sum((pred == labels).astype(jnp.float32),
                            axis=0, keepdims=True)                             # (1, 1)
        return loss11, correct11, dlogits

    def grads(x, z, h, dl, w2):
        # analytic backward of Flatten -> Linear -> ReLU -> Linear (mean scale already in dl)
        dw2 = lax.dot_general(h, dl, (((0,), (0,)), ((), ())),
                              preferred_element_type=jnp.float32)              # (H, C)
        db2 = jnp.sum(dl, axis=0, keepdims=True)                               # (1, C)
        dh = lax.dot_general(dl, w2, (((1,), (1,)), ((), ())),
                             preferred_element_type=jnp.float32)               # (N, H)
        dz = jnp.where(z > 0.0, dh, 0.0)
        dw1 = lax.dot_general(x, dz, (((0,), (0,)), ((), ())),
                              preferred_element_type=jnp.float32)              # (D, H)
        db1 = jnp.sum(dz, axis=0, keepdims=True)                               # (1, H)
        return dw1, db1, dw2, db2

    def kernel(xs_ref, ys_ref, xq_ref, yq_ref, w1_ref, b1_ref, w2_ref, b2_ref,
               loss_ref, corr_ref, gw1_ref, gb1_ref, gw2_ref, gb2_ref):
        xs = xs_ref[0]            # (Ns, D)
        ys = ys_ref[0]            # (Ns, 1) int32
        xq = xq_ref[0]            # (Q, D)
        yq = yq_ref[0]            # (Q, 1) int32
        w1 = w1_ref[...]
        b1 = b1_ref[...]
        w2 = w2_ref[...]
        b2 = b2_ref[...]

        # one-hot built in-kernel from integer labels (VPU compare against a class iota)
        ys_oh = (ys == lax.broadcasted_iota(jnp.int32, (Ns, C), 1)).astype(jnp.float32)
        yq_oh = (yq == lax.broadcasted_iota(jnp.int32, (Q, C), 1)).astype(jnp.float32)

        step_losses = []
        step_corrects = []

        # query with the original parameters (step 0)
        lg_q, _, _ = forward(xq, w1, b1, w2, b2)
        l0, c0, _ = xent(lg_q, yq_oh, yq, inv_q)
        step_losses.append(l0)
        step_corrects.append(c0)

        # first adaptation step on support with the original parameters
        lg_s, z_s, h_s = forward(xs, w1, b1, w2, b2)
        _, _, dl_s = xent(lg_s, ys_oh, ys, inv_ns)
        dw1, db1, dw2, db2 = grads(xs, z_s, h_s, dl_s, w2)
        fw1 = w1 - base_lr * dw1
        fb1 = b1 - base_lr * db1
        fw2 = w2 - base_lr * dw2
        fb2 = b2 - base_lr * db2

        # query after the first update (step 1)
        lg_q, _, _ = forward(xq, fw1, fb1, fw2, fb2)
        l1, c1, _ = xent(lg_q, yq_oh, yq, inv_q)
        step_losses.append(l1)
        step_corrects.append(c1)

        # remaining inner-loop updates (statically unrolled; fast weights stay in vregs)
        for k in range(1, update_step):
            lg_s, z_s, h_s = forward(xs, fw1, fb1, fw2, fb2)
            _, _, dl_s = xent(lg_s, ys_oh, ys, inv_ns)
            dw1, db1, dw2, db2 = grads(xs, z_s, h_s, dl_s, fw2)
            fw1 = fw1 - base_lr * dw1
            fb1 = fb1 - base_lr * db1
            fw2 = fw2 - base_lr * dw2
            fb2 = fb2 - base_lr * db2

            lg_q, z_q, h_q = forward(xq, fw1, fb1, fw2, fb2)
            lk, ck, dl_q = xent(lg_q, yq_oh, yq, inv_q)
            step_losses.append(lk)
            step_corrects.append(ck)

            if k == update_step - 1:
                # first-order meta gradient: grad of final query loss w.r.t. final fast weights
                gw1, gb1, gw2, gb2 = grads(xq, z_q, h_q, dl_q, fw2)
                gw1_ref[0] = gw1
                gb1_ref[0] = gb1
                gw2_ref[0] = gw2
                gb2_ref[0] = gb2

        # pack the S per-step scalars into one lane row and store once (no per-element stores)
        ids = lax.broadcasted_iota(jnp.int32, (1, 1, S), 2)
        loss_row = jnp.zeros((1, 1, S), jnp.float32)
        corr_row = jnp.zeros((1, 1, S), jnp.float32)
        for k in range(S):
            sel = (ids == k).astype(jnp.float32)
            loss_row = loss_row + step_losses[k].reshape(1, 1, 1) * sel
            corr_row = corr_row + step_corrects[k].reshape(1, 1, 1) * sel
        loss_ref[...] = loss_row
        corr_ref[...] = corr_row

    return kernel


def _fused_inner_loop(params, xs, ys, xq, yq, update_step, base_lr):
    T, Ns, D = xs.shape
    Q = xq.shape[1]
    H = params["w1"].shape[1]
    C = params["w2"].shape[1]
    S = update_step + 1

    kernel = _make_task_kernel(Ns, Q, D, H, C, S, update_step, base_lr)

    out_shape = (
        jax.ShapeDtypeStruct((T, 1, S), jnp.float32),   # per-task per-step query loss
        jax.ShapeDtypeStruct((T, 1, S), jnp.float32),   # per-task per-step correct count
        jax.ShapeDtypeStruct((T, D, H), jnp.float32),   # per-task final query grad w1
        jax.ShapeDtypeStruct((T, 1, H), jnp.float32),   # per-task final query grad b1
        jax.ShapeDtypeStruct((T, H, C), jnp.float32),   # per-task final query grad w2
        jax.ShapeDtypeStruct((T, 1, C), jnp.float32),   # per-task final query grad b2
    )

    in_specs = [
        pl.BlockSpec((1, Ns, D), lambda t: (t, 0, 0)),   # support images
        pl.BlockSpec((1, Ns, 1), lambda t: (t, 0, 0)),   # support labels (int32)
        pl.BlockSpec((1, Q, D), lambda t: (t, 0, 0)),    # query images
        pl.BlockSpec((1, Q, 1), lambda t: (t, 0, 0)),    # query labels (int32)
        pl.BlockSpec((D, H), lambda t: (0, 0)),          # w1 (shared across tasks)
        pl.BlockSpec((1, H), lambda t: (0, 0)),          # b1
        pl.BlockSpec((H, C), lambda t: (0, 0)),          # w2
        pl.BlockSpec((1, C), lambda t: (0, 0)),          # b2
    ]
    out_specs = (
        pl.BlockSpec((1, 1, S), lambda t: (t, 0, 0)),
        pl.BlockSpec((1, 1, S), lambda t: (t, 0, 0)),
        pl.BlockSpec((1, D, H), lambda t: (t, 0, 0)),
        pl.BlockSpec((1, 1, H), lambda t: (t, 0, 0)),
        pl.BlockSpec((1, H, C), lambda t: (t, 0, 0)),
        pl.BlockSpec((1, 1, C), lambda t: (t, 0, 0)),
    )

    return pl.pallas_call(
        kernel,
        grid=(T,),
        in_specs=in_specs,
        out_specs=out_specs,
        out_shape=out_shape,
        compiler_params=pltpu.CompilerParams(
            # task axis is independent -> megacore-shardable on v7x; harmless on v5e/v6e
            dimension_semantics=("parallel",),
        ),
    )(xs, ys, xq, yq, params["w1"], params["b1"], params["w2"], params["b2"])


# ------------------------------------------------------------------ meta update (fresh Adam step)
def adam_step(params, grads, lr=2e-4, b1=0.9, b2=0.999, eps=1e-8, t=1):
    new = {}
    for k in params:
        g = grads[k]
        m = (1.0 - b1) * g
        v = (1.0 - b2) * (g * g)
        mhat = m / (1.0 - b1 ** t)
        vhat = v / (1.0 - b2 ** t)
        new[k] = params[k] - lr * mhat / (jnp.sqrt(vhat) + eps)
    return new


# ------------------------------------------------------------------ MetaLearner.forward (jitted)
@functools.partial(jax.jit, static_argnames=("update_step", "base_lr", "meta_lr"))
def meta_learner_step(params, x_spt, y_spt, x_qry, y_qry,
                      update_step=5, base_lr=4 * 0.01, meta_lr=0.0002):
    task_num = x_spt.shape[0]
    n_support = x_spt.shape[1]
    query_size = x_qry.shape[1]
    d_spt = int(np.prod(x_spt.shape[2:]))
    d_qry = int(np.prod(x_qry.shape[2:]))

    xs = x_spt.reshape(task_num, n_support, d_spt).astype(jnp.float32)
    ys = y_spt.reshape(task_num, n_support, 1).astype(jnp.int32)
    xq = x_qry.reshape(task_num, query_size, d_qry).astype(jnp.float32)
    yq = y_qry.reshape(task_num, query_size, 1).astype(jnp.int32)

    losses_t, corrects_t, gw1_t, gb1_t, gw2_t, gb2_t = _fused_inner_loop(
        params, xs, ys, xq, yq, update_step, base_lr)

    loss_per_step = jnp.sum(losses_t, axis=(0, 1)) / task_num                    # (S,)
    accs = jnp.sum(corrects_t, axis=(0, 1)) / (query_size * task_num)            # (S,)

    # meta gradient: grad of (final-step query loss summed over tasks / task_num)
    meta_grads = {
        "w1": jnp.sum(gw1_t, axis=0) / task_num,
        "b1": jnp.sum(gb1_t, axis=0) / task_num,
        "w2": jnp.sum(gw2_t, axis=0) / task_num,
        "b2": jnp.sum(gb2_t, axis=0) / task_num,
    }
    new_params = adam_step(params, meta_grads, lr=meta_lr)
    return accs, loss_per_step, new_params


def meta_learner_forward(params, x_spt, y_spt, x_qry, y_qry,
                         update_step=5, base_lr=4 * 0.01, meta_lr=0.0002):
    accs, losses, new_params = meta_learner_step(
        params, x_spt, y_spt, x_qry, y_qry,
        update_step=update_step, base_lr=base_lr, meta_lr=meta_lr)
    accs, losses = jax.device_get((accs, losses))   # single host transfer
    return np.asarray(accs), np.asarray(losses), new_params


# ------------------------------------------------------------------ main
if __name__ == "__main__":
    key = jax.random.PRNGKey(0)
    task_num, ways, shots, h, w = 2, 4, 1, 16, 16
    query_size, hidden = 8, 32
    D = shots * h * w

    k1, k2, k3, k4, kw1, kw2 = jax.random.split(key, 6)
    x_spt = jax.random.normal(k1, (task_num, ways, shots, h, w), jnp.float32)
    y_spt = jax.random.randint(k2, (task_num, ways), 0, ways, jnp.int32)
    x_qry = jax.random.normal(k3, (task_num, query_size, 1, h, w), jnp.float32)
    y_qry = jax.random.randint(k4, (task_num, query_size), 0, ways, jnp.int32)

    # deterministic BaseNet parameter init (Flatten -> Linear(D,hidden) -> ReLU -> Linear(hidden,ways))
    params = {
        "w1": 0.05 * jax.random.normal(kw1, (D, hidden), jnp.float32),
        "b1": jnp.zeros((1, hidden), jnp.float32),
        "w2": 0.05 * jax.random.normal(kw2, (hidden, ways), jnp.float32),
        "b2": jnp.zeros((1, ways), jnp.float32),
    }

    accs, losses, new_params = meta_learner_forward(params, x_spt, y_spt, x_qry, y_qry)
    jax.block_until_ready(jax.tree_util.tree_leaves(new_params))
    assert accs.shape == (6,) and losses.shape == (6,)
    print("KERNEL_OK")
</pallas_src>

<mosaic_0001>
module attributes {stable_mosaic.version = 11 : i64} {
  func.func @kernel(%arg0: i32, %arg1: memref<1x4x256xf32, #tpu.memory_space<vmem>>, %arg2: memref<1x4x1xi32, #tpu.memory_space<vmem>>, %arg3: memref<1x8x256xf32, #tpu.memory_space<vmem>>, %arg4: memref<1x8x1xi32, #tpu.memory_space<vmem>>, %arg5: memref<256x32xf32, #tpu.memory_space<vmem>>, %arg6: memref<1x32xf32, #tpu.memory_space<vmem>>, %arg7: memref<32x4xf32, #tpu.memory_space<vmem>>, %arg8: memref<1x4xf32, #tpu.memory_space<vmem>>, %arg9: memref<1x1x6xf32, #tpu.memory_space<vmem>>, %arg10: memref<1x1x6xf32, #tpu.memory_space<vmem>>, %arg11: memref<1x256x32xf32, #tpu.memory_space<vmem>>, %arg12: memref<1x1x32xf32, #tpu.memory_space<vmem>>, %arg13: memref<1x32x4xf32, #tpu.memory_space<vmem>>, %arg14: memref<1x1x4xf32, #tpu.memory_space<vmem>>) attributes {dimension_semantics = [#tpu.dimension_semantics<parallel>], iteration_bounds = array<i64: 2>, scalar_prefetch = 0 : i64, scratch_operands = 0 : i64, tpu.core_type = #tpu.core_type<tc>, window_params = [{transform_indices = @transform_0, window_bounds = array<i64: 1, 4, 256>}, {transform_indices = @transform_1, window_bounds = array<i64: 1, 4, 1>}, {transform_indices = @transform_2, window_bounds = array<i64: 1, 8, 256>}, {transform_indices = @transform_3, window_bounds = array<i64: 1, 8, 1>}, {pipeline_mode = #tpu.pipeline_mode<synchronous>, transform_indices = @transform_4, window_bounds = array<i64: 256, 32>}, {pipeline_mode = #tpu.pipeline_mode<synchronous>, transform_indices = @transform_5, window_bounds = array<i64: 1, 32>}, {pipeline_mode = #tpu.pipeline_mode<synchronous>, transform_indices = @transform_6, window_bounds = array<i64: 32, 4>}, {pipeline_mode = #tpu.pipeline_mode<synchronous>, transform_indices = @transform_7, window_bounds = array<i64: 1, 4>}, {transform_indices = @transform_8, window_bounds = array<i64: 1, 1, 6>}, {transform_indices = @transform_9, window_bounds = array<i64: 1, 1, 6>}, {transform_indices = @transform_10, window_bounds = array<i64: 1, 256, 32>}, {transform_indices = @transform_11, window_bounds = array<i64: 1, 1, 32>}, {transform_indices = @transform_12, window_bounds = array<i64: 1, 32, 4>}, {transform_indices = @transform_13, window_bounds = array<i64: 1, 1, 4>}]} {
    %c0 = arith.constant 0 : index
    %c0_0 = arith.constant 0 : index
    %c0_1 = arith.constant 0 : index
    %0 = vector.load %arg1[%c0, %c0_0, %c0_1] : memref<1x4x256xf32, #tpu.memory_space<vmem>>, vector<1x4x256xf32>
    %1 = vector.shape_cast %0 : vector<1x4x256xf32> to vector<4x256xf32>
    %c0_2 = arith.constant 0 : index
    %c0_3 = arith.constant 0 : index
    %c0_4 = arith.constant 0 : index
    %2 = vector.load %arg2[%c0_2, %c0_3, %c0_4] : memref<1x4x1xi32, #tpu.memory_space<vmem>>, vector<1x4x1xi32>
    %3 = vector.shape_cast %2 : vector<1x4x1xi32> to vector<4x1xi32>
    %c0_5 = arith.constant 0 : index
    %c0_6 = arith.constant 0 : index
    %c0_7 = arith.constant 0 : index
    %4 = vector.load %arg3[%c0_5, %c0_6, %c0_7] : memref<1x8x256xf32, #tpu.memory_space<vmem>>, vector<1x8x256xf32>
    %5 = vector.shape_cast %4 : vector<1x8x256xf32> to vector<8x256xf32>
    %c0_8 = arith.constant 0 : index
    %c0_9 = arith.constant 0 : index
    %c0_10 = arith.constant 0 : index
    %6 = vector.load %arg4[%c0_8, %c0_9, %c0_10] : memref<1x8x1xi32, #tpu.memory_space<vmem>>, vector<1x8x1xi32>
    %7 = vector.shape_cast %6 : vector<1x8x1xi32> to vector<8x1xi32>
    %c0_11 = arith.constant 0 : index
    %c0_12 = arith.constant 0 : index
    %8 = vector.load %arg5[%c0_11, %c0_12] : memref<256x32xf32, #tpu.memory_space<vmem>>, vector<256x32xf32>
    %c0_13 = arith.constant 0 : index
    %c0_14 = arith.constant 0 : index
    %9 = vector.load %arg6[%c0_13, %c0_14] : memref<1x32xf32, #tpu.memory_space<vmem>>, vector<1x32xf32>
    %c0_15 = arith.constant 0 : index
    %c0_16 = arith.constant 0 : index
    %10 = vector.load %arg7[%c0_15, %c0_16] : memref<32x4xf32, #tpu.memory_space<vmem>>, vector<32x4xf32>
    %c0_17 = arith.constant 0 : index
    %c0_18 = arith.constant 0 : index
    %11 = vector.load %arg8[%c0_17, %c0_18] : memref<1x4xf32, #tpu.memory_space<vmem>>, vector<1x4xf32>
    %12 = tpu.iota {dimensions = array<i32: 1>} : vector<4x4xi32>
    %13 = vector.broadcast %3 : vector<4x1xi32> to vector<4x4xi32>
    %14 = arith.cmpi eq, %13, %12 : vector<4x4xi32>
    %15 = arith.extui %14 : vector<4x4xi1> to vector<4x4xi32>
    %16 = arith.sitofp %15 : vector<4x4xi32> to vector<4x4xf32>
    %17 = tpu.iota {dimensions = array<i32: 1>} : vector<8x4xi32>
    %18 = vector.broadcast %7 : vector<8x1xi32> to vector<8x4xi32>
    %19 = arith.cmpi eq, %18, %17 : vector<8x4xi32>
    %20 = arith.extui %19 : vector<8x4xi1> to vector<8x4xi32>
    %21 = arith.sitofp %20 : vector<8x4xi32> to vector<8x4xf32>
    %cst = arith.constant dense<0.000000e+00> : vector<8x32xf32>
    %22 = tpu.matmul %5, %8, %cst {dimension_numbers = #tpu.dot_dimension_numbers<[1], [0], [0], [1], [0, 0, 1, 1], [], []>} : vector<8x256xf32>, vector<256x32xf32>, vector<8x32xf32> -> vector<8x32xf32>
    %23 = vector.broadcast %9 : vector<1x32xf32> to vector<8x32xf32>
    %24 = arith.addf %22, %23 : vector<8x32xf32>
    %cst_19 = arith.constant 0.000000e+00 : f32
    %25 = vector.broadcast %cst_19 : f32 to vector<8x32xf32>
    %26 = arith.maximumf %24, %25 : vector<8x32xf32>
    %cst_20 = arith.constant dense<0.000000e+00> : vector<8x4xf32>
    %27 = tpu.matmul %26, %10, %cst_20 {dimension_numbers = #tpu.dot_dimension_numbers<[1], [0], [0], [1], [0, 0, 1, 1], [], []>} : vector<8x32xf32>, vector<32x4xf32>, vector<8x4xf32> -> vector<8x4xf32>
    %28 = vector.broadcast %11 : vector<1x4xf32> to vector<8x4xf32>
    %29 = arith.addf %27, %28 : vector<8x4xf32>
    %cst_21 = arith.constant dense<0xFF800000> : vector<8xf32>
    %30 = vector.multi_reduction <maximumf>, %29, %cst_21 [1] : vector<8x4xf32> to vector<8xf32>
    %31 = vector.shape_cast %30 : vector<8xf32> to vector<8x1xf32>
    %32 = vector.broadcast %31 : vector<8x1xf32> to vector<8x4xf32>
    %33 = arith.subf %29, %32 : vector<8x4xf32>
    %34 = math.exp %33 : vector<8x4xf32>
    %cst_22 = arith.constant dense<0.000000e+00> : vector<8xf32>
    %35 = vector.multi_reduction <add>, %34, %cst_22 [1] : vector<8x4xf32> to vector<8xf32>
    %36 = vector.shape_cast %35 : vector<8xf32> to vector<8x1xf32>
    %37 = math.log %36 : vector<8x1xf32>
    %38 = arith.addf %37, %31 : vector<8x1xf32>
    %39 = arith.mulf %21, %29 : vector<8x4xf32>
    %cst_23 = arith.constant dense<0.000000e+00> : vector<8xf32>
    %40 = vector.multi_reduction <add>, %39, %cst_23 [1] : vector<8x4xf32> to vector<8xf32>
    %41 = vector.shape_cast %40 : vector<8xf32> to vector<8x1xf32>
    %42 = arith.subf %38, %41 : vector<8x1xf32>
    %cst_24 = arith.constant dense<0.000000e+00> : vector<1xf32>
    %43 = vector.multi_reduction <add>, %42, %cst_24 [0] : vector<8x1xf32> to vector<1xf32>
    %44 = vector.shape_cast %43 : vector<1xf32> to vector<1x1xf32>
    %cst_25 = arith.constant 1.250000e-01 : f32
    %45 = vector.broadcast %cst_25 : f32 to vector<1x1xf32>
    %46 = arith.mulf %44, %45 : vector<1x1xf32>
    %47 = tpu.iota {dimensions = array<i32: 1>} : vector<8x4xi32>
    %48 = vector.broadcast %31 : vector<8x1xf32> to vector<8x4xf32>
    %49 = arith.cmpf oeq, %29, %48 : vector<8x4xf32>
    %c4_i32 = arith.constant 4 : i32
    %50 = vector.broadcast %c4_i32 : i32 to vector<8x4xi32>
    %51 = arith.select %49, %47, %50 : vector<8x4xi1>, vector<8x4xi32>
    %cst_26 = arith.constant dense<2147483647> : vector<8xi32>
    %52 = vector.multi_reduction <minsi>, %51, %cst_26 [1] : vector<8x4xi32> to vector<8xi32>
    %53 = vector.shape_cast %52 : vector<8xi32> to vector<8x1xi32>
    %54 = arith.cmpi eq, %53, %7 : vector<8x1xi32>
    %55 = arith.extui %54 : vector<8x1xi1> to vector<8x1xi32>
    %56 = arith.sitofp %55 : vector<8x1xi32> to vector<8x1xf32>
    %cst_27 = arith.constant dense<0.000000e+00> : vector<1xf32>
    %57 = vector.multi_reduction <add>, %56, %cst_27 [0] : vector<8x1xf32> to vector<1xf32>
    %58 = vector.shape_cast %57 : vector<1xf32> to vector<1x1xf32>
    %cst_28 = arith.constant dense<0.000000e+00> : vector<4x32xf32>
    %59 = tpu.matmul %1, %8, %cst_28 {dimension_numbers = #tpu.dot_dimension_numbers<[1], [0], [0], [1], [0, 0, 1, 1], [], []>} : vector<4x256xf32>, vector<256x32xf32>, vector<4x32xf32> -> vector<4x32xf32>
    %60 = vector.broadcast %9 : vector<1x32xf32> to vector<4x32xf32>
    %61 = arith.addf %59, %60 : vector<4x32xf32>
    %cst_29 = arith.constant 0.000000e+00 : f32
    %62 = vector.broadcast %cst_29 : f32 to vector<4x32xf32>
    %63 = arith.maximumf %61, %62 : vector<4x32xf32>
    %cst_30 = arith.constant dense<0.000000e+00> : vector<4x4xf32>
    %64 = tpu.matmul %63, %10, %cst_30 {dimension_numbers = #tpu.dot_dimension_numbers<[1], [0], [0], [1], [0, 0, 1, 1], [], []>} : vector<4x32xf32>, vector<32x4xf32>, vector<4x4xf32> -> vector<4x4xf32>
    %65 = vector.broadcast %11 : vector<1x4xf32> to vector<4x4xf32>
    %66 = arith.addf %64, %65 : vector<4x4xf32>
    %cst_31 = arith.constant dense<0xFF800000> : vector<4xf32>
    %67 = vector.multi_reduction <maximumf>, %66, %cst_31 [1] : vector<4x4xf32> to vector<4xf32>
    %68 = vector.shape_cast %67 : vector<4xf32> to vector<4x1xf32>
    %69 = vector.broadcast %68 : vector<4x1xf32> to vector<4x4xf32>
    %70 = arith.subf %66, %69 : vector<4x4xf32>
    %71 = math.exp %70 : vector<4x4xf32>
    %cst_32 = arith.constant dense<0.000000e+00> : vector<4xf32>
    %72 = vector.multi_reduction <add>, %71, %cst_32 [1] : vector<4x4xf32> to vector<4xf32>
    %73 = vector.shape_cast %72 : vector<4xf32> to vector<4x1xf32>
    %74 = vector.broadcast %73 : vector<4x1xf32> to vector<4x4xf32>
    %75 = arith.divf %71, %74 : vector<4x4xf32>
    %76 = arith.subf %75, %16 : vector<4x4xf32>
    %cst_33 = arith.constant 2.500000e-01 : f32
    %77 = vector.broadcast %cst_33 : f32 to vector<4x4xf32>
    %78 = arith.mulf %76, %77 : vector<4x4xf32>
    %cst_34 = arith.constant dense<0.000000e+00> : vector<32x4xf32>
    %79 = tpu.matmul %63, %78, %cst_34 {dimension_numbers = #tpu.dot_dimension_numbers<[0], [0], [1], [1], [0, 1, 1, 1], [], []>} : vector<4x32xf32>, vector<4x4xf32>, vector<32x4xf32> -> vector<32x4xf32>
    %cst_35 = arith.constant dense<0.000000e+00> : vector<4xf32>
    %80 = vector.multi_reduction <add>, %78, %cst_35 [0] : vector<4x4xf32> to vector<4xf32>
    %81 = vector.shape_cast %80 : vector<4xf32> to vector<1x4xf32>
    %cst_36 = arith.constant dense<0.000000e+00> : vector<4x32xf32>
    %82 = tpu.matmul %78, %10, %cst_36 {dimension_numbers = #tpu.dot_dimension_numbers<[1], [1], [0], [0], [0, 0, 1, 0], [], []>} : vector<4x4xf32>, vector<32x4xf32>, vector<4x32xf32> -> vector<4x32xf32>
    %cst_37 = arith.constant 0.000000e+00 : f32
    %83 = vector.broadcast %cst_37 : f32 to vector<4x32xf32>
    %84 = arith.cmpf ogt, %61, %83 : vector<4x32xf32>
    %cst_38 = arith.constant 0.000000e+00 : f32
    %85 = vector.broadcast %cst_38 : f32 to vector<4x32xf32>
    %86 = arith.select %84, %82, %85 : vector<4x32xi1>, vector<4x32xf32>
    %cst_39 = arith.constant dense<0.000000e+00> : vector<256x32xf32>
    %87 = tpu.matmul %1, %86, %cst_39 {dimension_numbers = #tpu.dot_dimension_numbers<[0], [0], [1], [1], [0, 1, 1, 1], [], []>} : vector<4x256xf32>, vector<4x32xf32>, vector<256x32xf32> -> vector<256x32xf32>
    %cst_40 = arith.constant dense<0.000000e+00> : vector<32xf32>
    %88 = vector.multi_reduction <add>, %86, %cst_40 [0] : vector<4x32xf32> to vector<32xf32>
    %89 = vector.shape_cast %88 : vector<32xf32> to vector<1x32xf32>
    %cst_41 = arith.constant 4.000000e-02 : f32
    %90 = vector.broadcast %cst_41 : f32 to vector<256x32xf32>
    %91 = arith.mulf %90, %87 : vector<256x32xf32>
    %92 = arith.subf %8, %91 : vector<256x32xf32>
    %cst_42 = arith.constant 4.000000e-02 : f32
    %93 = vector.broadcast %cst_42 : f32 to vector<1x32xf32>
    %94 = arith.mulf %93, %89 : vector<1x32xf32>
    %95 = arith.subf %9, %94 : vector<1x32xf32>
    %cst_43 = arith.constant 4.000000e-02 : f32
    %96 = vector.broadcast %cst_43 : f32 to vector<32x4xf32>
    %97 = arith.mulf %96, %79 : vector<32x4xf32>
    %98 = arith.subf %10, %97 : vector<32x4xf32>
    %cst_44 = arith.constant 4.000000e-02 : f32
    %99 = vector.broadcast %cst_44 : f32 to vector<1x4xf32>
    %100 = arith.mulf %99, %81 : vector<1x4xf32>
    %101 = arith.subf %11, %100 : vector<1x4xf32>
    %cst_45 = arith.constant dense<0.000000e+00> : vector<8x32xf32>
    %102 = tpu.matmul %5, %92, %cst_45 {dimension_numbers = #tpu.dot_dimension_numbers<[1], [0], [0], [1], [0, 0, 1, 1], [], []>} : vector<8x256xf32>, vector<256x32xf32>, vector<8x32xf32> -> vector<8x32xf32>
    %103 = vector.broadcast %95 : vector<1x32xf32> to vector<8x32xf32>
    %104 = arith.addf %102, %103 : vector<8x32xf32>
    %cst_46 = arith.constant 0.000000e+00 : f32
    %105 = vector.broadcast %cst_46 : f32 to vector<8x32xf32>
    %106 = arith.maximumf %104, %105 : vector<8x32xf32>
    %cst_47 = arith.constant dense<0.000000e+00> : vector<8x4xf32>
    %107 = tpu.matmul %106, %98, %cst_47 {dimension_numbers = #tpu.dot_dimension_numbers<[1], [0], [0], [1], [0, 0, 1, 1], [], []>} : vector<8x32xf32>, vector<32x4xf32>, vector<8x4xf32> -> vector<8x4xf32>
    %108 = vector.broadcast %101 : vector<1x4xf32> to vector<8x4xf32>
    %109 = arith.addf %107, %108 : vector<8x4xf32>
    %cst_48 = arith.constant dense<0xFF800000> : vector<8xf32>
    %110 = vector.multi_reduction <maximumf>, %109, %cst_48 [1] : vector<8x4xf32> to vector<8xf32>
    %111 = vector.shape_cast %110 : vector<8xf32> to vector<8x1xf32>
    %112 = vector.broadcast %111 : vector<8x1xf32> to vector<8x4xf32>
    %113 = arith.subf %109, %112 : vector<8x4xf32>
    %114 = math.exp %113 : vector<8x4xf32>
    %cst_49 = arith.constant dense<0.000000e+00> : vector<8xf32>
    %115 = vector.multi_reduction <add>, %114, %cst_49 [1] : vector<8x4xf32> to vector<8xf32>
    %116 = vector.shape_cast %115 : vector<8xf32> to vector<8x1xf32>
    %117 = math.log %116 : vector<8x1xf32>
    %118 = arith.addf %117, %111 : vector<8x1xf32>
    %119 = arith.mulf %21, %109 : vector<8x4xf32>
    %cst_50 = arith.constant dense<0.000000e+00> : vector<8xf32>
    %120 = vector.multi_reduction <add>, %119, %cst_50 [1] : vector<8x4xf32> to vector<8xf32>
    %121 = vector.shape_cast %120 : vector<8xf32> to vector<8x1xf32>
    %122 = arith.subf %118, %121 : vector<8x1xf32>
    %cst_51 = arith.constant dense<0.000000e+00> : vector<1xf32>
    %123 = vector.multi_reduction <add>, %122, %cst_51 [0] : vector<8x1xf32> to vector<1xf32>
    %124 = vector.shape_cast %123 : vector<1xf32> to vector<1x1xf32>
    %cst_52 = arith.constant 1.250000e-01 : f32
    %125 = vector.broadcast %cst_52 : f32 to vector<1x1xf32>
    %126 = arith.mulf %124, %125 : vector<1x1xf32>
    %127 = tpu.iota {dimensions = array<i32: 1>} : vector<8x4xi32>
    %128 = vector.broadcast %111 : vector<8x1xf32> to vector<8x4xf32>
    %129 = arith.cmpf oeq, %109, %128 : vector<8x4xf32>
    %c4_i32_53 = arith.constant 4 : i32
    %130 = vector.broadcast %c4_i32_53 : i32 to vector<8x4xi32>
    %131 = arith.select %129, %127, %130 : vector<8x4xi1>, vector<8x4xi32>
    %cst_54 = arith.constant dense<2147483647> : vector<8xi32>
    %132 = vector.multi_reduction <minsi>, %131, %cst_54 [1] : vector<8x4xi32> to vector<8xi32>
    %133 = vector.shape_cast %132 : vector<8xi32> to vector<8x1xi32>
    %134 = arith.cmpi eq, %133, %7 : vector<8x1xi32>
    %135 = arith.extui %134 : vector<8x1xi1> to vector<8x1xi32>
    %136 = arith.sitofp %135 : vector<8x1xi32> to vector<8x1xf32>
    %cst_55 = arith.constant dense<0.000000e+00> : vector<1xf32>
    %137 = vector.multi_reduction <add>, %136, %cst_55 [0] : vector<8x1xf32> to vector<1xf32>
    %138 = vector.shape_cast %137 : vector<1xf32> to vector<1x1xf32>
    %cst_56 = arith.constant dense<0.000000e+00> : vector<4x32xf32>
    %139 = tpu.matmul %1, %92, %cst_56 {dimension_numbers = #tpu.dot_dimension_numbers<[1], [0], [0], [1], [0, 0, 1, 1], [], []>} : vector<4x256xf32>, vector<256x32xf32>, vector<4x32xf32> -> vector<4x32xf32>
    %140 = vector.broadcast %95 : vector<1x32xf32> to vector<4x32xf32>
    %141 = arith.addf %139, %140 : vector<4x32xf32>
    %cst_57 = arith.constant 0.000000e+00 : f32
    %142 = vector.broadcast %cst_57 : f32 to vector<4x32xf32>
    %143 = arith.maximumf %141, %142 : vector<4x32xf32>
    %cst_58 = arith.constant dense<0.000000e+00> : vector<4x4xf32>
    %144 = tpu.matmul %143, %98, %cst_58 {dimension_numbers = #tpu.dot_dimension_numbers<[1], [0], [0], [1], [0, 0, 1, 1], [], []>} : vector<4x32xf32>, vector<32x4xf32>, vector<4x4xf32> -> vector<4x4xf32>
    %145 = vector.broadcast %101 : vector<1x4xf32> to vector<4x4xf32>
    %146 = arith.addf %144, %145 : vector<4x4xf32>
    %cst_59 = arith.constant dense<0xFF800000> : vector<4xf32>
    %147 = vector.multi_reduction <maximumf>, %146, %cst_59 [1] : vector<4x4xf32> to vector<4xf32>
    %148 = vector.shape_cast %147 : vector<4xf32> to vector<4x1xf32>
    %149 = vector.broadcast %148 : vector<4x1xf32> to vector<4x4xf32>
    %150 = arith.subf %146, %149 : vector<4x4xf32>
    %151 = math.exp %150 : vector<4x4xf32>
    %cst_60 = arith.constant dense<0.000000e+00> : vector<4xf32>
    %152 = vector.multi_reduction <add>, %151, %cst_60 [1] : vector<4x4xf32> to vector<4xf32>
    %153 = vector.shape_cast %152 : vector<4xf32> to vector<4x1xf32>
    %154 = vector.broadcast %153 : vector<4x1xf32> to vector<4x4xf32>
    %155 = arith.divf %151, %154 : vector<4x4xf32>
    %156 = arith.subf %155, %16 : vector<4x4xf32>
    %cst_61 = arith.constant 2.500000e-01 : f32
    %157 = vector.broadcast %cst_61 : f32 to vector<4x4xf32>
    %158 = arith.mulf %156, %157 : vector<4x4xf32>
    %cst_62 = arith.constant dense<0.000000e+00> : vector<32x4xf32>
    %159 = tpu.matmul %143, %158, %cst_62 {dimension_numbers = #tpu.dot_dimension_numbers<[0], [0], [1], [1], [0, 1, 1, 1], [], []>} : vector<4x32xf32>, vector<4x4xf32>, vector<32x4xf32> -> vector<32x4xf32>
    %cst_63 = arith.constant dense<0.000000e+00> : vector<4xf32>
    %160 = vector.multi_reduction <add>, %158, %cst_63 [0] : vector<4x4xf32> to vector<4xf32>
    %161 = vector.shape_cast %160 : vector<4xf32> to vector<1x4xf32>
    %cst_64 = arith.constant dense<0.000000e+00> : vector<4x32xf32>
    %162 = tpu.matmul %158, %98, %cst_64 {dimension_numbers = #tpu.dot_dimension_numbers<[1], [1], [0], [0], [0, 0, 1, 0], [], []>} : vector<4x4xf32>, vector<32x4xf32>, vector<4x32xf32> -> vector<4x32xf32>
    %cst_65 = arith.constant 0.000000e+00 : f32
    %163 = vector.broadcast %cst_65 : f32 to vector<4x32xf32>
    %164 = arith.cmpf ogt, %141, %163 : vector<4x32xf32>
    %cst_66 = arith.constant 0.000000e+00 : f32
    %165 = vector.broadcast %cst_66 : f32 to vector<4x32xf32>
    %166 = arith.select %164, %162, %165 : vector<4x32xi1>, vector<4x32xf32>
    %cst_67 = arith.constant dense<0.000000e+00> : vector<256x32xf32>
    %167 = tpu.matmul %1, %166, %cst_67 {dimension_numbers = #tpu.dot_dimension_numbers<[0], [0], [1], [1], [0, 1, 1, 1], [], []>} : vector<4x256xf32>, vector<4x32xf32>, vector<256x32xf32> -> vector<256x32xf32>
    %cst_68 = arith.constant dense<0.000000e+00> : vector<32xf32>
    %168 = vector.multi_reduction <add>, %166, %cst_68 [0] : vector<4x32xf32> to vector<32xf32>
    %169 = vector.shape_cast %168 : vector<32xf32> to vector<1x32xf32>
    %cst_69 = arith.constant 4.000000e-02 : f32
    %170 = vector.broadcast %cst_69 : f32 to vector<256x32xf32>
    %171 = arith.mulf %170, %167 : vector<256x32xf32>
    %172 = arith.subf %92, %171 : vector<256x32xf32>
    %cst_70 = arith.constant 4.000000e-02 : f32
    %173 = vector.broadcast %cst_70 : f32 to vector<1x32xf32>
    %174 = arith.mulf %173, %169 : vector<1x32xf32>
    %175 = arith.subf %95, %174 : vector<1x32xf32>
    %cst_71 = arith.constant 4.000000e-02 : f32
    %176 = vector.broadcast %cst_71 : f32 to vector<32x4xf32>
    %177 = arith.mulf %176, %159 : vector<32x4xf32>
    %178 = arith.subf %98, %177 : vector<32x4xf32>
    %cst_72 = arith.constant 4.000000e-02 : f32
    %179 = vector.broadcast %cst_72 : f32 to vector<1x4xf32>
    %180 = arith.mulf %179, %161 : vector<1x4xf32>
    %181 = arith.subf %101, %180 : vector<1x4xf32>
    %cst_73 = arith.constant dense<0.000000e+00> : vector<8x32xf32>
    %182 = tpu.matmul %5, %172, %cst_73 {dimension_numbers = #tpu.dot_dimension_numbers<[1], [0], [0], [1], [0, 0, 1, 1], [], []>} : vector<8x256xf32>, vector<256x32xf32>, vector<8x32xf32> -> vector<8x32xf32>
    %183 = vector.broadcast %175 : vector<1x32xf32> to vector<8x32xf32>
    %184 = arith.addf %182, %183 : vector<8x32xf32>
    %cst_74 = arith.constant 0.000000e+00 : f32
    %185 = vector.broadcast %cst_74 : f32 to vector<8x32xf32>
    %186 = arith.maximumf %184, %185 : vector<8x32xf32>
    %cst_75 = arith.constant dense<0.000000e+00> : vector<8x4xf32>
    %187 = tpu.matmul %186, %178, %cst_75 {dimension_numbers = #tpu.dot_dimension_numbers<[1], [0], [0], [1], [0, 0, 1, 1], [], []>} : vector<8x32xf32>, vector<32x4xf32>, vector<8x4xf32> -> vector<8x4xf32>
    %188 = vector.broadcast %181 : vector<1x4xf32> to vector<8x4xf32>
    %189 = arith.addf %187, %188 : vector<8x4xf32>
    %cst_76 = arith.constant dense<0xFF800000> : vector<8xf32>
    %190 = vector.multi_reduction <maximumf>, %189, %cst_76 [1] : vector<8x4xf32> to vector<8xf32>
    %191 = vector.shape_cast %190 : vector<8xf32> to vector<8x1xf32>
    %192 = vector.broadcast %191 : vector<8x1xf32> to vector<8x4xf32>
    %193 = arith.subf %189, %192 : vector<8x4xf32>
    %194 = math.exp %193 : vector<8x4xf32>
    %cst_77 = arith.constant dense<0.000000e+00> : vector<8xf32>
    %195 = vector.multi_reduction <add>, %194, %cst_77 [1] : vector<8x4xf32> to vector<8xf32>
    %196 = vector.shape_cast %195 : vector<8xf32> to vector<8x1xf32>
    %197 = math.log %196 : vector<8x1xf32>
    %198 = arith.addf %197, %191 : vector<8x1xf32>
    %199 = arith.mulf %21, %189 : vector<8x4xf32>
    %cst_78 = arith.constant dense<0.000000e+00> : vector<8xf32>
    %200 = vector.multi_reduction <add>, %199, %cst_78 [1] : vector<8x4xf32> to vector<8xf32>
    %201 = vector.shape_cast %200 : vector<8xf32> to vector<8x1xf32>
    %202 = arith.subf %198, %201 : vector<8x1xf32>
    %cst_79 = arith.constant dense<0.000000e+00> : vector<1xf32>
    %203 = vector.multi_reduction <add>, %202, %cst_79 [0] : vector<8x1xf32> to vector<1xf32>
    %204 = vector.shape_cast %203 : vector<1xf32> to vector<1x1xf32>
    %cst_80 = arith.constant 1.250000e-01 : f32
    %205 = vector.broadcast %cst_80 : f32 to vector<1x1xf32>
    %206 = arith.mulf %204, %205 : vector<1x1xf32>
    %207 = tpu.iota {dimensions = array<i32: 1>} : vector<8x4xi32>
    %208 = vector.broadcast %191 : vector<8x1xf32> to vector<8x4xf32>
    %209 = arith.cmpf oeq, %189, %208 : vector<8x4xf32>
    %c4_i32_81 = arith.constant 4 : i32
    %210 = vector.broadcast %c4_i32_81 : i32 to vector<8x4xi32>
    %211 = arith.select %209, %207, %210 : vector<8x4xi1>, vector<8x4xi32>
    %cst_82 = arith.constant dense<2147483647> : vector<8xi32>
    %212 = vector.multi_reduction <minsi>, %211, %cst_82 [1] : vector<8x4xi32> to vector<8xi32>
    %213 = vector.shape_cast %212 : vector<8xi32> to vector<8x1xi32>
    %214 = arith.cmpi eq, %213, %7 : vector<8x1xi32>
    %215 = arith.extui %214 : vector<8x1xi1> to vector<8x1xi32>
    %216 = arith.sitofp %215 : vector<8x1xi32> to vector<8x1xf32>
    %cst_83 = arith.constant dense<0.000000e+00> : vector<1xf32>
    %217 = vector.multi_reduction <add>, %216, %cst_83 [0] : vector<8x1xf32> to vector<1xf32>
    %218 = vector.shape_cast %217 : vector<1xf32> to vector<1x1xf32>
    %cst_84 = arith.constant dense<0.000000e+00> : vector<4x32xf32>
    %219 = tpu.matmul %1, %172, %cst_84 {dimension_numbers = #tpu.dot_dimension_numbers<[1], [0], [0], [1], [0, 0, 1, 1], [], []>} : vector<4x256xf32>, vector<256x32xf32>, vector<4x32xf32> -> vector<4x32xf32>
    %220 = vector.broadcast %175 : vector<1x32xf32> to vector<4x32xf32>
    %221 = arith.addf %219, %220 : vector<4x32xf32>
    %cst_85 = arith.constant 0.000000e+00 : f32
    %222 = vector.broadcast %cst_85 : f32 to vector<4x32xf32>
    %223 = arith.maximumf %221, %222 : vector<4x32xf32>
    %cst_86 = arith.constant dense<0.000000e+00> : vector<4x4xf32>
    %224 = tpu.matmul %223, %178, %cst_86 {dimension_numbers = #tpu.dot_dimension_numbers<[1], [0], [0], [1], [0, 0, 1, 1], [], []>} : vector<4x32xf32>, vector<32x4xf32>, vector<4x4xf32> -> vector<4x4xf32>
    %225 = vector.broadcast %181 : vector<1x4xf32> to vector<4x4xf32>
    %226 = arith.addf %224, %225 : vector<4x4xf32>
    %cst_87 = arith.constant dense<0xFF800000> : vector<4xf32>
    %227 = vector.multi_reduction <maximumf>, %226, %cst_87 [1] : vector<4x4xf32> to vector<4xf32>
    %228 = vector.shape_cast %227 : vector<4xf32> to vector<4x1xf32>
    %229 = vector.broadcast %228 : vector<4x1xf32> to vector<4x4xf32>
    %230 = arith.subf %226, %229 : vector<4x4xf32>
    %231 = math.exp %230 : vector<4x4xf32>
    %cst_88 = arith.constant dense<0.000000e+00> : vector<4xf32>
    %232 = vector.multi_reduction <add>, %231, %cst_88 [1] : vector<4x4xf32> to vector<4xf32>
    %233 = vector.shape_cast %232 : vector<4xf32> to vector<4x1xf32>
    %234 = vector.broadcast %233 : vector<4x1xf32> to vector<4x4xf32>
    %235 = arith.divf %231, %234 : vector<4x4xf32>
    %236 = arith.subf %235, %16 : vector<4x4xf32>
    %cst_89 = arith.constant 2.500000e-01 : f32
    %237 = vector.broadcast %cst_89 : f32 to vector<4x4xf32>
    %238 = arith.mulf %236, %237 : vector<4x4xf32>
    %cst_90 = arith.constant dense<0.000000e+00> : vector<32x4xf32>
    %239 = tpu.matmul %223, %238, %cst_90 {dimension_numbers = #tpu.dot_dimension_numbers<[0], [0], [1], [1], [0, 1, 1, 1], [], []>} : vector<4x32xf32>, vector<4x4xf32>, vector<32x4xf32> -> vector<32x4xf32>
    %cst_91 = arith.constant dense<0.000000e+00> : vector<4xf32>
    %240 = vector.multi_reduction <add>, %238, %cst_91 [0] : vector<4x4xf32> to vector<4xf32>
    %241 = vector.shape_cast %240 : vector<4xf32> to vector<1x4xf32>
    %cst_92 = arith.constant dense<0.000000e+00> : vector<4x32xf32>
    %242 = tpu.matmul %238, %178, %cst_92 {dimension_numbers = #tpu.dot_dimension_numbers<[1], [1], [0], [0], [0, 0, 1, 0], [], []>} : vector<4x4xf32>, vector<32x4xf32>, vector<4x32xf32> -> vector<4x32xf32>
    %cst_93 = arith.constant 0.000000e+00 : f32
    %243 = vector.broadcast %cst_93 : f32 to vector<4x32xf32>
    %244 = arith.cmpf ogt, %221, %243 : vector<4x32xf32>
    %cst_94 = arith.constant 0.000000e+00 : f32
    %245 = vector.broadcast %cst_94 : f32 to vector<4x32xf32>
    %246 = arith.select %244, %242, %245 : vector<4x32xi1>, vector<4x32xf32>
    %cst_95 = arith.constant dense<0.000000e+00> : vector<256x32xf32>
    %247 = tpu.matmul %1, %246, %cst_95 {dimension_numbers = #tpu.dot_dimension_numbers<[0], [0], [1], [1], [0, 1, 1, 1], [], []>} : vector<4x256xf32>, vector<4x32xf32>, vector<256x32xf32> -> vector<256x32xf32>
    %cst_96 = arith.constant dense<0.000000e+00> : vector<32xf32>
    %248 = vector.multi_reduction <add>, %246, %cst_96 [0] : vector<4x32xf32> to vector<32xf32>
    %249 = vector.shape_cast %248 : vector<32xf32> to vector<1x32xf32>
    %cst_97 = arith.constant 4.000000e-02 : f32
    %250 = vector.broadcast %cst_97 : f32 to vector<256x32xf32>
    %251 = arith.mulf %250, %247 : vector<256x32xf32>
    %252 = arith.subf %172, %251 : vector<256x32xf32>
    %cst_98 = arith.constant 4.000000e-02 : f32
    %253 = vector.broadcast %cst_98 : f32 to vector<1x32xf32>
    %254 = arith.mulf %253, %249 : vector<1x32xf32>
    %255 = arith.subf %175, %254 : vector<1x32xf32>
    %cst_99 = arith.constant 4.000000e-02 : f32
    %256 = vector.broadcast %cst_99 : f32 to vector<32x4xf32>
    %257 = arith.mulf %256, %239 : vector<32x4xf32>
    %258 = arith.subf %178, %257 : vector<32x4xf32>
    %cst_100 = arith.constant 4.000000e-02 : f32
    %259 = vector.broadcast %cst_100 : f32 to vector<1x4xf32>
    %260 = arith.mulf %259, %241 : vector<1x4xf32>
    %261 = arith.subf %181, %260 : vector<1x4xf32>
    %cst_101 = arith.constant dense<0.000000e+00> : vector<8x32xf32>
    %262 = tpu.matmul %5, %252, %cst_101 {dimension_numbers = #tpu.dot_dimension_numbers<[1], [0], [0], [1], [0, 0, 1, 1], [], []>} : vector<8x256xf32>, vector<256x32xf32>, vector<8x32xf32> -> vector<8x32xf32>
    %263 = vector.broadcast %255 : vector<1x32xf32> to vector<8x32xf32>
    %264 = arith.addf %262, %263 : vector<8x32xf32>
    %cst_102 = arith.constant 0.000000e+00 : f32
    %265 = vector.broadcast %cst_102 : f32 to vector<8x32xf32>
    %266 = arith.maximumf %264, %265 : vector<8x32xf32>
    %cst_103 = arith.constant dense<0.000000e+00> : vector<8x4xf32>
    %267 = tpu.matmul %266, %258, %cst_103 {dimension_numbers = #tpu.dot_dimension_numbers<[1], [0], [0], [1], [0, 0, 1, 1], [], []>} : vector<8x32xf32>, vector<32x4xf32>, vector<8x4xf32> -> vector<8x4xf32>
    %268 = vector.broadcast %261 : vector<1x4xf32> to vector<8x4xf32>
    %269 = arith.addf %267, %268 : vector<8x4xf32>
    %cst_104 = arith.constant dense<0xFF800000> : vector<8xf32>
    %270 = vector.multi_reduction <maximumf>, %269, %cst_104 [1] : vector<8x4xf32> to vector<8xf32>
    %271 = vector.shape_cast %270 : vector<8xf32> to vector<8x1xf32>
    %272 = vector.broadcast %271 : vector<8x1xf32> to vector<8x4xf32>
    %273 = arith.subf %269, %272 : vector<8x4xf32>
    %274 = math.exp %273 : vector<8x4xf32>
    %cst_105 = arith.constant dense<0.000000e+00> : vector<8xf32>
    %275 = vector.multi_reduction <add>, %274, %cst_105 [1] : vector<8x4xf32> to vector<8xf32>
    %276 = vector.shape_cast %275 : vector<8xf32> to vector<8x1xf32>
    %277 = math.log %276 : vector<8x1xf32>
    %278 = arith.addf %277, %271 : vector<8x1xf32>
    %279 = arith.mulf %21, %269 : vector<8x4xf32>
    %cst_106 = arith.constant dense<0.000000e+00> : vector<8xf32>
    %280 = vector.multi_reduction <add>, %279, %cst_106 [1] : vector<8x4xf32> to vector<8xf32>
    %281 = vector.shape_cast %280 : vector<8xf32> to vector<8x1xf32>
    %282 = arith.subf %278, %281 : vector<8x1xf32>
    %cst_107 = arith.constant dense<0.000000e+00> : vector<1xf32>
    %283 = vector.multi_reduction <add>, %282, %cst_107 [0] : vector<8x1xf32> to vector<1xf32>
    %284 = vector.shape_cast %283 : vector<1xf32> to vector<1x1xf32>
    %cst_108 = arith.constant 1.250000e-01 : f32
    %285 = vector.broadcast %cst_108 : f32 to vector<1x1xf32>
    %286 = arith.mulf %284, %285 : vector<1x1xf32>
    %287 = tpu.iota {dimensions = array<i32: 1>} : vector<8x4xi32>
    %288 = vector.broadcast %271 : vector<8x1xf32> to vector<8x4xf32>
    %289 = arith.cmpf oeq, %269, %288 : vector<8x4xf32>
    %c4_i32_109 = arith.constant 4 : i32
    %290 = vector.broadcast %c4_i32_109 : i32 to vector<8x4xi32>
    %291 = arith.select %289, %287, %290 : vector<8x4xi1>, vector<8x4xi32>
    %cst_110 = arith.constant dense<2147483647> : vector<8xi32>
    %292 = vector.multi_reduction <minsi>, %291, %cst_110 [1] : vector<8x4xi32> to vector<8xi32>
    %293 = vector.shape_cast %292 : vector<8xi32> to vector<8x1xi32>
    %294 = arith.cmpi eq, %293, %7 : vector<8x1xi32>
    %295 = arith.extui %294 : vector<8x1xi1> to vector<8x1xi32>
    %296 = arith.sitofp %295 : vector<8x1xi32> to vector<8x1xf32>
    %cst_111 = arith.constant dense<0.000000e+00> : vector<1xf32>
    %297 = vector.multi_reduction <add>, %296, %cst_111 [0] : vector<8x1xf32> to vector<1xf32>
    %298 = vector.shape_cast %297 : vector<1xf32> to vector<1x1xf32>
    %cst_112 = arith.constant dense<0.000000e+00> : vector<4x32xf32>
    %299 = tpu.matmul %1, %252, %cst_112 {dimension_numbers = #tpu.dot_dimension_numbers<[1], [0], [0], [1], [0, 0, 1, 1], [], []>} : vector<4x256xf32>, vector<256x32xf32>, vector<4x32xf32> -> vector<4x32xf32>
    %300 = vector.broadcast %255 : vector<1x32xf32> to vector<4x32xf32>
    %301 = arith.addf %299, %300 : vector<4x32xf32>
    %cst_113 = arith.constant 0.000000e+00 : f32
    %302 = vector.broadcast %cst_113 : f32 to vector<4x32xf32>
    %303 = arith.maximumf %301, %302 : vector<4x32xf32>
    %cst_114 = arith.constant dense<0.000000e+00> : vector<4x4xf32>
    %304 = tpu.matmul %303, %258, %cst_114 {dimension_numbers = #tpu.dot_dimension_numbers<[1], [0], [0], [1], [0, 0, 1, 1], [], []>} : vector<4x32xf32>, vector<32x4xf32>, vector<4x4xf32> -> vector<4x4xf32>
    %305 = vector.broadcast %261 : vector<1x4xf32> to vector<4x4xf32>
    %306 = arith.addf %304, %305 : vector<4x4xf32>
    %cst_115 = arith.constant dense<0xFF800000> : vector<4xf32>
    %307 = vector.multi_reduction <maximumf>, %306, %cst_115 [1] : vector<4x4xf32> to vector<4xf32>
    %308 = vector.shape_cast %307 : vector<4xf32> to vector<4x1xf32>
    %309 = vector.broadcast %308 : vector<4x1xf32> to vector<4x4xf32>
    %310 = arith.subf %306, %309 : vector<4x4xf32>
    %311 = math.exp %310 : vector<4x4xf32>
    %cst_116 = arith.constant dense<0.000000e+00> : vector<4xf32>
    %312 = vector.multi_reduction <add>, %311, %cst_116 [1] : vector<4x4xf32> to vector<4xf32>
    %313 = vector.shape_cast %312 : vector<4xf32> to vector<4x1xf32>
    %314 = vector.broadcast %313 : vector<4x1xf32> to vector<4x4xf32>
    %315 = arith.divf %311, %314 : vector<4x4xf32>
    %316 = arith.subf %315, %16 : vector<4x4xf32>
    %cst_117 = arith.constant 2.500000e-01 : f32
    %317 = vector.broadcast %cst_117 : f32 to vector<4x4xf32>
    %318 = arith.mulf %316, %317 : vector<4x4xf32>
    %cst_118 = arith.constant dense<0.000000e+00> : vector<32x4xf32>
    %319 = tpu.matmul %303, %318, %cst_118 {dimension_numbers = #tpu.dot_dimension_numbers<[0], [0], [1], [1], [0, 1, 1, 1], [], []>} : vector<4x32xf32>, vector<4x4xf32>, vector<32x4xf32> -> vector<32x4xf32>
    %cst_119 = arith.constant dense<0.000000e+00> : vector<4xf32>
    %320 = vector.multi_reduction <add>, %318, %cst_119 [0] : vector<4x4xf32> to vector<4xf32>
    %321 = vector.shape_cast %320 : vector<4xf32> to vector<1x4xf32>
    %cst_120 = arith.constant dense<0.000000e+00> : vector<4x32xf32>
    %322 = tpu.matmul %318, %258, %cst_120 {dimension_numbers = #tpu.dot_dimension_numbers<[1], [1], [0], [0], [0, 0, 1, 0], [], []>} : vector<4x4xf32>, vector<32x4xf32>, vector<4x32xf32> -> vector<4x32xf32>
    %cst_121 = arith.constant 0.000000e+00 : f32
    %323 = vector.broadcast %cst_121 : f32 to vector<4x32xf32>
    %324 = arith.cmpf ogt, %301, %323 : vector<4x32xf32>
    %cst_122 = arith.constant 0.000000e+00 : f32
    %325 = vector.broadcast %cst_122 : f32 to vector<4x32xf32>
    %326 = arith.select %324, %322, %325 : vector<4x32xi1>, vector<4x32xf32>
    %cst_123 = arith.constant dense<0.000000e+00> : vector<256x32xf32>
    %327 = tpu.matmul %1, %326, %cst_123 {dimension_numbers = #tpu.dot_dimension_numbers<[0], [0], [1], [1], [0, 1, 1, 1], [], []>} : vector<4x256xf32>, vector<4x32xf32>, vector<256x32xf32> -> vector<256x32xf32>
    %cst_124 = arith.constant dense<0.000000e+00> : vector<32xf32>
    %328 = vector.multi_reduction <add>, %326, %cst_124 [0] : vector<4x32xf32> to vector<32xf32>
    %329 = vector.shape_cast %328 : vector<32xf32> to vector<1x32xf32>
    %cst_125 = arith.constant 4.000000e-02 : f32
    %330 = vector.broadcast %cst_125 : f32 to vector<256x32xf32>
    %331 = arith.mulf %330, %327 : vector<256x32xf32>
    %332 = arith.subf %252, %331 : vector<256x32xf32>
    %cst_126 = arith.constant 4.000000e-02 : f32
    %333 = vector.broadcast %cst_126 : f32 to vector<1x32xf32>
    %334 = arith.mulf %333, %329 : vector<1x32xf32>
    %335 = arith.subf %255, %334 : vector<1x32xf32>
    %cst_127 = arith.constant 4.000000e-02 : f32
    %336 = vector.broadcast %cst_127 : f32 to vector<32x4xf32>
    %337 = arith.mulf %336, %319 : vector<32x4xf32>
    %338 = arith.subf %258, %337 : vector<32x4xf32>
    %cst_128 = arith.constant 4.000000e-02 : f32
    %339 = vector.broadcast %cst_128 : f32 to vector<1x4xf32>
    %340 = arith.mulf %339, %321 : vector<1x4xf32>
    %341 = arith.subf %261, %340 : vector<1x4xf32>
    %cst_129 = arith.constant dense<0.000000e+00> : vector<8x32xf32>
    %342 = tpu.matmul %5, %332, %cst_129 {dimension_numbers = #tpu.dot_dimension_numbers<[1], [0], [0], [1], [0, 0, 1, 1], [], []>} : vector<8x256xf32>, vector<256x32xf32>, vector<8x32xf32> -> vector<8x32xf32>
    %343 = vector.broadcast %335 : vector<1x32xf32> to vector<8x32xf32>
    %344 = arith.addf %342, %343 : vector<8x32xf32>
    %cst_130 = arith.constant 0.000000e+00 : f32
    %345 = vector.broadcast %cst_130 : f32 to vector<8x32xf32>
    %346 = arith.maximumf %344, %345 : vector<8x32xf32>
    %cst_131 = arith.constant dense<0.000000e+00> : vector<8x4xf32>
    %347 = tpu.matmul %346, %338, %cst_131 {dimension_numbers = #tpu.dot_dimension_numbers<[1], [0], [0], [1], [0, 0, 1, 1], [], []>} : vector<8x32xf32>, vector<32x4xf32>, vector<8x4xf32> -> vector<8x4xf32>
    %348 = vector.broadcast %341 : vector<1x4xf32> to vector<8x4xf32>
    %349 = arith.addf %347, %348 : vector<8x4xf32>
    %cst_132 = arith.constant dense<0xFF800000> : vector<8xf32>
    %350 = vector.multi_reduction <maximumf>, %349, %cst_132 [1] : vector<8x4xf32> to vector<8xf32>
    %351 = vector.shape_cast %350 : vector<8xf32> to vector<8x1xf32>
    %352 = vector.broadcast %351 : vector<8x1xf32> to vector<8x4xf32>
    %353 = arith.subf %349, %352 : vector<8x4xf32>
    %354 = math.exp %353 : vector<8x4xf32>
    %cst_133 = arith.constant dense<0.000000e+00> : vector<8xf32>
    %355 = vector.multi_reduction <add>, %354, %cst_133 [1] : vector<8x4xf32> to vector<8xf32>
    %356 = vector.shape_cast %355 : vector<8xf32> to vector<8x1xf32>
    %357 = math.log %356 : vector<8x1xf32>
    %358 = arith.addf %357, %351 : vector<8x1xf32>
    %359 = arith.mulf %21, %349 : vector<8x4xf32>
    %cst_134 = arith.constant dense<0.000000e+00> : vector<8xf32>
    %360 = vector.multi_reduction <add>, %359, %cst_134 [1] : vector<8x4xf32> to vector<8xf32>
    %361 = vector.shape_cast %360 : vector<8xf32> to vector<8x1xf32>
    %362 = arith.subf %358, %361 : vector<8x1xf32>
    %cst_135 = arith.constant dense<0.000000e+00> : vector<1xf32>
    %363 = vector.multi_reduction <add>, %362, %cst_135 [0] : vector<8x1xf32> to vector<1xf32>
    %364 = vector.shape_cast %363 : vector<1xf32> to vector<1x1xf32>
    %cst_136 = arith.constant 1.250000e-01 : f32
    %365 = vector.broadcast %cst_136 : f32 to vector<1x1xf32>
    %366 = arith.mulf %364, %365 : vector<1x1xf32>
    %367 = tpu.iota {dimensions = array<i32: 1>} : vector<8x4xi32>
    %368 = vector.broadcast %351 : vector<8x1xf32> to vector<8x4xf32>
    %369 = arith.cmpf oeq, %349, %368 : vector<8x4xf32>
    %c4_i32_137 = arith.constant 4 : i32
    %370 = vector.broadcast %c4_i32_137 : i32 to vector<8x4xi32>
    %371 = arith.select %369, %367, %370 : vector<8x4xi1>, vector<8x4xi32>
    %cst_138 = arith.constant dense<2147483647> : vector<8xi32>
    %372 = vector.multi_reduction <minsi>, %371, %cst_138 [1] : vector<8x4xi32> to vector<8xi32>
    %373 = vector.shape_cast %372 : vector<8xi32> to vector<8x1xi32>
    %374 = arith.cmpi eq, %373, %7 : vector<8x1xi32>
    %375 = arith.extui %374 : vector<8x1xi1> to vector<8x1xi32>
    %376 = arith.sitofp %375 : vector<8x1xi32> to vector<8x1xf32>
    %cst_139 = arith.constant dense<0.000000e+00> : vector<1xf32>
    %377 = vector.multi_reduction <add>, %376, %cst_139 [0] : vector<8x1xf32> to vector<1xf32>
    %378 = vector.shape_cast %377 : vector<1xf32> to vector<1x1xf32>
    %cst_140 = arith.constant dense<0.000000e+00> : vector<4x32xf32>
    %379 = tpu.matmul %1, %332, %cst_140 {dimension_numbers = #tpu.dot_dimension_numbers<[1], [0], [0], [1], [0, 0, 1, 1], [], []>} : vector<4x256xf32>, vector<256x32xf32>, vector<4x32xf32> -> vector<4x32xf32>
    %380 = vector.broadcast %335 : vector<1x32xf32> to vector<4x32xf32>
    %381 = arith.addf %379, %380 : vector<4x32xf32>
    %cst_141 = arith.constant 0.000000e+00 : f32
    %382 = vector.broadcast %cst_141 : f32 to vector<4x32xf32>
    %383 = arith.maximumf %381, %382 : vector<4x32xf32>
    %cst_142 = arith.constant dense<0.000000e+00> : vector<4x4xf32>
    %384 = tpu.matmul %383, %338, %cst_142 {dimension_numbers = #tpu.dot_dimension_numbers<[1], [0], [0], [1], [0, 0, 1, 1], [], []>} : vector<4x32xf32>, vector<32x4xf32>, vector<4x4xf32> -> vector<4x4xf32>
    %385 = vector.broadcast %341 : vector<1x4xf32> to vector<4x4xf32>
    %386 = arith.addf %384, %385 : vector<4x4xf32>
    %cst_143 = arith.constant dense<0xFF800000> : vector<4xf32>
    %387 = vector.multi_reduction <maximumf>, %386, %cst_143 [1] : vector<4x4xf32> to vector<4xf32>
    %388 = vector.shape_cast %387 : vector<4xf32> to vector<4x1xf32>
    %389 = vector.broadcast %388 : vector<4x1xf32> to vector<4x4xf32>
    %390 = arith.subf %386, %389 : vector<4x4xf32>
    %391 = math.exp %390 : vector<4x4xf32>
    %cst_144 = arith.constant dense<0.000000e+00> : vector<4xf32>
    %392 = vector.multi_reduction <add>, %391, %cst_144 [1] : vector<4x4xf32> to vector<4xf32>
    %393 = vector.shape_cast %392 : vector<4xf32> to vector<4x1xf32>
    %394 = vector.broadcast %393 : vector<4x1xf32> to vector<4x4xf32>
    %395 = arith.divf %391, %394 : vector<4x4xf32>
    %396 = arith.subf %395, %16 : vector<4x4xf32>
    %cst_145 = arith.constant 2.500000e-01 : f32
    %397 = vector.broadcast %cst_145 : f32 to vector<4x4xf32>
    %398 = arith.mulf %396, %397 : vector<4x4xf32>
    %cst_146 = arith.constant dense<0.000000e+00> : vector<32x4xf32>
    %399 = tpu.matmul %383, %398, %cst_146 {dimension_numbers = #tpu.dot_dimension_numbers<[0], [0], [1], [1], [0, 1, 1, 1], [], []>} : vector<4x32xf32>, vector<4x4xf32>, vector<32x4xf32> -> vector<32x4xf32>
    %cst_147 = arith.constant dense<0.000000e+00> : vector<4xf32>
    %400 = vector.multi_reduction <add>, %398, %cst_147 [0] : vector<4x4xf32> to vector<4xf32>
    %401 = vector.shape_cast %400 : vector<4xf32> to vector<1x4xf32>
    %cst_148 = arith.constant dense<0.000000e+00> : vector<4x32xf32>
    %402 = tpu.matmul %398, %338, %cst_148 {dimension_numbers = #tpu.dot_dimension_numbers<[1], [1], [0], [0], [0, 0, 1, 0], [], []>} : vector<4x4xf32>, vector<32x4xf32>, vector<4x32xf32> -> vector<4x32xf32>
    %cst_149 = arith.constant 0.000000e+00 : f32
    %403 = vector.broadcast %cst_149 : f32 to vector<4x32xf32>
    %404 = arith.cmpf ogt, %381, %403 : vector<4x32xf32>
    %cst_150 = arith.constant 0.000000e+00 : f32
    %405 = vector.broadcast %cst_150 : f32 to vector<4x32xf32>
    %406 = arith.select %404, %402, %405 : vector<4x32xi1>, vector<4x32xf32>
    %cst_151 = arith.constant dense<0.000000e+00> : vector<256x32xf32>
    %407 = tpu.matmul %1, %406, %cst_151 {dimension_numbers = #tpu.dot_dimension_numbers<[0], [0], [1], [1], [0, 1, 1, 1], [], []>} : vector<4x256xf32>, vector<4x32xf32>, vector<256x32xf32> -> vector<256x32xf32>
    %cst_152 = arith.constant dense<0.000000e+00> : vector<32xf32>
    %408 = vector.multi_reduction <add>, %406, %cst_152 [0] : vector<4x32xf32> to vector<32xf32>
    %409 = vector.shape_cast %408 : vector<32xf32> to vector<1x32xf32>
    %cst_153 = arith.constant 4.000000e-02 : f32
    %410 = vector.broadcast %cst_153 : f32 to vector<256x32xf32>
    %411 = arith.mulf %410, %407 : vector<256x32xf32>
    %412 = arith.subf %332, %411 : vector<256x32xf32>
    %cst_154 = arith.constant 4.000000e-02 : f32
    %413 = vector.broadcast %cst_154 : f32 to vector<1x32xf32>
    %414 = arith.mulf %413, %409 : vector<1x32xf32>
    %415 = arith.subf %335, %414 : vector<1x32xf32>
    %cst_155 = arith.constant 4.000000e-02 : f32
    %416 = vector.broadcast %cst_155 : f32 to vector<32x4xf32>
    %417 = arith.mulf %416, %399 : vector<32x4xf32>
    %418 = arith.subf %338, %417 : vector<32x4xf32>
    %cst_156 = arith.constant 4.000000e-02 : f32
    %419 = vector.broadcast %cst_156 : f32 to vector<1x4xf32>
    %420 = arith.mulf %419, %401 : vector<1x4xf32>
    %421 = arith.subf %341, %420 : vector<1x4xf32>
    %cst_157 = arith.constant dense<0.000000e+00> : vector<8x32xf32>
    %422 = tpu.matmul %5, %412, %cst_157 {dimension_numbers = #tpu.dot_dimension_numbers<[1], [0], [0], [1], [0, 0, 1, 1], [], []>} : vector<8x256xf32>, vector<256x32xf32>, vector<8x32xf32> -> vector<8x32xf32>
    %423 = vector.broadcast %415 : vector<1x32xf32> to vector<8x32xf32>
    %424 = arith.addf %422, %423 : vector<8x32xf32>
    %cst_158 = arith.constant 0.000000e+00 : f32
    %425 = vector.broadcast %cst_158 : f32 to vector<8x32xf32>
    %426 = arith.maximumf %424, %425 : vector<8x32xf32>
    %cst_159 = arith.constant dense<0.000000e+00> : vector<8x4xf32>
    %427 = tpu.matmul %426, %418, %cst_159 {dimension_numbers = #tpu.dot_dimension_numbers<[1], [0], [0], [1], [0, 0, 1, 1], [], []>} : vector<8x32xf32>, vector<32x4xf32>, vector<8x4xf32> -> vector<8x4xf32>
    %428 = vector.broadcast %421 : vector<1x4xf32> to vector<8x4xf32>
    %429 = arith.addf %427, %428 : vector<8x4xf32>
    %cst_160 = arith.constant dense<0xFF800000> : vector<8xf32>
    %430 = vector.multi_reduction <maximumf>, %429, %cst_160 [1] : vector<8x4xf32> to vector<8xf32>
    %431 = vector.shape_cast %430 : vector<8xf32> to vector<8x1xf32>
    %432 = vector.broadcast %431 : vector<8x1xf32> to vector<8x4xf32>
    %433 = arith.subf %429, %432 : vector<8x4xf32>
    %434 = math.exp %433 : vector<8x4xf32>
    %cst_161 = arith.constant dense<0.000000e+00> : vector<8xf32>
    %435 = vector.multi_reduction <add>, %434, %cst_161 [1] : vector<8x4xf32> to vector<8xf32>
    %436 = vector.shape_cast %435 : vector<8xf32> to vector<8x1xf32>
    %437 = vector.broadcast %436 : vector<8x1xf32> to vector<8x4xf32>
    %438 = arith.divf %434, %437 : vector<8x4xf32>
    %439 = math.log %436 : vector<8x1xf32>
    %440 = arith.addf %439, %431 : vector<8x1xf32>
    %441 = arith.mulf %21, %429 : vector<8x4xf32>
    %cst_162 = arith.constant dense<0.000000e+00> : vector<8xf32>
    %442 = vector.multi_reduction <add>, %441, %cst_162 [1] : vector<8x4xf32> to vector<8xf32>
    %443 = vector.shape_cast %442 : vector<8xf32> to vector<8x1xf32>
    %444 = arith.subf %440, %443 : vector<8x1xf32>
    %cst_163 = arith.constant dense<0.000000e+00> : vector<1xf32>
    %445 = vector.multi_reduction <add>, %444, %cst_163 [0] : vector<8x1xf32> to vector<1xf32>
    %446 = vector.shape_cast %445 : vector<1xf32> to vector<1x1xf32>
    %cst_164 = arith.constant 1.250000e-01 : f32
    %447 = vector.broadcast %cst_164 : f32 to vector<1x1xf32>
    %448 = arith.mulf %446, %447 : vector<1x1xf32>
    %449 = arith.subf %438, %21 : vector<8x4xf32>
    %cst_165 = arith.constant 1.250000e-01 : f32
    %450 = vector.broadcast %cst_165 : f32 to vector<8x4xf32>
    %451 = arith.mulf %449, %450 : vector<8x4xf32>
    %452 = tpu.iota {dimensions = array<i32: 1>} : vector<8x4xi32>
    %453 = vector.broadcast %431 : vector<8x1xf32> to vector<8x4xf32>
    %454 = arith.cmpf oeq, %429, %453 : vector<8x4xf32>
    %c4_i32_166 = arith.constant 4 : i32
    %455 = vector.broadcast %c4_i32_166 : i32 to vector<8x4xi32>
    %456 = arith.select %454, %452, %455 : vector<8x4xi1>, vector<8x4xi32>
    %cst_167 = arith.constant dense<2147483647> : vector<8xi32>
    %457 = vector.multi_reduction <minsi>, %456, %cst_167 [1] : vector<8x4xi32> to vector<8xi32>
    %458 = vector.shape_cast %457 : vector<8xi32> to vector<8x1xi32>
    %459 = arith.cmpi eq, %458, %7 : vector<8x1xi32>
    %460 = arith.extui %459 : vector<8x1xi1> to vector<8x1xi32>
    %461 = arith.sitofp %460 : vector<8x1xi32> to vector<8x1xf32>
    %cst_168 = arith.constant dense<0.000000e+00> : vector<1xf32>
    %462 = vector.multi_reduction <add>, %461, %cst_168 [0] : vector<8x1xf32> to vector<1xf32>
    %463 = vector.shape_cast %462 : vector<1xf32> to vector<1x1xf32>
    %cst_169 = arith.constant dense<0.000000e+00> : vector<32x4xf32>
    %464 = tpu.matmul %426, %451, %cst_169 {dimension_numbers = #tpu.dot_dimension_numbers<[0], [0], [1], [1], [0, 1, 1, 1], [], []>} : vector<8x32xf32>, vector<8x4xf32>, vector<32x4xf32> -> vector<32x4xf32>
    %cst_170 = arith.constant dense<0.000000e+00> : vector<4xf32>
    %465 = vector.multi_reduction <add>, %451, %cst_170 [0] : vector<8x4xf32> to vector<4xf32>
    %466 = vector.shape_cast %465 : vector<4xf32> to vector<1x4xf32>
    %cst_171 = arith.constant dense<0.000000e+00> : vector<8x32xf32>
    %467 = tpu.matmul %451, %418, %cst_171 {dimension_numbers = #tpu.dot_dimension_numbers<[1], [1], [0], [0], [0, 0, 1, 0], [], []>} : vector<8x4xf32>, vector<32x4xf32>, vector<8x32xf32> -> vector<8x32xf32>
    %cst_172 = arith.constant 0.000000e+00 : f32
    %468 = vector.broadcast %cst_172 : f32 to vector<8x32xf32>
    %469 = arith.cmpf ogt, %424, %468 : vector<8x32xf32>
    %cst_173 = arith.constant 0.000000e+00 : f32
    %470 = vector.broadcast %cst_173 : f32 to vector<8x32xf32>
    %471 = arith.select %469, %467, %470 : vector<8x32xi1>, vector<8x32xf32>
    %cst_174 = arith.constant dense<0.000000e+00> : vector<256x32xf32>
    %472 = tpu.matmul %5, %471, %cst_174 {dimension_numbers = #tpu.dot_dimension_numbers<[0], [0], [1], [1], [0, 1, 1, 1], [], []>} : vector<8x256xf32>, vector<8x32xf32>, vector<256x32xf32> -> vector<256x32xf32>
    %cst_175 = arith.constant dense<0.000000e+00> : vector<32xf32>
    %473 = vector.multi_reduction <add>, %471, %cst_175 [0] : vector<8x32xf32> to vector<32xf32>
    %474 = vector.shape_cast %473 : vector<32xf32> to vector<1x32xf32>
    %c0_176 = arith.constant 0 : index
    %c0_177 = arith.constant 0 : index
    %c0_178 = arith.constant 0 : index
    %475 = vector.load %arg11[%c0_176, %c0_177, %c0_178] : memref<1x256x32xf32, #tpu.memory_space<vmem>>, vector<1x256x32xf32>
    %476 = vector.shape_cast %475 : vector<1x256x32xf32> to vector<256x32xf32>
    %477 = vector.shape_cast %472 : vector<256x32xf32> to vector<1x256x32xf32>
    tpu.vector_store %arg11[%c0_176, %c0_177, %c0_178], %477 {strides = array<i32>} : memref<1x256x32xf32, #tpu.memory_space<vmem>>, vector<1x256x32xf32>,
    %c0_179 = arith.constant 0 : index
    %c0_180 = arith.constant 0 : index
    %c0_181 = arith.constant 0 : index
    %478 = vector.load %arg12[%c0_179, %c0_180, %c0_181] : memref<1x1x32xf32, #tpu.memory_space<vmem>>, vector<1x1x32xf32>
    %479 = vector.shape_cast %478 : vector<1x1x32xf32> to vector<1x32xf32>
    %480 = vector.shape_cast %474 : vector<1x32xf32> to vector<1x1x32xf32>
    tpu.vector_store %arg12[%c0_179, %c0_180, %c0_181], %480 {strides = array<i32>} : memref<1x1x32xf32, #tpu.memory_space<vmem>>, vector<1x1x32xf32>,
    %c0_182 = arith.constant 0 : index
    %c0_183 = arith.constant 0 : index
    %c0_184 = arith.constant 0 : index
    %481 = vector.load %arg13[%c0_182, %c0_183, %c0_184] : memref<1x32x4xf32, #tpu.memory_space<vmem>>, vector<1x32x4xf32>
    %482 = vector.shape_cast %481 : vector<1x32x4xf32> to vector<32x4xf32>
    %483 = vector.shape_cast %464 : vector<32x4xf32> to vector<1x32x4xf32>
    tpu.vector_store %arg13[%c0_182, %c0_183, %c0_184], %483 {strides = array<i32>} : memref<1x32x4xf32, #tpu.memory_space<vmem>>, vector<1x32x4xf32>,
    %c0_185 = arith.constant 0 : index
    %c0_186 = arith.constant 0 : index
    %c0_187 = arith.constant 0 : index
    %484 = vector.load %arg14[%c0_185, %c0_186, %c0_187] : memref<1x1x4xf32, #tpu.memory_space<vmem>>, vector<1x1x4xf32>
    %485 = vector.shape_cast %484 : vector<1x1x4xf32> to vector<1x4xf32>
    %486 = vector.shape_cast %466 : vector<1x4xf32> to vector<1x1x4xf32>
    tpu.vector_store %arg14[%c0_185, %c0_186, %c0_187], %486 {strides = array<i32>} : memref<1x1x4xf32, #tpu.memory_space<vmem>>, vector<1x1x4xf32>,
    %487 = tpu.iota {dimensions = array<i32: 2>} : vector<1x1x6xi32>
    %cst_188 = arith.constant 0.000000e+00 : f32
    %488 = vector.broadcast %cst_188 : f32 to vector<1x1x6xf32>
    %cst_189 = arith.constant 0.000000e+00 : f32
    %489 = vector.broadcast %cst_189 : f32 to vector<1x1x6xf32>
    %c0_i32 = arith.constant 0 : i32
    %490 = vector.broadcast %c0_i32 : i32 to vector<1x1x6xi32>
    %491 = arith.cmpi eq, %487, %490 : vector<1x1x6xi32>
    %492 = arith.extui %491 : vector<1x1x6xi1> to vector<1x1x6xi32>
    %493 = arith.sitofp %492 : vector<1x1x6xi32> to vector<1x1x6xf32>
    %494 = vector.shape_cast %46 : vector<1x1xf32> to vector<1x1x1xf32>
    %495 = vector.broadcast %494 : vector<1x1x1xf32> to vector<1x1x6xf32>
    %496 = arith.mulf %495, %493 : vector<1x1x6xf32>
    %497 = arith.addf %488, %496 : vector<1x1x6xf32>
    %498 = vector.shape_cast %58 : vector<1x1xf32> to vector<1x1x1xf32>
    %499 = vector.broadcast %498 : vector<1x1x1xf32> to vector<1x1x6xf32>
    %500 = arith.mulf %499, %493 : vector<1x1x6xf32>
    %501 = arith.addf %489, %500 : vector<1x1x6xf32>
    %c1_i32 = arith.constant 1 : i32
    %502 = vector.broadcast %c1_i32 : i32 to vector<1x1x6xi32>
    %503 = arith.cmpi eq, %487, %502 : vector<1x1x6xi32>
    %504 = arith.extui %503 : vector<1x1x6xi1> to vector<1x1x6xi32>
    %505 = arith.sitofp %504 : vector<1x1x6xi32> to vector<1x1x6xf32>
    %506 = vector.shape_cast %126 : vector<1x1xf32> to vector<1x1x1xf32>
    %507 = vector.broadcast %506 : vector<1x1x1xf32> to vector<1x1x6xf32>
    %508 = arith.mulf %507, %505 : vector<1x1x6xf32>
    %509 = arith.addf %497, %508 : vector<1x1x6xf32>
    %510 = vector.shape_cast %138 : vector<1x1xf32> to vector<1x1x1xf32>
    %511 = vector.broadcast %510 : vector<1x1x1xf32> to vector<1x1x6xf32>
    %512 = arith.mulf %511, %505 : vector<1x1x6xf32>
    %513 = arith.addf %501, %512 : vector<1x1x6xf32>
    %c2_i32 = arith.constant 2 : i32
    %514 = vector.broadcast %c2_i32 : i32 to vector<1x1x6xi32>
    %515 = arith.cmpi eq, %487, %514 : vector<1x1x6xi32>
    %516 = arith.extui %515 : vector<1x1x6xi1> to vector<1x1x6xi32>
    %517 = arith.sitofp %516 : vector<1x1x6xi32> to vector<1x1x6xf32>
    %518 = vector.shape_cast %206 : vector<1x1xf32> to vector<1x1x1xf32>
    %519 = vector.broadcast %518 : vector<1x1x1xf32> to vector<1x1x6xf32>
    %520 = arith.mulf %519, %517 : vector<1x1x6xf32>
    %521 = arith.addf %509, %520 : vector<1x1x6xf32>
    %522 = vector.shape_cast %218 : vector<1x1xf32> to vector<1x1x1xf32>
    %523 = vector.broadcast %522 : vector<1x1x1xf32> to vector<1x1x6xf32>
    %524 = arith.mulf %523, %517 : vector<1x1x6xf32>
    %525 = arith.addf %513, %524 : vector<1x1x6xf32>
    %c3_i32 = arith.constant 3 : i32
    %526 = vector.broadcast %c3_i32 : i32 to vector<1x1x6xi32>
    %527 = arith.cmpi eq, %487, %526 : vector<1x1x6xi32>
    %528 = arith.extui %527 : vector<1x1x6xi1> to vector<1x1x6xi32>
    %529 = arith.sitofp %528 : vector<1x1x6xi32> to vector<1x1x6xf32>
    %530 = vector.shape_cast %286 : vector<1x1xf32> to vector<1x1x1xf32>
    %531 = vector.broadcast %530 : vector<1x1x1xf32> to vector<1x1x6xf32>
    %532 = arith.mulf %531, %529 : vector<1x1x6xf32>
    %533 = arith.addf %521, %532 : vector<1x1x6xf32>
    %534 = vector.shape_cast %298 : vector<1x1xf32> to vector<1x1x1xf32>
    %535 = vector.broadcast %534 : vector<1x1x1xf32> to vector<1x1x6xf32>
    %536 = arith.mulf %535, %529 : vector<1x1x6xf32>
    %537 = arith.addf %525, %536 : vector<1x1x6xf32>
    %c4_i32_190 = arith.constant 4 : i32
    %538 = vector.broadcast %c4_i32_190 : i32 to vector<1x1x6xi32>
    %539 = arith.cmpi eq, %487, %538 : vector<1x1x6xi32>
    %540 = arith.extui %539 : vector<1x1x6xi1> to vector<1x1x6xi32>
    %541 = arith.sitofp %540 : vector<1x1x6xi32> to vector<1x1x6xf32>
    %542 = vector.shape_cast %366 : vector<1x1xf32> to vector<1x1x1xf32>
    %543 = vector.broadcast %542 : vector<1x1x1xf32> to vector<1x1x6xf32>
    %544 = arith.mulf %543, %541 : vector<1x1x6xf32>
    %545 = arith.addf %533, %544 : vector<1x1x6xf32>
    %546 = vector.shape_cast %378 : vector<1x1xf32> to vector<1x1x1xf32>
    %547 = vector.broadcast %546 : vector<1x1x1xf32> to vector<1x1x6xf32>
    %548 = arith.mulf %547, %541 : vector<1x1x6xf32>
    %549 = arith.addf %537, %548 : vector<1x1x6xf32>
    %c5_i32 = arith.constant 5 : i32
    %550 = vector.broadcast %c5_i32 : i32 to vector<1x1x6xi32>
    %551 = arith.cmpi eq, %487, %550 : vector<1x1x6xi32>
    %552 = arith.extui %551 : vector<1x1x6xi1> to vector<1x1x6xi32>
    %553 = arith.sitofp %552 : vector<1x1x6xi32> to vector<1x1x6xf32>
    %554 = vector.shape_cast %448 : vector<1x1xf32> to vector<1x1x1xf32>
    %555 = vector.broadcast %554 : vector<1x1x1xf32> to vector<1x1x6xf32>
    %556 = arith.mulf %555, %553 : vector<1x1x6xf32>
    %557 = arith.addf %545, %556 : vector<1x1x6xf32>
    %558 = vector.shape_cast %463 : vector<1x1xf32> to vector<1x1x1xf32>
    %559 = vector.broadcast %558 : vector<1x1x1xf32> to vector<1x1x6xf32>
    %560 = arith.mulf %559, %553 : vector<1x1x6xf32>
    %561 = arith.addf %549, %560 : vector<1x1x6xf32>
    %c0_191 = arith.constant 0 : index
    %c0_192 = arith.constant 0 : index
    %c0_193 = arith.constant 0 : index
    %562 = vector.load %arg9[%c0_191, %c0_192, %c0_193] : memref<1x1x6xf32, #tpu.memory_space<vmem>>, vector<1x1x6xf32>
    tpu.vector_store %arg9[%c0_191, %c0_192, %c0_193], %557 {strides = array<i32>} : memref<1x1x6xf32, #tpu.memory_space<vmem>>, vector<1x1x6xf32>,
    %c0_194 = arith.constant 0 : index
    %c0_195 = arith.constant 0 : index
    %c0_196 = arith.constant 0 : index
    %563 = vector.load %arg10[%c0_194, %c0_195, %c0_196] : memref<1x1x6xf32, #tpu.memory_space<vmem>>, vector<1x1x6xf32>
    tpu.vector_store %arg10[%c0_194, %c0_195, %c0_196], %561 {strides = array<i32>} : memref<1x1x6xf32, #tpu.memory_space<vmem>>, vector<1x1x6xf32>,
    return
  }
  func.func @transform_0(%arg0: i32) -> (i32, i32, i32) {
    %c0_i32 = arith.constant 0 : i32
    %c0_i32_0 = arith.constant 0 : i32
    %c0_i32_1 = arith.constant 0 : i32
    return %arg0, %c0_i32, %c0_i32_0 : i32, i32, i32
  }
  func.func @transform_1(%arg0: i32) -> (i32, i32, i32) {
    %c0_i32 = arith.constant 0 : i32
    %c0_i32_0 = arith.constant 0 : i32
    %c0_i32_1 = arith.constant 0 : i32
    return %arg0, %c0_i32, %c0_i32_0 : i32, i32, i32
  }
  func.func @transform_2(%arg0: i32) -> (i32, i32, i32) {
    %c0_i32 = arith.constant 0 : i32
    %c0_i32_0 = arith.constant 0 : i32
    %c0_i32_1 = arith.constant 0 : i32
    return %arg0, %c0_i32, %c0_i32_0 : i32, i32, i32
  }
  func.func @transform_3(%arg0: i32) -> (i32, i32, i32) {
    %c0_i32 = arith.constant 0 : i32
    %c0_i32_0 = arith.constant 0 : i32
    %c0_i32_1 = arith.constant 0 : i32
    return %arg0, %c0_i32, %c0_i32_0 : i32, i32, i32
  }
  func.func @transform_4(%arg0: i32) -> (i32, i32) {
    %c0_i32 = arith.constant 0 : i32
    %c0_i32_0 = arith.constant 0 : i32
    %c0_i32_1 = arith.constant 0 : i32
    return %c0_i32, %c0_i32_0 : i32, i32
  }
  func.func @transform_5(%arg0: i32) -> (i32, i32) {
    %c0_i32 = arith.constant 0 : i32
    %c0_i32_0 = arith.constant 0 : i32
    %c0_i32_1 = arith.constant 0 : i32
    return %c0_i32, %c0_i32_0 : i32, i32
  }
  func.func @transform_6(%arg0: i32) -> (i32, i32) {
    %c0_i32 = arith.constant 0 : i32
    %c0_i32_0 = arith.constant 0 : i32
    %c0_i32_1 = arith.constant 0 : i32
    return %c0_i32, %c0_i32_0 : i32, i32
  }
  func.func @transform_7(%arg0: i32) -> (i32, i32) {
    %c0_i32 = arith.constant 0 : i32
    %c0_i32_0 = arith.constant 0 : i32
    %c0_i32_1 = arith.constant 0 : i32
    return %c0_i32, %c0_i32_0 : i32, i32
  }
  func.func @transform_8(%arg0: i32) -> (i32, i32, i32) {
    %c0_i32 = arith.constant 0 : i32
    %c0_i32_0 = arith.constant 0 : i32
    %c0_i32_1 = arith.constant 0 : i32
    return %arg0, %c0_i32, %c0_i32_0 : i32, i32, i32
  }
  func.func @transform_9(%arg0: i32) -> (i32, i32, i32) {
    %c0_i32 = arith.constant 0 : i32
    %c0_i32_0 = arith.constant 0 : i32
    %c0_i32_1 = arith.constant 0 : i32
    return %arg0, %c0_i32, %c0_i32_0 : i32, i32, i32
  }
  func.func @transform_10(%arg0: i32) -> (i32, i32, i32) {
    %c0_i32 = arith.constant 0 : i32
    %c0_i32_0 = arith.constant 0 : i32
    %c0_i32_1 = arith.constant 0 : i32
    return %arg0, %c0_i32, %c0_i32_0 : i32, i32, i32
  }
  func.func @transform_11(%arg0: i32) -> (i32, i32, i32) {
    %c0_i32 = arith.constant 0 : i32
    %c0_i32_0 = arith.constant 0 : i32
    %c0_i32_1 = arith.constant 0 : i32
    return %arg0, %c0_i32, %c0_i32_0 : i32, i32, i32
  }
  func.func @transform_12(%arg0: i32) -> (i32, i32, i32) {
    %c0_i32 = arith.constant 0 : i32
    %c0_i32_0 = arith.constant 0 : i32
    %c0_i32_1 = arith.constant 0 : i32
    return %arg0, %c0_i32, %c0_i32_0 : i32, i32, i32
  }
  func.func @transform_13(%arg0: i32) -> (i32, i32, i32) {
    %c0_i32 = arith.constant 0 : i32
    %c0_i32_0 = arith.constant 0 : i32
    %c0_i32_1 = arith.constant 0 : i32
    return %arg0, %c0_i32, %c0_i32_0 : i32, i32, i32
  }
}

</mosaic_0001>

<llo_original>
// kernel: meta_learner_step.1
$region0: #{meta_learner_step.1}
  #allocation0 [shape = 'u32[]', space=smem, size = 0x4, offset = 0x4, fixed_abs, tag = 'smem constant byte address 0x4 - core index']
  #allocation1 [shape = 'u32[144,128]{1,0:T(1,128)}', space=vmem, size = 0x12000, scoped, tag = 'internal scratch']
  %s0 = inlined_call_operand.vmem [shape: f32[2,4,256], index: 0, kind: input, shape index: {}]
  %s1 = inlined_call_operand.vmem [shape: s32[2,4,1], index: 1, kind: input, shape index: {}]
  %s2 = inlined_call_operand.vmem [shape: f32[2,8,256], index: 2, kind: input, shape index: {}]
  %s3 = inlined_call_operand.vmem [shape: s32[2,8,1], index: 3, kind: input, shape index: {}]
  %s4 = inlined_call_operand.vmem [shape: f32[256,32], index: 4, kind: input, shape index: {}]
  %s5 = inlined_call_operand.vmem [shape: f32[1,32], index: 5, kind: input, shape index: {}]
  %s6 = inlined_call_operand.vmem [shape: f32[32,4], index: 6, kind: input, shape index: {}]
  %s7 = inlined_call_operand.vmem [shape: f32[1,4], index: 7, kind: input, shape index: {}]
  %s8 = inlined_call_operand.vmem [shape: f32[2,1,6], index: 8, kind: output, shape index: {0}]
  %s9 = inlined_call_operand.vmem [shape: f32[2,1,6], index: 9, kind: output, shape index: {1}]
  %s10 = inlined_call_operand.vmem [shape: f32[2,256,32], index: 10, kind: output, shape index: {2}]
  %s11 = inlined_call_operand.vmem [shape: f32[2,1,32], index: 11, kind: output, shape index: {3}]
  %s12 = inlined_call_operand.vmem [shape: f32[2,32,4], index: 12, kind: output, shape index: {4}]
  %s13 = inlined_call_operand.vmem [shape: f32[2,1,4], index: 13, kind: output, shape index: {5}]
  %14 = xla_tuple %s8, %s9, %s10, %s11, %s12, %s13
  %s15 = sld [smem:[#allocation0]]
  $region105: #{meta_learner_step.1} parent=0
    _
  %s17 = ssub.s32 1, %s15
  %s18 = scalar_select 0, %s17, %s15
  loop: start=0, step=1, limit=4
  $region2: #{meta_learner_step.1} parent=0 // loop_pre_header
    _
  $region3: #{meta_learner_step.1} parent=0 // loop_header
    %s20 = sphi 0, %s24
    %p21 = scmp.ge.s32.totalorder %s20, 4
    %s30 = sphi 0, %s32
    %s33 = sphi 0, %s30
    %s34 = sphi 0, %s33
    %s50 = sphi 0, %s34
    %s56 = sphi 0, %s58
    %s59 = sphi 0, %s56
    %s60 = sphi 0, %s59
    %s76 = sphi 0, %s60
    %s82 = sphi 0, %s84
    %s85 = sphi 0, %s82
    %s86 = sphi 0, %s85
    %s102 = sphi 0, %s86
    %s108 = sphi 0, %s110
    %s111 = sphi 0, %s108
    %s112 = sphi 0, %s111
    %s128 = sphi 0, %s112
    %s132 = sphi 0, %s132
    %s134 = sphi 0, %s132
    %s135 = sphi 0, %s134
    %s149 = sphi 0, %s135
    %s153 = sphi 0, %s153
    %s155 = sphi 0, %s153
    %s156 = sphi 0, %s155
    %s170 = sphi 0, %s156
    %s174 = sphi 0, %s174
    %s176 = sphi 0, %s174
    %s177 = sphi 0, %s176
    %s191 = sphi 0, %s177
    %s195 = sphi 0, %s195
    %s197 = sphi 0, %s195
    %s198 = sphi 0, %s197
    %s212 = sphi 0, %s198
    %s218 = sphi 0, %s220
    %s221 = sphi 0, %s218
    %s222 = sphi 0, %s221
    %s238 = sphi 0, %s222
    %s244 = sphi 0, %s246
    %s247 = sphi 0, %s244
    %s248 = sphi 0, %s247
    %s264 = sphi 0, %s248
    %s270 = sphi 0, %s272
    %s273 = sphi 0, %s270
    %s274 = sphi 0, %s273
    %s290 = sphi 0, %s274
    %s296 = sphi 0, %s298
    %s299 = sphi 0, %s296
    %s300 = sphi 0, %s299
    %s316 = sphi 0, %s300
    %s322 = sphi 0, %s324
    %s325 = sphi 0, %s322
    %s326 = sphi 0, %s325
    %s342 = sphi 0, %s326
    %s348 = sphi 0, %s350
    %s351 = sphi 0, %s348
    %s352 = sphi 0, %s351
    %s368 = sphi 0, %s352
  $region4: #{meta_learner_step.1} parent=0 // loop_header_branch
    %23 = sbr.rel (%p21) target = $region8
  $region5: #{meta_learner_step.1} parent=0 // loop_body
    %s25 = ssub.s32 %s20, 1
    %s26 = ssub.s32 %s20, 2
    %s27 = sadd.s32 %s20, 1
    %s28 = ssub.s32 %s20, %s27
    %p29 = scmp.eq.s32.totalorder %s28, 0
    %s31 = sadd.s32 %s30, 1
    %s32 = scalar_select %p29, %s30, %s31
    %p35 = pneg %p29
    %p36 = scmp.eq.s32.totalorder %s20, 1
    %p37 = por %p35, %p36
    %p38 = scmp.ne.s32.totalorder %s30, %s33
    %p39 = scmp.eq.s32.totalorder %s20, 0
    %p40 = por %p38, %p39
    %p41 = scmp.ne.s32.totalorder %s30, %s33
    %p42 = scmp.eq.s32.totalorder %s25, 1
    %p43 = por %p41, %p42
    %p44 = scmp.ne.s32.totalorder %s33, %s34
    %p45 = scmp.eq.s32.totalorder %s25, 0
    %p46 = por %p44, %p45
    %p47 = scmp.ne.s32.totalorder %s33, %s34
    %p48 = scmp.eq.s32.totalorder %s26, 1
    %p49 = por %p47, %p48
    %p51 = scmp.ne.s32.totalorder %s34, %s50
    %p52 = scmp.eq.s32.totalorder %s26, 0
    %p53 = por %p51, %p52
    %s54 = ssub.s32 %s20, %s27
    %p55 = scmp.eq.s32.totalorder %s54, 0
    %s57 = sadd.s32 %s56, 1
    %s58 = scalar_select %p55, %s56, %s57
    %p61 = pneg %p55
    %p62 = scmp.eq.s32.totalorder %s20, 1
    %p63 = por %p61, %p62
    %p64 = scmp.ne.s32.totalorder %s56, %s59
    %p65 = scmp.eq.s32.totalorder %s20, 0
    %p66 = por %p64, %p65
    %p67 = scmp.ne.s32.totalorder %s56, %s59
    %p68 = scmp.eq.s32.totalorder %s25, 1
    %p69 = por %p67, %p68
    %p70 = scmp.ne.s32.totalorder %s59, %s60
    %p71 = scmp.eq.s32.totalorder %s25, 0
    %p72 = por %p70, %p71
    %p73 = scmp.ne.s32.totalorder %s59, %s60
    %p74 = scmp.eq.s32.totalorder %s26, 1
    %p75 = por %p73, %p74
    %p77 = scmp.ne.s32.totalorder %s60, %s76
    %p78 = scmp.eq.s32.totalorder %s26, 0
    %p79 = por %p77, %p78
    %s80 = ssub.s32 %s20, %s27
    %p81 = scmp.eq.s32.totalorder %s80, 0
    %s83 = sadd.s32 %s82, 1
    %s84 = scalar_select %p81, %s82, %s83
    %p87 = pneg %p81
    %p88 = scmp.eq.s32.totalorder %s20, 1
    %p89 = por %p87, %p88
    %p90 = scmp.ne.s32.totalorder %s82, %s85
    %p91 = scmp.eq.s32.totalorder %s20, 0
    %p92 = por %p90, %p91
    %p93 = scmp.ne.s32.totalorder %s82, %s85
    %p94 = scmp.eq.s32.totalorder %s25, 1
    %p95 = por %p93, %p94
    %p96 = scmp.ne.s32.totalorder %s85, %s86
    %p97 = scmp.eq.s32.totalorder %s25, 0
    %p98 = por %p96, %p97
    %p99 = scmp.ne.s32.totalorder %s85, %s86
    %p100 = scmp.eq.s32.totalorder %s26, 1
    %p101 = por %p99, %p100
    %p103 = scmp.ne.s32.totalorder %s86, %s102
    %p104 = scmp.eq.s32.totalorder %s26, 0
    %p105 = por %p103, %p104
    %s106 = ssub.s32 %s20, %s27
    %p107 = scmp.eq.s32.totalorder %s106, 0
    %s109 = sadd.s32 %s108, 1
    %s110 = scalar_select %p107, %s108, %s109
    %p113 = pneg %p107
    %p114 = scmp.eq.s32.totalorder %s20, 1
    %p115 = por %p113, %p114
    %p116 = scmp.ne.s32.totalorder %s108, %s111
    %p117 = scmp.eq.s32.totalorder %s20, 0
    %p118 = por %p116, %p117
    %p119 = scmp.ne.s32.totalorder %s108, %s111
    %p120 = scmp.eq.s32.totalorder %s25, 1
    %p121 = por %p119, %p120
    %p122 = scmp.ne.s32.totalorder %s111, %s112
    %p123 = scmp.eq.s32.totalorder %s25, 0
    %p124 = por %p122, %p123
    %p125 = scmp.ne.s32.totalorder %s111, %s112
    %p126 = scmp.eq.s32.totalorder %s26, 1
    %p127 = por %p125, %p126
    %p129 = scmp.ne.s32.totalorder %s112, %s128
    %p130 = scmp.eq.s32.totalorder %s26, 0
    %p131 = por %p129, %p130
    %s133 = sadd.s32 %s132, 1
    %p136 = scmp.eq.s32.totalorder %s20, 1
    %p137 = scmp.ne.s32.totalorder %s132, %s134
    %p138 = scmp.eq.s32.totalorder %s20, 0
    %p139 = por %p137, %p138
    %p140 = scmp.ne.s32.totalorder %s132, %s134
    %p141 = scmp.eq.s32.totalorder %s25, 1
    %p142 = por %p140, %p141
    %p143 = scmp.ne.s32.totalorder %s134, %s135
    %p144 = scmp.eq.s32.totalorder %s25, 0
    %p145 = por %p143, %p144
    %p146 = scmp.ne.s32.totalorder %s134, %s135
    %p147 = scmp.eq.s32.totalorder %s26, 1
    %p148 = por %p146, %p147
    %p150 = scmp.ne.s32.totalorder %s135, %s149
    %p151 = scmp.eq.s32.totalorder %s26, 0
    %p152 = por %p150, %p151
    %s154 = sadd.s32 %s153, 1
    %p157 = scmp.eq.s32.totalorder %s20, 1
    %p158 = scmp.ne.s32.totalorder %s153, %s155
    %p159 = scmp.eq.s32.totalorder %s20, 0
    %p160 = por %p158, %p159
    %p161 = scmp.ne.s32.totalorder %s153, %s155
    %p162 = scmp.eq.s32.totalorder %s25, 1
    %p163 = por %p161, %p162
    %p164 = scmp.ne.s32.totalorder %s155, %s156
    %p165 = scmp.eq.s32.totalorder %s25, 0
    %p166 = por %p164, %p165
    %p167 = scmp.ne.s32.totalorder %s155, %s156
    %p168 = scmp.eq.s32.totalorder %s26, 1
    %p169 = por %p167, %p168
    %p171 = scmp.ne.s32.totalorder %s156, %s170
    %p172 = scmp.eq.s32.totalorder %s26, 0
    %p173 = por %p171, %p172
    %s175 = sadd.s32 %s174, 1
    %p178 = scmp.eq.s32.totalorder %s20, 1
    %p179 = scmp.ne.s32.totalorder %s174, %s176
    %p180 = scmp.eq.s32.totalorder %s20, 0
    %p181 = por %p179, %p180
    %p182 = scmp.ne.s32.totalorder %s174, %s176
    %p183 = scmp.eq.s32.totalorder %s25, 1
    %p184 = por %p182, %p183
    %p185 = scmp.ne.s32.totalorder %s176, %s177
    %p186 = scmp.eq.s32.totalorder %s25, 0
    %p187 = por %p185, %p186
    %p188 = scmp.ne.s32.totalorder %s176, %s177
    %p189 = scmp.eq.s32.totalorder %s26, 1
    %p190 = por %p188, %p189
    %p192 = scmp.ne.s32.totalorder %s177, %s191
    %p193 = scmp.eq.s32.totalorder %s26, 0
    %p194 = por %p192, %p193
    %s196 = sadd.s32 %s195, 1
    %p199 = scmp.eq.s32.totalorder %s20, 1
    %p200 = scmp.ne.s32.totalorder %s195, %s197
    %p201 = scmp.eq.s32.totalorder %s20, 0
    %p202 = por %p200, %p201
    %p203 = scmp.ne.s32.totalorder %s195, %s197
    %p204 = scmp.eq.s32.totalorder %s25, 1
    %p205 = por %p203, %p204
    %p206 = scmp.ne.s32.totalorder %s197, %s198
    %p207 = scmp.eq.s32.totalorder %s25, 0
    %p208 = por %p206, %p207
    %p209 = scmp.ne.s32.totalorder %s197, %s198
    %p210 = scmp.eq.s32.totalorder %s26, 1
    %p211 = por %p209, %p210
    %p213 = scmp.ne.s32.totalorder %s198, %s212
    %p214 = scmp.eq.s32.totalorder %s26, 0
    %p215 = por %p213, %p214
    %s216 = ssub.s32 %s20, %s27
    %p217 = scmp.eq.s32.totalorder %s216, 0
    %s219 = sadd.s32 %s218, 1
    %s220 = scalar_select %p217, %s218, %s219
    %p223 = pneg %p217
    %p224 = scmp.eq.s32.totalorder %s20, 1
    %p225 = por %p223, %p224
    %p226 = scmp.ne.s32.totalorder %s218, %s221
    %p227 = scmp.eq.s32.totalorder %s20, 0
    %p228 = por %p226, %p227
    %p229 = scmp.ne.s32.totalorder %s218, %s221
    %p230 = scmp.eq.s32.totalorder %s25, 1
    %p231 = por %p229, %p230
    %p232 = scmp.ne.s32.totalorder %s221, %s222
    %p233 = scmp.eq.s32.totalorder %s25, 0
    %p234 = por %p232, %p233
    %p235 = scmp.ne.s32.totalorder %s221, %s222
    %p236 = scmp.eq.s32.totalorder %s26, 1
    %p237 = por %p235, %p236
    %p239 = scmp.ne.s32.totalorder %s222, %s238
    %p240 = scmp.eq.s32.totalorder %s26, 0
    %p241 = por %p239, %p240
    %s242 = ssub.s32 %s20, %s27
    %p243 = scmp.eq.s32.totalorder %s242, 0
    %s245 = sadd.s32 %s244, 1
    %s246 = scalar_select %p243, %s244, %s245
    %p249 = pneg %p243
    %p250 = scmp.eq.s32.totalorder %s20, 1
    %p251 = por %p249, %p250
    %p252 = scmp.ne.s32.totalorder %s244, %s247
    %p253 = scmp.eq.s32.totalorder %s20, 0
    %p254 = por %p252, %p253
    %p255 = scmp.ne.s32.totalorder %s244, %s247
    %p256 = scmp.eq.s32.totalorder %s25, 1
    %p257 = por %p255, %p256
    %p258 = scmp.ne.s32.totalorder %s247, %s248
    %p259 = scmp.eq.s32.totalorder %s25, 0
    %p260 = por %p258, %p259
    %p261 = scmp.ne.s32.totalorder %s247, %s248
    %p262 = scmp.eq.s32.totalorder %s26, 1
    %p263 = por %p261, %p262
    %p265 = scmp.ne.s32.totalorder %s248, %s264
    %p266 = scmp.eq.s32.totalorder %s26, 0
    %p267 = por %p265, %p266
    %s268 = ssub.s32 %s20, %s27
    %p269 = scmp.eq.s32.totalorder %s268, 0
    %s271 = sadd.s32 %s270, 1
    %s272 = scalar_select %p269, %s270, %s271
    %p275 = pneg %p269
    %p276 = scmp.eq.s32.totalorder %s20, 1
    %p277 = por %p275, %p276
    %p278 = scmp.ne.s32.totalorder %s270, %s273
    %p279 = scmp.eq.s32.totalorder %s20, 0
    %p280 = por %p278, %p279
    %p281 = scmp.ne.s32.totalorder %s270, %s273
    %p282 = scmp.eq.s32.totalorder %s25, 1
    %p283 = por %p281, %p282
    %p284 = scmp.ne.s32.totalorder %s273, %s274
    %p285 = scmp.eq.s32.totalorder %s25, 0
    %p286 = por %p284, %p285
    %p287 = scmp.ne.s32.totalorder %s273, %s274
    %p288 = scmp.eq.s32.totalorder %s26, 1
    %p289 = por %p287, %p288
    %p291 = scmp.ne.s32.totalorder %s274, %s290
    %p292 = scmp.eq.s32.totalorder %s26, 0
    %p293 = por %p291, %p292
    %s294 = ssub.s32 %s20, %s27
    %p295 = scmp.eq.s32.totalorder %s294, 0
    %s297 = sadd.s32 %s296, 1
    %s298 = scalar_select %p295, %s296, %s297
    %p301 = pneg %p295
    %p302 = scmp.eq.s32.totalorder %s20, 1
    %p303 = por %p301, %p302
    %p304 = scmp.ne.s32.totalorder %s296, %s299
    %p305 = scmp.eq.s32.totalorder %s20, 0
    %p306 = por %p304, %p305
    %p307 = scmp.ne.s32.totalorder %s296, %s299
    %p308 = scmp.eq.s32.totalorder %s25, 1
    %p309 = por %p307, %p308
    %p310 = scmp.ne.s32.totalorder %s299, %s300
    %p311 = scmp.eq.s32.totalorder %s25, 0
    %p312 = por %p310, %p311
    %p313 = scmp.ne.s32.totalorder %s299, %s300
    %p314 = scmp.eq.s32.totalorder %s26, 1
    %p315 = por %p313, %p314
    %p317 = scmp.ne.s32.totalorder %s300, %s316
    %p318 = scmp.eq.s32.totalorder %s26, 0
    %p319 = por %p317, %p318
    %s320 = ssub.s32 %s20, %s27
    %p321 = scmp.eq.s32.totalorder %s320, 0
    %s323 = sadd.s32 %s322, 1
    %s324 = scalar_select %p321, %s322, %s323
    %p327 = pneg %p321
    %p328 = scmp.eq.s32.totalorder %s20, 1
    %p329 = por %p327, %p328
    %p330 = scmp.ne.s32.totalorder %s322, %s325
    %p331 = scmp.eq.s32.totalorder %s20, 0
    %p332 = por %p330, %p331
    %p333 = scmp.ne.s32.totalorder %s322, %s325
    %p334 = scmp.eq.s32.totalorder %s25, 1
    %p335 = por %p333, %p334
    %p336 = scmp.ne.s32.totalorder %s325, %s326
    %p337 = scmp.eq.s32.totalorder %s25, 0
    %p338 = por %p336, %p337
    %p339 = scmp.ne.s32.totalorder %s325, %s326
    %p340 = scmp.eq.s32.totalorder %s26, 1
    %p341 = por %p339, %p340
    %p343 = scmp.ne.s32.totalorder %s326, %s342
    %p344 = scmp.eq.s32.totalorder %s26, 0
    %p345 = por %p343, %p344
    %s346 = ssub.s32 %s20, %s27
    %p347 = scmp.eq.s32.totalorder %s346, 0
    %s349 = sadd.s32 %s348, 1
    %s350 = scalar_select %p347, %s348, %s349
    %p353 = pneg %p347
    %p354 = scmp.eq.s32.totalorder %s20, 1
    %p355 = por %p353, %p354
    %p356 = scmp.ne.s32.totalorder %s348, %s351
    %p357 = scmp.eq.s32.totalorder %s20, 0
    %p358 = por %p356, %p357
    %p359 = scmp.ne.s32.totalorder %s348, %s351
    %p360 = scmp.eq.s32.totalorder %s25, 1
    %p361 = por %p359, %p360
    %p362 = scmp.ne.s32.totalorder %s351, %s352
    %p363 = scmp.eq.s32.totalorder %s25, 0
    %p364 = por %p362, %p363
    %p365 = scmp.ne.s32.totalorder %s351, %s352
    %p366 = scmp.eq.s32.totalorder %s26, 1
    %p367 = por %p365, %p366
    %p369 = scmp.ne.s32.totalorder %s352, %s368
    %p370 = scmp.eq.s32.totalorder %s26, 0
    %p371 = por %p369, %p370
    %p372 = scmp.le.s32.totalorder 1, %s20
    %p373 = scmp.lt.s32.totalorder %s20, 3
    %p374 = pnand %p372, %p373
    %p375 = pneg %p374
    // Predicated region
    $region9: #{meta_learner_step.1} parent=5 // pred_check
      _
    $region10: #{meta_learner_step.1} parent=5 // pred_check_branch
      %377 = sbr.rel (%p374) target = $region12
    $region11: #{meta_learner_step.1} parent=5 // pred_region
      %s378 = ssub.s32 %s20, 1
      // Predicated region
      $region13: #{meta_learner_step.1} parent=11 // pred_check
        %p379 = pneg %p145
      $region14: #{meta_learner_step.1} parent=11 // pred_check_branch
        %381 = sbr.rel (%p379) target = $region16
      $region15: #{meta_learner_step.1} parent=11 // pred_region
        _
      $region16: #{meta_learner_step.1} parent=11 // pred_fallthru
        _
      // Predicated region
      $region17: #{meta_learner_step.1} parent=11 // pred_check
        %p382 = pneg %p166
      $region18: #{meta_learner_step.1} parent=11 // pred_check_branch
        %384 = sbr.rel (%p382) target = $region20
      $region19: #{meta_learner_step.1} parent=11 // pred_region
        _
      $region20: #{meta_learner_step.1} parent=11 // pred_fallthru
        _
      // Predicated region
      $region21: #{meta_learner_step.1} parent=11 // pred_check
        %p385 = pneg %p187
      $region22: #{meta_learner_step.1} parent=11 // pred_check_branch
        %387 = sbr.rel (%p385) target = $region24
      $region23: #{meta_learner_step.1} parent=11 // pred_region
        _
      $region24: #{meta_learner_step.1} parent=11 // pred_fallthru
        _
      // Predicated region
      $region25: #{meta_learner_step.1} parent=11 // pred_check
        %p388 = pneg %p208
      $region26: #{meta_learner_step.1} parent=11 // pred_check_branch
        %390 = sbr.rel (%p388) target = $region28
      $region27: #{meta_learner_step.1} parent=11 // pred_region
        _
      $region28: #{meta_learner_step.1} parent=11 // pred_fallthru
        _
    $region12: #{meta_learner_step.1} parent=5 // pred_fallthru
      _
    %p391 = scmp.lt.s32.totalorder %s20, 2
    // Predicated region
    $region29: #{meta_learner_step.1} parent=5 // pred_check
      %p392 = pneg %p391
    $region30: #{meta_learner_step.1} parent=5 // pred_check_branch
      %394 = sbr.rel (%p392) target = $region32
    $region31: #{meta_learner_step.1} parent=5 // pred_region
      // Predicated region
      $region33: #{meta_learner_step.1} parent=31 // pred_check
        %p395 = pneg %p40
      $region34: #{meta_learner_step.1} parent=31 // pred_check_branch
        %397 = sbr.rel (%p395) target = $region36
      $region35: #{meta_learner_step.1} parent=31 // pred_region
        %p398 = scmp.lt.s32.totalorder %s20, 1
        %s399 = scalar_select %p398, %s20, 1
        %s400 = smul.addr %s399, 2
        %s401 = smul.addr %s400, 4
        %s402 = scalar_lea.vmem %s0, %s401
      $region36: #{meta_learner_step.1} parent=31 // pred_fallthru
        _
      // Predicated region
      $region37: #{meta_learner_step.1} parent=31 // pred_check
        %p403 = pneg %p66
      $region38: #{meta_learner_step.1} parent=31 // pred_check_branch
        %405 = sbr.rel (%p403) target = $region40
      $region39: #{meta_learner_step.1} parent=31 // pred_region
        %p406 = scmp.lt.s32.totalorder %s20, 1
        %s407 = scalar_select %p406, %s20, 1
        %s408 = smul.addr %s407, 4
        %s409 = scalar_lea.vmem %s1, %s408
      $region40: #{meta_learner_step.1} parent=31 // pred_fallthru
        _
      // Predicated region
      $region41: #{meta_learner_step.1} parent=31 // pred_check
        %p410 = pneg %p92
      $region42: #{meta_learner_step.1} parent=31 // pred_check_branch
        %412 = sbr.rel (%p410) target = $region44
      $region43: #{meta_learner_step.1} parent=31 // pred_region
        %p413 = scmp.lt.s32.totalorder %s20, 1
        %s414 = scalar_select %p413, %s20, 1
        %s415 = smul.addr %s414, 2
        %s416 = smul.addr %s415, 8
        %s417 = scalar_lea.vmem %s2, %s416
      $region44: #{meta_learner_step.1} parent=31 // pred_fallthru
        _
      // Predicated region
      $region45: #{meta_learner_step.1} parent=31 // pred_check
        %p418 = pneg %p118
      $region46: #{meta_learner_step.1} parent=31 // pred_check_branch
        %420 = sbr.rel (%p418) target = $region48
      $region47: #{meta_learner_step.1} parent=31 // pred_region
        %p421 = scmp.lt.s32.totalorder %s20, 1
        %s422 = scalar_select %p421, %s20, 1
        %s423 = smul.addr %s422, 8
        %s424 = scalar_lea.vmem %s3, %s423
      $region48: #{meta_learner_step.1} parent=31 // pred_fallthru
        _
    $region32: #{meta_learner_step.1} parent=5 // pred_fallthru
      _
    %p425 = scmp.le.s32.totalorder 1, %s20
    %p426 = scmp.lt.s32.totalorder %s20, 3
    %p427 = pnand %p425, %p426
    %p428 = pneg %p427
    // Predicated region
    $region49: #{meta_learner_step.1} parent=5 // pred_check
      _
    $region50: #{meta_learner_step.1} parent=5 // pred_check_branch
      %430 = sbr.rel (%p427) target = $region52
    $region51: #{meta_learner_step.1} parent=5 // pred_region
      %s431 = ssub.s32 %s20, 1
      %p432 = scmp.lt.s32.totalorder %s25, 1
      %s433 = scalar_select %p432, %s25, 1
      %s434 = smul.addr %s433, 2
      %s435 = smul.addr %s434, 4
      %s436 = scalar_lea.vmem %s0, %s435
      %p437 = pneg %p46
      %p438 = pneg %p43
      %p439 = scmp.lt.s32.totalorder %s25, 1
      %s440 = scalar_select %p439, %s25, 1
      %s441 = smul.addr %s440, 4
      %s442 = scalar_lea.vmem %s1, %s441
      %p443 = pneg %p72
      %p444 = pneg %p69
      %p445 = scmp.lt.s32.totalorder %s25, 1
      %s446 = scalar_select %p445, %s25, 1
      %s447 = smul.addr %s446, 2
      %s448 = smul.addr %s447, 8
      %s449 = scalar_lea.vmem %s2, %s448
      %p450 = pneg %p98
      %p451 = pneg %p95
      %p452 = scmp.lt.s32.totalorder %s25, 1
      %s453 = scalar_select %p452, %s25, 1
      %s454 = smul.addr %s453, 8
      %s455 = scalar_lea.vmem %s3, %s454
      %p456 = pneg %p124
      %p457 = pneg %p121
      %p458 = pneg %p145
      %p459 = pneg %p142
      %p460 = pneg %p166
      %p461 = pneg %p163
      %p462 = pneg %p187
      %p463 = pneg %p184
      %p464 = pneg %p208
      %p465 = pneg %p205
      %p466 = pneg %p234
      %p467 = pneg %p231
      %p468 = scmp.lt.s32.totalorder %s25, 1
      %s469 = scalar_select %p468, %s25, 1
      %s470 = scalar_lea.vmem %s8, %s469
      %p471 = pneg %p260
      %p472 = pneg %p257
      %p473 = scmp.lt.s32.totalorder %s25, 1
      %s474 = scalar_select %p473, %s25, 1
      %s475 = scalar_lea.vmem %s9, %s474
      %p476 = pneg %p286
      %p477 = pneg %p283
      %p478 = scmp.lt.s32.totalorder %s25, 1
      %s479 = scalar_select %p478, %s25, 1
      %s480 = smul.addr %s479, 32
      %s481 = smul.addr %s480, 8
      %s482 = scalar_lea.vmem %s10, %s481
      %p483 = pneg %p312
      %p484 = pneg %p309
      %p485 = scmp.lt.s32.totalorder %s25, 1
      %s486 = scalar_select %p485, %s25, 1
      %s487 = scalar_lea.vmem %s11, %s486
      %p488 = pneg %p338
      %p489 = pneg %p335
      %p490 = scmp.lt.s32.totalorder %s25, 1
      %s491 = scalar_select %p490, %s25, 1
      %s492 = smul.addr %s491, 4
      %s493 = smul.addr %s492, 8
      %s494 = scalar_lea.vmem %s12, %s493
      %p495 = pneg %p364
      %p496 = pneg %p361
      %p497 = scmp.lt.s32.totalorder %s25, 1
      %s498 = scalar_select %p497, %s25, 1
      %s499 = scalar_lea.vmem %s13, %s498
      %p500 = scmp.lt.s32.totalorder %s25, 1
      %s501 = scalar_select %p500, %s25, 1
      %s502 = smul.addr %s501, 2
      %s503 = smul.addr %s502, 4
      %s504 = scalar_lea.vmem %s0, %s503
      %p505 = scmp.lt.s32.totalorder %s25, 1
      %s506 = scalar_select %p505, %s25, 1
      %s507 = smul.addr %s506, 4
      %s508 = scalar_lea.vmem %s1, %s507
      %p509 = scmp.lt.s32.totalorder %s25, 1
      %s510 = scalar_select %p509, %s25, 1
      %s511 = smul.addr %s510, 2
      %s512 = smul.addr %s511, 8
      %s513 = scalar_lea.vmem %s2, %s512
      %p514 = scmp.lt.s32.totalorder %s25, 1
      %s515 = scalar_select %p514, %s25, 1
      %s516 = smul.addr %s515, 8
      %s517 = scalar_lea.vmem %s3, %s516
      %p518 = scmp.lt.s32.totalorder %s25, 1
      %s519 = scalar_select %p518, %s25, 1
      %s520 = scalar_lea.vmem %s8, %s519
      %p521 = scmp.lt.s32.totalorder %s25, 1
      %s522 = scalar_select %p521, %s25, 1
      %s523 = scalar_lea.vmem %s9, %s522
      %p524 = scmp.lt.s32.totalorder %s25, 1
      %s525 = scalar_select %p524, %s25, 1
      %s526 = smul.addr %s525, 32
      %s527 = smul.addr %s526, 8
      %s528 = scalar_lea.vmem %s10, %s527
      %p529 = scmp.lt.s32.totalorder %s25, 1
      %s530 = scalar_select %p529, %s25, 1
      %s531 = scalar_lea.vmem %s11, %s530
      %p532 = scmp.lt.s32.totalorder %s25, 1
      %s533 = scalar_select %p532, %s25, 1
      %s534 = smul.addr %s533, 4
      %s535 = smul.addr %s534, 8
      %s536 = scalar_lea.vmem %s12, %s535
      %p537 = scmp.lt.s32.totalorder %s25, 1
      %s538 = scalar_select %p537, %s25, 1
      %s539 = scalar_lea.vmem %s13, %s538
      %v540 = vld [vmem:[%s504] sm:$0xff]
      %v541 = vld [vmem:[%s508] sm:$0xf]
      %v542 = vld [vmem:[%s513] sm:$0xff]
      %v543 = vld [vmem:[%s513 + $0x8] sm:$0xff]
      %v544 = vld [vmem:[%s517] sm:$0xff]
      %v545 = vld [vmem:[%s4] sm:$0xff]
      %v546 = vld [vmem:[%s4 + $0x8] sm:$0xff]
      %v547 = vld [vmem:[%s4 + $0x10] sm:$0xff]
      %v548 = vld [vmem:[%s4 + $0x18] sm:$0xff]
      %v549 = vld [vmem:[%s4 + $0x20] sm:$0xff]
      %v550 = vld [vmem:[%s4 + $0x28] sm:$0xff]
      %v551 = vld [vmem:[%s4 + $0x30] sm:$0xff]
      %v552 = vld [vmem:[%s4 + $0x38] sm:$0xff]
      %v553 = vld [vmem:[%s4 + $0x40] sm:$0xff]
      %v554 = vld [vmem:[%s4 + $0x48] sm:$0xff]
      %v555 = vld [vmem:[%s4 + $0x50] sm:$0xff]
      %v556 = vld [vmem:[%s4 + $0x58] sm:$0xff]
      %v557 = vld [vmem:[%s4 + $0x60] sm:$0xff]
      %v558 = vld [vmem:[%s4 + $0x68] sm:$0xff]
      %v559 = vld [vmem:[%s4 + $0x70] sm:$0xff]
      %v560 = vld [vmem:[%s4 + $0x78] sm:$0xff]
      %v561 = vld [vmem:[%s4 + $0x80] sm:$0xff]
      %v562 = vld [vmem:[%s4 + $0x88] sm:$0xff]
      %v563 = vld [vmem:[%s4 + $0x90] sm:$0xff]
      %v564 = vld [vmem:[%s4 + $0x98] sm:$0xff]
      %v565 = vld [vmem:[%s4 + $0xa0] sm:$0xff]
      %v566 = vld [vmem:[%s4 + $0xa8] sm:$0xff]
      %v567 = vld [vmem:[%s4 + $0xb0] sm:$0xff]
      %v568 = vld [vmem:[%s4 + $0xb8] sm:$0xff]
      %v569 = vld [vmem:[%s4 + $0xc0] sm:$0xff]
      %v570 = vld [vmem:[%s4 + $0xc8] sm:$0xff]
      %v571 = vld [vmem:[%s4 + $0xd0] sm:$0xff]
      %v572 = vld [vmem:[%s4 + $0xd8] sm:$0xff]
      %v573 = vld [vmem:[%s4 + $0xe0] sm:$0xff]
      %v574 = vld [vmem:[%s4 + $0xe8] sm:$0xff]
      %v575 = vld [vmem:[%s4 + $0xf0] sm:$0xff]
      %v576 = vld [vmem:[%s4 + $0xf8] sm:$0xff]
      %v577 = vld [vmem:[%s5] sm:$0x1]
      %v578 = vld [vmem:[%s6] sm:$0xff]
      %v579 = vld [vmem:[%s6 + $0x8] sm:$0xff]
      %v580 = vld [vmem:[%s6 + $0x10] sm:$0xff]
      %v581 = vld [vmem:[%s6 + $0x18] sm:$0xff]
      %v582 = vld [vmem:[%s7] sm:$0x1]
      %v583 = vlaneseq
      %v584 = vand.u32 %v583, 127
      %585 = vset.pattern.permute.xlu0 0
      %586 = vperm.xlu0 %585, %v541
      %v587 = vpop.permute.xlu0 %586
      %vm588 = vcmp.eq.s32.totalorder %v587, %v584
      %v589 = vsel %vm588, 1, 0
      %v590 = vcvt.s32.f32 %v589
      %591 = vset.pattern.permute.xlu0 0
      %592 = vperm.xlu0 %591, %v544
      %v593 = vpop.permute.xlu0 %592
      %vm594 = vcmp.eq.s32.totalorder %v593, %v584
      %v595 = vsel %vm594, 1, 0
      %v596 = vcvt.s32.f32 %v595
      %v598 = vlaneseq
      %v599 = vshrl.u32 %v598, 7
      %v600 = vsub.s32 0, %v599
      %v601 = vrot.slane %v577, %v600
      %603 = vmatprep.subr.mxu0 0.0
      %604 = vmatpush1.msra.mxu0 %v545
      %605 = vmatprep.subr.mxu0 0.0
      %606 = vmatpush1.msra.mxu0 %v546
      %607 = vmatprep.subr.mxu0 0.0
      %608 = vmatpush1.msra.mxu0 %v547
      %609 = vmatprep.subr.mxu0 0.0
      %610 = vmatpush1.msra.mxu0 %v548
      %611 = vmatprep.subr.mxu0 0.0
      %612 = vmatpush1.msra.mxu0 %v549
      %613 = vmatprep.subr.mxu0 0.0
      %614 = vmatpush1.msra.mxu0 %v550
      %615 = vmatprep.subr.mxu0 0.0
      %616 = vmatpush1.msra.mxu0 %v551
      %617 = vmatprep.subr.mxu0 0.0
      %618 = vmatpush1.msra.mxu0 %v552
      %619 = vmatprep.subr.mxu0 0.0
      %620 = vmatpush1.msra.mxu0 %v553
      %621 = vmatprep.subr.mxu0 0.0
      %622 = vmatpush1.msra.mxu0 %v554
      %623 = vmatprep.subr.mxu0 0.0
      %624 = vmatpush1.msra.mxu0 %v555
      %625 = vmatprep.subr.mxu0 0.0
      %626 = vmatpush1.msra.mxu0 %v556
      %627 = vmatprep.subr.mxu0 0.0
      %628 = vmatpush1.msra.mxu0 %v557
      %629 = vmatprep.subr.mxu0 0.0
      %630 = vmatpush1.msra.mxu0 %v558
      %631 = vmatprep.subr.mxu0 0.0
      %632 = vmatpush1.msra.mxu0 %v559
      %633 = vmatprep.subr.mxu0 0.0
      %634 = vmatpush1.msra.mxu0 %v560
      %635 = vmatprep.subr.mxu0 0.0
      %636 = vmatpush1.msra.mxu0 %v561
      %637 = vmatprep.subr.mxu0 0.0
      %638 = vmatpush1.msra.mxu0 %v562
      %639 = vmatprep.subr.mxu0 0.0
      %640 = vmatpush1.msra.mxu0 %v563
      %641 = vmatprep.subr.mxu0 0.0
      %642 = vmatpush1.msra.mxu0 %v564
      %643 = vmatprep.subr.mxu0 0.0
      %644 = vmatpush1.msra.mxu0 %v565
      %645 = vmatprep.subr.mxu0 0.0
      %646 = vmatpush1.msra.mxu0 %v566
      %647 = vmatprep.subr.mxu0 0.0
      %648 = vmatpush1.msra.mxu0 %v567
      %649 = vmatprep.subr.mxu0 0.0
      %650 = vmatpush1.msra.mxu0 %v568
      %651 = vmatprep.subr.mxu0 0.0
      %652 = vmatpush1.msra.mxu0 %v569
      %653 = vmatprep.subr.mxu0 0.0
      %654 = vmatpush1.msra.mxu0 %v570
      %655 = vmatprep.subr.mxu0 0.0
      %656 = vmatpush1.msra.mxu0 %v571
      %657 = vmatprep.subr.mxu0 0.0
      %658 = vmatpush1.msra.mxu0 %v572
      %659 = vmatprep.subr.mxu0 0.0
      %660 = vmatpush1.msra.mxu0 %v573
      %661 = vmatprep.subr.mxu0 0.0
      %662 = vmatpush1.msra.mxu0 %v574
      %663 = vmatprep.subr.mxu0 0.0
      %664 = vmatpush1.msra.mxu0 %v575
      %665 = vmatprep.subr.mxu0 0.0
      %666 = vmatpush1.msra.mxu0 %v576
      %667 = vmatprep.mubr.f32.mxu0 %v543
      %668 = vmatmul.mubr.f32.gmra.mrb[0].mxu0 %v542
      %v669 = vpop.f32.mrb[0].mxu0
      %v670 = vadd.f32 %v601, %v669
      %v671 = vpop.f32.mrb[0].mxu0
      %672 = vdwg.mxu0
      %v673 = vmax.f32 %v670, 0.0
      %v675 = vlaneseq
      %v676 = vshrl.u32 %v675, 7
      %v677 = vsub.s32 0, %v676
      %v678 = vrot.slane %v582, %v677
      %vm680 = vcmask 261120
      %v682 = vsel %vm680, %v673, 0
      %684 = vmatprep.subr.mxu0 0.0
      %685 = vmatpush1.msra.mxu0 %v578
      %686 = vmatprep.subr.mxu0 0.0
      %687 = vmatpush1.msra.mxu0 %v579
      %688 = vmatprep.subr.mxu0 0.0
      %689 = vmatpush1.msra.mxu0 %v580
      %690 = vmatprep.subr.mxu0 0.0
      %691 = vmatpush1.msra.mxu0 %v581
      %692 = vmatprep.subr.mxu0 0.0
      %693 = vmatpush1.msra.mxu0 0.0
      %694 = vmatprep.subr.mxu0 0.0
      %695 = vmatpush1.msra.mxu0 0.0
      %696 = vmatprep.subr.mxu0 0.0
      %697 = vmatpush1.msra.mxu0 0.0
      %698 = vmatprep.subr.mxu0 0.0
      %699 = vmatpush1.msra.mxu0 0.0
      %700 = vmatprep.subr.mxu0 0.0
      %701 = vmatpush1.msra.mxu0 0.0
      %702 = vmatprep.subr.mxu0 0.0
      %703 = vmatpush1.msra.mxu0 0.0
      %704 = vmatprep.subr.mxu0 0.0
      %705 = vmatpush1.msra.mxu0 0.0
      %706 = vmatprep.subr.mxu0 0.0
      %707 = vmatpush1.msra.mxu0 0.0
      %708 = vmatprep.subr.mxu0 0.0
      %709 = vmatpush1.msra.mxu0 0.0
      %710 = vmatprep.subr.mxu0 0.0
      %711 = vmatpush1.msra.mxu0 0.0
      %712 = vmatprep.subr.mxu0 0.0
      %713 = vmatpush1.msra.mxu0 0.0
      %714 = vmatprep.subr.mxu0 0.0
      %715 = vmatpush1.msra.mxu0 0.0
      %716 = vmatprep.subr.mxu0 0.0
      %717 = vmatpush1.msra.mxu0 0.0
      %718 = vmatprep.subr.mxu0 0.0
      %719 = vmatpush1.msra.mxu0 0.0
      %720 = vmatprep.subr.mxu0 0.0
      %721 = vmatpush1.msra.mxu0 0.0
      %722 = vmatprep.subr.mxu0 0.0
      %723 = vmatpush1.msra.mxu0 0.0
      %724 = vmatprep.subr.mxu0 0.0
      %725 = vmatpush1.msra.mxu0 0.0
      %726 = vmatprep.subr.mxu0 0.0
      %727 = vmatpush1.msra.mxu0 0.0
      %728 = vmatprep.subr.mxu0 0.0
      %729 = vmatpush1.msra.mxu0 0.0
      %730 = vmatprep.subr.mxu0 0.0
      %731 = vmatpush1.msra.mxu0 0.0
      %732 = vmatprep.subr.mxu0 0.0
      %733 = vmatpush1.msra.mxu0 0.0
      %734 = vmatprep.subr.mxu0 0.0
      %735 = vmatpush1.msra.mxu0 0.0
      %736 = vmatprep.subr.mxu0 0.0
      %737 = vmatpush1.msra.mxu0 0.0
      %738 = vmatprep.subr.mxu0 0.0
      %739 = vmatpush1.msra.mxu0 0.0
      %740 = vmatprep.subr.mxu0 0.0
      %741 = vmatpush1.msra.mxu0 0.0
      %742 = vmatprep.subr.mxu0 0.0
      %743 = vmatpush1.msra.mxu0 0.0
      %744 = vmatprep.subr.mxu0 0.0
      %745 = vmatpush1.msra.mxu0 0.0
      %746 = vmatprep.subr.mxu0 0.0
      %747 = vmatpush1.msra.mxu0 0.0
      %748 = vmatprep.mubr.f32.mxu0 0.0
      %749 = vmatmul.mubr.f32.gmra.mrb[0].mxu0 %v682
      %v750 = vpop.f32.mrb[0].mxu0
      %v751 = vadd.f32 %v678, %v750
      %v752 = vpop.f32.mrb[0].mxu0
      %753 = vdwg.mxu0
      %vm754 = vcmask 31744
      %v755 = vsel %vm754, %v751, -inf
      %756 = vmax.xlane.f32.xlu0 %v755
      %v757 = vpop.xlane.xlu0 %756
      %v758 = vsub.f32 %v751, %v757
      %v759 = vmul.f32 %v758, 1.442695
      %v760 = vpow.pop %v759
      %v761 = vsel %vm754, %v760, 0.0
      %762 = vadd.xlane.f32.xlu0 %v761
      %v763 = vpop.xlane.xlu0 %762
      %v764 = vlog2.pop %v763
      %v765 = vmul.f32 %v764, 0.6931472
      %v766 = vadd.f32 %v765, %v757
      %v767 = vmul.f32 %v596, %v751
      %v768 = vsel %vm754, %v767, 0.0
      %769 = vadd.xlane.f32.xlu0 %v768
      %v770 = vpop.xlane.xlu0 %769
      %v771 = vsub.f32 %v766, %v770
      %v772 = vrot.slane %v771, 4
      %v773 = vadd.f32 %v771, %v772
      %v774 = vrot.slane %v773, 2
      %v775 = vadd.f32 %v773, %v774
      %v776 = vrot.slane %v775, 1
      %v777 = vadd.f32 %v775, %v776
      %v778 = vmul.f32 %v777, 0.125
      %vm779 = vcmp.eq.f32.partialorder %v751, %v757
      %v780 = vsel %vm779, %v584, 4
      %v781 = vsel %vm754, %v780, 2147483647
      %v782 = vand.u32 %v781, 65535
      %v783 = vshra.s32 %v781, 16
      %v784 = vcvt.s32.f32 %v782
      %v785 = vcvt.s32.f32 %v783
      %786 = vmin.xlane.f32.xlu0 %v785
      %v787 = vpop.xlane.xlu0 %786
      %vm788 = vcmp.eq.f32.partialorder %v785, %v787
      %v789 = vsel %vm788, %v784, inf
      %790 = vmin.xlane.f32.xlu0 %v789
      %v791 = vpop.xlane.xlu0 %790
      %v792 = vcvt.f32.s32 %v791
      %v793 = vcvt.f32.s32 %v787
      %v794 = vshll.u32 %v793, 16
      %v795 = vadd.s32 %v794, %v792
      %vm796 = vcmp.eq.s32.totalorder %v795, %v544
      %v797 = vsel %vm796, 1, 0
      %v798 = vcvt.s32.f32 %v797
      %vm799 = vcmask 7168
      %v800 = vsel %vm799, %v798, 0.0
      %v801 = vrot.slane %v800, 4
      %v802 = vadd.f32 %v800, %v801
      %v803 = vrot.slane %v802, 2
      %v804 = vadd.f32 %v802, %v803
      %v805 = vrot.slane %v804, 1
      %v806 = vadd.f32 %v804, %v805
      %v808 = vcombine.high %v540, %v540
      %810 = vmatprep.subr.mxu0 0.0
      %811 = vmatpush1.msra.mxu0 %v545
      %812 = vmatprep.subr.mxu0 0.0
      %813 = vmatpush1.msra.mxu0 %v546
      %814 = vmatprep.subr.mxu0 0.0
      %815 = vmatpush1.msra.mxu0 %v547
      %816 = vmatprep.subr.mxu0 0.0
      %817 = vmatpush1.msra.mxu0 %v548
      %818 = vmatprep.subr.mxu0 0.0
      %819 = vmatpush1.msra.mxu0 %v549
      %820 = vmatprep.subr.mxu0 0.0
      %821 = vmatpush1.msra.mxu0 %v550
      %822 = vmatprep.subr.mxu0 0.0
      %823 = vmatpush1.msra.mxu0 %v551
      %824 = vmatprep.subr.mxu0 0.0
      %825 = vmatpush1.msra.mxu0 %v552
      %826 = vmatprep.subr.mxu0 0.0
      %827 = vmatpush1.msra.mxu0 %v553
      %828 = vmatprep.subr.mxu0 0.0
      %829 = vmatpush1.msra.mxu0 %v554
      %830 = vmatprep.subr.mxu0 0.0
      %831 = vmatpush1.msra.mxu0 %v555
      %832 = vmatprep.subr.mxu0 0.0
      %833 = vmatpush1.msra.mxu0 %v556
      %834 = vmatprep.subr.mxu0 0.0
      %835 = vmatpush1.msra.mxu0 %v557
      %836 = vmatprep.subr.mxu0 0.0
      %837 = vmatpush1.msra.mxu0 %v558
      %838 = vmatprep.subr.mxu0 0.0
      %839 = vmatpush1.msra.mxu0 %v559
      %840 = vmatprep.subr.mxu0 0.0
      %841 = vmatpush1.msra.mxu0 %v560
      %842 = vmatprep.subr.mxu0 0.0
      %843 = vmatpush1.msra.mxu0 %v561
      %844 = vmatprep.subr.mxu0 0.0
      %845 = vmatpush1.msra.mxu0 %v562
      %846 = vmatprep.subr.mxu0 0.0
      %847 = vmatpush1.msra.mxu0 %v563
      %848 = vmatprep.subr.mxu0 0.0
      %849 = vmatpush1.msra.mxu0 %v564
      %850 = vmatprep.subr.mxu0 0.0
      %851 = vmatpush1.msra.mxu0 %v565
      %852 = vmatprep.subr.mxu0 0.0
      %853 = vmatpush1.msra.mxu0 %v566
      %854 = vmatprep.subr.mxu0 0.0
      %855 = vmatpush1.msra.mxu0 %v567
      %856 = vmatprep.subr.mxu0 0.0
      %857 = vmatpush1.msra.mxu0 %v568
      %858 = vmatprep.subr.mxu0 0.0
      %859 = vmatpush1.msra.mxu0 %v569
      %860 = vmatprep.subr.mxu0 0.0
      %861 = vmatpush1.msra.mxu0 %v570
      %862 = vmatprep.subr.mxu0 0.0
      %863 = vmatpush1.msra.mxu0 %v571
      %864 = vmatprep.subr.mxu0 0.0
      %865 = vmatpush1.msra.mxu0 %v572
      %866 = vmatprep.subr.mxu0 0.0
      %867 = vmatpush1.msra.mxu0 %v573
      %868 = vmatprep.subr.mxu0 0.0
      %869 = vmatpush1.msra.mxu0 %v574
      %870 = vmatprep.subr.mxu0 0.0
      %871 = vmatpush1.msra.mxu0 %v575
      %872 = vmatprep.subr.mxu0 0.0
      %873 = vmatpush1.msra.mxu0 %v576
      %874 = vmatprep.mubr.f32.mxu0 %v808
      %875 = vmatmul.mubr.f32.gmra.mrb[0].mxu0 %v540
      %v876 = vpop.f32.mrb[0].mxu0
      %v877 = vadd.f32 %v601, %v876
      %v878 = vpop.f32.mrb[0].mxu0
      %879 = vdwg.mxu0
      %v880 = vmax.f32 %v877, 0.0
      %v882 = vsel %vm680, %v880, 0
      %884 = vmatprep.subr.mxu0 0.0
      %885 = vmatpush1.msra.mxu0 %v578
      %886 = vmatprep.subr.mxu0 0.0
      %887 = vmatpush1.msra.mxu0 %v579
      %888 = vmatprep.subr.mxu0 0.0
      %889 = vmatpush1.msra.mxu0 %v580
      %890 = vmatprep.subr.mxu0 0.0
      %891 = vmatpush1.msra.mxu0 %v581
      %892 = vmatprep.subr.mxu0 0.0
      %893 = vmatpush1.msra.mxu0 0.0
      %894 = vmatprep.subr.mxu0 0.0
      %895 = vmatpush1.msra.mxu0 0.0
      %896 = vmatprep.subr.mxu0 0.0
      %897 = vmatpush1.msra.mxu0 0.0
      %898 = vmatprep.subr.mxu0 0.0
      %899 = vmatpush1.msra.mxu0 0.0
      %900 = vmatprep.subr.mxu0 0.0
      %901 = vmatpush1.msra.mxu0 0.0
      %902 = vmatprep.subr.mxu0 0.0
      %903 = vmatpush1.msra.mxu0 0.0
      %904 = vmatprep.subr.mxu0 0.0
      %905 = vmatpush1.msra.mxu0 0.0
      %906 = vmatprep.subr.mxu0 0.0
      %907 = vmatpush1.msra.mxu0 0.0
      %908 = vmatprep.subr.mxu0 0.0
      %909 = vmatpush1.msra.mxu0 0.0
      %910 = vmatprep.subr.mxu0 0.0
      %911 = vmatpush1.msra.mxu0 0.0
      %912 = vmatprep.subr.mxu0 0.0
      %913 = vmatpush1.msra.mxu0 0.0
      %914 = vmatprep.subr.mxu0 0.0
      %915 = vmatpush1.msra.mxu0 0.0
      %916 = vmatprep.subr.mxu0 0.0
      %917 = vmatpush1.msra.mxu0 0.0
      %918 = vmatprep.subr.mxu0 0.0
      %919 = vmatpush1.msra.mxu0 0.0
      %920 = vmatprep.subr.mxu0 0.0
      %921 = vmatpush1.msra.mxu0 0.0
      %922 = vmatprep.subr.mxu0 0.0
      %923 = vmatpush1.msra.mxu0 0.0
      %924 = vmatprep.subr.mxu0 0.0
      %925 = vmatpush1.msra.mxu0 0.0
      %926 = vmatprep.subr.mxu0 0.0
      %927 = vmatpush1.msra.mxu0 0.0
      %928 = vmatprep.subr.mxu0 0.0
      %929 = vmatpush1.msra.mxu0 0.0
      %930 = vmatprep.subr.mxu0 0.0
      %931 = vmatpush1.msra.mxu0 0.0
      %932 = vmatprep.subr.mxu0 0.0
      %933 = vmatpush1.msra.mxu0 0.0
      %934 = vmatprep.subr.mxu0 0.0
      %935 = vmatpush1.msra.mxu0 0.0
      %936 = vmatprep.subr.mxu0 0.0
      %937 = vmatpush1.msra.mxu0 0.0
      %938 = vmatprep.subr.mxu0 0.0
      %939 = vmatpush1.msra.mxu0 0.0
      %940 = vmatprep.subr.mxu0 0.0
      %941 = vmatpush1.msra.mxu0 0.0
      %942 = vmatprep.subr.mxu0 0.0
      %943 = vmatpush1.msra.mxu0 0.0
      %944 = vmatprep.subr.mxu0 0.0
      %945 = vmatpush1.msra.mxu0 0.0
      %946 = vmatprep.subr.mxu0 0.0
      %947 = vmatpush1.msra.mxu0 0.0
      %948 = vmatprep.mubr.f32.mxu0 0.0
      %949 = vmatmul.mubr.f32.gmra.mrb[0].mxu0 %v882
      %v950 = vpop.f32.mrb[0].mxu0
      %v951 = vadd.f32 %v678, %v950
      %v952 = vpop.f32.mrb[0].mxu0
      %953 = vdwg.mxu0
      %vm954 = vcmask 27648
      %v955 = vsel %vm954, %v951, -inf
      %956 = vmax.xlane.f32.xlu0 %v955
      %v957 = vpop.xlane.xlu0 %956
      %v958 = vsub.f32 %v951, %v957
      %v959 = vmul.f32 %v958, 1.442695
      %v960 = vpow.pop %v959
      %v961 = vsel %vm954, %v960, 0.0
      %962 = vadd.xlane.f32.xlu0 %v961
      %v963 = vpop.xlane.xlu0 %962
      %v964 = vrcp.pop %v963
      %v965 = vmul.f32 %v960, %v964
      %v966 = vsub.f32 %v965, %v590
      %v967 = vmul.f32 %v966, 0.25
      %968 = vxpose.xlu0.b32.start [1/16] %v880, 128
      %969 = vxpose.xlu0.b32.cont [2/16] 0.0, 128
      %970 = vxpose.xlu0.b32.cont [3/16] 0.0, 128
      %971 = vxpose.xlu0.b32.cont [4/16] 0.0, 128
      %972 = vxpose.xlu0.b32.cont [5/16] 0.0, 128
      %973 = vxpose.xlu0.b32.cont [6/16] 0.0, 128
      %974 = vxpose.xlu0.b32.cont [7/16] 0.0, 128
      %975 = vxpose.xlu0.b32.cont [8/16] 0.0, 128
      %976 = vxpose.xlu0.b32.cont [9/16] 0.0, 128
      %977 = vxpose.xlu0.b32.cont [10/16] 0.0, 128
      %978 = vxpose.xlu0.b32.cont [11/16] 0.0, 128
      %979 = vxpose.xlu0.b32.cont [12/16] 0.0, 128
      %980 = vxpose.xlu0.b32.cont [13/16] 0.0, 128
      %981 = vxpose.xlu0.b32.cont [14/16] 0.0, 128
      %982 = vxpose.xlu0.b32.cont [15/16] 0.0, 128
      %983 = vxpose.xlu0.b32.end [16/16] 0.0, 128
      %v984 = vpop.trf.xlu0
      %v985 = vpop.trf.xlu0
      %v986 = vpop.trf.xlu0
      %v987 = vpop.trf.xlu0
      %v988 = vpop.trf.xlu0
      %v989 = vpop.trf.xlu0
      %v990 = vpop.trf.xlu0
      %v991 = vpop.trf.xlu0
      %v992 = vpop.trf.xlu0
      %v993 = vpop.trf.xlu0
      %v994 = vpop.trf.xlu0
      %v995 = vpop.trf.xlu0
      %v996 = vpop.trf.xlu0
      %v997 = vpop.trf.xlu0
      %v998 = vpop.trf.xlu0
      %v999 = vpop.trf.xlu0
      %v1001 = vsel %vm754, %v984, 0
      %v1004 = vsel %vm754, %v985, 0
      %v1007 = vsel %vm754, %v986, 0
      %v1010 = vsel %vm754, %v987, 0
      %vm1012 = vcmask 1043456
      %v1014 = vsel %vm1012, %v967, 0
      %1016 = vmatprep.subr.mxu0 0.0
      %1017 = vmatpush1.msra.mxu0 %v1014
      %1018 = vmatprep.subr.mxu0 0.0
      %1019 = vmatpush1.msra.mxu0 0.0
      %1020 = vmatprep.subr.mxu0 0.0
      %1021 = vmatpush1.msra.mxu0 0.0
      %1022 = vmatprep.subr.mxu0 0.0
      %1023 = vmatpush1.msra.mxu0 0.0
      %1024 = vmatprep.subr.mxu0 0.0
      %1025 = vmatpush1.msra.mxu0 0.0
      %1026 = vmatprep.subr.mxu0 0.0
      %1027 = vmatpush1.msra.mxu0 0.0
      %1028 = vmatprep.subr.mxu0 0.0
      %1029 = vmatpush1.msra.mxu0 0.0
      %1030 = vmatprep.subr.mxu0 0.0
      %1031 = vmatpush1.msra.mxu0 0.0
      %1032 = vmatprep.subr.mxu0 0.0
      %1033 = vmatpush1.msra.mxu0 0.0
      %1034 = vmatprep.subr.mxu0 0.0
      %1035 = vmatpush1.msra.mxu0 0.0
      %1036 = vmatprep.subr.mxu0 0.0
      %1037 = vmatpush1.msra.mxu0 0.0
      %1038 = vmatprep.subr.mxu0 0.0
      %1039 = vmatpush1.msra.mxu0 0.0
      %1040 = vmatprep.subr.mxu0 0.0
      %1041 = vmatpush1.msra.mxu0 0.0
      %1042 = vmatprep.subr.mxu0 0.0
      %1043 = vmatpush1.msra.mxu0 0.0
      %1044 = vmatprep.subr.mxu0 0.0
      %1045 = vmatpush1.msra.mxu0 0.0
      %1046 = vmatprep.subr.mxu0 0.0
      %1047 = vmatpush1.msra.mxu0 0.0
      %1048 = vmatprep.subr.mxu0 0.0
      %1049 = vmatpush1.msra.mxu0 0.0
      %1050 = vmatprep.subr.mxu0 0.0
      %1051 = vmatpush1.msra.mxu0 0.0
      %1052 = vmatprep.subr.mxu0 0.0
      %1053 = vmatpush1.msra.mxu0 0.0
      %1054 = vmatprep.subr.mxu0 0.0
      %1055 = vmatpush1.msra.mxu0 0.0
      %1056 = vmatprep.subr.mxu0 0.0
      %1057 = vmatpush1.msra.mxu0 0.0
      %1058 = vmatprep.subr.mxu0 0.0
      %1059 = vmatpush1.msra.mxu0 0.0
      %1060 = vmatprep.subr.mxu0 0.0
      %1061 = vmatpush1.msra.mxu0 0.0
      %1062 = vmatprep.subr.mxu0 0.0
      %1063 = vmatpush1.msra.mxu0 0.0
      %1064 = vmatprep.subr.mxu0 0.0
      %1065 = vmatpush1.msra.mxu0 0.0
      %1066 = vmatprep.subr.mxu0 0.0
      %1067 = vmatpush1.msra.mxu0 0.0
      %1068 = vmatprep.subr.mxu0 0.0
      %1069 = vmatpush1.msra.mxu0 0.0
      %1070 = vmatprep.subr.mxu0 0.0
      %1071 = vmatpush1.msra.mxu0 0.0
      %1072 = vmatprep.subr.mxu0 0.0
      %1073 = vmatpush1.msra.mxu0 0.0
      %1074 = vmatprep.subr.mxu0 0.0
      %1075 = vmatpush1.msra.mxu0 0.0
      %1076 = vmatprep.subr.mxu0 0.0
      %1077 = vmatpush1.msra.mxu0 0.0
      %1078 = vmatprep.subr.mxu0 0.0
      %1079 = vmatpush1.msra.mxu0 0.0
      %1080 = vmatprep.mubr.f32.mxu0 0.0
      %1081 = vmatmul.mubr.f32.gmra.mrb[0].mxu0 %v1001
      %v1082 = vpop.f32.mrb[0].mxu0
      %v1083 = vadd.f32 0.0, %v1082
      %v1084 = vpop.f32.mrb[0].mxu0
      %1085 = vmatprep.mubr.f32.mxu0 0.0
      %1086 = vmatmul.mubr.f32.gmra.mrb[0].mxu0 %v1004
      %v1087 = vpop.f32.mrb[0].mxu0
      %v1088 = vadd.f32 0.0, %v1087
      %v1089 = vpop.f32.mrb[0].mxu0
      %1090 = vmatprep.mubr.f32.mxu0 0.0
      %1091 = vmatmul.mubr.f32.gmra.mrb[0].mxu0 %v1007
      %v1092 = vpop.f32.mrb[0].mxu0
      %v1093 = vadd.f32 0.0, %v1092
      %v1094 = vpop.f32.mrb[0].mxu0
      %1095 = vmatprep.mubr.f32.mxu0 0.0
      %1096 = vmatmul.mubr.f32.gmra.mrb[0].mxu0 %v1010
      %v1097 = vpop.f32.mrb[0].mxu0
      %v1098 = vadd.f32 0.0, %v1097
      %v1099 = vpop.f32.mrb[0].mxu0
      %1100 = vdwg.mxu0
      %v1101 = vsel %vm954, %v967, 0.0
      %v1102 = vrot.slane %v1101, 4
      %v1103 = vadd.f32 %v1101, %v1102
      %v1104 = vrot.slane %v1103, 2
      %v1105 = vadd.f32 %v1103, %v1104
      %v1106 = vrot.slane %v1105, 1
      %v1107 = vadd.f32 %v1105, %v1106
      %v1108 = vsel %vm754, %v967, 0
      %v1111 = vsel %vm754, %v578, 0
      %v1114 = vsel %vm754, %v579, 0
      %v1117 = vsel %vm754, %v580, 0
      %v1120 = vsel %vm754, %v581, 0
      %1122 = vmatprep.subr.mxu0 0.0
      %1123 = vmatpush1.xpose.msra.mxu0 %v1111
      %1124 = vmatprep.subr.mxu0 0.0
      %1125 = vmatpush1.xpose.msra.mxu0 %v1114
      %1126 = vmatprep.subr.mxu0 0.0
      %1127 = vmatpush1.xpose.msra.mxu0 %v1117
      %1128 = vmatprep.subr.mxu0 0.0
      %1129 = vmatpush1.xpose.msra.mxu0 %v1120
      %1130 = vmatprep.subr.mxu0 0.0
      %1131 = vmatpush1.xpose.msra.mxu0 0.0
      %1132 = vmatprep.subr.mxu0 0.0
      %1133 = vmatpush1.xpose.msra.mxu0 0.0
      %1134 = vmatprep.subr.mxu0 0.0
      %1135 = vmatpush1.xpose.msra.mxu0 0.0
      %1136 = vmatprep.subr.mxu0 0.0
      %1137 = vmatpush1.xpose.msra.mxu0 0.0
      %1138 = vmatprep.subr.mxu0 0.0
      %1139 = vmatpush1.xpose.msra.mxu0 0.0
      %1140 = vmatprep.subr.mxu0 0.0
      %1141 = vmatpush1.xpose.msra.mxu0 0.0
      %1142 = vmatprep.subr.mxu0 0.0
      %1143 = vmatpush1.xpose.msra.mxu0 0.0
      %1144 = vmatprep.subr.mxu0 0.0
      %1145 = vmatpush1.xpose.msra.mxu0 0.0
      %1146 = vmatprep.subr.mxu0 0.0
      %1147 = vmatpush1.xpose.msra.mxu0 0.0
      %1148 = vmatprep.subr.mxu0 0.0
      %1149 = vmatpush1.xpose.msra.mxu0 0.0
      %1150 = vmatprep.subr.mxu0 0.0
      %1151 = vmatpush1.xpose.msra.mxu0 0.0
      %1152 = vmatprep.subr.mxu0 0.0
      %1153 = vmatpush1.xpose.msra.mxu0 0.0
      %1154 = vmatprep.subr.mxu0 0.0
      %1155 = vmatpush1.xpose.msra.mxu0 0.0
      %1156 = vmatprep.subr.mxu0 0.0
      %1157 = vmatpush1.xpose.msra.mxu0 0.0
      %1158 = vmatprep.subr.mxu0 0.0
      %1159 = vmatpush1.xpose.msra.mxu0 0.0
      %1160 = vmatprep.subr.mxu0 0.0
      %1161 = vmatpush1.xpose.msra.mxu0 0.0
      %1162 = vmatprep.subr.mxu0 0.0
      %1163 = vmatpush1.xpose.msra.mxu0 0.0
      %1164 = vmatprep.subr.mxu0 0.0
      %1165 = vmatpush1.xpose.msra.mxu0 0.0
      %1166 = vmatprep.subr.mxu0 0.0
      %1167 = vmatpush1.xpose.msra.mxu0 0.0
      %1168 = vmatprep.subr.mxu0 0.0
      %1169 = vmatpush1.xpose.msra.mxu0 0.0
      %1170 = vmatprep.subr.mxu0 0.0
      %1171 = vmatpush1.xpose.msra.mxu0 0.0
      %1172 = vmatprep.subr.mxu0 0.0
      %1173 = vmatpush1.xpose.msra.mxu0 0.0
      %1174 = vmatprep.subr.mxu0 0.0
      %1175 = vmatpush1.xpose.msra.mxu0 0.0
      %1176 = vmatprep.subr.mxu0 0.0
      %1177 = vmatpush1.xpose.msra.mxu0 0.0
      %1178 = vmatprep.subr.mxu0 0.0
      %1179 = vmatpush1.xpose.msra.mxu0 0.0
      %1180 = vmatprep.subr.mxu0 0.0
      %1181 = vmatpush1.xpose.msra.mxu0 0.0
      %1182 = vmatprep.subr.mxu0 0.0
      %1183 = vmatpush1.xpose.msra.mxu0 0.0
      %1184 = vmatprep.subr.mxu0 0.0
      %1185 = vmatpush1.xpose.msra.mxu0 0.0
      %1186 = vmatprep.mubr.f32.mxu0 0.0
      %1187 = vmatmul.mubr.f32.gmra.mrb[0].mxu0 %v1108
      %v1188 = vpop.f32.mrb[0].mxu0
      %v1189 = vadd.f32 0.0, %v1188
      %v1190 = vpop.f32.mrb[0].mxu0
      %1191 = vdwg.mxu0
      %vm1192 = vcmp.gt.f32.partialorder %v877, 0.0
      %v1193 = vsel %vm1192, %v1189, 0.0
      %1194 = vxpose.xlu0.b32.start [1/16] %v540, 128
      %1195 = vxpose.xlu0.b32.cont [2/16] 0.0, 128
      %1196 = vxpose.xlu0.b32.cont [3/16] 0.0, 128
      %1197 = vxpose.xlu0.b32.cont [4/16] 0.0, 128
      %1198 = vxpose.xlu0.b32.cont [5/16] 0.0, 128
      %1199 = vxpose.xlu0.b32.cont [6/16] 0.0, 128
      %1200 = vxpose.xlu0.b32.cont [7/16] 0.0, 128
      %1201 = vxpose.xlu0.b32.cont [8/16] 0.0, 128
      %1202 = vxpose.xlu0.b32.cont [9/16] 0.0, 128
      %1203 = vxpose.xlu0.b32.cont [10/16] 0.0, 128
      %1204 = vxpose.xlu0.b32.cont [11/16] 0.0, 128
      %1205 = vxpose.xlu0.b32.cont [12/16] 0.0, 128
      %1206 = vxpose.xlu0.b32.cont [13/16] 0.0, 128
      %1207 = vxpose.xlu0.b32.cont [14/16] 0.0, 128
      %1208 = vxpose.xlu0.b32.cont [15/16] 0.0, 128
      %1209 = vxpose.xlu0.b32.end [16/16] 0.0, 128
      %v1210 = vpop.trf.xlu0
      %v1211 = vpop.trf.xlu0
      %v1212 = vpop.trf.xlu0
      %v1213 = vpop.trf.xlu0
      %v1214 = vpop.trf.xlu0
      %v1215 = vpop.trf.xlu0
      %v1216 = vpop.trf.xlu0
      %v1217 = vpop.trf.xlu0
      %v1218 = vpop.trf.xlu0
      %v1219 = vpop.trf.xlu0
      %v1220 = vpop.trf.xlu0
      %v1221 = vpop.trf.xlu0
      %v1222 = vpop.trf.xlu0
      %v1223 = vpop.trf.xlu0
      %v1224 = vpop.trf.xlu0
      %v1225 = vpop.trf.xlu0
      %1226 = vxpose.xlu0.b32.start [1/16] %v808, 128
      %1227 = vxpose.xlu0.b32.cont [2/16] 0.0, 128
      %1228 = vxpose.xlu0.b32.cont [3/16] 0.0, 128
      %1229 = vxpose.xlu0.b32.cont [4/16] 0.0, 128
      %1230 = vxpose.xlu0.b32.cont [5/16] 0.0, 128
      %1231 = vxpose.xlu0.b32.cont [6/16] 0.0, 128
      %1232 = vxpose.xlu0.b32.cont [7/16] 0.0, 128
      %1233 = vxpose.xlu0.b32.cont [8/16] 0.0, 128
      %1234 = vxpose.xlu0.b32.cont [9/16] 0.0, 128
      %1235 = vxpose.xlu0.b32.cont [10/16] 0.0, 128
      %1236 = vxpose.xlu0.b32.cont [11/16] 0.0, 128
      %1237 = vxpose.xlu0.b32.cont [12/16] 0.0, 128
      %1238 = vxpose.xlu0.b32.cont [13/16] 0.0, 128
      %1239 = vxpose.xlu0.b32.cont [14/16] 0.0, 128
      %1240 = vxpose.xlu0.b32.cont [15/16] 0.0, 128
      %1241 = vxpose.xlu0.b32.end [16/16] 0.0, 128
      %v1242 = vpop.trf.xlu0
      %v1243 = vpop.trf.xlu0
      %v1244 = vpop.trf.xlu0
      %v1245 = vpop.trf.xlu0
      %v1246 = vpop.trf.xlu0
      %v1247 = vpop.trf.xlu0
      %v1248 = vpop.trf.xlu0
      %v1249 = vpop.trf.xlu0
      %v1250 = vpop.trf.xlu0
      %v1251 = vpop.trf.xlu0
      %v1252 = vpop.trf.xlu0
      %v1253 = vpop.trf.xlu0
      %v1254 = vpop.trf.xlu0
      %v1255 = vpop.trf.xlu0
      %v1256 = vpop.trf.xlu0
      %v1257 = vpop.trf.xlu0
      %v1259 = vsel %vm754, %v1210, 0
      %v1262 = vsel %vm754, %v1211, 0
      %v1265 = vsel %vm754, %v1212, 0
      %v1268 = vsel %vm754, %v1213, 0
      %v1271 = vsel %vm754, %v1214, 0
      %v1274 = vsel %vm754, %v1215, 0
      %v1277 = vsel %vm754, %v1216, 0
      %v1280 = vsel %vm754, %v1217, 0
      %v1283 = vsel %vm754, %v1218, 0
      %v1286 = vsel %vm754, %v1219, 0
      %v1289 = vsel %vm754, %v1220, 0
      %v1292 = vsel %vm754, %v1221, 0
      %v1295 = vsel %vm754, %v1222, 0
      %v1298 = vsel %vm754, %v1223, 0
      %v1301 = vsel %vm754, %v1224, 0
      %v1304 = vsel %vm754, %v1225, 0
      %v1307 = vsel %vm754, %v1242, 0
      %v1310 = vsel %vm754, %v1243, 0
      %v1313 = vsel %vm754, %v1244, 0
      %v1316 = vsel %vm754, %v1245, 0
      %v1319 = vsel %vm754, %v1246, 0
      %v1322 = vsel %vm754, %v1247, 0
      %v1325 = vsel %vm754, %v1248, 0
      %v1328 = vsel %vm754, %v1249, 0
      %v1331 = vsel %vm754, %v1250, 0
      %v1334 = vsel %vm754, %v1251, 0
      %v1337 = vsel %vm754, %v1252, 0
      %v1340 = vsel %vm754, %v1253, 0
      %v1343 = vsel %vm754, %v1254, 0
      %v1346 = vsel %vm754, %v1255, 0
      %v1349 = vsel %vm754, %v1256, 0
      %v1352 = vsel %vm754, %v1257, 0
      %v1355 = vsel %vm1012, %v1193, 0
      %1357 = vmatprep.subr.mxu0 0.0
      %1358 = vmatpush1.msra.mxu0 %v1355
      %1359 = vmatprep.subr.mxu0 0.0
      %1360 = vmatpush1.msra.mxu0 0.0
      %1361 = vmatprep.subr.mxu0 0.0
      %1362 = vmatpush1.msra.mxu0 0.0
      %1363 = vmatprep.subr.mxu0 0.0
      %1364 = vmatpush1.msra.mxu0 0.0
      %1365 = vmatprep.subr.mxu0 0.0
      %1366 = vmatpush1.msra.mxu0 0.0
      %1367 = vmatprep.subr.mxu0 0.0
      %1368 = vmatpush1.msra.mxu0 0.0
      %1369 = vmatprep.subr.mxu0 0.0
      %1370 = vmatpush1.msra.mxu0 0.0
      %1371 = vmatprep.subr.mxu0 0.0
      %1372 = vmatpush1.msra.mxu0 0.0
      %1373 = vmatprep.subr.mxu0 0.0
      %1374 = vmatpush1.msra.mxu0 0.0
      %1375 = vmatprep.subr.mxu0 0.0
      %1376 = vmatpush1.msra.mxu0 0.0
      %1377 = vmatprep.subr.mxu0 0.0
      %1378 = vmatpush1.msra.mxu0 0.0
      %1379 = vmatprep.subr.mxu0 0.0
      %1380 = vmatpush1.msra.mxu0 0.0
      %1381 = vmatprep.subr.mxu0 0.0
      %1382 = vmatpush1.msra.mxu0 0.0
      %1383 = vmatprep.subr.mxu0 0.0
      %1384 = vmatpush1.msra.mxu0 0.0
      %1385 = vmatprep.subr.mxu0 0.0
      %1386 = vmatpush1.msra.mxu0 0.0
      %1387 = vmatprep.subr.mxu0 0.0
      %1388 = vmatpush1.msra.mxu0 0.0
      %1389 = vmatprep.subr.mxu0 0.0
      %1390 = vmatpush1.msra.mxu0 0.0
      %1391 = vmatprep.subr.mxu0 0.0
      %1392 = vmatpush1.msra.mxu0 0.0
      %1393 = vmatprep.subr.mxu0 0.0
      %1394 = vmatpush1.msra.mxu0 0.0
      %1395 = vmatprep.subr.mxu0 0.0
      %1396 = vmatpush1.msra.mxu0 0.0
      %1397 = vmatprep.subr.mxu0 0.0
      %1398 = vmatpush1.msra.mxu0 0.0
      %1399 = vmatprep.subr.mxu0 0.0
      %1400 = vmatpush1.msra.mxu0 0.0
      %1401 = vmatprep.subr.mxu0 0.0
      %1402 = vmatpush1.msra.mxu0 0.0
      %1403 = vmatprep.subr.mxu0 0.0
      %1404 = vmatpush1.msra.mxu0 0.0
      %1405 = vmatprep.subr.mxu0 0.0
      %1406 = vmatpush1.msra.mxu0 0.0
      %1407 = vmatprep.subr.mxu0 0.0
      %1408 = vmatpush1.msra.mxu0 0.0
      %1409 = vmatprep.subr.mxu0 0.0
      %1410 = vmatpush1.msra.mxu0 0.0
      %1411 = vmatprep.subr.mxu0 0.0
      %1412 = vmatpush1.msra.mxu0 0.0
      %1413 = vmatprep.subr.mxu0 0.0
      %1414 = vmatpush1.msra.mxu0 0.0
      %1415 = vmatprep.subr.mxu0 0.0
      %1416 = vmatpush1.msra.mxu0 0.0
      %1417 = vmatprep.subr.mxu0 0.0
      %1418 = vmatpush1.msra.mxu0 0.0
      %1419 = vmatprep.subr.mxu0 0.0
      %1420 = vmatpush1.msra.mxu0 0.0
      %1421 = vmatprep.mubr.f32.mxu0 0.0
      %1422 = vmatmul.mubr.f32.gmra.mrb[0].mxu0 %v1259
      %v1423 = vpop.f32.mrb[0].mxu0
      %v1424 = vadd.f32 0.0, %v1423
      %v1425 = vpop.f32.mrb[0].mxu0
      %1426 = vmatprep.mubr.f32.mxu0 0.0
      %1427 = vmatmul.mubr.f32.gmra.mrb[0].mxu0 %v1262
      %v1428 = vpop.f32.mrb[0].mxu0
      %v1429 = vadd.f32 0.0, %v1428
      %v1430 = vpop.f32.mrb[0].mxu0
      %1431 = vmatprep.mubr.f32.mxu0 0.0
      %1432 = vmatmul.mubr.f32.gmra.mrb[0].mxu0 %v1265
      %v1433 = vpop.f32.mrb[0].mxu0
      %v1434 = vadd.f32 0.0, %v1433
      %v1435 = vpop.f32.mrb[0].mxu0
      %1436 = vmatprep.mubr.f32.mxu0 0.0
      %1437 = vmatmul.mubr.f32.gmra.mrb[0].mxu0 %v1268
      %v1438 = vpop.f32.mrb[0].mxu0
      %v1439 = vadd.f32 0.0, %v1438
      %v1440 = vpop.f32.mrb[0].mxu0
      %1441 = vmatprep.mubr.f32.mxu0 0.0
      %1442 = vmatmul.mubr.f32.gmra.mrb[0].mxu0 %v1271
      %v1443 = vpop.f32.mrb[0].mxu0
      %v1444 = vadd.f32 0.0, %v1443
      %v1445 = vpop.f32.mrb[0].mxu0
      %1446 = vmatprep.mubr.f32.mxu0 0.0
      %1447 = vmatmul.mubr.f32.gmra.mrb[0].mxu0 %v1274
      %v1448 = vpop.f32.mrb[0].mxu0
      %v1449 = vadd.f32 0.0, %v1448
      %v1450 = vpop.f32.mrb[0].mxu0
      %1451 = vmatprep.mubr.f32.mxu0 0.0
      %1452 = vmatmul.mubr.f32.gmra.mrb[0].mxu0 %v1277
      %v1453 = vpop.f32.mrb[0].mxu0
      %v1454 = vadd.f32 0.0, %v1453
      %v1455 = vpop.f32.mrb[0].mxu0
      %1456 = vmatprep.mubr.f32.mxu0 0.0
      %1457 = vmatmul.mubr.f32.gmra.mrb[0].mxu0 %v1280
      %v1458 = vpop.f32.mrb[0].mxu0
      %v1459 = vadd.f32 0.0, %v1458
      %v1460 = vpop.f32.mrb[0].mxu0
      %1461 = vmatprep.mubr.f32.mxu0 0.0
      %1462 = vmatmul.mubr.f32.gmra.mrb[0].mxu0 %v1283
      %v1463 = vpop.f32.mrb[0].mxu0
      %v1464 = vadd.f32 0.0, %v1463
      %v1465 = vpop.f32.mrb[0].mxu0
      %1466 = vmatprep.mubr.f32.mxu0 0.0
      %1467 = vmatmul.mubr.f32.gmra.mrb[0].mxu0 %v1286
      %v1468 = vpop.f32.mrb[0].mxu0
      %v1469 = vadd.f32 0.0, %v1468
      %v1470 = vpop.f32.mrb[0].mxu0
      %1471 = vmatprep.mubr.f32.mxu0 0.0
      %1472 = vmatmul.mubr.f32.gmra.mrb[0].mxu0 %v1289
      %v1473 = vpop.f32.mrb[0].mxu0
      %v1474 = vadd.f32 0.0, %v1473
      %v1475 = vpop.f32.mrb[0].mxu0
      %1476 = vmatprep.mubr.f32.mxu0 0.0
      %1477 = vmatmul.mubr.f32.gmra.mrb[0].mxu0 %v1292
      %v1478 = vpop.f32.mrb[0].mxu0
      %v1479 = vadd.f32 0.0, %v1478
      %v1480 = vpop.f32.mrb[0].mxu0
      %1481 = vmatprep.mubr.f32.mxu0 0.0
      %1482 = vmatmul.mubr.f32.gmra.mrb[0].mxu0 %v1295
      %v1483 = vpop.f32.mrb[0].mxu0
      %v1484 = vadd.f32 0.0, %v1483
      %v1485 = vpop.f32.mrb[0].mxu0
      %1486 = vmatprep.mubr.f32.mxu0 0.0
      %1487 = vmatmul.mubr.f32.gmra.mrb[0].mxu0 %v1298
      %v1488 = vpop.f32.mrb[0].mxu0
      %v1489 = vadd.f32 0.0, %v1488
      %v1490 = vpop.f32.mrb[0].mxu0
      %1491 = vmatprep.mubr.f32.mxu0 0.0
      %1492 = vmatmul.mubr.f32.gmra.mrb[0].mxu0 %v1301
      %v1493 = vpop.f32.mrb[0].mxu0
      %v1494 = vadd.f32 0.0, %v1493
      %v1495 = vpop.f32.mrb[0].mxu0
      %1496 = vmatprep.mubr.f32.mxu0 0.0
      %1497 = vmatmul.mubr.f32.gmra.mrb[0].mxu0 %v1304
      %v1498 = vpop.f32.mrb[0].mxu0
      %v1499 = vadd.f32 0.0, %v1498
      %v1500 = vpop.f32.mrb[0].mxu0
      %1501 = vmatprep.mubr.f32.mxu0 0.0
      %1502 = vmatmul.mubr.f32.gmra.mrb[0].mxu0 %v1307
      %v1503 = vpop.f32.mrb[0].mxu0
      %v1504 = vadd.f32 0.0, %v1503
      %v1505 = vpop.f32.mrb[0].mxu0
      %1506 = vmatprep.mubr.f32.mxu0 0.0
      %1507 = vmatmul.mubr.f32.gmra.mrb[0].mxu0 %v1310
      %v1508 = vpop.f32.mrb[0].mxu0
      %v1509 = vadd.f32 0.0, %v1508
      %v1510 = vpop.f32.mrb[0].mxu0
      %1511 = vmatprep.mubr.f32.mxu0 0.0
      %1512 = vmatmul.mubr.f32.gmra.mrb[0].mxu0 %v1313
      %v1513 = vpop.f32.mrb[0].mxu0
      %v1514 = vadd.f32 0.0, %v1513
      %v1515 = vpop.f32.mrb[0].mxu0
      %1516 = vmatprep.mubr.f32.mxu0 0.0
      %1517 = vmatmul.mubr.f32.gmra.mrb[0].mxu0 %v1316
      %v1518 = vpop.f32.mrb[0].mxu0
      %v1519 = vadd.f32 0.0, %v1518
      %v1520 = vpop.f32.mrb[0].mxu0
      %1521 = vmatprep.mubr.f32.mxu0 0.0
      %1522 = vmatmul.mubr.f32.gmra.mrb[0].mxu0 %v1319
      %v1523 = vpop.f32.mrb[0].mxu0
      %v1524 = vadd.f32 0.0, %v1523
      %v1525 = vpop.f32.mrb[0].mxu0
      %1526 = vmatprep.mubr.f32.mxu0 0.0
      %1527 = vmatmul.mubr.f32.gmra.mrb[0].mxu0 %v1322
      %v1528 = vpop.f32.mrb[0].mxu0
      %v1529 = vadd.f32 0.0, %v1528
      %v1530 = vpop.f32.mrb[0].mxu0
      %1531 = vmatprep.mubr.f32.mxu0 0.0
      %1532 = vmatmul.mubr.f32.gmra.mrb[0].mxu0 %v1325
      %v1533 = vpop.f32.mrb[0].mxu0
      %v1534 = vadd.f32 0.0, %v1533
      %v1535 = vpop.f32.mrb[0].mxu0
      %1536 = vmatprep.mubr.f32.mxu0 0.0
      %1537 = vmatmul.mubr.f32.gmra.mrb[0].mxu0 %v1328
      %v1538 = vpop.f32.mrb[0].mxu0
      %v1539 = vadd.f32 0.0, %v1538
      %v1540 = vpop.f32.mrb[0].mxu0
      %1541 = vmatprep.mubr.f32.mxu0 0.0
      %1542 = vmatmul.mubr.f32.gmra.mrb[0].mxu0 %v1331
      %v1543 = vpop.f32.mrb[0].mxu0
      %v1544 = vadd.f32 0.0, %v1543
      %v1545 = vpop.f32.mrb[0].mxu0
      %1546 = vmatprep.mubr.f32.mxu0 0.0
      %1547 = vmatmul.mubr.f32.gmra.mrb[0].mxu0 %v1334
      %v1548 = vpop.f32.mrb[0].mxu0
      %v1549 = vadd.f32 0.0, %v1548
      %v1550 = vpop.f32.mrb[0].mxu0
      %1551 = vmatprep.mubr.f32.mxu0 0.0
      %1552 = vmatmul.mubr.f32.gmra.mrb[0].mxu0 %v1337
      %v1553 = vpop.f32.mrb[0].mxu0
      %v1554 = vadd.f32 0.0, %v1553
      %v1555 = vpop.f32.mrb[0].mxu0
      %1556 = vmatprep.mubr.f32.mxu0 0.0
      %1557 = vmatmul.mubr.f32.gmra.mrb[0].mxu0 %v1340
      %v1558 = vpop.f32.mrb[0].mxu0
      %v1559 = vadd.f32 0.0, %v1558
      %v1560 = vpop.f32.mrb[0].mxu0
      %1561 = vmatprep.mubr.f32.mxu0 0.0
      %1562 = vmatmul.mubr.f32.gmra.mrb[0].mxu0 %v1343
      %v1563 = vpop.f32.mrb[0].mxu0
      %v1564 = vadd.f32 0.0, %v1563
      %v1565 = vpop.f32.mrb[0].mxu0
      %1566 = vmatprep.mubr.f32.mxu0 0.0
      %1567 = vmatmul.mubr.f32.gmra.mrb[0].mxu0 %v1346
      %v1568 = vpop.f32.mrb[0].mxu0
      %v1569 = vadd.f32 0.0, %v1568
      %v1570 = vpop.f32.mrb[0].mxu0
      %1571 = vmatprep.mubr.f32.mxu0 0.0
      %1572 = vmatmul.mubr.f32.gmra.mrb[0].mxu0 %v1349
      %v1573 = vpop.f32.mrb[0].mxu0
      %v1574 = vadd.f32 0.0, %v1573
      %v1575 = vpop.f32.mrb[0].mxu0
      %1576 = vmatprep.mubr.f32.mxu0 0.0
      %1577 = vmatmul.mubr.f32.gmra.mrb[0].mxu0 %v1352
      %v1578 = vpop.f32.mrb[0].mxu0
      %v1579 = vadd.f32 0.0, %v1578
      %v1580 = vpop.f32.mrb[0].mxu0
      %1581 = vdwg.mxu0
      %vm1582 = vcmask 257024
      %v1583 = vsel %vm1582, %v1193, 0.0
      %v1584 = vrot.slane %v1583, 4
      %v1585 = vadd.f32 %v1583, %v1584
      %v1586 = vrot.slane %v1585, 2
      %v1587 = vadd.f32 %v1585, %v1586
      %v1588 = vrot.slane %v1587, 1
      %v1589 = vadd.f32 %v1587, %v1588
      %v1590 = vmul.f32 %v1424, 0.04
      %v1591 = vmul.f32 %v1429, 0.04
      %v1592 = vmul.f32 %v1434, 0.04
      %v1593 = vmul.f32 %v1439, 0.04
      %v1594 = vmul.f32 %v1444, 0.04
      %v1595 = vmul.f32 %v1449, 0.04
      %v1596 = vmul.f32 %v1454, 0.04
      %v1597 = vmul.f32 %v1459, 0.04
      %v1598 = vmul.f32 %v1464, 0.04
      %v1599 = vmul.f32 %v1469, 0.04
      %v1600 = vmul.f32 %v1474, 0.04
      %v1601 = vmul.f32 %v1479, 0.04
      %v1602 = vmul.f32 %v1484, 0.04
      %v1603 = vmul.f32 %v1489, 0.04
      %v1604 = vmul.f32 %v1494, 0.04
      %v1605 = vmul.f32 %v1499, 0.04
      %v1606 = vmul.f32 %v1504, 0.04
      %v1607 = vmul.f32 %v1509, 0.04
      %v1608 = vmul.f32 %v1514, 0.04
      %v1609 = vmul.f32 %v1519, 0.04
      %v1610 = vmul.f32 %v1524, 0.04
      %v1611 = vmul.f32 %v1529, 0.04
      %v1612 = vmul.f32 %v1534, 0.04
      %v1613 = vmul.f32 %v1539, 0.04
      %v1614 = vmul.f32 %v1544, 0.04
      %v1615 = vmul.f32 %v1549, 0.04
      %v1616 = vmul.f32 %v1554, 0.04
      %v1617 = vmul.f32 %v1559, 0.04
      %v1618 = vmul.f32 %v1564, 0.04
      %v1619 = vmul.f32 %v1569, 0.04
      %v1620 = vmul.f32 %v1574, 0.04
      %v1621 = vmul.f32 %v1579, 0.04
      %v1622 = vsub.f32 %v545, %v1590
      %v1623 = vsub.f32 %v546, %v1591
      %v1624 = vsub.f32 %v547, %v1592
      %v1625 = vsub.f32 %v548, %v1593
      %v1626 = vsub.f32 %v549, %v1594
      %v1627 = vsub.f32 %v550, %v1595
      %v1628 = vsub.f32 %v551, %v1596
      %v1629 = vsub.f32 %v552, %v1597
      %v1630 = vsub.f32 %v553, %v1598
      %v1631 = vsub.f32 %v554, %v1599
      %v1632 = vsub.f32 %v555, %v1600
      %v1633 = vsub.f32 %v556, %v1601
      %v1634 = vsub.f32 %v557, %v1602
      %v1635 = vsub.f32 %v558, %v1603
      %v1636 = vsub.f32 %v559, %v1604
      %v1637 = vsub.f32 %v560, %v1605
      %v1638 = vsub.f32 %v561, %v1606
      %v1639 = vsub.f32 %v562, %v1607
      %v1640 = vsub.f32 %v563, %v1608
      %v1641 = vsub.f32 %v564, %v1609
      %v1642 = vsub.f32 %v565, %v1610
      %v1643 = vsub.f32 %v566, %v1611
      %v1644 = vsub.f32 %v567, %v1612
      %v1645 = vsub.f32 %v568, %v1613
      %v1646 = vsub.f32 %v569, %v1614
      %v1647 = vsub.f32 %v570, %v1615
      %v1648 = vsub.f32 %v571, %v1616
      %v1649 = vsub.f32 %v572, %v1617
      %v1650 = vsub.f32 %v573, %v1618
      %v1651 = vsub.f32 %v574, %v1619
      %v1652 = vsub.f32 %v575, %v1620
      %v1653 = vsub.f32 %v576, %v1621
      %v1654 = vmul.f32 %v1589, 0.04
      %v1655 = vsub.f32 %v577, %v1654
      %v1656 = vmul.f32 %v1083, 0.04
      %v1657 = vmul.f32 %v1088, 0.04
      %v1658 = vmul.f32 %v1093, 0.04
      %v1659 = vmul.f32 %v1098, 0.04
      %v1660 = vsub.f32 %v578, %v1656
      %v1661 = vsub.f32 %v579, %v1657
      %v1662 = vsub.f32 %v580, %v1658
      %v1663 = vsub.f32 %v581, %v1659
      %v1664 = vmul.f32 %v1107, 0.04
      %v1665 = vsub.f32 %v582, %v1664
      %v1667 = vlaneseq
      %v1668 = vshrl.u32 %v1667, 7
      %v1669 = vsub.s32 0, %v1668
      %v1670 = vrot.slane %v1655, %v1669
      %1672 = vmatprep.subr.mxu0 0.0
      %1673 = vmatpush1.msra.mxu0 %v1622
      %1674 = vmatprep.subr.mxu0 0.0
      %1675 = vmatpush1.msra.mxu0 %v1623
      %1676 = vmatprep.subr.mxu0 0.0
      %1677 = vmatpush1.msra.mxu0 %v1624
      %1678 = vmatprep.subr.mxu0 0.0
      %1679 = vmatpush1.msra.mxu0 %v1625
      %1680 = vmatprep.subr.mxu0 0.0
      %1681 = vmatpush1.msra.mxu0 %v1626
      %1682 = vmatprep.subr.mxu0 0.0
      %1683 = vmatpush1.msra.mxu0 %v1627
      %1684 = vmatprep.subr.mxu0 0.0
      %1685 = vmatpush1.msra.mxu0 %v1628
      %1686 = vmatprep.subr.mxu0 0.0
      %1687 = vmatpush1.msra.mxu0 %v1629
      %1688 = vmatprep.subr.mxu0 0.0
      %1689 = vmatpush1.msra.mxu0 %v1630
      %1690 = vmatprep.subr.mxu0 0.0
      %1691 = vmatpush1.msra.mxu0 %v1631
      %1692 = vmatprep.subr.mxu0 0.0
      %1693 = vmatpush1.msra.mxu0 %v1632
      %1694 = vmatprep.subr.mxu0 0.0
      %1695 = vmatpush1.msra.mxu0 %v1633
      %1696 = vmatprep.subr.mxu0 0.0
      %1697 = vmatpush1.msra.mxu0 %v1634
      %1698 = vmatprep.subr.mxu0 0.0
      %1699 = vmatpush1.msra.mxu0 %v1635
      %1700 = vmatprep.subr.mxu0 0.0
      %1701 = vmatpush1.msra.mxu0 %v1636
      %1702 = vmatprep.subr.mxu0 0.0
      %1703 = vmatpush1.msra.mxu0 %v1637
      %1704 = vmatprep.subr.mxu0 0.0
      %1705 = vmatpush1.msra.mxu0 %v1638
      %1706 = vmatprep.subr.mxu0 0.0
      %1707 = vmatpush1.msra.mxu0 %v1639
      %1708 = vmatprep.subr.mxu0 0.0
      %1709 = vmatpush1.msra.mxu0 %v1640
      %1710 = vmatprep.subr.mxu0 0.0
      %1711 = vmatpush1.msra.mxu0 %v1641
      %1712 = vmatprep.subr.mxu0 0.0
      %1713 = vmatpush1.msra.mxu0 %v1642
      %1714 = vmatprep.subr.mxu0 0.0
      %1715 = vmatpush1.msra.mxu0 %v1643
      %1716 = vmatprep.subr.mxu0 0.0
      %1717 = vmatpush1.msra.mxu0 %v1644
      %1718 = vmatprep.subr.mxu0 0.0
      %1719 = vmatpush1.msra.mxu0 %v1645
      %1720 = vmatprep.subr.mxu0 0.0
      %1721 = vmatpush1.msra.mxu0 %v1646
      %1722 = vmatprep.subr.mxu0 0.0
      %1723 = vmatpush1.msra.mxu0 %v1647
      %1724 = vmatprep.subr.mxu0 0.0
      %1725 = vmatpush1.msra.mxu0 %v1648
      %1726 = vmatprep.subr.mxu0 0.0
      %1727 = vmatpush1.msra.mxu0 %v1649
      %1728 = vmatprep.subr.mxu0 0.0
      %1729 = vmatpush1.msra.mxu0 %v1650
      %1730 = vmatprep.subr.mxu0 0.0
      %1731 = vmatpush1.msra.mxu0 %v1651
      %1732 = vmatprep.subr.mxu0 0.0
      %1733 = vmatpush1.msra.mxu0 %v1652
      %1734 = vmatprep.subr.mxu0 0.0
      %1735 = vmatpush1.msra.mxu0 %v1653
      %1736 = vmatprep.mubr.f32.mxu0 %v543
      %1737 = vmatmul.mubr.f32.gmra.mrb[0].mxu0 %v542
      %v1738 = vpop.f32.mrb[0].mxu0
      %v1739 = vadd.f32 %v1670, %v1738
      %v1740 = vpop.f32.mrb[0].mxu0
      %1741 = vdwg.mxu0
      %v1742 = vmax.f32 %v1739, 0.0
      %v1744 = vlaneseq
      %v1745 = vshrl.u32 %v1744, 7
      %v1746 = vsub.s32 0, %v1745
      %v1747 = vrot.slane %v1665, %v1746
      %v1750 = vsel %vm680, %v1742, 0
      %1752 = vmatprep.subr.mxu0 0.0
      %1753 = vmatpush1.msra.mxu0 %v1660
      %1754 = vmatprep.subr.mxu0 0.0
      %1755 = vmatpush1.msra.mxu0 %v1661
      %1756 = vmatprep.subr.mxu0 0.0
      %1757 = vmatpush1.msra.mxu0 %v1662
      %1758 = vmatprep.subr.mxu0 0.0
      %1759 = vmatpush1.msra.mxu0 %v1663
      %1760 = vmatprep.subr.mxu0 0.0
      %1761 = vmatpush1.msra.mxu0 0.0
      %1762 = vmatprep.subr.mxu0 0.0
      %1763 = vmatpush1.msra.mxu0 0.0
      %1764 = vmatprep.subr.mxu0 0.0
      %1765 = vmatpush1.msra.mxu0 0.0
      %1766 = vmatprep.subr.mxu0 0.0
      %1767 = vmatpush1.msra.mxu0 0.0
      %1768 = vmatprep.subr.mxu0 0.0
      %1769 = vmatpush1.msra.mxu0 0.0
      %1770 = vmatprep.subr.mxu0 0.0
      %1771 = vmatpush1.msra.mxu0 0.0
      %1772 = vmatprep.subr.mxu0 0.0
      %1773 = vmatpush1.msra.mxu0 0.0
      %1774 = vmatprep.subr.mxu0 0.0
      %1775 = vmatpush1.msra.mxu0 0.0
      %1776 = vmatprep.subr.mxu0 0.0
      %1777 = vmatpush1.msra.mxu0 0.0
      %1778 = vmatprep.subr.mxu0 0.0
      %1779 = vmatpush1.msra.mxu0 0.0
      %1780 = vmatprep.subr.mxu0 0.0
      %1781 = vmatpush1.msra.mxu0 0.0
      %1782 = vmatprep.subr.mxu0 0.0
      %1783 = vmatpush1.msra.mxu0 0.0
      %1784 = vmatprep.subr.mxu0 0.0
      %1785 = vmatpush1.msra.mxu0 0.0
      %1786 = vmatprep.subr.mxu0 0.0
      %1787 = vmatpush1.msra.mxu0 0.0
      %1788 = vmatprep.subr.mxu0 0.0
      %1789 = vmatpush1.msra.mxu0 0.0
      %1790 = vmatprep.subr.mxu0 0.0
      %1791 = vmatpush1.msra.mxu0 0.0
      %1792 = vmatprep.subr.mxu0 0.0
      %1793 = vmatpush1.msra.mxu0 0.0
      %1794 = vmatprep.subr.mxu0 0.0
      %1795 = vmatpush1.msra.mxu0 0.0
      %1796 = vmatprep.subr.mxu0 0.0
      %1797 = vmatpush1.msra.mxu0 0.0
      %1798 = vmatprep.subr.mxu0 0.0
      %1799 = vmatpush1.msra.mxu0 0.0
      %1800 = vmatprep.subr.mxu0 0.0
      %1801 = vmatpush1.msra.mxu0 0.0
      %1802 = vmatprep.subr.mxu0 0.0
      %1803 = vmatpush1.msra.mxu0 0.0
      %1804 = vmatprep.subr.mxu0 0.0
      %1805 = vmatpush1.msra.mxu0 0.0
      %1806 = vmatprep.subr.mxu0 0.0
      %1807 = vmatpush1.msra.mxu0 0.0
      %1808 = vmatprep.subr.mxu0 0.0
      %1809 = vmatpush1.msra.mxu0 0.0
      %1810 = vmatprep.subr.mxu0 0.0
      %1811 = vmatpush1.msra.mxu0 0.0
      %1812 = vmatprep.subr.mxu0 0.0
      %1813 = vmatpush1.msra.mxu0 0.0
      %1814 = vmatprep.subr.mxu0 0.0
      %1815 = vmatpush1.msra.mxu0 0.0
      %1816 = vmatprep.mubr.f32.mxu0 0.0
      %1817 = vmatmul.mubr.f32.gmra.mrb[0].mxu0 %v1750
      %v1818 = vpop.f32.mrb[0].mxu0
      %v1819 = vadd.f32 %v1747, %v1818
      %v1820 = vpop.f32.mrb[0].mxu0
      %1821 = vdwg.mxu0
      %v1822 = vsel %vm754, %v1819, -inf
      %1823 = vmax.xlane.f32.xlu0 %v1822
      %v1824 = vpop.xlane.xlu0 %1823
      %v1825 = vsub.f32 %v1819, %v1824
      %v1826 = vmul.f32 %v1825, 1.442695
      %v1827 = vpow.pop %v1826
      %v1828 = vsel %vm754, %v1827, 0.0
      %1829 = vadd.xlane.f32.xlu0 %v1828
      %v1830 = vpop.xlane.xlu0 %1829
      %v1831 = vlog2.pop %v1830
      %v1832 = vmul.f32 %v1831, 0.6931472
      %v1833 = vadd.f32 %v1832, %v1824
      %v1834 = vmul.f32 %v596, %v1819
      %v1835 = vsel %vm754, %v1834, 0.0
      %1836 = vadd.xlane.f32.xlu0 %v1835
      %v1837 = vpop.xlane.xlu0 %1836
      %v1838 = vsub.f32 %v1833, %v1837
      %v1839 = vrot.slane %v1838, 4
      %v1840 = vadd.f32 %v1838, %v1839
      %v1841 = vrot.slane %v1840, 2
      %v1842 = vadd.f32 %v1840, %v1841
      %v1843 = vrot.slane %v1842, 1
      %v1844 = vadd.f32 %v1842, %v1843
      %v1845 = vmul.f32 %v1844, 0.125
      %vm1846 = vcmp.eq.f32.partialorder %v1819, %v1824
      %v1847 = vsel %vm1846, %v584, 4
      %v1848 = vsel %vm754, %v1847, 2147483647
      %v1849 = vand.u32 %v1848, 65535
      %v1850 = vshra.s32 %v1848, 16
      %v1851 = vcvt.s32.f32 %v1849
      %v1852 = vcvt.s32.f32 %v1850
      %1853 = vmin.xlane.f32.xlu0 %v1852
      %v1854 = vpop.xlane.xlu0 %1853
      %vm1855 = vcmp.eq.f32.partialorder %v1852, %v1854
      %v1856 = vsel %vm1855, %v1851, inf
      %1857 = vmin.xlane.f32.xlu0 %v1856
      %v1858 = vpop.xlane.xlu0 %1857
      %v1859 = vcvt.f32.s32 %v1858
      %v1860 = vcvt.f32.s32 %v1854
      %v1861 = vshll.u32 %v1860, 16
      %v1862 = vadd.s32 %v1861, %v1859
      %vm1863 = vcmp.eq.s32.totalorder %v1862, %v544
      %v1864 = vsel %vm1863, 1, 0
      %v1865 = vcvt.s32.f32 %v1864
      %v1866 = vsel %vm799, %v1865, 0.0
      %v1867 = vrot.slane %v1866, 4
      %v1868 = vadd.f32 %v1866, %v1867
      %v1869 = vrot.slane %v1868, 2
      %v1870 = vadd.f32 %v1868, %v1869
      %v1871 = vrot.slane %v1870, 1
      %v1872 = vadd.f32 %v1870, %v1871
      %1873 = vmatprep.subr.mxu0 0.0
      %1874 = vmatpush1.msra.mxu0 %v1622
      %1875 = vmatprep.subr.mxu0 0.0
      %1876 = vmatpush1.msra.mxu0 %v1623
      %1877 = vmatprep.subr.mxu0 0.0
      %1878 = vmatpush1.msra.mxu0 %v1624
      %1879 = vmatprep.subr.mxu0 0.0
      %1880 = vmatpush1.msra.mxu0 %v1625
      %1881 = vmatprep.subr.mxu0 0.0
      %1882 = vmatpush1.msra.mxu0 %v1626
      %1883 = vmatprep.subr.mxu0 0.0
      %1884 = vmatpush1.msra.mxu0 %v1627
      %1885 = vmatprep.subr.mxu0 0.0
      %1886 = vmatpush1.msra.mxu0 %v1628
      %1887 = vmatprep.subr.mxu0 0.0
      %1888 = vmatpush1.msra.mxu0 %v1629
      %1889 = vmatprep.subr.mxu0 0.0
      %1890 = vmatpush1.msra.mxu0 %v1630
      %1891 = vmatprep.subr.mxu0 0.0
      %1892 = vmatpush1.msra.mxu0 %v1631
      %1893 = vmatprep.subr.mxu0 0.0
      %1894 = vmatpush1.msra.mxu0 %v1632
      %1895 = vmatprep.subr.mxu0 0.0
      %1896 = vmatpush1.msra.mxu0 %v1633
      %1897 = vmatprep.subr.mxu0 0.0
      %1898 = vmatpush1.msra.mxu0 %v1634
      %1899 = vmatprep.subr.mxu0 0.0
      %1900 = vmatpush1.msra.mxu0 %v1635
      %1901 = vmatprep.subr.mxu0 0.0
      %1902 = vmatpush1.msra.mxu0 %v1636
      %1903 = vmatprep.subr.mxu0 0.0
      %1904 = vmatpush1.msra.mxu0 %v1637
      %1905 = vmatprep.subr.mxu0 0.0
      %1906 = vmatpush1.msra.mxu0 %v1638
      %1907 = vmatprep.subr.mxu0 0.0
      %1908 = vmatpush1.msra.mxu0 %v1639
      %1909 = vmatprep.subr.mxu0 0.0
      %1910 = vmatpush1.msra.mxu0 %v1640
      %1911 = vmatprep.subr.mxu0 0.0
      %1912 = vmatpush1.msra.mxu0 %v1641
      %1913 = vmatprep.subr.mxu0 0.0
      %1914 = vmatpush1.msra.mxu0 %v1642
      %1915 = vmatprep.subr.mxu0 0.0
      %1916 = vmatpush1.msra.mxu0 %v1643
      %1917 = vmatprep.subr.mxu0 0.0
      %1918 = vmatpush1.msra.mxu0 %v1644
      %1919 = vmatprep.subr.mxu0 0.0
      %1920 = vmatpush1.msra.mxu0 %v1645
      %1921 = vmatprep.subr.mxu0 0.0
      %1922 = vmatpush1.msra.mxu0 %v1646
      %1923 = vmatprep.subr.mxu0 0.0
      %1924 = vmatpush1.msra.mxu0 %v1647
      %1925 = vmatprep.subr.mxu0 0.0
      %1926 = vmatpush1.msra.mxu0 %v1648
      %1927 = vmatprep.subr.mxu0 0.0
      %1928 = vmatpush1.msra.mxu0 %v1649
      %1929 = vmatprep.subr.mxu0 0.0
      %1930 = vmatpush1.msra.mxu0 %v1650
      %1931 = vmatprep.subr.mxu0 0.0
      %1932 = vmatpush1.msra.mxu0 %v1651
      %1933 = vmatprep.subr.mxu0 0.0
      %1934 = vmatpush1.msra.mxu0 %v1652
      %1935 = vmatprep.subr.mxu0 0.0
      %1936 = vmatpush1.msra.mxu0 %v1653
      %1937 = vmatprep.mubr.f32.mxu0 %v808
      %1938 = vmatmul.mubr.f32.gmra.mrb[0].mxu0 %v540
      %v1939 = vpop.f32.mrb[0].mxu0
      %v1940 = vadd.f32 %v1670, %v1939
      %v1941 = vpop.f32.mrb[0].mxu0
      %1942 = vdwg.mxu0
      %v1943 = vmax.f32 %v1940, 0.0
      %v1945 = vsel %vm680, %v1943, 0
      %1947 = vmatprep.subr.mxu0 0.0
      %1948 = vmatpush1.msra.mxu0 %v1660
      %1949 = vmatprep.subr.mxu0 0.0
      %1950 = vmatpush1.msra.mxu0 %v1661
      %1951 = vmatprep.subr.mxu0 0.0
      %1952 = vmatpush1.msra.mxu0 %v1662
      %1953 = vmatprep.subr.mxu0 0.0
      %1954 = vmatpush1.msra.mxu0 %v1663
      %1955 = vmatprep.subr.mxu0 0.0
      %1956 = vmatpush1.msra.mxu0 0.0
      %1957 = vmatprep.subr.mxu0 0.0
      %1958 = vmatpush1.msra.mxu0 0.0
      %1959 = vmatprep.subr.mxu0 0.0
      %1960 = vmatpush1.msra.mxu0 0.0
      %1961 = vmatprep.subr.mxu0 0.0
      %1962 = vmatpush1.msra.mxu0 0.0
      %1963 = vmatprep.subr.mxu0 0.0
      %1964 = vmatpush1.msra.mxu0 0.0
      %1965 = vmatprep.subr.mxu0 0.0
      %1966 = vmatpush1.msra.mxu0 0.0
      %1967 = vmatprep.subr.mxu0 0.0
      %1968 = vmatpush1.msra.mxu0 0.0
      %1969 = vmatprep.subr.mxu0 0.0
      %1970 = vmatpush1.msra.mxu0 0.0
      %1971 = vmatprep.subr.mxu0 0.0
      %1972 = vmatpush1.msra.mxu0 0.0
      %1973 = vmatprep.subr.mxu0 0.0
      %1974 = vmatpush1.msra.mxu0 0.0
      %1975 = vmatprep.subr.mxu0 0.0
      %1976 = vmatpush1.msra.mxu0 0.0
      %1977 = vmatprep.subr.mxu0 0.0
      %1978 = vmatpush1.msra.mxu0 0.0
      %1979 = vmatprep.subr.mxu0 0.0
      %1980 = vmatpush1.msra.mxu0 0.0
      %1981 = vmatprep.subr.mxu0 0.0
      %1982 = vmatpush1.msra.mxu0 0.0
      %1983 = vmatprep.subr.mxu0 0.0
      %1984 = vmatpush1.msra.mxu0 0.0
      %1985 = vmatprep.subr.mxu0 0.0
      %1986 = vmatpush1.msra.mxu0 0.0
      %1987 = vmatprep.subr.mxu0 0.0
      %1988 = vmatpush1.msra.mxu0 0.0
      %1989 = vmatprep.subr.mxu0 0.0
      %1990 = vmatpush1.msra.mxu0 0.0
      %1991 = vmatprep.subr.mxu0 0.0
      %1992 = vmatpush1.msra.mxu0 0.0
      %1993 = vmatprep.subr.mxu0 0.0
      %1994 = vmatpush1.msra.mxu0 0.0
      %1995 = vmatprep.subr.mxu0 0.0
      %1996 = vmatpush1.msra.mxu0 0.0
      %1997 = vmatprep.subr.mxu0 0.0
      %1998 = vmatpush1.msra.mxu0 0.0
      %1999 = vmatprep.subr.mxu0 0.0
      %2000 = vmatpush1.msra.mxu0 0.0
      %2001 = vmatprep.subr.mxu0 0.0
      %2002 = vmatpush1.msra.mxu0 0.0
      %2003 = vmatprep.subr.mxu0 0.0
      %2004 = vmatpush1.msra.mxu0 0.0
      %2005 = vmatprep.subr.mxu0 0.0
      %2006 = vmatpush1.msra.mxu0 0.0
      %2007 = vmatprep.subr.mxu0 0.0
      %2008 = vmatpush1.msra.mxu0 0.0
      %2009 = vmatprep.subr.mxu0 0.0
      %2010 = vmatpush1.msra.mxu0 0.0
      %2011 = vmatprep.mubr.f32.mxu0 0.0
      %2012 = vmatmul.mubr.f32.gmra.mrb[0].mxu0 %v1945
      %v2013 = vpop.f32.mrb[0].mxu0
      %v2014 = vadd.f32 %v1747, %v2013
      %v2015 = vpop.f32.mrb[0].mxu0
      %2016 = vdwg.mxu0
      %v2017 = vsel %vm954, %v2014, -inf
      %2018 = vmax.xlane.f32.xlu0 %v2017
      %v2019 = vpop.xlane.xlu0 %2018
      %v2020 = vsub.f32 %v2014, %v2019
      %v2021 = vmul.f32 %v2020, 1.442695
      %v2022 = vpow.pop %v2021
      %v2023 = vsel %vm954, %v2022, 0.0
      %2024 = vadd.xlane.f32.xlu0 %v2023
      %v2025 = vpop.xlane.xlu0 %2024
      %v2026 = vrcp.pop %v2025
      %v2027 = vmul.f32 %v2022, %v2026
      %v2028 = vsub.f32 %v2027, %v590
      %v2029 = vmul.f32 %v2028, 0.25
      %2030 = vxpose.xlu0.b32.start [1/16] %v1943, 128
      %2031 = vxpose.xlu0.b32.cont [2/16] 0.0, 128
      %2032 = vxpose.xlu0.b32.cont [3/16] 0.0, 128
      %2033 = vxpose.xlu0.b32.cont [4/16] 0.0, 128
      %2034 = vxpose.xlu0.b32.cont [5/16] 0.0, 128
      %2035 = vxpose.xlu0.b32.cont [6/16] 0.0, 128
      %2036 = vxpose.xlu0.b32.cont [7/16] 0.0, 128
      %2037 = vxpose.xlu0.b32.cont [8/16] 0.0, 128
      %2038 = vxpose.xlu0.b32.cont [9/16] 0.0, 128
      %2039 = vxpose.xlu0.b32.cont [10/16] 0.0, 128
      %2040 = vxpose.xlu0.b32.cont [11/16] 0.0, 128
      %2041 = vxpose.xlu0.b32.cont [12/16] 0.0, 128
      %2042 = vxpose.xlu0.b32.cont [13/16] 0.0, 128
      %2043 = vxpose.xlu0.b32.cont [14/16] 0.0, 128
      %2044 = vxpose.xlu0.b32.cont [15/16] 0.0, 128
      %2045 = vxpose.xlu0.b32.end [16/16] 0.0, 128
      %v2046 = vpop.trf.xlu0
      %v2047 = vpop.trf.xlu0
      %v2048 = vpop.trf.xlu0
      %v2049 = vpop.trf.xlu0
      %v2050 = vpop.trf.xlu0
      %v2051 = vpop.trf.xlu0
      %v2052 = vpop.trf.xlu0
      %v2053 = vpop.trf.xlu0
      %v2054 = vpop.trf.xlu0
      %v2055 = vpop.trf.xlu0
      %v2056 = vpop.trf.xlu0
      %v2057 = vpop.trf.xlu0
      %v2058 = vpop.trf.xlu0
      %v2059 = vpop.trf.xlu0
      %v2060 = vpop.trf.xlu0
      %v2061 = vpop.trf.xlu0
      %v2063 = vsel %vm754, %v2046, 0
      %v2066 = vsel %vm754, %v2047, 0
      %v2069 = vsel %vm754, %v2048, 0
      %v2072 = vsel %vm754, %v2049, 0
      %v2075 = vsel %vm1012, %v2029, 0
      %2077 = vmatprep.subr.mxu0 0.0
      %2078 = vmatpush1.msra.mxu0 %v2075
      %2079 = vmatprep.subr.mxu0 0.0
      %2080 = vmatpush1.msra.mxu0 0.0
      %2081 = vmatprep.subr.mxu0 0.0
      %2082 = vmatpush1.msra.mxu0 0.0
      %2083 = vmatprep.subr.mxu0 0.0
      %2084 = vmatpush1.msra.mxu0 0.0
      %2085 = vmatprep.subr.mxu0 0.0
      %2086 = vmatpush1.msra.mxu0 0.0
      %2087 = vmatprep.subr.mxu0 0.0
      %2088 = vmatpush1.msra.mxu0 0.0
      %2089 = vmatprep.subr.mxu0 0.0
      %2090 = vmatpush1.msra.mxu0 0.0
      %2091 = vmatprep.subr.mxu0 0.0
      %2092 = vmatpush1.msra.mxu0 0.0
      %2093 = vmatprep.subr.mxu0 0.0
      %2094 = vmatpush1.msra.mxu0 0.0
      %2095 = vmatprep.subr.mxu0 0.0
      %2096 = vmatpush1.msra.mxu0 0.0
      %2097 = vmatprep.subr.mxu0 0.0
      %2098 = vmatpush1.msra.mxu0 0.0
      %2099 = vmatprep.subr.mxu0 0.0
      %2100 = vmatpush1.msra.mxu0 0.0
      %2101 = vmatprep.subr.mxu0 0.0
      %2102 = vmatpush1.msra.mxu0 0.0
      %2103 = vmatprep.subr.mxu0 0.0
      %2104 = vmatpush1.msra.mxu0 0.0
      %2105 = vmatprep.subr.mxu0 0.0
      %2106 = vmatpush1.msra.mxu0 0.0
      %2107 = vmatprep.subr.mxu0 0.0
      %2108 = vmatpush1.msra.mxu0 0.0
      %2109 = vmatprep.subr.mxu0 0.0
      %2110 = vmatpush1.msra.mxu0 0.0
      %2111 = vmatprep.subr.mxu0 0.0
      %2112 = vmatpush1.msra.mxu0 0.0
      %2113 = vmatprep.subr.mxu0 0.0
      %2114 = vmatpush1.msra.mxu0 0.0
      %2115 = vmatprep.subr.mxu0 0.0
      %2116 = vmatpush1.msra.mxu0 0.0
      %2117 = vmatprep.subr.mxu0 0.0
      %2118 = vmatpush1.msra.mxu0 0.0
      %2119 = vmatprep.subr.mxu0 0.0
      %2120 = vmatpush1.msra.mxu0 0.0
      %2121 = vmatprep.subr.mxu0 0.0
      %2122 = vmatpush1.msra.mxu0 0.0
      %2123 = vmatprep.subr.mxu0 0.0
      %2124 = vmatpush1.msra.mxu0 0.0
      %2125 = vmatprep.subr.mxu0 0.0
      %2126 = vmatpush1.msra.mxu0 0.0
      %2127 = vmatprep.subr.mxu0 0.0
      %2128 = vmatpush1.msra.mxu0 0.0
      %2129 = vmatprep.subr.mxu0 0.0
      %2130 = vmatpush1.msra.mxu0 0.0
      %2131 = vmatprep.subr.mxu0 0.0
      %2132 = vmatpush1.msra.mxu0 0.0
      %2133 = vmatprep.subr.mxu0 0.0
      %2134 = vmatpush1.msra.mxu0 0.0
      %2135 = vmatprep.subr.mxu0 0.0
      %2136 = vmatpush1.msra.mxu0 0.0
      %2137 = vmatprep.subr.mxu0 0.0
      %2138 = vmatpush1.msra.mxu0 0.0
      %2139 = vmatprep.subr.mxu0 0.0
      %2140 = vmatpush1.msra.mxu0 0.0
      %2141 = vmatprep.mubr.f32.mxu0 0.0
      %2142 = vmatmul.mubr.f32.gmra.mrb[0].mxu0 %v2063
      %v2143 = vpop.f32.mrb[0].mxu0
      %v2144 = vadd.f32 0.0, %v2143
      %v2145 = vpop.f32.mrb[0].mxu0
      %2146 = vmatprep.mubr.f32.mxu0 0.0
      %2147 = vmatmul.mubr.f32.gmra.mrb[0].mxu0 %v2066
      %v2148 = vpop.f32.mrb[0].mxu0
      %v2149 = vadd.f32 0.0, %v2148
      %v2150 = vpop.f32.mrb[0].mxu0
      %2151 = vmatprep.mubr.f32.mxu0 0.0
      %2152 = vmatmul.mubr.f32.gmra.mrb[0].mxu0 %v2069
      %v2153 = vpop.f32.mrb[0].mxu0
      %v2154 = vadd.f32 0.0, %v2153
      %v2155 = vpop.f32.mrb[0].mxu0
      %2156 = vmatprep.mubr.f32.mxu0 0.0
      %2157 = vmatmul.mubr.f32.gmra.mrb[0].mxu0 %v2072
      %v2158 = vpop.f32.mrb[0].mxu0
      %v2159 = vadd.f32 0.0, %v2158
      %v2160 = vpop.f32.mrb[0].mxu0
      %2161 = vdwg.mxu0
      %v2162 = vsel %vm954, %v2029, 0.0
      %v2163 = vrot.slane %v2162, 4
      %v2164 = vadd.f32 %v2162, %v2163
      %v2165 = vrot.slane %v2164, 2
      %v2166 = vadd.f32 %v2164, %v2165
      %v2167 = vrot.slane %v2166, 1
      %v2168 = vadd.f32 %v2166, %v2167
      %v2169 = vsel %vm754, %v2029, 0
      %v2172 = vsel %vm754, %v1660, 0
      %v2175 = vsel %vm754, %v1661, 0
      %v2178 = vsel %vm754, %v1662, 0
      %v2181 = vsel %vm754, %v1663, 0
      %2183 = vmatprep.subr.mxu0 0.0
      %2184 = vmatpush1.xpose.msra.mxu0 %v2172
      %2185 = vmatprep.subr.mxu0 0.0
      %2186 = vmatpush1.xpose.msra.mxu0 %v2175
      %2187 = vmatprep.subr.mxu0 0.0
      %2188 = vmatpush1.xpose.msra.mxu0 %v2178
      %2189 = vmatprep.subr.mxu0 0.0
      %2190 = vmatpush1.xpose.msra.mxu0 %v2181
      %2191 = vmatprep.subr.mxu0 0.0
      %2192 = vmatpush1.xpose.msra.mxu0 0.0
      %2193 = vmatprep.subr.mxu0 0.0
      %2194 = vmatpush1.xpose.msra.mxu0 0.0
      %2195 = vmatprep.subr.mxu0 0.0
      %2196 = vmatpush1.xpose.msra.mxu0 0.0
      %2197 = vmatprep.subr.mxu0 0.0
      %2198 = vmatpush1.xpose.msra.mxu0 0.0
      %2199 = vmatprep.subr.mxu0 0.0
      %2200 = vmatpush1.xpose.msra.mxu0 0.0
      %2201 = vmatprep.subr.mxu0 0.0
      %2202 = vmatpush1.xpose.msra.mxu0 0.0
      %2203 = vmatprep.subr.mxu0 0.0
      %2204 = vmatpush1.xpose.msra.mxu0 0.0
      %2205 = vmatprep.subr.mxu0 0.0
      %2206 = vmatpush1.xpose.msra.mxu0 0.0
      %2207 = vmatprep.subr.mxu0 0.0
      %2208 = vmatpush1.xpose.msra.mxu0 0.0
      %2209 = vmatprep.subr.mxu0 0.0
      %2210 = vmatpush1.xpose.msra.mxu0 0.0
      %2211 = vmatprep.subr.mxu0 0.0
      %2212 = vmatpush1.xpose.msra.mxu0 0.0
      %2213 = vmatprep.subr.mxu0 0.0
      %2214 = vmatpush1.xpose.msra.mxu0 0.0
      %2215 = vmatprep.subr.mxu0 0.0
      %2216 = vmatpush1.xpose.msra.mxu0 0.0
      %2217 = vmatprep.subr.mxu0 0.0
      %2218 = vmatpush1.xpose.msra.mxu0 0.0
      %2219 = vmatprep.subr.mxu0 0.0
      %2220 = vmatpush1.xpose.msra.mxu0 0.0
      %2221 = vmatprep.subr.mxu0 0.0
      %2222 = vmatpush1.xpose.msra.mxu0 0.0
      %2223 = vmatprep.subr.mxu0 0.0
      %2224 = vmatpush1.xpose.msra.mxu0 0.0
      %2225 = vmatprep.subr.mxu0 0.0
      %2226 = vmatpush1.xpose.msra.mxu0 0.0
      %2227 = vmatprep.subr.mxu0 0.0
      %2228 = vmatpush1.xpose.msra.mxu0 0.0
      %2229 = vmatprep.subr.mxu0 0.0
      %2230 = vmatpush1.xpose.msra.mxu0 0.0
      %2231 = vmatprep.subr.mxu0 0.0
      %2232 = vmatpush1.xpose.msra.mxu0 0.0
      %2233 = vmatprep.subr.mxu0 0.0
      %2234 = vmatpush1.xpose.msra.mxu0 0.0
      %2235 = vmatprep.subr.mxu0 0.0
      %2236 = vmatpush1.xpose.msra.mxu0 0.0
      %2237 = vmatprep.subr.mxu0 0.0
      %2238 = vmatpush1.xpose.msra.mxu0 0.0
      %2239 = vmatprep.subr.mxu0 0.0
      %2240 = vmatpush1.xpose.msra.mxu0 0.0
      %2241 = vmatprep.subr.mxu0 0.0
      %2242 = vmatpush1.xpose.msra.mxu0 0.0
      %2243 = vmatprep.subr.mxu0 0.0
      %2244 = vmatpush1.xpose.msra.mxu0 0.0
      %2245 = vmatprep.subr.mxu0 0.0
      %2246 = vmatpush1.xpose.msra.mxu0 0.0
      %2247 = vmatprep.mubr.f32.mxu0 0.0
      %2248 = vmatmul.mubr.f32.gmra.mrb[0].mxu0 %v2169
      %v2249 = vpop.f32.mrb[0].mxu0
      %v2250 = vadd.f32 0.0, %v2249
      %v2251 = vpop.f32.mrb[0].mxu0
      %2252 = vdwg.mxu0
      %vm2253 = vcmp.gt.f32.partialorder %v1940, 0.0
      %v2254 = vsel %vm2253, %v2250, 0.0
      %v2256 = vsel %vm1012, %v2254, 0
      %2258 = vmatprep.subr.mxu0 0.0
      %2259 = vmatpush1.msra.mxu0 %v2256
      %2260 = vmatprep.subr.mxu0 0.0
      %2261 = vmatpush1.msra.mxu0 0.0
      %2262 = vmatprep.subr.mxu0 0.0
      %2263 = vmatpush1.msra.mxu0 0.0
      %2264 = vmatprep.subr.mxu0 0.0
      %2265 = vmatpush1.msra.mxu0 0.0
      %2266 = vmatprep.subr.mxu0 0.0
      %2267 = vmatpush1.msra.mxu0 0.0
      %2268 = vmatprep.subr.mxu0 0.0
      %2269 = vmatpush1.msra.mxu0 0.0
      %2270 = vmatprep.subr.mxu0 0.0
      %2271 = vmatpush1.msra.mxu0 0.0
      %2272 = vmatprep.subr.mxu0 0.0
      %2273 = vmatpush1.msra.mxu0 0.0
      %2274 = vmatprep.subr.mxu0 0.0
      %2275 = vmatpush1.msra.mxu0 0.0
      %2276 = vmatprep.subr.mxu0 0.0
      %2277 = vmatpush1.msra.mxu0 0.0
      %2278 = vmatprep.subr.mxu0 0.0
      %2279 = vmatpush1.msra.mxu0 0.0
      %2280 = vmatprep.subr.mxu0 0.0
      %2281 = vmatpush1.msra.mxu0 0.0
      %2282 = vmatprep.subr.mxu0 0.0
      %2283 = vmatpush1.msra.mxu0 0.0
      %2284 = vmatprep.subr.mxu0 0.0
      %2285 = vmatpush1.msra.mxu0 0.0
      %2286 = vmatprep.subr.mxu0 0.0
      %2287 = vmatpush1.msra.mxu0 0.0
      %2288 = vmatprep.subr.mxu0 0.0
      %2289 = vmatpush1.msra.mxu0 0.0
      %2290 = vmatprep.subr.mxu0 0.0
      %2291 = vmatpush1.msra.mxu0 0.0
      %2292 = vmatprep.subr.mxu0 0.0
      %2293 = vmatpush1.msra.mxu0 0.0
      %2294 = vmatprep.subr.mxu0 0.0
      %2295 = vmatpush1.msra.mxu0 0.0
      %2296 = vmatprep.subr.mxu0 0.0
      %2297 = vmatpush1.msra.mxu0 0.0
      %2298 = vmatprep.subr.mxu0 0.0
      %2299 = vmatpush1.msra.mxu0 0.0
      %2300 = vmatprep.subr.mxu0 0.0
      %2301 = vmatpush1.msra.mxu0 0.0
      %2302 = vmatprep.subr.mxu0 0.0
      %2303 = vmatpush1.msra.mxu0 0.0
      %2304 = vmatprep.subr.mxu0 0.0
      %2305 = vmatpush1.msra.mxu0 0.0
      %2306 = vmatprep.subr.mxu0 0.0
      %2307 = vmatpush1.msra.mxu0 0.0
      %2308 = vmatprep.subr.mxu0 0.0
      %2309 = vmatpush1.msra.mxu0 0.0
      %2310 = vmatprep.subr.mxu0 0.0
      %2311 = vmatpush1.msra.mxu0 0.0
      %2312 = vmatprep.subr.mxu0 0.0
      %2313 = vmatpush1.msra.mxu0 0.0
      %2314 = vmatprep.subr.mxu0 0.0
      %2315 = vmatpush1.msra.mxu0 0.0
      %2316 = vmatprep.subr.mxu0 0.0
      %2317 = vmatpush1.msra.mxu0 0.0
      %2318 = vmatprep.subr.mxu0 0.0
      %2319 = vmatpush1.msra.mxu0 0.0
      %2320 = vmatprep.subr.mxu0 0.0
      %2321 = vmatpush1.msra.mxu0 0.0
      %2322 = vmatprep.mubr.f32.mxu0 0.0
      %2323 = vmatmul.mubr.f32.gmra.mrb[0].mxu0 %v1259
      %v2324 = vpop.f32.mrb[0].mxu0
      %v2325 = vadd.f32 0.0, %v2324
      %v2326 = vpop.f32.mrb[0].mxu0
      %2327 = vmatprep.mubr.f32.mxu0 0.0
      %2328 = vmatmul.mubr.f32.gmra.mrb[0].mxu0 %v1262
      %v2329 = vpop.f32.mrb[0].mxu0
      %v2330 = vadd.f32 0.0, %v2329
      %v2331 = vpop.f32.mrb[0].mxu0
      %2332 = vmatprep.mubr.f32.mxu0 0.0
      %2333 = vmatmul.mubr.f32.gmra.mrb[0].mxu0 %v1265
      %v2334 = vpop.f32.mrb[0].mxu0
      %v2335 = vadd.f32 0.0, %v2334
      %v2336 = vpop.f32.mrb[0].mxu0
      %2337 = vmatprep.mubr.f32.mxu0 0.0
      %2338 = vmatmul.mubr.f32.gmra.mrb[0].mxu0 %v1268
      %v2339 = vpop.f32.mrb[0].mxu0
      %v2340 = vadd.f32 0.0, %v2339
      %v2341 = vpop.f32.mrb[0].mxu0
      %2342 = vmatprep.mubr.f32.mxu0 0.0
      %2343 = vmatmul.mubr.f32.gmra.mrb[0].mxu0 %v1271
      %v2344 = vpop.f32.mrb[0].mxu0
      %v2345 = vadd.f32 0.0, %v2344
      %v2346 = vpop.f32.mrb[0].mxu0
      %2347 = vmatprep.mubr.f32.mxu0 0.0
      %2348 = vmatmul.mubr.f32.gmra.mrb[0].mxu0 %v1274
      %v2349 = vpop.f32.mrb[0].mxu0
      %v2350 = vadd.f32 0.0, %v2349
      %v2351 = vpop.f32.mrb[0].mxu0
      %2352 = vmatprep.mubr.f32.mxu0 0.0
      %2353 = vmatmul.mubr.f32.gmra.mrb[0].mxu0 %v1277
      %v2354 = vpop.f32.mrb[0].mxu0
      %v2355 = vadd.f32 0.0, %v2354
      %v2356 = vpop.f32.mrb[0].mxu0
      %2357 = vmatprep.mubr.f32.mxu0 0.0
      %2358 = vmatmul.mubr.f32.gmra.mrb[0].mxu0 %v1280
      %v2359 = vpop.f32.mrb[0].mxu0
      %v2360 = vadd.f32 0.0, %v2359
      %v2361 = vpop.f32.mrb[0].mxu0
      %2362 = vmatprep.mubr.f32.mxu0 0.0
      %2363 = vmatmul.mubr.f32.gmra.mrb[0].mxu0 %v1283
      %v2364 = vpop.f32.mrb[0].mxu0
      %v2365 = vadd.f32 0.0, %v2364
      %v2366 = vpop.f32.mrb[0].mxu0
      %2367 = vmatprep.mubr.f32.mxu0 0.0
      %2368 = vmatmul.mubr.f32.gmra.mrb[0].mxu0 %v1286
      %v2369 = vpop.f32.mrb[0].mxu0
      %v2370 = vadd.f32 0.0, %v2369
      %v2371 = vpop.f32.mrb[0].mxu0
      %2372 = vmatprep.mubr.f32.mxu0 0.0
      %2373 = vmatmul.mubr.f32.gmra.mrb[0].mxu0 %v1289
      %v2374 = vpop.f32.mrb[0].mxu0
      %v2375 = vadd.f32 0.0, %v2374
      %v2376 = vpop.f32.mrb[0].mxu0
      %2377 = vmatprep.mubr.f32.mxu0 0.0
      %2378 = vmatmul.mubr.f32.gmra.mrb[0].mxu0 %v1292
      %v2379 = vpop.f32.mrb[0].mxu0
      %v2380 = vadd.f32 0.0, %v2379
      %v2381 = vpop.f32.mrb[0].mxu0
      %2382 = vmatprep.mubr.f32.mxu0 0.0
      %2383 = vmatmul.mubr.f32.gmra.mrb[0].mxu0 %v1295
      %v2384 = vpop.f32.mrb[0].mxu0
      %v2385 = vadd.f32 0.0, %v2384
      %v2386 = vpop.f32.mrb[0].mxu0
      %2387 = vmatprep.mubr.f32.mxu0 0.0
      %2388 = vmatmul.mubr.f32.gmra.mrb[0].mxu0 %v1298
      %v2389 = vpop.f32.mrb[0].mxu0
      %v2390 = vadd.f32 0.0, %v2389
      %v2391 = vpop.f32.mrb[0].mxu0
      %2392 = vmatprep.mubr.f32.mxu0 0.0
      %2393 = vmatmul.mubr.f32.gmra.mrb[0].mxu0 %v1301
      %v2394 = vpop.f32.mrb[0].mxu0
      %v2395 = vadd.f32 0.0, %v2394
      %v2396 = vpop.f32.mrb[0].mxu0
      %2397 = vmatprep.mubr.f32.mxu0 0.0
      %2398 = vmatmul.mubr.f32.gmra.mrb[0].mxu0 %v1304
      %v2399 = vpop.f32.mrb[0].mxu0
      %v2400 = vadd.f32 0.0, %v2399
      %v2401 = vpop.f32.mrb[0].mxu0
      %2402 = vmatprep.mubr.f32.mxu0 0.0
      %2403 = vmatmul.mubr.f32.gmra.mrb[0].mxu0 %v1307
      %v2404 = vpop.f32.mrb[0].mxu0
      %v2405 = vadd.f32 0.0, %v2404
      %v2406 = vpop.f32.mrb[0].mxu0
      %2407 = vmatprep.mubr.f32.mxu0 0.0
      %2408 = vmatmul.mubr.f32.gmra.mrb[0].mxu0 %v1310
      %v2409 = vpop.f32.mrb[0].mxu0
      %v2410 = vadd.f32 0.0, %v2409
      %v2411 = vpop.f32.mrb[0].mxu0
      %2412 = vmatprep.mubr.f32.mxu0 0.0
      %2413 = vmatmul.mubr.f32.gmra.mrb[0].mxu0 %v1313
      %v2414 = vpop.f32.mrb[0].mxu0
      %v2415 = vadd.f32 0.0, %v2414
      %v2416 = vpop.f32.mrb[0].mxu0
      %2417 = vmatprep.mubr.f32.mxu0 0.0
      %2418 = vmatmul.mubr.f32.gmra.mrb[0].mxu0 %v1316
      %v2419 = vpop.f32.mrb[0].mxu0
      %v2420 = vadd.f32 0.0, %v2419
      %v2421 = vpop.f32.mrb[0].mxu0
      %2422 = vmatprep.mubr.f32.mxu0 0.0
      %2423 = vmatmul.mubr.f32.gmra.mrb[0].mxu0 %v1319
      %v2424 = vpop.f32.mrb[0].mxu0
      %v2425 = vadd.f32 0.0, %v2424
      %v2426 = vpop.f32.mrb[0].mxu0
      %2427 = vmatprep.mubr.f32.mxu0 0.0
      %2428 = vmatmul.mubr.f32.gmra.mrb[0].mxu0 %v1322
      %v2429 = vpop.f32.mrb[0].mxu0
      %v2430 = vadd.f32 0.0, %v2429
      %v2431 = vpop.f32.mrb[0].mxu0
      %2432 = vmatprep.mubr.f32.mxu0 0.0
      %2433 = vmatmul.mubr.f32.gmra.mrb[0].mxu0 %v1325
      %v2434 = vpop.f32.mrb[0].mxu0
      %v2435 = vadd.f32 0.0, %v2434
      %v2436 = vpop.f32.mrb[0].mxu0
      %2437 = vmatprep.mubr.f32.mxu0 0.0
      %2438 = vmatmul.mubr.f32.gmra.mrb[0].mxu0 %v1328
      %v2439 = vpop.f32.mrb[0].mxu0
      %v2440 = vadd.f32 0.0, %v2439
      %v2441 = vpop.f32.mrb[0].mxu0
      %2442 = vmatprep.mubr.f32.mxu0 0.0
      %2443 = vmatmul.mubr.f32.gmra.mrb[0].mxu0 %v1331
      %v2444 = vpop.f32.mrb[0].mxu0
      %v2445 = vadd.f32 0.0, %v2444
      %v2446 = vpop.f32.mrb[0].mxu0
      %2447 = vmatprep.mubr.f32.mxu0 0.0
      %2448 = vmatmul.mubr.f32.gmra.mrb[0].mxu0 %v1334
      %v2449 = vpop.f32.mrb[0].mxu0
      %v2450 = vadd.f32 0.0, %v2449
      %v2451 = vpop.f32.mrb[0].mxu0
      %2452 = vmatprep.mubr.f32.mxu0 0.0
      %2453 = vmatmul.mubr.f32.gmra.mrb[0].mxu0 %v1337
      %v2454 = vpop.f32.mrb[0].mxu0
      %v2455 = vadd.f32 0.0, %v2454
      %v2456 = vpop.f32.mrb[0].mxu0
      %2457 = vmatprep.mubr.f32.mxu0 0.0
      %2458 = vmatmul.mubr.f32.gmra.mrb[0].mxu0 %v1340
      %v2459 = vpop.f32.mrb[0].mxu0
      %v2460 = vadd.f32 0.0, %v2459
      %v2461 = vpop.f32.mrb[0].mxu0
      %2462 = vmatprep.mubr.f32.mxu0 0.0
      %2463 = vmatmul.mubr.f32.gmra.mrb[0].mxu0 %v1343
      %v2464 = vpop.f32.mrb[0].mxu0
      %v2465 = vadd.f32 0.0, %v2464
      %v2466 = vpop.f32.mrb[0].mxu0
      %2467 = vmatprep.mubr.f32.mxu0 0.0
      %2468 = vmatmul.mubr.f32.gmra.mrb[0].mxu0 %v1346
      %v2469 = vpop.f32.mrb[0].mxu0
      %v2470 = vadd.f32 0.0, %v2469
      %v2471 = vpop.f32.mrb[0].mxu0
      %2472 = vmatprep.mubr.f32.mxu0 0.0
      %2473 = vmatmul.mubr.f32.gmra.mrb[0].mxu0 %v1349
      %v2474 = vpop.f32.mrb[0].mxu0
      %v2475 = vadd.f32 0.0, %v2474
      %v2476 = vpop.f32.mrb[0].mxu0
      %2477 = vmatprep.mubr.f32.mxu0 0.0
      %2478 = vmatmul.mubr.f32.gmra.mrb[0].mxu0 %v1352
      %v2479 = vpop.f32.mrb[0].mxu0
      %v2480 = vadd.f32 0.0, %v2479
      %v2481 = vpop.f32.mrb[0].mxu0
      %2482 = vdwg.mxu0
      %v2483 = vsel %vm1582, %v2254, 0.0
      %v2484 = vrot.slane %v2483, 4
      %v2485 = vadd.f32 %v2483, %v2484
      %v2486 = vrot.slane %v2485, 2
      %v2487 = vadd.f32 %v2485, %v2486
      %v2488 = vrot.slane %v2487, 1
      %v2489 = vadd.f32 %v2487, %v2488
      %v2490 = vmul.f32 %v2325, 0.04
      %v2491 = vmul.f32 %v2330, 0.04
      %v2492 = vmul.f32 %v2335, 0.04
      %v2493 = vmul.f32 %v2340, 0.04
      %v2494 = vmul.f32 %v2345, 0.04
      %v2495 = vmul.f32 %v2350, 0.04
      %v2496 = vmul.f32 %v2355, 0.04
      %v2497 = vmul.f32 %v2360, 0.04
      %v2498 = vmul.f32 %v2365, 0.04
      %v2499 = vmul.f32 %v2370, 0.04
      %v2500 = vmul.f32 %v2375, 0.04
      %v2501 = vmul.f32 %v2380, 0.04
      %v2502 = vmul.f32 %v2385, 0.04
      %v2503 = vmul.f32 %v2390, 0.04
      %v2504 = vmul.f32 %v2395, 0.04
      %v2505 = vmul.f32 %v2400, 0.04
      %v2506 = vmul.f32 %v2405, 0.04
      %v2507 = vmul.f32 %v2410, 0.04
      %v2508 = vmul.f32 %v2415, 0.04
      %v2509 = vmul.f32 %v2420, 0.04
      %v2510 = vmul.f32 %v2425, 0.04
      %v2511 = vmul.f32 %v2430, 0.04
      %v2512 = vmul.f32 %v2435, 0.04
      %v2513 = vmul.f32 %v2440, 0.04
      %v2514 = vmul.f32 %v2445, 0.04
      %v2515 = vmul.f32 %v2450, 0.04
      %v2516 = vmul.f32 %v2455, 0.04
      %v2517 = vmul.f32 %v2460, 0.04
      %v2518 = vmul.f32 %v2465, 0.04
      %v2519 = vmul.f32 %v2470, 0.04
      %v2520 = vmul.f32 %v2475, 0.04
      %v2521 = vmul.f32 %v2480, 0.04
      %v2522 = vsub.f32 %v1622, %v2490
      %v2523 = vsub.f32 %v1623, %v2491
      %v2524 = vsub.f32 %v1624, %v2492
      %v2525 = vsub.f32 %v1625, %v2493
      %v2526 = vsub.f32 %v1626, %v2494
      %v2527 = vsub.f32 %v1627, %v2495
      %v2528 = vsub.f32 %v1628, %v2496
      %v2529 = vsub.f32 %v1629, %v2497
      %v2530 = vsub.f32 %v1630, %v2498
      %v2531 = vsub.f32 %v1631, %v2499
      %v2532 = vsub.f32 %v1632, %v2500
      %v2533 = vsub.f32 %v1633, %v2501
      %v2534 = vsub.f32 %v1634, %v2502
      %v2535 = vsub.f32 %v1635, %v2503
      %v2536 = vsub.f32 %v1636, %v2504
      %v2537 = vsub.f32 %v1637, %v2505
      %v2538 = vsub.f32 %v1638, %v2506
      %v2539 = vsub.f32 %v1639, %v2507
      %v2540 = vsub.f32 %v1640, %v2508
      %v2541 = vsub.f32 %v1641, %v2509
      %v2542 = vsub.f32 %v1642, %v2510
      %v2543 = vsub.f32 %v1643, %v2511
      %v2544 = vsub.f32 %v1644, %v2512
      %v2545 = vsub.f32 %v1645, %v2513
      %v2546 = vsub.f32 %v1646, %v2514
      %v2547 = vsub.f32 %v1647, %v2515
      %v2548 = vsub.f32 %v1648, %v2516
      %v2549 = vsub.f32 %v1649, %v2517
      %v2550 = vsub.f32 %v1650, %v2518
      %v2551 = vsub.f32 %v1651, %v2519
      %v2552 = vsub.f32 %v1652, %v2520
      %v2553 = vsub.f32 %v1653, %v2521
      %v2554 = vmul.f32 %v2489, 0.04
      %v2555 = vsub.f32 %v1655, %v2554
      %v2556 = vmul.f32 %v2144, 0.04
      %v2557 = vmul.f32 %v2149, 0.04
      %v2558 = vmul.f32 %v2154, 0.04
      %v2559 = vmul.f32 %v2159, 0.04
      %v2560 = vsub.f32 %v1660, %v2556
      %v2561 = vsub.f32 %v1661, %v2557
      %v2562 = vsub.f32 %v1662, %v2558
      %v2563 = vsub.f32 %v1663, %v2559
      %v2564 = vmul.f32 %v2168, 0.04
      %v2565 = vsub.f32 %v1665, %v2564
      %v2567 = vlaneseq
      %v2568 = vshrl.u32 %v2567, 7
      %v2569 = vsub.s32 0, %v2568
      %v2570 = vrot.slane %v2555, %v2569
      %2572 = vmatprep.subr.mxu0 0.0
      %2573 = vmatpush1.msra.mxu0 %v2522
      %2574 = vmatprep.subr.mxu0 0.0
      %2575 = vmatpush1.msra.mxu0 %v2523
      %2576 = vmatprep.subr.mxu0 0.0
      %2577 = vmatpush1.msra.mxu0 %v2524
      %2578 = vmatprep.subr.mxu0 0.0
      %2579 = vmatpush1.msra.mxu0 %v2525
      %2580 = vmatprep.subr.mxu0 0.0
      %2581 = vmatpush1.msra.mxu0 %v2526
      %2582 = vmatprep.subr.mxu0 0.0
      %2583 = vmatpush1.msra.mxu0 %v2527
      %2584 = vmatprep.subr.mxu0 0.0
      %2585 = vmatpush1.msra.mxu0 %v2528
      %2586 = vmatprep.subr.mxu0 0.0
      %2587 = vmatpush1.msra.mxu0 %v2529
      %2588 = vmatprep.subr.mxu0 0.0
      %2589 = vmatpush1.msra.mxu0 %v2530
      %2590 = vmatprep.subr.mxu0 0.0
      %2591 = vmatpush1.msra.mxu0 %v2531
      %2592 = vmatprep.subr.mxu0 0.0
      %2593 = vmatpush1.msra.mxu0 %v2532
      %2594 = vmatprep.subr.mxu0 0.0
      %2595 = vmatpush1.msra.mxu0 %v2533
      %2596 = vmatprep.subr.mxu0 0.0
      %2597 = vmatpush1.msra.mxu0 %v2534
      %2598 = vmatprep.subr.mxu0 0.0
      %2599 = vmatpush1.msra.mxu0 %v2535
      %2600 = vmatprep.subr.mxu0 0.0
      %2601 = vmatpush1.msra.mxu0 %v2536
      %2602 = vmatprep.subr.mxu0 0.0
      %2603 = vmatpush1.msra.mxu0 %v2537
      %2604 = vmatprep.subr.mxu0 0.0
      %2605 = vmatpush1.msra.mxu0 %v2538
      %2606 = vmatprep.subr.mxu0 0.0
      %2607 = vmatpush1.msra.mxu0 %v2539
      %2608 = vmatprep.subr.mxu0 0.0
      %2609 = vmatpush1.msra.mxu0 %v2540
      %2610 = vmatprep.subr.mxu0 0.0
      %2611 = vmatpush1.msra.mxu0 %v2541
      %2612 = vmatprep.subr.mxu0 0.0
      %2613 = vmatpush1.msra.mxu0 %v2542
      %2614 = vmatprep.subr.mxu0 0.0
      %2615 = vmatpush1.msra.mxu0 %v2543
      %2616 = vmatprep.subr.mxu0 0.0
      %2617 = vmatpush1.msra.mxu0 %v2544
      %2618 = vmatprep.subr.mxu0 0.0
      %2619 = vmatpush1.msra.mxu0 %v2545
      %2620 = vmatprep.subr.mxu0 0.0
      %2621 = vmatpush1.msra.mxu0 %v2546
      %2622 = vmatprep.subr.mxu0 0.0
      %2623 = vmatpush1.msra.mxu0 %v2547
      %2624 = vmatprep.subr.mxu0 0.0
      %2625 = vmatpush1.msra.mxu0 %v2548
      %2626 = vmatprep.subr.mxu0 0.0
      %2627 = vmatpush1.msra.mxu0 %v2549
      %2628 = vmatprep.subr.mxu0 0.0
      %2629 = vmatpush1.msra.mxu0 %v2550
      %2630 = vmatprep.subr.mxu0 0.0
      %2631 = vmatpush1.msra.mxu0 %v2551
      %2632 = vmatprep.subr.mxu0 0.0
      %2633 = vmatpush1.msra.mxu0 %v2552
      %2634 = vmatprep.subr.mxu0 0.0
      %2635 = vmatpush1.msra.mxu0 %v2553
      %2636 = vmatprep.mubr.f32.mxu0 %v543
      %2637 = vmatmul.mubr.f32.gmra.mrb[0].mxu0 %v542
      %v2638 = vpop.f32.mrb[0].mxu0
      %v2639 = vadd.f32 %v2570, %v2638
      %v2640 = vpop.f32.mrb[0].mxu0
      %2641 = vdwg.mxu0
      %v2642 = vmax.f32 %v2639, 0.0
      %v2644 = vlaneseq
      %v2645 = vshrl.u32 %v2644, 7
      %v2646 = vsub.s32 0, %v2645
      %v2647 = vrot.slane %v2565, %v2646
      %v2650 = vsel %vm680, %v2642, 0
      %2652 = vmatprep.subr.mxu0 0.0
      %2653 = vmatpush1.msra.mxu0 %v2560
      %2654 = vmatprep.subr.mxu0 0.0
      %2655 = vmatpush1.msra.mxu0 %v2561
      %2656 = vmatprep.subr.mxu0 0.0
      %2657 = vmatpush1.msra.mxu0 %v2562
      %2658 = vmatprep.subr.mxu0 0.0
      %2659 = vmatpush1.msra.mxu0 %v2563
      %2660 = vmatprep.subr.mxu0 0.0
      %2661 = vmatpush1.msra.mxu0 0.0
      %2662 = vmatprep.subr.mxu0 0.0
      %2663 = vmatpush1.msra.mxu0 0.0
      %2664 = vmatprep.subr.mxu0 0.0
      %2665 = vmatpush1.msra.mxu0 0.0
      %2666 = vmatprep.subr.mxu0 0.0
      %2667 = vmatpush1.msra.mxu0 0.0
      %2668 = vmatprep.subr.mxu0 0.0
      %2669 = vmatpush1.msra.mxu0 0.0
      %2670 = vmatprep.subr.mxu0 0.0
      %2671 = vmatpush1.msra.mxu0 0.0
      %2672 = vmatprep.subr.mxu0 0.0
      %2673 = vmatpush1.msra.mxu0 0.0
      %2674 = vmatprep.subr.mxu0 0.0
      %2675 = vmatpush1.msra.mxu0 0.0
      %2676 = vmatprep.subr.mxu0 0.0
      %2677 = vmatpush1.msra.mxu0 0.0
      %2678 = vmatprep.subr.mxu0 0.0
      %2679 = vmatpush1.msra.mxu0 0.0
      %2680 = vmatprep.subr.mxu0 0.0
      %2681 = vmatpush1.msra.mxu0 0.0
      %2682 = vmatprep.subr.mxu0 0.0
      %2683 = vmatpush1.msra.mxu0 0.0
      %2684 = vmatprep.subr.mxu0 0.0
      %2685 = vmatpush1.msra.mxu0 0.0
      %2686 = vmatprep.subr.mxu0 0.0
      %2687 = vmatpush1.msra.mxu0 0.0
      %2688 = vmatprep.subr.mxu0 0.0
      %2689 = vmatpush1.msra.mxu0 0.0
      %2690 = vmatprep.subr.mxu0 0.0
      %2691 = vmatpush1.msra.mxu0 0.0
      %2692 = vmatprep.subr.mxu0 0.0
      %2693 = vmatpush1.msra.mxu0 0.0
      %2694 = vmatprep.subr.mxu0 0.0
      %2695 = vmatpush1.msra.mxu0 0.0
      %2696 = vmatprep.subr.mxu0 0.0
      %2697 = vmatpush1.msra.mxu0 0.0
      %2698 = vmatprep.subr.mxu0 0.0
      %2699 = vmatpush1.msra.mxu0 0.0
      %2700 = vmatprep.subr.mxu0 0.0
      %2701 = vmatpush1.msra.mxu0 0.0
      %2702 = vmatprep.subr.mxu0 0.0
      %2703 = vmatpush1.msra.mxu0 0.0
      %2704 = vmatprep.subr.mxu0 0.0
      %2705 = vmatpush1.msra.mxu0 0.0
      %2706 = vmatprep.subr.mxu0 0.0
      %2707 = vmatpush1.msra.mxu0 0.0
      %2708 = vmatprep.subr.mxu0 0.0
      %2709 = vmatpush1.msra.mxu0 0.0
      %2710 = vmatprep.subr.mxu0 0.0
      %2711 = vmatpush1.msra.mxu0 0.0
      %2712 = vmatprep.subr.mxu0 0.0
      %2713 = vmatpush1.msra.mxu0 0.0
      %2714 = vmatprep.subr.mxu0 0.0
      %2715 = vmatpush1.msra.mxu0 0.0
      %2716 = vmatprep.mubr.f32.mxu0 0.0
      %2717 = vmatmul.mubr.f32.gmra.mrb[0].mxu0 %v2650
      %v2718 = vpop.f32.mrb[0].mxu0
      %v2719 = vadd.f32 %v2647, %v2718
      %v2720 = vpop.f32.mrb[0].mxu0
      %2721 = vdwg.mxu0
      %v2722 = vsel %vm754, %v2719, -inf
      %2723 = vmax.xlane.f32.xlu0 %v2722
      %v2724 = vpop.xlane.xlu0 %2723
      %v2725 = vsub.f32 %v2719, %v2724
      %v2726 = vmul.f32 %v2725, 1.442695
      %v2727 = vpow.pop %v2726
      %v2728 = vsel %vm754, %v2727, 0.0
      %2729 = vadd.xlane.f32.xlu0 %v2728
      %v2730 = vpop.xlane.xlu0 %2729
      %v2731 = vlog2.pop %v2730
      %v2732 = vmul.f32 %v2731, 0.6931472
      %v2733 = vadd.f32 %v2732, %v2724
      %v2734 = vmul.f32 %v596, %v2719
      %v2735 = vsel %vm754, %v2734, 0.0
      %2736 = vadd.xlane.f32.xlu0 %v2735
      %v2737 = vpop.xlane.xlu0 %2736
      %v2738 = vsub.f32 %v2733, %v2737
      %v2739 = vrot.slane %v2738, 4
      %v2740 = vadd.f32 %v2738, %v2739
      %v2741 = vrot.slane %v2740, 2
      %v2742 = vadd.f32 %v2740, %v2741
      %v2743 = vrot.slane %v2742, 1
      %v2744 = vadd.f32 %v2742, %v2743
      %v2745 = vmul.f32 %v2744, 0.125
      %vm2746 = vcmp.eq.f32.partialorder %v2719, %v2724
      %v2747 = vsel %vm2746, %v584, 4
      %v2748 = vsel %vm754, %v2747, 2147483647
      %v2749 = vand.u32 %v2748, 65535
      %v2750 = vshra.s32 %v2748, 16
      %v2751 = vcvt.s32.f32 %v2749
      %v2752 = vcvt.s32.f32 %v2750
      %2753 = vmin.xlane.f32.xlu0 %v2752
      %v2754 = vpop.xlane.xlu0 %2753
      %vm2755 = vcmp.eq.f32.partialorder %v2752, %v2754
      %v2756 = vsel %vm2755, %v2751, inf
      %2757 = vmin.xlane.f32.xlu0 %v2756
      %v2758 = vpop.xlane.xlu0 %2757
      %v2759 = vcvt.f32.s32 %v2758
      %v2760 = vcvt.f32.s32 %v2754
      %v2761 = vshll.u32 %v2760, 16
      %v2762 = vadd.s32 %v2761, %v2759
      %vm2763 = vcmp.eq.s32.totalorder %v2762, %v544
      %v2764 = vsel %vm2763, 1, 0
      %v2765 = vcvt.s32.f32 %v2764
      %v2766 = vsel %vm799, %v2765, 0.0
      %v2767 = vrot.slane %v2766, 4
      %v2768 = vadd.f32 %v2766, %v2767
      %v2769 = vrot.slane %v2768, 2
      %v2770 = vadd.f32 %v2768, %v2769
      %v2771 = vrot.slane %v2770, 1
      %v2772 = vadd.f32 %v2770, %v2771
      %2773 = vmatprep.subr.mxu0 0.0
      %2774 = vmatpush1.msra.mxu0 %v2522
      %2775 = vmatprep.subr.mxu0 0.0
      %2776 = vmatpush1.msra.mxu0 %v2523
      %2777 = vmatprep.subr.mxu0 0.0
      %2778 = vmatpush1.msra.mxu0 %v2524
      %2779 = vmatprep.subr.mxu0 0.0
      %2780 = vmatpush1.msra.mxu0 %v2525
      %2781 = vmatprep.subr.mxu0 0.0
      %2782 = vmatpush1.msra.mxu0 %v2526
      %2783 = vmatprep.subr.mxu0 0.0
      %2784 = vmatpush1.msra.mxu0 %v2527
      %2785 = vmatprep.subr.mxu0 0.0
      %2786 = vmatpush1.msra.mxu0 %v2528
      %2787 = vmatprep.subr.mxu0 0.0
      %2788 = vmatpush1.msra.mxu0 %v2529
      %2789 = vmatprep.subr.mxu0 0.0
      %2790 = vmatpush1.msra.mxu0 %v2530
      %2791 = vmatprep.subr.mxu0 0.0
      %2792 = vmatpush1.msra.mxu0 %v2531
      %2793 = vmatprep.subr.mxu0 0.0
      %2794 = vmatpush1.msra.mxu0 %v2532
      %2795 = vmatprep.subr.mxu0 0.0
      %2796 = vmatpush1.msra.mxu0 %v2533
      %2797 = vmatprep.subr.mxu0 0.0
      %2798 = vmatpush1.msra.mxu0 %v2534
      %2799 = vmatprep.subr.mxu0 0.0
      %2800 = vmatpush1.msra.mxu0 %v2535
      %2801 = vmatprep.subr.mxu0 0.0
      %2802 = vmatpush1.msra.mxu0 %v2536
      %2803 = vmatprep.subr.mxu0 0.0
      %2804 = vmatpush1.msra.mxu0 %v2537
      %2805 = vmatprep.subr.mxu0 0.0
      %2806 = vmatpush1.msra.mxu0 %v2538
      %2807 = vmatprep.subr.mxu0 0.0
      %2808 = vmatpush1.msra.mxu0 %v2539
      %2809 = vmatprep.subr.mxu0 0.0
      %2810 = vmatpush1.msra.mxu0 %v2540
      %2811 = vmatprep.subr.mxu0 0.0
      %2812 = vmatpush1.msra.mxu0 %v2541
      %2813 = vmatprep.subr.mxu0 0.0
      %2814 = vmatpush1.msra.mxu0 %v2542
      %2815 = vmatprep.subr.mxu0 0.0
      %2816 = vmatpush1.msra.mxu0 %v2543
      %2817 = vmatprep.subr.mxu0 0.0
      %2818 = vmatpush1.msra.mxu0 %v2544
      %2819 = vmatprep.subr.mxu0 0.0
      %2820 = vmatpush1.msra.mxu0 %v2545
      %2821 = vmatprep.subr.mxu0 0.0
      %2822 = vmatpush1.msra.mxu0 %v2546
      %2823 = vmatprep.subr.mxu0 0.0
      %2824 = vmatpush1.msra.mxu0 %v2547
      %2825 = vmatprep.subr.mxu0 0.0
      %2826 = vmatpush1.msra.mxu0 %v2548
      %2827 = vmatprep.subr.mxu0 0.0
      %2828 = vmatpush1.msra.mxu0 %v2549
      %2829 = vmatprep.subr.mxu0 0.0
      %2830 = vmatpush1.msra.mxu0 %v2550
      %2831 = vmatprep.subr.mxu0 0.0
      %2832 = vmatpush1.msra.mxu0 %v2551
      %2833 = vmatprep.subr.mxu0 0.0
      %2834 = vmatpush1.msra.mxu0 %v2552
      %2835 = vmatprep.subr.mxu0 0.0
      %2836 = vmatpush1.msra.mxu0 %v2553
      %2837 = vmatprep.mubr.f32.mxu0 %v808
      %2838 = vmatmul.mubr.f32.gmra.mrb[0].mxu0 %v540
      %v2839 = vpop.f32.mrb[0].mxu0
      %v2840 = vadd.f32 %v2570, %v2839
      %v2841 = vpop.f32.mrb[0].mxu0
      %2842 = vdwg.mxu0
      %v2843 = vmax.f32 %v2840, 0.0
      %v2845 = vsel %vm680, %v2843, 0
      %2847 = vmatprep.subr.mxu0 0.0
      %2848 = vmatpush1.msra.mxu0 %v2560
      %2849 = vmatprep.subr.mxu0 0.0
      %2850 = vmatpush1.msra.mxu0 %v2561
      %2851 = vmatprep.subr.mxu0 0.0
      %2852 = vmatpush1.msra.mxu0 %v2562
      %2853 = vmatprep.subr.mxu0 0.0
      %2854 = vmatpush1.msra.mxu0 %v2563
      %2855 = vmatprep.subr.mxu0 0.0
      %2856 = vmatpush1.msra.mxu0 0.0
      %2857 = vmatprep.subr.mxu0 0.0
      %2858 = vmatpush1.msra.mxu0 0.0
      %2859 = vmatprep.subr.mxu0 0.0
      %2860 = vmatpush1.msra.mxu0 0.0
      %2861 = vmatprep.subr.mxu0 0.0
      %2862 = vmatpush1.msra.mxu0 0.0
      %2863 = vmatprep.subr.mxu0 0.0
      %2864 = vmatpush1.msra.mxu0 0.0
      %2865 = vmatprep.subr.mxu0 0.0
      %2866 = vmatpush1.msra.mxu0 0.0
      %2867 = vmatprep.subr.mxu0 0.0
      %2868 = vmatpush1.msra.mxu0 0.0
      %2869 = vmatprep.subr.mxu0 0.0
      %2870 = vmatpush1.msra.mxu0 0.0
      %2871 = vmatprep.subr.mxu0 0.0
      %2872 = vmatpush1.msra.mxu0 0.0
      %2873 = vmatprep.subr.mxu0 0.0
      %2874 = vmatpush1.msra.mxu0 0.0
      %2875 = vmatprep.subr.mxu0 0.0
      %2876 = vmatpush1.msra.mxu0 0.0
      %2877 = vmatprep.subr.mxu0 0.0
      %2878 = vmatpush1.msra.mxu0 0.0
      %2879 = vmatprep.subr.mxu0 0.0
      %2880 = vmatpush1.msra.mxu0 0.0
      %2881 = vmatprep.subr.mxu0 0.0
      %2882 = vmatpush1.msra.mxu0 0.0
      %2883 = vmatprep.subr.mxu0 0.0
      %2884 = vmatpush1.msra.mxu0 0.0
      %2885 = vmatprep.subr.mxu0 0.0
      %2886 = vmatpush1.msra.mxu0 0.0
      %2887 = vmatprep.subr.mxu0 0.0
      %2888 = vmatpush1.msra.mxu0 0.0
      %2889 = vmatprep.subr.mxu0 0.0
      %2890 = vmatpush1.msra.mxu0 0.0
      %2891 = vmatprep.subr.mxu0 0.0
      %2892 = vmatpush1.msra.mxu0 0.0
      %2893 = vmatprep.subr.mxu0 0.0
      %2894 = vmatpush1.msra.mxu0 0.0
      %2895 = vmatprep.subr.mxu0 0.0
      %2896 = vmatpush1.msra.mxu0 0.0
      %2897 = vmatprep.subr.mxu0 0.0
      %2898 = vmatpush1.msra.mxu0 0.0
      %2899 = vmatprep.subr.mxu0 0.0
      %2900 = vmatpush1.msra.mxu0 0.0
      %2901 = vmatprep.subr.mxu0 0.0
      %2902 = vmatpush1.msra.mxu0 0.0
      %2903 = vmatprep.subr.mxu0 0.0
      %2904 = vmatpush1.msra.mxu0 0.0
      %2905 = vmatprep.subr.mxu0 0.0
      %2906 = vmatpush1.msra.mxu0 0.0
      %2907 = vmatprep.subr.mxu0 0.0
      %2908 = vmatpush1.msra.mxu0 0.0
      %2909 = vmatprep.subr.mxu0 0.0
      %2910 = vmatpush1.msra.mxu0 0.0
      %2911 = vmatprep.mubr.f32.mxu0 0.0
      %2912 = vmatmul.mubr.f32.gmra.mrb[0].mxu0 %v2845
      %v2913 = vpop.f32.mrb[0].mxu0
      %v2914 = vadd.f32 %v2647, %v2913
      %v2915 = vpop.f32.mrb[0].mxu0
      %2916 = vdwg.mxu0
      %v2917 = vsel %vm954, %v2914, -inf
      %2918 = vmax.xlane.f32.xlu0 %v2917
      %v2919 = vpop.xlane.xlu0 %2918
      %v2920 = vsub.f32 %v2914, %v2919
      %v2921 = vmul.f32 %v2920, 1.442695
      %v2922 = vpow.pop %v2921
      %v2923 = vsel %vm954, %v2922, 0.0
      %2924 = vadd.xlane.f32.xlu0 %v2923
      %v2925 = vpop.xlane.xlu0 %2924
      %v2926 = vrcp.pop %v2925
      %v2927 = vmul.f32 %v2922, %v2926
      %v2928 = vsub.f32 %v2927, %v590
      %v2929 = vmul.f32 %v2928, 0.25
      %2930 = vxpose.xlu0.b32.start [1/16] %v2843, 128
      %2931 = vxpose.xlu0.b32.cont [2/16] 0.0, 128
      %2932 = vxpose.xlu0.b32.cont [3/16] 0.0, 128
      %2933 = vxpose.xlu0.b32.cont [4/16] 0.0, 128
      %2934 = vxpose.xlu0.b32.cont [5/16] 0.0, 128
      %2935 = vxpose.xlu0.b32.cont [6/16] 0.0, 128
      %2936 = vxpose.xlu0.b32.cont [7/16] 0.0, 128
      %2937 = vxpose.xlu0.b32.cont [8/16] 0.0, 128
      %2938 = vxpose.xlu0.b32.cont [9/16] 0.0, 128
      %2939 = vxpose.xlu0.b32.cont [10/16] 0.0, 128
      %2940 = vxpose.xlu0.b32.cont [11/16] 0.0, 128
      %2941 = vxpose.xlu0.b32.cont [12/16] 0.0, 128
      %2942 = vxpose.xlu0.b32.cont [13/16] 0.0, 128
      %2943 = vxpose.xlu0.b32.cont [14/16] 0.0, 128
      %2944 = vxpose.xlu0.b32.cont [15/16] 0.0, 128
      %2945 = vxpose.xlu0.b32.end [16/16] 0.0, 128
      %v2946 = vpop.trf.xlu0
      %v2947 = vpop.trf.xlu0
      %v2948 = vpop.trf.xlu0
      %v2949 = vpop.trf.xlu0
      %v2950 = vpop.trf.xlu0
      %v2951 = vpop.trf.xlu0
      %v2952 = vpop.trf.xlu0
      %v2953 = vpop.trf.xlu0
      %v2954 = vpop.trf.xlu0
      %v2955 = vpop.trf.xlu0
      %v2956 = vpop.trf.xlu0
      %v2957 = vpop.trf.xlu0
      %v2958 = vpop.trf.xlu0
      %v2959 = vpop.trf.xlu0
      %v2960 = vpop.trf.xlu0
      %v2961 = vpop.trf.xlu0
      %v2963 = vsel %vm754, %v2946, 0
      %v2966 = vsel %vm754, %v2947, 0
      %v2969 = vsel %vm754, %v2948, 0
      %v2972 = vsel %vm754, %v2949, 0
      %v2975 = vsel %vm1012, %v2929, 0
      %2977 = vmatprep.subr.mxu0 0.0
      %2978 = vmatpush1.msra.mxu0 %v2975
      %2979 = vmatprep.subr.mxu0 0.0
      %2980 = vmatpush1.msra.mxu0 0.0
      %2981 = vmatprep.subr.mxu0 0.0
      %2982 = vmatpush1.msra.mxu0 0.0
      %2983 = vmatprep.subr.mxu0 0.0
      %2984 = vmatpush1.msra.mxu0 0.0
      %2985 = vmatprep.subr.mxu0 0.0
      %2986 = vmatpush1.msra.mxu0 0.0
      %2987 = vmatprep.subr.mxu0 0.0
      %2988 = vmatpush1.msra.mxu0 0.0
      %2989 = vmatprep.subr.mxu0 0.0
      %2990 = vmatpush1.msra.mxu0 0.0
      %2991 = vmatprep.subr.mxu0 0.0
      %2992 = vmatpush1.msra.mxu0 0.0
      %2993 = vmatprep.subr.mxu0 0.0
      %2994 = vmatpush1.msra.mxu0 0.0
      %2995 = vmatprep.subr.mxu0 0.0
      %2996 = vmatpush1.msra.mxu0 0.0
      %2997 = vmatprep.subr.mxu0 0.0
      %2998 = vmatpush1.msra.mxu0 0.0
      %2999 = vmatprep.subr.mxu0 0.0
      %3000 = vmatpush1.msra.mxu0 0.0
      %3001 = vmatprep.subr.mxu0 0.0
      %3002 = vmatpush1.msra.mxu0 0.0
      %3003 = vmatprep.subr.mxu0 0.0
      %3004 = vmatpush1.msra.mxu0 0.0
      %3005 = vmatprep.subr.mxu0 0.0
      %3006 = vmatpush1.msra.mxu0 0.0
      %3007 = vmatprep.subr.mxu0 0.0
      %3008 = vmatpush1.msra.mxu0 0.0
      %3009 = vmatprep.subr.mxu0 0.0
      %3010 = vmatpush1.msra.mxu0 0.0
      %3011 = vmatprep.subr.mxu0 0.0
      %3012 = vmatpush1.msra.mxu0 0.0
      %3013 = vmatprep.subr.mxu0 0.0
      %3014 = vmatpush1.msra.mxu0 0.0
      %3015 = vmatprep.subr.mxu0 0.0
      %3016 = vmatpush1.msra.mxu0 0.0
      %3017 = vmatprep.subr.mxu0 0.0
      %3018 = vmatpush1.msra.mxu0 0.0
      %3019 = vmatprep.subr.mxu0 0.0
      %3020 = vmatpush1.msra.mxu0 0.0
      %3021 = vmatprep.subr.mxu0 0.0
      %3022 = vmatpush1.msra.mxu0 0.0
      %3023 = vmatprep.subr.mxu0 0.0
      %3024 = vmatpush1.msra.mxu0 0.0
      %3025 = vmatprep.subr.mxu0 0.0
      %3026 = vmatpush1.msra.mxu0 0.0
      %3027 = vmatprep.subr.mxu0 0.0
      %3028 = vmatpush1.msra.mxu0 0.0
      %3029 = vmatprep.subr.mxu0 0.0
      %3030 = vmatpush1.msra.mxu0 0.0
      %3031 = vmatprep.subr.mxu0 0.0
      %3032 = vmatpush1.msra.mxu0 0.0
      %3033 = vmatprep.subr.mxu0 0.0
      %3034 = vmatpush1.msra.mxu0 0.0
      %3035 = vmatprep.subr.mxu0 0.0
      %3036 = vmatpush1.msra.mxu0 0.0
      %3037 = vmatprep.subr.mxu0 0.0
      %3038 = vmatpush1.msra.mxu0 0.0
      %3039 = vmatprep.subr.mxu0 0.0
      %3040 = vmatpush1.msra.mxu0 0.0
      %3041 = vmatprep.mubr.f32.mxu0 0.0
      %3042 = vmatmul.mubr.f32.gmra.mrb[0].mxu0 %v2963
      %v3043 = vpop.f32.mrb[0].mxu0
      %v3044 = vadd.f32 0.0, %v3043
      %v3045 = vpop.f32.mrb[0].mxu0
      %3046 = vmatprep.mubr.f32.mxu0 0.0
      %3047 = vmatmul.mubr.f32.gmra.mrb[0].mxu0 %v2966
      %v3048 = vpop.f32.mrb[0].mxu0
      %v3049 = vadd.f32 0.0, %v3048
      %v3050 = vpop.f32.mrb[0].mxu0
      %3051 = vmatprep.mubr.f32.mxu0 0.0
      %3052 = vmatmul.mubr.f32.gmra.mrb[0].mxu0 %v2969
      %v3053 = vpop.f32.mrb[0].mxu0
      %v3054 = vadd.f32 0.0, %v3053
      %v3055 = vpop.f32.mrb[0].mxu0
      %3056 = vmatprep.mubr.f32.mxu0 0.0
      %3057 = vmatmul.mubr.f32.gmra.mrb[0].mxu0 %v2972
      %v3058 = vpop.f32.mrb[0].mxu0
      %v3059 = vadd.f32 0.0, %v3058
      %v3060 = vpop.f32.mrb[0].mxu0
      %3061 = vdwg.mxu0
      %v3062 = vsel %vm954, %v2929, 0.0
      %v3063 = vrot.slane %v3062, 4
      %v3064 = vadd.f32 %v3062, %v3063
      %v3065 = vrot.slane %v3064, 2
      %v3066 = vadd.f32 %v3064, %v3065
      %v3067 = vrot.slane %v3066, 1
      %v3068 = vadd.f32 %v3066, %v3067
      %v3069 = vsel %vm754, %v2929, 0
      %v3072 = vsel %vm754, %v2560, 0
      %v3075 = vsel %vm754, %v2561, 0
      %v3078 = vsel %vm754, %v2562, 0
      %v3081 = vsel %vm754, %v2563, 0
      %3083 = vmatprep.subr.mxu0 0.0
      %3084 = vmatpush1.xpose.msra.mxu0 %v3072
      %3085 = vmatprep.subr.mxu0 0.0
      %3086 = vmatpush1.xpose.msra.mxu0 %v3075
      %3087 = vmatprep.subr.mxu0 0.0
      %3088 = vmatpush1.xpose.msra.mxu0 %v3078
      %3089 = vmatprep.subr.mxu0 0.0
      %3090 = vmatpush1.xpose.msra.mxu0 %v3081
      %3091 = vmatprep.subr.mxu0 0.0
      %3092 = vmatpush1.xpose.msra.mxu0 0.0
      %3093 = vmatprep.subr.mxu0 0.0
      %3094 = vmatpush1.xpose.msra.mxu0 0.0
      %3095 = vmatprep.subr.mxu0 0.0
      %3096 = vmatpush1.xpose.msra.mxu0 0.0
      %3097 = vmatprep.subr.mxu0 0.0
      %3098 = vmatpush1.xpose.msra.mxu0 0.0
      %3099 = vmatprep.subr.mxu0 0.0
      %3100 = vmatpush1.xpose.msra.mxu0 0.0
      %3101 = vmatprep.subr.mxu0 0.0
      %3102 = vmatpush1.xpose.msra.mxu0 0.0
      %3103 = vmatprep.subr.mxu0 0.0
      %3104 = vmatpush1.xpose.msra.mxu0 0.0
      %3105 = vmatprep.subr.mxu0 0.0
      %3106 = vmatpush1.xpose.msra.mxu0 0.0
      %3107 = vmatprep.subr.mxu0 0.0
      %3108 = vmatpush1.xpose.msra.mxu0 0.0
      %3109 = vmatprep.subr.mxu0 0.0
      %3110 = vmatpush1.xpose.msra.mxu0 0.0
      %3111 = vmatprep.subr.mxu0 0.0
      %3112 = vmatpush1.xpose.msra.mxu0 0.0
      %3113 = vmatprep.subr.mxu0 0.0
      %3114 = vmatpush1.xpose.msra.mxu0 0.0
      %3115 = vmatprep.subr.mxu0 0.0
      %3116 = vmatpush1.xpose.msra.mxu0 0.0
      %3117 = vmatprep.subr.mxu0 0.0
      %3118 = vmatpush1.xpose.msra.mxu0 0.0
      %3119 = vmatprep.subr.mxu0 0.0
      %3120 = vmatpush1.xpose.msra.mxu0 0.0
      %3121 = vmatprep.subr.mxu0 0.0
      %3122 = vmatpush1.xpose.msra.mxu0 0.0
      %3123 = vmatprep.subr.mxu0 0.0
      %3124 = vmatpush1.xpose.msra.mxu0 0.0
      %3125 = vmatprep.subr.mxu0 0.0
      %3126 = vmatpush1.xpose.msra.mxu0 0.0
      %3127 = vmatprep.subr.mxu0 0.0
      %3128 = vmatpush1.xpose.msra.mxu0 0.0
      %3129 = vmatprep.subr.mxu0 0.0
      %3130 = vmatpush1.xpose.msra.mxu0 0.0
      %3131 = vmatprep.subr.mxu0 0.0
      %3132 = vmatpush1.xpose.msra.mxu0 0.0
      %3133 = vmatprep.subr.mxu0 0.0
      %3134 = vmatpush1.xpose.msra.mxu0 0.0
      %3135 = vmatprep.subr.mxu0 0.0
      %3136 = vmatpush1.xpose.msra.mxu0 0.0
      %3137 = vmatprep.subr.mxu0 0.0
      %3138 = vmatpush1.xpose.msra.mxu0 0.0
      %3139 = vmatprep.subr.mxu0 0.0
      %3140 = vmatpush1.xpose.msra.mxu0 0.0
      %3141 = vmatprep.subr.mxu0 0.0
      %3142 = vmatpush1.xpose.msra.mxu0 0.0
      %3143 = vmatprep.subr.mxu0 0.0
      %3144 = vmatpush1.xpose.msra.mxu0 0.0
      %3145 = vmatprep.subr.mxu0 0.0
      %3146 = vmatpush1.xpose.msra.mxu0 0.0
      %3147 = vmatprep.mubr.f32.mxu0 0.0
      %3148 = vmatmul.mubr.f32.gmra.mrb[0].mxu0 %v3069
      %v3149 = vpop.f32.mrb[0].mxu0
      %v3150 = vadd.f32 0.0, %v3149
      %v3151 = vpop.f32.mrb[0].mxu0
      %3152 = vdwg.mxu0
      %vm3153 = vcmp.gt.f32.partialorder %v2840, 0.0
      %v3154 = vsel %vm3153, %v3150, 0.0
      %v3156 = vsel %vm1012, %v3154, 0
      %3158 = vmatprep.subr.mxu0 0.0
      %3159 = vmatpush1.msra.mxu0 %v3156
      %3160 = vmatprep.subr.mxu0 0.0
      %3161 = vmatpush1.msra.mxu0 0.0
      %3162 = vmatprep.subr.mxu0 0.0
      %3163 = vmatpush1.msra.mxu0 0.0
      %3164 = vmatprep.subr.mxu0 0.0
      %3165 = vmatpush1.msra.mxu0 0.0
      %3166 = vmatprep.subr.mxu0 0.0
      %3167 = vmatpush1.msra.mxu0 0.0
      %3168 = vmatprep.subr.mxu0 0.0
      %3169 = vmatpush1.msra.mxu0 0.0
      %3170 = vmatprep.subr.mxu0 0.0
      %3171 = vmatpush1.msra.mxu0 0.0
      %3172 = vmatprep.subr.mxu0 0.0
      %3173 = vmatpush1.msra.mxu0 0.0
      %3174 = vmatprep.subr.mxu0 0.0
      %3175 = vmatpush1.msra.mxu0 0.0
      %3176 = vmatprep.subr.mxu0 0.0
      %3177 = vmatpush1.msra.mxu0 0.0
      %3178 = vmatprep.subr.mxu0 0.0
      %3179 = vmatpush1.msra.mxu0 0.0
      %3180 = vmatprep.subr.mxu0 0.0
      %3181 = vmatpush1.msra.mxu0 0.0
      %3182 = vmatprep.subr.mxu0 0.0
      %3183 = vmatpush1.msra.mxu0 0.0
      %3184 = vmatprep.subr.mxu0 0.0
      %3185 = vmatpush1.msra.mxu0 0.0
      %3186 = vmatprep.subr.mxu0 0.0
      %3187 = vmatpush1.msra.mxu0 0.0
      %3188 = vmatprep.subr.mxu0 0.0
      %3189 = vmatpush1.msra.mxu0 0.0
      %3190 = vmatprep.subr.mxu0 0.0
      %3191 = vmatpush1.msra.mxu0 0.0
      %3192 = vmatprep.subr.mxu0 0.0
      %3193 = vmatpush1.msra.mxu0 0.0
      %3194 = vmatprep.subr.mxu0 0.0
      %3195 = vmatpush1.msra.mxu0 0.0
      %3196 = vmatprep.subr.mxu0 0.0
      %3197 = vmatpush1.msra.mxu0 0.0
      %3198 = vmatprep.subr.mxu0 0.0
      %3199 = vmatpush1.msra.mxu0 0.0
      %3200 = vmatprep.subr.mxu0 0.0
      %3201 = vmatpush1.msra.mxu0 0.0
      %3202 = vmatprep.subr.mxu0 0.0
      %3203 = vmatpush1.msra.mxu0 0.0
      %3204 = vmatprep.subr.mxu0 0.0
      %3205 = vmatpush1.msra.mxu0 0.0
      %3206 = vmatprep.subr.mxu0 0.0
      %3207 = vmatpush1.msra.mxu0 0.0
      %3208 = vmatprep.subr.mxu0 0.0
      %3209 = vmatpush1.msra.mxu0 0.0
      %3210 = vmatprep.subr.mxu0 0.0
      %3211 = vmatpush1.msra.mxu0 0.0
      %3212 = vmatprep.subr.mxu0 0.0
      %3213 = vmatpush1.msra.mxu0 0.0
      %3214 = vmatprep.subr.mxu0 0.0
      %3215 = vmatpush1.msra.mxu0 0.0
      %3216 = vmatprep.subr.mxu0 0.0
      %3217 = vmatpush1.msra.mxu0 0.0
      %3218 = vmatprep.subr.mxu0 0.0
      %3219 = vmatpush1.msra.mxu0 0.0
      %3220 = vmatprep.subr.mxu0 0.0
      %3221 = vmatpush1.msra.mxu0 0.0
      %3222 = vmatprep.mubr.f32.mxu0 0.0
      %3223 = vmatmul.mubr.f32.gmra.mrb[0].mxu0 %v1259
      %v3224 = vpop.f32.mrb[0].mxu0
      %v3225 = vadd.f32 0.0, %v3224
      %v3226 = vpop.f32.mrb[0].mxu0
      %3227 = vmatprep.mubr.f32.mxu0 0.0
      %3228 = vmatmul.mubr.f32.gmra.mrb[0].mxu0 %v1262
      %v3229 = vpop.f32.mrb[0].mxu0
      %v3230 = vadd.f32 0.0, %v3229
      %v3231 = vpop.f32.mrb[0].mxu0
      %3232 = vmatprep.mubr.f32.mxu0 0.0
      %3233 = vmatmul.mubr.f32.gmra.mrb[0].mxu0 %v1265
      %v3234 = vpop.f32.mrb[0].mxu0
      %v3235 = vadd.f32 0.0, %v3234
      %v3236 = vpop.f32.mrb[0].mxu0
      %3237 = vmatprep.mubr.f32.mxu0 0.0
      %3238 = vmatmul.mubr.f32.gmra.mrb[0].mxu0 %v1268
      %v3239 = vpop.f32.mrb[0].mxu0
      %v3240 = vadd.f32 0.0, %v3239
      %v3241 = vpop.f32.mrb[0].mxu0
      %3242 = vmatprep.mubr.f32.mxu0 0.0
      %3243 = vmatmul.mubr.f32.gmra.mrb[0].mxu0 %v1271
      %v3244 = vpop.f32.mrb[0].mxu0
      %v3245 = vadd.f32 0.0, %v3244
      %v3246 = vpop.f32.mrb[0].mxu0
      %3247 = vmatprep.mubr.f32.mxu0 0.0
      %3248 = vmatmul.mubr.f32.gmra.mrb[0].mxu0 %v1274
      %v3249 = vpop.f32.mrb[0].mxu0
      %v3250 = vadd.f32 0.0, %v3249
      %v3251 = vpop.f32.mrb[0].mxu0
      %3252 = vmatprep.mubr.f32.mxu0 0.0
      %3253 = vmatmul.mubr.f32.gmra.mrb[0].mxu0 %v1277
      %v3254 = vpop.f32.mrb[0].mxu0
      %v3255 = vadd.f32 0.0, %v3254
      %v3256 = vpop.f32.mrb[0].mxu0
      %3257 = vmatprep.mubr.f32.mxu0 0.0
      %3258 = vmatmul.mubr.f32.gmra.mrb[0].mxu0 %v1280
      %v3259 = vpop.f32.mrb[0].mxu0
      %v3260 = vadd.f32 0.0, %v3259
      %v3261 = vpop.f32.mrb[0].mxu0
      %3262 = vmatprep.mubr.f32.mxu0 0.0
      %3263 = vmatmul.mubr.f32.gmra.mrb[0].mxu0 %v1283
      %v3264 = vpop.f32.mrb[0].mxu0
      %v3265 = vadd.f32 0.0, %v3264
      %v3266 = vpop.f32.mrb[0].mxu0
      %3267 = vmatprep.mubr.f32.mxu0 0.0
      %3268 = vmatmul.mubr.f32.gmra.mrb[0].mxu0 %v1286
      %v3269 = vpop.f32.mrb[0].mxu0
      %v3270 = vadd.f32 0.0, %v3269
      %v3271 = vpop.f32.mrb[0].mxu0
      %3272 = vmatprep.mubr.f32.mxu0 0.0
      %3273 = vmatmul.mubr.f32.gmra.mrb[0].mxu0 %v1289
      %v3274 = vpop.f32.mrb[0].mxu0
      %v3275 = vadd.f32 0.0, %v3274
      %v3276 = vpop.f32.mrb[0].mxu0
      %3277 = vmatprep.mubr.f32.mxu0 0.0
      %3278 = vmatmul.mubr.f32.gmra.mrb[0].mxu0 %v1292
      %v3279 = vpop.f32.mrb[0].mxu0
      %v3280 = vadd.f32 0.0, %v3279
      %v3281 = vpop.f32.mrb[0].mxu0
      %3282 = vmatprep.mubr.f32.mxu0 0.0
      %3283 = vmatmul.mubr.f32.gmra.mrb[0].mxu0 %v1295
      %v3284 = vpop.f32.mrb[0].mxu0
      %v3285 = vadd.f32 0.0, %v3284
      %v3286 = vpop.f32.mrb[0].mxu0
      %3287 = vmatprep.mubr.f32.mxu0 0.0
      %3288 = vmatmul.mubr.f32.gmra.mrb[0].mxu0 %v1298
      %v3289 = vpop.f32.mrb[0].mxu0
      %v3290 = vadd.f32 0.0, %v3289
      %v3291 = vpop.f32.mrb[0].mxu0
      %3292 = vmatprep.mubr.f32.mxu0 0.0
      %3293 = vmatmul.mubr.f32.gmra.mrb[0].mxu0 %v1301
      %v3294 = vpop.f32.mrb[0].mxu0
      %v3295 = vadd.f32 0.0, %v3294
      %v3296 = vpop.f32.mrb[0].mxu0
      %3297 = vmatprep.mubr.f32.mxu0 0.0
      %3298 = vmatmul.mubr.f32.gmra.mrb[0].mxu0 %v1304
      %v3299 = vpop.f32.mrb[0].mxu0
      %v3300 = vadd.f32 0.0, %v3299
      %v3301 = vpop.f32.mrb[0].mxu0
      %3302 = vmatprep.mubr.f32.mxu0 0.0
      %3303 = vmatmul.mubr.f32.gmra.mrb[0].mxu0 %v1307
      %v3304 = vpop.f32.mrb[0].mxu0
      %v3305 = vadd.f32 0.0, %v3304
      %v3306 = vpop.f32.mrb[0].mxu0
      %3307 = vmatprep.mubr.f32.mxu0 0.0
      %3308 = vmatmul.mubr.f32.gmra.mrb[0].mxu0 %v1310
      %v3309 = vpop.f32.mrb[0].mxu0
      %v3310 = vadd.f32 0.0, %v3309
      %v3311 = vpop.f32.mrb[0].mxu0
      %3312 = vmatprep.mubr.f32.mxu0 0.0
      %3313 = vmatmul.mubr.f32.gmra.mrb[0].mxu0 %v1313
      %v3314 = vpop.f32.mrb[0].mxu0
      %v3315 = vadd.f32 0.0, %v3314
      %v3316 = vpop.f32.mrb[0].mxu0
      %3317 = vmatprep.mubr.f32.mxu0 0.0
      %3318 = vmatmul.mubr.f32.gmra.mrb[0].mxu0 %v1316
      %v3319 = vpop.f32.mrb[0].mxu0
      %v3320 = vadd.f32 0.0, %v3319
      %v3321 = vpop.f32.mrb[0].mxu0
      %3322 = vmatprep.mubr.f32.mxu0 0.0
      %3323 = vmatmul.mubr.f32.gmra.mrb[0].mxu0 %v1319
      %v3324 = vpop.f32.mrb[0].mxu0
      %v3325 = vadd.f32 0.0, %v3324
      %v3326 = vpop.f32.mrb[0].mxu0
      %3327 = vmatprep.mubr.f32.mxu0 0.0
      %3328 = vmatmul.mubr.f32.gmra.mrb[0].mxu0 %v1322
      %v3329 = vpop.f32.mrb[0].mxu0
      %v3330 = vadd.f32 0.0, %v3329
      %v3331 = vpop.f32.mrb[0].mxu0
      %3332 = vmatprep.mubr.f32.mxu0 0.0
      %3333 = vmatmul.mubr.f32.gmra.mrb[0].mxu0 %v1325
      %v3334 = vpop.f32.mrb[0].mxu0
      %v3335 = vadd.f32 0.0, %v3334
      %v3336 = vpop.f32.mrb[0].mxu0
      %3337 = vmatprep.mubr.f32.mxu0 0.0
      %3338 = vmatmul.mubr.f32.gmra.mrb[0].mxu0 %v1328
      %v3339 = vpop.f32.mrb[0].mxu0
      %v3340 = vadd.f32 0.0, %v3339
      %v3341 = vpop.f32.mrb[0].mxu0
      %3342 = vmatprep.mubr.f32.mxu0 0.0
      %3343 = vmatmul.mubr.f32.gmra.mrb[0].mxu0 %v1331
      %v3344 = vpop.f32.mrb[0].mxu0
      %v3345 = vadd.f32 0.0, %v3344
      %v3346 = vpop.f32.mrb[0].mxu0
      %3347 = vmatprep.mubr.f32.mxu0 0.0
      %3348 = vmatmul.mubr.f32.gmra.mrb[0].mxu0 %v1334
      %v3349 = vpop.f32.mrb[0].mxu0
      %v3350 = vadd.f32 0.0, %v3349
      %v3351 = vpop.f32.mrb[0].mxu0
      %3352 = vmatprep.mubr.f32.mxu0 0.0
      %3353 = vmatmul.mubr.f32.gmra.mrb[0].mxu0 %v1337
      %v3354 = vpop.f32.mrb[0].mxu0
      %v3355 = vadd.f32 0.0, %v3354
      %v3356 = vpop.f32.mrb[0].mxu0
      %3357 = vmatprep.mubr.f32.mxu0 0.0
      %3358 = vmatmul.mubr.f32.gmra.mrb[0].mxu0 %v1340
      %v3359 = vpop.f32.mrb[0].mxu0
      %v3360 = vadd.f32 0.0, %v3359
      %v3361 = vpop.f32.mrb[0].mxu0
      %3362 = vmatprep.mubr.f32.mxu0 0.0
      %3363 = vmatmul.mubr.f32.gmra.mrb[0].mxu0 %v1343
      %v3364 = vpop.f32.mrb[0].mxu0
      %v3365 = vadd.f32 0.0, %v3364
      %v3366 = vpop.f32.mrb[0].mxu0
      %3367 = vmatprep.mubr.f32.mxu0 0.0
      %3368 = vmatmul.mubr.f32.gmra.mrb[0].mxu0 %v1346
      %v3369 = vpop.f32.mrb[0].mxu0
      %v3370 = vadd.f32 0.0, %v3369
      %v3371 = vpop.f32.mrb[0].mxu0
      %3372 = vmatprep.mubr.f32.mxu0 0.0
      %3373 = vmatmul.mubr.f32.gmra.mrb[0].mxu0 %v1349
      %v3374 = vpop.f32.mrb[0].mxu0
      %v3375 = vadd.f32 0.0, %v3374
      %v3376 = vpop.f32.mrb[0].mxu0
      %3377 = vmatprep.mubr.f32.mxu0 0.0
      %3378 = vmatmul.mubr.f32.gmra.mrb[0].mxu0 %v1352
      %v3379 = vpop.f32.mrb[0].mxu0
      %v3380 = vadd.f32 0.0, %v3379
      %v3381 = vpop.f32.mrb[0].mxu0
      %3382 = vdwg.mxu0
      %v3383 = vsel %vm1582, %v3154, 0.0
      %v3384 = vrot.slane %v3383, 4
      %v3385 = vadd.f32 %v3383, %v3384
      %v3386 = vrot.slane %v3385, 2
      %v3387 = vadd.f32 %v3385, %v3386
      %v3388 = vrot.slane %v3387, 1
      %v3389 = vadd.f32 %v3387, %v3388
      %v3390 = vmul.f32 %v3225, 0.04
      %v3391 = vmul.f32 %v3230, 0.04
      %v3392 = vmul.f32 %v3235, 0.04
      %v3393 = vmul.f32 %v3240, 0.04
      %v3394 = vmul.f32 %v3245, 0.04
      %v3395 = vmul.f32 %v3250, 0.04
      %v3396 = vmul.f32 %v3255, 0.04
      %v3397 = vmul.f32 %v3260, 0.04
      %v3398 = vmul.f32 %v3265, 0.04
      %v3399 = vmul.f32 %v3270, 0.04
      %v3400 = vmul.f32 %v3275, 0.04
      %v3401 = vmul.f32 %v3280, 0.04
      %v3402 = vmul.f32 %v3285, 0.04
      %v3403 = vmul.f32 %v3290, 0.04
      %v3404 = vmul.f32 %v3295, 0.04
      %v3405 = vmul.f32 %v3300, 0.04
      %v3406 = vmul.f32 %v3305, 0.04
      %v3407 = vmul.f32 %v3310, 0.04
      %v3408 = vmul.f32 %v3315, 0.04
      %v3409 = vmul.f32 %v3320, 0.04
      %v3410 = vmul.f32 %v3325, 0.04
      %v3411 = vmul.f32 %v3330, 0.04
      %v3412 = vmul.f32 %v3335, 0.04
      %v3413 = vmul.f32 %v3340, 0.04
      %v3414 = vmul.f32 %v3345, 0.04
      %v3415 = vmul.f32 %v3350, 0.04
      %v3416 = vmul.f32 %v3355, 0.04
      %v3417 = vmul.f32 %v3360, 0.04
      %v3418 = vmul.f32 %v3365, 0.04
      %v3419 = vmul.f32 %v3370, 0.04
      %v3420 = vmul.f32 %v3375, 0.04
      %v3421 = vmul.f32 %v3380, 0.04
      %v3422 = vsub.f32 %v2522, %v3390
      %v3423 = vsub.f32 %v2523, %v3391
      %v3424 = vsub.f32 %v2524, %v3392
      %v3425 = vsub.f32 %v2525, %v3393
      %v3426 = vsub.f32 %v2526, %v3394
      %v3427 = vsub.f32 %v2527, %v3395
      %v3428 = vsub.f32 %v2528, %v3396
      %v3429 = vsub.f32 %v2529, %v3397
      %v3430 = vsub.f32 %v2530, %v3398
      %v3431 = vsub.f32 %v2531, %v3399
      %v3432 = vsub.f32 %v2532, %v3400
      %v3433 = vsub.f32 %v2533, %v3401
      %v3434 = vsub.f32 %v2534, %v3402
      %v3435 = vsub.f32 %v2535, %v3403
      %v3436 = vsub.f32 %v2536, %v3404
      %v3437 = vsub.f32 %v2537, %v3405
      %v3438 = vsub.f32 %v2538, %v3406
      %v3439 = vsub.f32 %v2539, %v3407
      %v3440 = vsub.f32 %v2540, %v3408
      %v3441 = vsub.f32 %v2541, %v3409
      %v3442 = vsub.f32 %v2542, %v3410
      %v3443 = vsub.f32 %v2543, %v3411
      %v3444 = vsub.f32 %v2544, %v3412
      %v3445 = vsub.f32 %v2545, %v3413
      %v3446 = vsub.f32 %v2546, %v3414
      %v3447 = vsub.f32 %v2547, %v3415
      %v3448 = vsub.f32 %v2548, %v3416
      %v3449 = vsub.f32 %v2549, %v3417
      %v3450 = vsub.f32 %v2550, %v3418
      %v3451 = vsub.f32 %v2551, %v3419
      %v3452 = vsub.f32 %v2552, %v3420
      %v3453 = vsub.f32 %v2553, %v3421
      %v3454 = vmul.f32 %v3389, 0.04
      %v3455 = vsub.f32 %v2555, %v3454
      %v3456 = vmul.f32 %v3044, 0.04
      %v3457 = vmul.f32 %v3049, 0.04
      %v3458 = vmul.f32 %v3054, 0.04
      %v3459 = vmul.f32 %v3059, 0.04
      %v3460 = vsub.f32 %v2560, %v3456
      %v3461 = vsub.f32 %v2561, %v3457
      %v3462 = vsub.f32 %v2562, %v3458
      %v3463 = vsub.f32 %v2563, %v3459
      %v3464 = vmul.f32 %v3068, 0.04
      %v3465 = vsub.f32 %v2565, %v3464
      %v3467 = vlaneseq
      %v3468 = vshrl.u32 %v3467, 7
      %v3469 = vsub.s32 0, %v3468
      %v3470 = vrot.slane %v3455, %v3469
      %3472 = vmatprep.subr.mxu0 0.0
      %3473 = vmatpush1.msra.mxu0 %v3422
      %3474 = vmatprep.subr.mxu0 0.0
      %3475 = vmatpush1.msra.mxu0 %v3423
      %3476 = vmatprep.subr.mxu0 0.0
      %3477 = vmatpush1.msra.mxu0 %v3424
      %3478 = vmatprep.subr.mxu0 0.0
      %3479 = vmatpush1.msra.mxu0 %v3425
      %3480 = vmatprep.subr.mxu0 0.0
      %3481 = vmatpush1.msra.mxu0 %v3426
      %3482 = vmatprep.subr.mxu0 0.0
      %3483 = vmatpush1.msra.mxu0 %v3427
      %3484 = vmatprep.subr.mxu0 0.0
      %3485 = vmatpush1.msra.mxu0 %v3428
      %3486 = vmatprep.subr.mxu0 0.0
      %3487 = vmatpush1.msra.mxu0 %v3429
      %3488 = vmatprep.subr.mxu0 0.0
      %3489 = vmatpush1.msra.mxu0 %v3430
      %3490 = vmatprep.subr.mxu0 0.0
      %3491 = vmatpush1.msra.mxu0 %v3431
      %3492 = vmatprep.subr.mxu0 0.0
      %3493 = vmatpush1.msra.mxu0 %v3432
      %3494 = vmatprep.subr.mxu0 0.0
      %3495 = vmatpush1.msra.mxu0 %v3433
      %3496 = vmatprep.subr.mxu0 0.0
      %3497 = vmatpush1.msra.mxu0 %v3434
      %3498 = vmatprep.subr.mxu0 0.0
      %3499 = vmatpush1.msra.mxu0 %v3435
      %3500 = vmatprep.subr.mxu0 0.0
      %3501 = vmatpush1.msra.mxu0 %v3436
      %3502 = vmatprep.subr.mxu0 0.0
      %3503 = vmatpush1.msra.mxu0 %v3437
      %3504 = vmatprep.subr.mxu0 0.0
      %3505 = vmatpush1.msra.mxu0 %v3438
      %3506 = vmatprep.subr.mxu0 0.0
      %3507 = vmatpush1.msra.mxu0 %v3439
      %3508 = vmatprep.subr.mxu0 0.0
      %3509 = vmatpush1.msra.mxu0 %v3440
      %3510 = vmatprep.subr.mxu0 0.0
      %3511 = vmatpush1.msra.mxu0 %v3441
      %3512 = vmatprep.subr.mxu0 0.0
      %3513 = vmatpush1.msra.mxu0 %v3442
      %3514 = vmatprep.subr.mxu0 0.0
      %3515 = vmatpush1.msra.mxu0 %v3443
      %3516 = vmatprep.subr.mxu0 0.0
      %3517 = vmatpush1.msra.mxu0 %v3444
      %3518 = vmatprep.subr.mxu0 0.0
      %3519 = vmatpush1.msra.mxu0 %v3445
      %3520 = vmatprep.subr.mxu0 0.0
      %3521 = vmatpush1.msra.mxu0 %v3446
      %3522 = vmatprep.subr.mxu0 0.0
      %3523 = vmatpush1.msra.mxu0 %v3447
      %3524 = vmatprep.subr.mxu0 0.0
      %3525 = vmatpush1.msra.mxu0 %v3448
      %3526 = vmatprep.subr.mxu0 0.0
      %3527 = vmatpush1.msra.mxu0 %v3449
      %3528 = vmatprep.subr.mxu0 0.0
      %3529 = vmatpush1.msra.mxu0 %v3450
      %3530 = vmatprep.subr.mxu0 0.0
      %3531 = vmatpush1.msra.mxu0 %v3451
      %3532 = vmatprep.subr.mxu0 0.0
      %3533 = vmatpush1.msra.mxu0 %v3452
      %3534 = vmatprep.subr.mxu0 0.0
      %3535 = vmatpush1.msra.mxu0 %v3453
      %3536 = vmatprep.mubr.f32.mxu0 %v543
      %3537 = vmatmul.mubr.f32.gmra.mrb[0].mxu0 %v542
      %v3538 = vpop.f32.mrb[0].mxu0
      %v3539 = vadd.f32 %v3470, %v3538
      %v3540 = vpop.f32.mrb[0].mxu0
      %3541 = vdwg.mxu0
      %v3542 = vmax.f32 %v3539, 0.0
      %v3544 = vlaneseq
      %v3545 = vshrl.u32 %v3544, 7
      %v3546 = vsub.s32 0, %v3545
      %v3547 = vrot.slane %v3465, %v3546
      %v3550 = vsel %vm680, %v3542, 0
      %3552 = vmatprep.subr.mxu0 0.0
      %3553 = vmatpush1.msra.mxu0 %v3460
      %3554 = vmatprep.subr.mxu0 0.0
      %3555 = vmatpush1.msra.mxu0 %v3461
      %3556 = vmatprep.subr.mxu0 0.0
      %3557 = vmatpush1.msra.mxu0 %v3462
      %3558 = vmatprep.subr.mxu0 0.0
      %3559 = vmatpush1.msra.mxu0 %v3463
      %3560 = vmatprep.subr.mxu0 0.0
      %3561 = vmatpush1.msra.mxu0 0.0
      %3562 = vmatprep.subr.mxu0 0.0
      %3563 = vmatpush1.msra.mxu0 0.0
      %3564 = vmatprep.subr.mxu0 0.0
      %3565 = vmatpush1.msra.mxu0 0.0
      %3566 = vmatprep.subr.mxu0 0.0
      %3567 = vmatpush1.msra.mxu0 0.0
      %3568 = vmatprep.subr.mxu0 0.0
      %3569 = vmatpush1.msra.mxu0 0.0
      %3570 = vmatprep.subr.mxu0 0.0
      %3571 = vmatpush1.msra.mxu0 0.0
      %3572 = vmatprep.subr.mxu0 0.0
      %3573 = vmatpush1.msra.mxu0 0.0
      %3574 = vmatprep.subr.mxu0 0.0
      %3575 = vmatpush1.msra.mxu0 0.0
      %3576 = vmatprep.subr.mxu0 0.0
      %3577 = vmatpush1.msra.mxu0 0.0
      %3578 = vmatprep.subr.mxu0 0.0
      %3579 = vmatpush1.msra.mxu0 0.0
      %3580 = vmatprep.subr.mxu0 0.0
      %3581 = vmatpush1.msra.mxu0 0.0
      %3582 = vmatprep.subr.mxu0 0.0
      %3583 = vmatpush1.msra.mxu0 0.0
      %3584 = vmatprep.subr.mxu0 0.0
      %3585 = vmatpush1.msra.mxu0 0.0
      %3586 = vmatprep.subr.mxu0 0.0
      %3587 = vmatpush1.msra.mxu0 0.0
      %3588 = vmatprep.subr.mxu0 0.0
      %3589 = vmatpush1.msra.mxu0 0.0
      %3590 = vmatprep.subr.mxu0 0.0
      %3591 = vmatpush1.msra.mxu0 0.0
      %3592 = vmatprep.subr.mxu0 0.0
      %3593 = vmatpush1.msra.mxu0 0.0
      %3594 = vmatprep.subr.mxu0 0.0
      %3595 = vmatpush1.msra.mxu0 0.0
      %3596 = vmatprep.subr.mxu0 0.0
      %3597 = vmatpush1.msra.mxu0 0.0
      %3598 = vmatprep.subr.mxu0 0.0
      %3599 = vmatpush1.msra.mxu0 0.0
      %3600 = vmatprep.subr.mxu0 0.0
      %3601 = vmatpush1.msra.mxu0 0.0
      %3602 = vmatprep.subr.mxu0 0.0
      %3603 = vmatpush1.msra.mxu0 0.0
      %3604 = vmatprep.subr.mxu0 0.0
      %3605 = vmatpush1.msra.mxu0 0.0
      %3606 = vmatprep.subr.mxu0 0.0
      %3607 = vmatpush1.msra.mxu0 0.0
      %3608 = vmatprep.subr.mxu0 0.0
      %3609 = vmatpush1.msra.mxu0 0.0
      %3610 = vmatprep.subr.mxu0 0.0
      %3611 = vmatpush1.msra.mxu0 0.0
      %3612 = vmatprep.subr.mxu0 0.0
      %3613 = vmatpush1.msra.mxu0 0.0
      %3614 = vmatprep.subr.mxu0 0.0
      %3615 = vmatpush1.msra.mxu0 0.0
      %3616 = vmatprep.mubr.f32.mxu0 0.0
      %3617 = vmatmul.mubr.f32.gmra.mrb[0].mxu0 %v3550
      %v3618 = vpop.f32.mrb[0].mxu0
      %v3619 = vadd.f32 %v3547, %v3618
      %v3620 = vpop.f32.mrb[0].mxu0
      %3621 = vdwg.mxu0
      %v3622 = vsel %vm754, %v3619, -inf
      %3623 = vmax.xlane.f32.xlu0 %v3622
      %v3624 = vpop.xlane.xlu0 %3623
      %v3625 = vsub.f32 %v3619, %v3624
      %v3626 = vmul.f32 %v3625, 1.442695
      %v3627 = vpow.pop %v3626
      %v3628 = vsel %vm754, %v3627, 0.0
      %3629 = vadd.xlane.f32.xlu0 %v3628
      %v3630 = vpop.xlane.xlu0 %3629
      %v3631 = vlog2.pop %v3630
      %v3632 = vmul.f32 %v3631, 0.6931472
      %v3633 = vadd.f32 %v3632, %v3624
      %v3634 = vmul.f32 %v596, %v3619
      %v3635 = vsel %vm754, %v3634, 0.0
      %3636 = vadd.xlane.f32.xlu0 %v3635
      %v3637 = vpop.xlane.xlu0 %3636
      %v3638 = vsub.f32 %v3633, %v3637
      %v3639 = vrot.slane %v3638, 4
      %v3640 = vadd.f32 %v3638, %v3639
      %v3641 = vrot.slane %v3640, 2
      %v3642 = vadd.f32 %v3640, %v3641
      %v3643 = vrot.slane %v3642, 1
      %v3644 = vadd.f32 %v3642, %v3643
      %v3645 = vmul.f32 %v3644, 0.125
      %vm3646 = vcmp.eq.f32.partialorder %v3619, %v3624
      %v3647 = vsel %vm3646, %v584, 4
      %v3648 = vsel %vm754, %v3647, 2147483647
      %v3649 = vand.u32 %v3648, 65535
      %v3650 = vshra.s32 %v3648, 16
      %v3651 = vcvt.s32.f32 %v3649
      %v3652 = vcvt.s32.f32 %v3650
      %3653 = vmin.xlane.f32.xlu0 %v3652
      %v3654 = vpop.xlane.xlu0 %3653
      %vm3655 = vcmp.eq.f32.partialorder %v3652, %v3654
      %v3656 = vsel %vm3655, %v3651, inf
      %3657 = vmin.xlane.f32.xlu0 %v3656
      %v3658 = vpop.xlane.xlu0 %3657
      %v3659 = vcvt.f32.s32 %v3658
      %v3660 = vcvt.f32.s32 %v3654
      %v3661 = vshll.u32 %v3660, 16
      %v3662 = vadd.s32 %v3661, %v3659
      %vm3663 = vcmp.eq.s32.totalorder %v3662, %v544
      %v3664 = vsel %vm3663, 1, 0
      %v3665 = vcvt.s32.f32 %v3664
      %v3666 = vsel %vm799, %v3665, 0.0
      %v3667 = vrot.slane %v3666, 4
      %v3668 = vadd.f32 %v3666, %v3667
      %v3669 = vrot.slane %v3668, 2
      %v3670 = vadd.f32 %v3668, %v3669
      %v3671 = vrot.slane %v3670, 1
      %v3672 = vadd.f32 %v3670, %v3671
      %3673 = vmatprep.subr.mxu0 0.0
      %3674 = vmatpush1.msra.mxu0 %v3422
      %3675 = vmatprep.subr.mxu0 0.0
      %3676 = vmatpush1.msra.mxu0 %v3423
      %3677 = vmatprep.subr.mxu0 0.0
      %3678 = vmatpush1.msra.mxu0 %v3424
      %3679 = vmatprep.subr.mxu0 0.0
      %3680 = vmatpush1.msra.mxu0 %v3425
      %3681 = vmatprep.subr.mxu0 0.0
      %3682 = vmatpush1.msra.mxu0 %v3426
      %3683 = vmatprep.subr.mxu0 0.0
      %3684 = vmatpush1.msra.mxu0 %v3427
      %3685 = vmatprep.subr.mxu0 0.0
      %3686 = vmatpush1.msra.mxu0 %v3428
      %3687 = vmatprep.subr.mxu0 0.0
      %3688 = vmatpush1.msra.mxu0 %v3429
      %3689 = vmatprep.subr.mxu0 0.0
      %3690 = vmatpush1.msra.mxu0 %v3430
      %3691 = vmatprep.subr.mxu0 0.0
      %3692 = vmatpush1.msra.mxu0 %v3431
      %3693 = vmatprep.subr.mxu0 0.0
      %3694 = vmatpush1.msra.mxu0 %v3432
      %3695 = vmatprep.subr.mxu0 0.0
      %3696 = vmatpush1.msra.mxu0 %v3433
      %3697 = vmatprep.subr.mxu0 0.0
      %3698 = vmatpush1.msra.mxu0 %v3434
      %3699 = vmatprep.subr.mxu0 0.0
      %3700 = vmatpush1.msra.mxu0 %v3435
      %3701 = vmatprep.subr.mxu0 0.0
      %3702 = vmatpush1.msra.mxu0 %v3436
      %3703 = vmatprep.subr.mxu0 0.0
      %3704 = vmatpush1.msra.mxu0 %v3437
      %3705 = vmatprep.subr.mxu0 0.0
      %3706 = vmatpush1.msra.mxu0 %v3438
      %3707 = vmatprep.subr.mxu0 0.0
      %3708 = vmatpush1.msra.mxu0 %v3439
      %3709 = vmatprep.subr.mxu0 0.0
      %3710 = vmatpush1.msra.mxu0 %v3440
      %3711 = vmatprep.subr.mxu0 0.0
      %3712 = vmatpush1.msra.mxu0 %v3441
      %3713 = vmatprep.subr.mxu0 0.0
      %3714 = vmatpush1.msra.mxu0 %v3442
      %3715 = vmatprep.subr.mxu0 0.0
      %3716 = vmatpush1.msra.mxu0 %v3443
      %3717 = vmatprep.subr.mxu0 0.0
      %3718 = vmatpush1.msra.mxu0 %v3444
      %3719 = vmatprep.subr.mxu0 0.0
      %3720 = vmatpush1.msra.mxu0 %v3445
      %3721 = vmatprep.subr.mxu0 0.0
      %3722 = vmatpush1.msra.mxu0 %v3446
      %3723 = vmatprep.subr.mxu0 0.0
      %3724 = vmatpush1.msra.mxu0 %v3447
      %3725 = vmatprep.subr.mxu0 0.0
      %3726 = vmatpush1.msra.mxu0 %v3448
      %3727 = vmatprep.subr.mxu0 0.0
      %3728 = vmatpush1.msra.mxu0 %v3449
      %3729 = vmatprep.subr.mxu0 0.0
      %3730 = vmatpush1.msra.mxu0 %v3450
      %3731 = vmatprep.subr.mxu0 0.0
      %3732 = vmatpush1.msra.mxu0 %v3451
      %3733 = vmatprep.subr.mxu0 0.0
      %3734 = vmatpush1.msra.mxu0 %v3452
      %3735 = vmatprep.subr.mxu0 0.0
      %3736 = vmatpush1.msra.mxu0 %v3453
      %3737 = vmatprep.mubr.f32.mxu0 %v808
      %3738 = vmatmul.mubr.f32.gmra.mrb[0].mxu0 %v540
      %v3739 = vpop.f32.mrb[0].mxu0
      %v3740 = vadd.f32 %v3470, %v3739
      %v3741 = vpop.f32.mrb[0].mxu0
      %3742 = vdwg.mxu0
      %v3743 = vmax.f32 %v3740, 0.0
      %v3745 = vsel %vm680, %v3743, 0
      %3747 = vmatprep.subr.mxu0 0.0
      %3748 = vmatpush1.msra.mxu0 %v3460
      %3749 = vmatprep.subr.mxu0 0.0
      %3750 = vmatpush1.msra.mxu0 %v3461
      %3751 = vmatprep.subr.mxu0 0.0
      %3752 = vmatpush1.msra.mxu0 %v3462
      %3753 = vmatprep.subr.mxu0 0.0
      %3754 = vmatpush1.msra.mxu0 %v3463
      %3755 = vmatprep.subr.mxu0 0.0
      %3756 = vmatpush1.msra.mxu0 0.0
      %3757 = vmatprep.subr.mxu0 0.0
      %3758 = vmatpush1.msra.mxu0 0.0
      %3759 = vmatprep.subr.mxu0 0.0
      %3760 = vmatpush1.msra.mxu0 0.0
      %3761 = vmatprep.subr.mxu0 0.0
      %3762 = vmatpush1.msra.mxu0 0.0
      %3763 = vmatprep.subr.mxu0 0.0
      %3764 = vmatpush1.msra.mxu0 0.0
      %3765 = vmatprep.subr.mxu0 0.0
      %3766 = vmatpush1.msra.mxu0 0.0
      %3767 = vmatprep.subr.mxu0 0.0
      %3768 = vmatpush1.msra.mxu0 0.0
      %3769 = vmatprep.subr.mxu0 0.0
      %3770 = vmatpush1.msra.mxu0 0.0
      %3771 = vmatprep.subr.mxu0 0.0
      %3772 = vmatpush1.msra.mxu0 0.0
      %3773 = vmatprep.subr.mxu0 0.0
      %3774 = vmatpush1.msra.mxu0 0.0
      %3775 = vmatprep.subr.mxu0 0.0
      %3776 = vmatpush1.msra.mxu0 0.0
      %3777 = vmatprep.subr.mxu0 0.0
      %3778 = vmatpush1.msra.mxu0 0.0
      %3779 = vmatprep.subr.mxu0 0.0
      %3780 = vmatpush1.msra.mxu0 0.0
      %3781 = vmatprep.subr.mxu0 0.0
      %3782 = vmatpush1.msra.mxu0 0.0
      %3783 = vmatprep.subr.mxu0 0.0
      %3784 = vmatpush1.msra.mxu0 0.0
      %3785 = vmatprep.subr.mxu0 0.0
      %3786 = vmatpush1.msra.mxu0 0.0
      %3787 = vmatprep.subr.mxu0 0.0
      %3788 = vmatpush1.msra.mxu0 0.0
      %3789 = vmatprep.subr.mxu0 0.0
      %3790 = vmatpush1.msra.mxu0 0.0
      %3791 = vmatprep.subr.mxu0 0.0
      %3792 = vmatpush1.msra.mxu0 0.0
      %3793 = vmatprep.subr.mxu0 0.0
      %3794 = vmatpush1.msra.mxu0 0.0
      %3795 = vmatprep.subr.mxu0 0.0
      %3796 = vmatpush1.msra.mxu0 0.0
      %3797 = vmatprep.subr.mxu0 0.0
      %3798 = vmatpush1.msra.mxu0 0.0
      %3799 = vmatprep.subr.mxu0 0.0
      %3800 = vmatpush1.msra.mxu0 0.0
      %3801 = vmatprep.subr.mxu0 0.0
      %3802 = vmatpush1.msra.mxu0 0.0
      %3803 = vmatprep.subr.mxu0 0.0
      %3804 = vmatpush1.msra.mxu0 0.0
      %3805 = vmatprep.subr.mxu0 0.0
      %3806 = vmatpush1.msra.mxu0 0.0
      %3807 = vmatprep.subr.mxu0 0.0
      %3808 = vmatpush1.msra.mxu0 0.0
      %3809 = vmatprep.subr.mxu0 0.0
      %3810 = vmatpush1.msra.mxu0 0.0
      %3811 = vmatprep.mubr.f32.mxu0 0.0
      %3812 = vmatmul.mubr.f32.gmra.mrb[0].mxu0 %v3745
      %v3813 = vpop.f32.mrb[0].mxu0
      %v3814 = vadd.f32 %v3547, %v3813
      %v3815 = vpop.f32.mrb[0].mxu0
      %3816 = vdwg.mxu0
      %v3817 = vsel %vm954, %v3814, -inf
      %3818 = vmax.xlane.f32.xlu0 %v3817
      %v3819 = vpop.xlane.xlu0 %3818
      %v3820 = vsub.f32 %v3814, %v3819
      %v3821 = vmul.f32 %v3820, 1.442695
      %v3822 = vpow.pop %v3821
      %v3823 = vsel %vm954, %v3822, 0.0
      %3824 = vadd.xlane.f32.xlu0 %v3823
      %v3825 = vpop.xlane.xlu0 %3824
      %v3826 = vrcp.pop %v3825
      %v3827 = vmul.f32 %v3822, %v3826
      %v3828 = vsub.f32 %v3827, %v590
      %v3829 = vmul.f32 %v3828, 0.25
      %3830 = vxpose.xlu0.b32.start [1/16] %v3743, 128
      %3831 = vxpose.xlu0.b32.cont [2/16] 0.0, 128
      %3832 = vxpose.xlu0.b32.cont [3/16] 0.0, 128
      %3833 = vxpose.xlu0.b32.cont [4/16] 0.0, 128
      %3834 = vxpose.xlu0.b32.cont [5/16] 0.0, 128
      %3835 = vxpose.xlu0.b32.cont [6/16] 0.0, 128
      %3836 = vxpose.xlu0.b32.cont [7/16] 0.0, 128
      %3837 = vxpose.xlu0.b32.cont [8/16] 0.0, 128
      %3838 = vxpose.xlu0.b32.cont [9/16] 0.0, 128
      %3839 = vxpose.xlu0.b32.cont [10/16] 0.0, 128
      %3840 = vxpose.xlu0.b32.cont [11/16] 0.0, 128
      %3841 = vxpose.xlu0.b32.cont [12/16] 0.0, 128
      %3842 = vxpose.xlu0.b32.cont [13/16] 0.0, 128
      %3843 = vxpose.xlu0.b32.cont [14/16] 0.0, 128
      %3844 = vxpose.xlu0.b32.cont [15/16] 0.0, 128
      %3845 = vxpose.xlu0.b32.end [16/16] 0.0, 128
      %v3846 = vpop.trf.xlu0
      %v3847 = vpop.trf.xlu0
      %v3848 = vpop.trf.xlu0
      %v3849 = vpop.trf.xlu0
      %v3850 = vpop.trf.xlu0
      %v3851 = vpop.trf.xlu0
      %v3852 = vpop.trf.xlu0
      %v3853 = vpop.trf.xlu0
      %v3854 = vpop.trf.xlu0
      %v3855 = vpop.trf.xlu0
      %v3856 = vpop.trf.xlu0
      %v3857 = vpop.trf.xlu0
      %v3858 = vpop.trf.xlu0
      %v3859 = vpop.trf.xlu0
      %v3860 = vpop.trf.xlu0
      %v3861 = vpop.trf.xlu0
      %v3863 = vsel %vm754, %v3846, 0
      %v3866 = vsel %vm754, %v3847, 0
      %v3869 = vsel %vm754, %v3848, 0
      %v3872 = vsel %vm754, %v3849, 0
      %v3875 = vsel %vm1012, %v3829, 0
      %3877 = vmatprep.subr.mxu0 0.0
      %3878 = vmatpush1.msra.mxu0 %v3875
      %3879 = vmatprep.subr.mxu0 0.0
      %3880 = vmatpush1.msra.mxu0 0.0
      %3881 = vmatprep.subr.mxu0 0.0
      %3882 = vmatpush1.msra.mxu0 0.0
      %3883 = vmatprep.subr.mxu0 0.0
      %3884 = vmatpush1.msra.mxu0 0.0
      %3885 = vmatprep.subr.mxu0 0.0
      %3886 = vmatpush1.msra.mxu0 0.0
      %3887 = vmatprep.subr.mxu0 0.0
      %3888 = vmatpush1.msra.mxu0 0.0
      %3889 = vmatprep.subr.mxu0 0.0
      %3890 = vmatpush1.msra.mxu0 0.0
      %3891 = vmatprep.subr.mxu0 0.0
      %3892 = vmatpush1.msra.mxu0 0.0
      %3893 = vmatprep.subr.mxu0 0.0
      %3894 = vmatpush1.msra.mxu0 0.0
      %3895 = vmatprep.subr.mxu0 0.0
      %3896 = vmatpush1.msra.mxu0 0.0
      %3897 = vmatprep.subr.mxu0 0.0
      %3898 = vmatpush1.msra.mxu0 0.0
      %3899 = vmatprep.subr.mxu0 0.0
      %3900 = vmatpush1.msra.mxu0 0.0
      %3901 = vmatprep.subr.mxu0 0.0
      %3902 = vmatpush1.msra.mxu0 0.0
      %3903 = vmatprep.subr.mxu0 0.0
      %3904 = vmatpush1.msra.mxu0 0.0
      %3905 = vmatprep.subr.mxu0 0.0
      %3906 = vmatpush1.msra.mxu0 0.0
      %3907 = vmatprep.subr.mxu0 0.0
      %3908 = vmatpush1.msra.mxu0 0.0
      %3909 = vmatprep.subr.mxu0 0.0
      %3910 = vmatpush1.msra.mxu0 0.0
      %3911 = vmatprep.subr.mxu0 0.0
      %3912 = vmatpush1.msra.mxu0 0.0
      %3913 = vmatprep.subr.mxu0 0.0
      %3914 = vmatpush1.msra.mxu0 0.0
      %3915 = vmatprep.subr.mxu0 0.0
      %3916 = vmatpush1.msra.mxu0 0.0
      %3917 = vmatprep.subr.mxu0 0.0
      %3918 = vmatpush1.msra.mxu0 0.0
      %3919 = vmatprep.subr.mxu0 0.0
      %3920 = vmatpush1.msra.mxu0 0.0
      %3921 = vmatprep.subr.mxu0 0.0
      %3922 = vmatpush1.msra.mxu0 0.0
      %3923 = vmatprep.subr.mxu0 0.0
      %3924 = vmatpush1.msra.mxu0 0.0
      %3925 = vmatprep.subr.mxu0 0.0
      %3926 = vmatpush1.msra.mxu0 0.0
      %3927 = vmatprep.subr.mxu0 0.0
      %3928 = vmatpush1.msra.mxu0 0.0
      %3929 = vmatprep.subr.mxu0 0.0
      %3930 = vmatpush1.msra.mxu0 0.0
      %3931 = vmatprep.subr.mxu0 0.0
      %3932 = vmatpush1.msra.mxu0 0.0
      %3933 = vmatprep.subr.mxu0 0.0
      %3934 = vmatpush1.msra.mxu0 0.0
      %3935 = vmatprep.subr.mxu0 0.0
      %3936 = vmatpush1.msra.mxu0 0.0
      %3937 = vmatprep.subr.mxu0 0.0
      %3938 = vmatpush1.msra.mxu0 0.0
      %3939 = vmatprep.subr.mxu0 0.0
      %3940 = vmatpush1.msra.mxu0 0.0
      %3941 = vmatprep.mubr.f32.mxu0 0.0
      %3942 = vmatmul.mubr.f32.gmra.mrb[0].mxu0 %v3863
      %v3943 = vpop.f32.mrb[0].mxu0
      %v3944 = vadd.f32 0.0, %v3943
      %v3945 = vpop.f32.mrb[0].mxu0
      %3946 = vmatprep.mubr.f32.mxu0 0.0
      %3947 = vmatmul.mubr.f32.gmra.mrb[0].mxu0 %v3866
      %v3948 = vpop.f32.mrb[0].mxu0
      %v3949 = vadd.f32 0.0, %v3948
      %v3950 = vpop.f32.mrb[0].mxu0
      %3951 = vmatprep.mubr.f32.mxu0 0.0
      %3952 = vmatmul.mubr.f32.gmra.mrb[0].mxu0 %v3869
      %v3953 = vpop.f32.mrb[0].mxu0
      %v3954 = vadd.f32 0.0, %v3953
      %v3955 = vpop.f32.mrb[0].mxu0
      %3956 = vmatprep.mubr.f32.mxu0 0.0
      %3957 = vmatmul.mubr.f32.gmra.mrb[0].mxu0 %v3872
      %v3958 = vpop.f32.mrb[0].mxu0
      %v3959 = vadd.f32 0.0, %v3958
      %v3960 = vpop.f32.mrb[0].mxu0
      %3961 = vdwg.mxu0
      %v3962 = vsel %vm954, %v3829, 0.0
      %v3963 = vrot.slane %v3962, 4
      %v3964 = vadd.f32 %v3962, %v3963
      %v3965 = vrot.slane %v3964, 2
      %v3966 = vadd.f32 %v3964, %v3965
      %v3967 = vrot.slane %v3966, 1
      %v3968 = vadd.f32 %v3966, %v3967
      %v3969 = vsel %vm754, %v3829, 0
      %v3972 = vsel %vm754, %v3460, 0
      %v3975 = vsel %vm754, %v3461, 0
      %v3978 = vsel %vm754, %v3462, 0
      %v3981 = vsel %vm754, %v3463, 0
      %3983 = vmatprep.subr.mxu0 0.0
      %3984 = vmatpush1.xpose.msra.mxu0 %v3972
      %3985 = vmatprep.subr.mxu0 0.0
      %3986 = vmatpush1.xpose.msra.mxu0 %v3975
      %3987 = vmatprep.subr.mxu0 0.0
      %3988 = vmatpush1.xpose.msra.mxu0 %v3978
      %3989 = vmatprep.subr.mxu0 0.0
      %3990 = vmatpush1.xpose.msra.mxu0 %v3981
      %3991 = vmatprep.subr.mxu0 0.0
      %3992 = vmatpush1.xpose.msra.mxu0 0.0
      %3993 = vmatprep.subr.mxu0 0.0
      %3994 = vmatpush1.xpose.msra.mxu0 0.0
      %3995 = vmatprep.subr.mxu0 0.0
      %3996 = vmatpush1.xpose.msra.mxu0 0.0
      %3997 = vmatprep.subr.mxu0 0.0
      %3998 = vmatpush1.xpose.msra.mxu0 0.0
      %3999 = vmatprep.subr.mxu0 0.0
      %4000 = vmatpush1.xpose.msra.mxu0 0.0
      %4001 = vmatprep.subr.mxu0 0.0
      %4002 = vmatpush1.xpose.msra.mxu0 0.0
      %4003 = vmatprep.subr.mxu0 0.0
      %4004 = vmatpush1.xpose.msra.mxu0 0.0
      %4005 = vmatprep.subr.mxu0 0.0
      %4006 = vmatpush1.xpose.msra.mxu0 0.0
      %4007 = vmatprep.subr.mxu0 0.0
      %4008 = vmatpush1.xpose.msra.mxu0 0.0
      %4009 = vmatprep.subr.mxu0 0.0
      %4010 = vmatpush1.xpose.msra.mxu0 0.0
      %4011 = vmatprep.subr.mxu0 0.0
      %4012 = vmatpush1.xpose.msra.mxu0 0.0
      %4013 = vmatprep.subr.mxu0 0.0
      %4014 = vmatpush1.xpose.msra.mxu0 0.0
      %4015 = vmatprep.subr.mxu0 0.0
      %4016 = vmatpush1.xpose.msra.mxu0 0.0
      %4017 = vmatprep.subr.mxu0 0.0
      %4018 = vmatpush1.xpose.msra.mxu0 0.0
      %4019 = vmatprep.subr.mxu0 0.0
      %4020 = vmatpush1.xpose.msra.mxu0 0.0
      %4021 = vmatprep.subr.mxu0 0.0
      %4022 = vmatpush1.xpose.msra.mxu0 0.0
      %4023 = vmatprep.subr.mxu0 0.0
      %4024 = vmatpush1.xpose.msra.mxu0 0.0
      %4025 = vmatprep.subr.mxu0 0.0
      %4026 = vmatpush1.xpose.msra.mxu0 0.0
      %4027 = vmatprep.subr.mxu0 0.0
      %4028 = vmatpush1.xpose.msra.mxu0 0.0
      %4029 = vmatprep.subr.mxu0 0.0
      %4030 = vmatpush1.xpose.msra.mxu0 0.0
      %4031 = vmatprep.subr.mxu0 0.0
      %4032 = vmatpush1.xpose.msra.mxu0 0.0
      %4033 = vmatprep.subr.mxu0 0.0
      %4034 = vmatpush1.xpose.msra.mxu0 0.0
      %4035 = vmatprep.subr.mxu0 0.0
      %4036 = vmatpush1.xpose.msra.mxu0 0.0
      %4037 = vmatprep.subr.mxu0 0.0
      %4038 = vmatpush1.xpose.msra.mxu0 0.0
      %4039 = vmatprep.subr.mxu0 0.0
      %4040 = vmatpush1.xpose.msra.mxu0 0.0
      %4041 = vmatprep.subr.mxu0 0.0
      %4042 = vmatpush1.xpose.msra.mxu0 0.0
      %4043 = vmatprep.subr.mxu0 0.0
      %4044 = vmatpush1.xpose.msra.mxu0 0.0
      %4045 = vmatprep.subr.mxu0 0.0
      %4046 = vmatpush1.xpose.msra.mxu0 0.0
      %4047 = vmatprep.mubr.f32.mxu0 0.0
      %4048 = vmatmul.mubr.f32.gmra.mrb[0].mxu0 %v3969
      %v4049 = vpop.f32.mrb[0].mxu0
      %v4050 = vadd.f32 0.0, %v4049
      %v4051 = vpop.f32.mrb[0].mxu0
      %4052 = vdwg.mxu0
      %vm4053 = vcmp.gt.f32.partialorder %v3740, 0.0
      %v4054 = vsel %vm4053, %v4050, 0.0
      %v4056 = vsel %vm1012, %v4054, 0
      %4058 = vmatprep.subr.mxu0 0.0
      %4059 = vmatpush1.msra.mxu0 %v4056
      %4060 = vmatprep.subr.mxu0 0.0
      %4061 = vmatpush1.msra.mxu0 0.0
      %4062 = vmatprep.subr.mxu0 0.0
      %4063 = vmatpush1.msra.mxu0 0.0
      %4064 = vmatprep.subr.mxu0 0.0
      %4065 = vmatpush1.msra.mxu0 0.0
      %4066 = vmatprep.subr.mxu0 0.0
      %4067 = vmatpush1.msra.mxu0 0.0
      %4068 = vmatprep.subr.mxu0 0.0
      %4069 = vmatpush1.msra.mxu0 0.0
      %4070 = vmatprep.subr.mxu0 0.0
      %4071 = vmatpush1.msra.mxu0 0.0
      %4072 = vmatprep.subr.mxu0 0.0
      %4073 = vmatpush1.msra.mxu0 0.0
      %4074 = vmatprep.subr.mxu0 0.0
      %4075 = vmatpush1.msra.mxu0 0.0
      %4076 = vmatprep.subr.mxu0 0.0
      %4077 = vmatpush1.msra.mxu0 0.0
      %4078 = vmatprep.subr.mxu0 0.0
      %4079 = vmatpush1.msra.mxu0 0.0
      %4080 = vmatprep.subr.mxu0 0.0
      %4081 = vmatpush1.msra.mxu0 0.0
      %4082 = vmatprep.subr.mxu0 0.0
      %4083 = vmatpush1.msra.mxu0 0.0
      %4084 = vmatprep.subr.mxu0 0.0
      %4085 = vmatpush1.msra.mxu0 0.0
      %4086 = vmatprep.subr.mxu0 0.0
      %4087 = vmatpush1.msra.mxu0 0.0
      %4088 = vmatprep.subr.mxu0 0.0
      %4089 = vmatpush1.msra.mxu0 0.0
      %4090 = vmatprep.subr.mxu0 0.0
      %4091 = vmatpush1.msra.mxu0 0.0
      %4092 = vmatprep.subr.mxu0 0.0
      %4093 = vmatpush1.msra.mxu0 0.0
      %4094 = vmatprep.subr.mxu0 0.0
      %4095 = vmatpush1.msra.mxu0 0.0
      %4096 = vmatprep.subr.mxu0 0.0
      %4097 = vmatpush1.msra.mxu0 0.0
      %4098 = vmatprep.subr.mxu0 0.0
      %4099 = vmatpush1.msra.mxu0 0.0
      %4100 = vmatprep.subr.mxu0 0.0
      %4101 = vmatpush1.msra.mxu0 0.0
      %4102 = vmatprep.subr.mxu0 0.0
      %4103 = vmatpush1.msra.mxu0 0.0
      %4104 = vmatprep.subr.mxu0 0.0
      %4105 = vmatpush1.msra.mxu0 0.0
      %4106 = vmatprep.subr.mxu0 0.0
      %4107 = vmatpush1.msra.mxu0 0.0
      %4108 = vmatprep.subr.mxu0 0.0
      %4109 = vmatpush1.msra.mxu0 0.0
      %4110 = vmatprep.subr.mxu0 0.0
      %4111 = vmatpush1.msra.mxu0 0.0
      %4112 = vmatprep.subr.mxu0 0.0
      %4113 = vmatpush1.msra.mxu0 0.0
      %4114 = vmatprep.subr.mxu0 0.0
      %4115 = vmatpush1.msra.mxu0 0.0
      %4116 = vmatprep.subr.mxu0 0.0
      %4117 = vmatpush1.msra.mxu0 0.0
      %4118 = vmatprep.subr.mxu0 0.0
      %4119 = vmatpush1.msra.mxu0 0.0
      %4120 = vmatprep.subr.mxu0 0.0
      %4121 = vmatpush1.msra.mxu0 0.0
      %4122 = vmatprep.mubr.f32.mxu0 0.0
      %4123 = vmatmul.mubr.f32.gmra.mrb[0].mxu0 %v1259
      %v4124 = vpop.f32.mrb[0].mxu0
      %v4125 = vadd.f32 0.0, %v4124
      %v4126 = vpop.f32.mrb[0].mxu0
      %4127 = vmatprep.mubr.f32.mxu0 0.0
      %4128 = vmatmul.mubr.f32.gmra.mrb[0].mxu0 %v1262
      %v4129 = vpop.f32.mrb[0].mxu0
      %v4130 = vadd.f32 0.0, %v4129
      %v4131 = vpop.f32.mrb[0].mxu0
      %4132 = vmatprep.mubr.f32.mxu0 0.0
      %4133 = vmatmul.mubr.f32.gmra.mrb[0].mxu0 %v1265
      %v4134 = vpop.f32.mrb[0].mxu0
      %v4135 = vadd.f32 0.0, %v4134
      %v4136 = vpop.f32.mrb[0].mxu0
      %4137 = vmatprep.mubr.f32.mxu0 0.0
      %4138 = vmatmul.mubr.f32.gmra.mrb[0].mxu0 %v1268
      %v4139 = vpop.f32.mrb[0].mxu0
      %v4140 = vadd.f32 0.0, %v4139
      %v4141 = vpop.f32.mrb[0].mxu0
      %4142 = vmatprep.mubr.f32.mxu0 0.0
      %4143 = vmatmul.mubr.f32.gmra.mrb[0].mxu0 %v1271
      %v4144 = vpop.f32.mrb[0].mxu0
      %v4145 = vadd.f32 0.0, %v4144
      %v4146 = vpop.f32.mrb[0].mxu0
      %4147 = vmatprep.mubr.f32.mxu0 0.0
      %4148 = vmatmul.mubr.f32.gmra.mrb[0].mxu0 %v1274
      %v4149 = vpop.f32.mrb[0].mxu0
      %v4150 = vadd.f32 0.0, %v4149
      %v4151 = vpop.f32.mrb[0].mxu0
      %4152 = vmatprep.mubr.f32.mxu0 0.0
      %4153 = vmatmul.mubr.f32.gmra.mrb[0].mxu0 %v1277
      %v4154 = vpop.f32.mrb[0].mxu0
      %v4155 = vadd.f32 0.0, %v4154
      %v4156 = vpop.f32.mrb[0].mxu0
      %4157 = vmatprep.mubr.f32.mxu0 0.0
      %4158 = vmatmul.mubr.f32.gmra.mrb[0].mxu0 %v1280
      %v4159 = vpop.f32.mrb[0].mxu0
      %v4160 = vadd.f32 0.0, %v4159
      %v4161 = vpop.f32.mrb[0].mxu0
      %4162 = vmatprep.mubr.f32.mxu0 0.0
      %4163 = vmatmul.mubr.f32.gmra.mrb[0].mxu0 %v1283
      %v4164 = vpop.f32.mrb[0].mxu0
      %v4165 = vadd.f32 0.0, %v4164
      %v4166 = vpop.f32.mrb[0].mxu0
      %4167 = vmatprep.mubr.f32.mxu0 0.0
      %4168 = vmatmul.mubr.f32.gmra.mrb[0].mxu0 %v1286
      %v4169 = vpop.f32.mrb[0].mxu0
      %v4170 = vadd.f32 0.0, %v4169
      %v4171 = vpop.f32.mrb[0].mxu0
      %4172 = vmatprep.mubr.f32.mxu0 0.0
      %4173 = vmatmul.mubr.f32.gmra.mrb[0].mxu0 %v1289
      %v4174 = vpop.f32.mrb[0].mxu0
      %v4175 = vadd.f32 0.0, %v4174
      %v4176 = vpop.f32.mrb[0].mxu0
      %4177 = vmatprep.mubr.f32.mxu0 0.0
      %4178 = vmatmul.mubr.f32.gmra.mrb[0].mxu0 %v1292
      %v4179 = vpop.f32.mrb[0].mxu0
      %v4180 = vadd.f32 0.0, %v4179
      %v4181 = vpop.f32.mrb[0].mxu0
      %4182 = vmatprep.mubr.f32.mxu0 0.0
      %4183 = vmatmul.mubr.f32.gmra.mrb[0].mxu0 %v1295
      %v4184 = vpop.f32.mrb[0].mxu0
      %v4185 = vadd.f32 0.0, %v4184
      %v4186 = vpop.f32.mrb[0].mxu0
      %4187 = vmatprep.mubr.f32.mxu0 0.0
      %4188 = vmatmul.mubr.f32.gmra.mrb[0].mxu0 %v1298
      %v4189 = vpop.f32.mrb[0].mxu0
      %v4190 = vadd.f32 0.0, %v4189
      %v4191 = vpop.f32.mrb[0].mxu0
      %4192 = vmatprep.mubr.f32.mxu0 0.0
      %4193 = vmatmul.mubr.f32.gmra.mrb[0].mxu0 %v1301
      %v4194 = vpop.f32.mrb[0].mxu0
      %v4195 = vadd.f32 0.0, %v4194
      %v4196 = vpop.f32.mrb[0].mxu0
      %4197 = vmatprep.mubr.f32.mxu0 0.0
      %4198 = vmatmul.mubr.f32.gmra.mrb[0].mxu0 %v1304
      %v4199 = vpop.f32.mrb[0].mxu0
      %v4200 = vadd.f32 0.0, %v4199
      %v4201 = vpop.f32.mrb[0].mxu0
      %4202 = vmatprep.mubr.f32.mxu0 0.0
      %4203 = vmatmul.mubr.f32.gmra.mrb[0].mxu0 %v1307
      %v4204 = vpop.f32.mrb[0].mxu0
      %v4205 = vadd.f32 0.0, %v4204
      %v4206 = vpop.f32.mrb[0].mxu0
      %4207 = vmatprep.mubr.f32.mxu0 0.0
      %4208 = vmatmul.mubr.f32.gmra.mrb[0].mxu0 %v1310
      %v4209 = vpop.f32.mrb[0].mxu0
      %v4210 = vadd.f32 0.0, %v4209
      %v4211 = vpop.f32.mrb[0].mxu0
      %4212 = vmatprep.mubr.f32.mxu0 0.0
      %4213 = vmatmul.mubr.f32.gmra.mrb[0].mxu0 %v1313
      %v4214 = vpop.f32.mrb[0].mxu0
      %v4215 = vadd.f32 0.0, %v4214
      %v4216 = vpop.f32.mrb[0].mxu0
      %4217 = vmatprep.mubr.f32.mxu0 0.0
      %4218 = vmatmul.mubr.f32.gmra.mrb[0].mxu0 %v1316
      %v4219 = vpop.f32.mrb[0].mxu0
      %v4220 = vadd.f32 0.0, %v4219
      %v4221 = vpop.f32.mrb[0].mxu0
      %4222 = vmatprep.mubr.f32.mxu0 0.0
      %4223 = vmatmul.mubr.f32.gmra.mrb[0].mxu0 %v1319
      %v4224 = vpop.f32.mrb[0].mxu0
      %v4225 = vadd.f32 0.0, %v4224
      %v4226 = vpop.f32.mrb[0].mxu0
      %4227 = vmatprep.mubr.f32.mxu0 0.0
      %4228 = vmatmul.mubr.f32.gmra.mrb[0].mxu0 %v1322
      %v4229 = vpop.f32.mrb[0].mxu0
      %v4230 = vadd.f32 0.0, %v4229
      %v4231 = vpop.f32.mrb[0].mxu0
      %4232 = vmatprep.mubr.f32.mxu0 0.0
      %4233 = vmatmul.mubr.f32.gmra.mrb[0].mxu0 %v1325
      %v4234 = vpop.f32.mrb[0].mxu0
      %v4235 = vadd.f32 0.0, %v4234
      %v4236 = vpop.f32.mrb[0].mxu0
      %4237 = vmatprep.mubr.f32.mxu0 0.0
      %4238 = vmatmul.mubr.f32.gmra.mrb[0].mxu0 %v1328
      %v4239 = vpop.f32.mrb[0].mxu0
      %v4240 = vadd.f32 0.0, %v4239
      %v4241 = vpop.f32.mrb[0].mxu0
      %4242 = vmatprep.mubr.f32.mxu0 0.0
      %4243 = vmatmul.mubr.f32.gmra.mrb[0].mxu0 %v1331
      %v4244 = vpop.f32.mrb[0].mxu0
      %v4245 = vadd.f32 0.0, %v4244
      %v4246 = vpop.f32.mrb[0].mxu0
      %4247 = vmatprep.mubr.f32.mxu0 0.0
      %4248 = vmatmul.mubr.f32.gmra.mrb[0].mxu0 %v1334
      %v4249 = vpop.f32.mrb[0].mxu0
      %v4250 = vadd.f32 0.0, %v4249
      %v4251 = vpop.f32.mrb[0].mxu0
      %4252 = vmatprep.mubr.f32.mxu0 0.0
      %4253 = vmatmul.mubr.f32.gmra.mrb[0].mxu0 %v1337
      %v4254 = vpop.f32.mrb[0].mxu0
      %v4255 = vadd.f32 0.0, %v4254
      %v4256 = vpop.f32.mrb[0].mxu0
      %4257 = vmatprep.mubr.f32.mxu0 0.0
      %4258 = vmatmul.mubr.f32.gmra.mrb[0].mxu0 %v1340
      %v4259 = vpop.f32.mrb[0].mxu0
      %v4260 = vadd.f32 0.0, %v4259
      %v4261 = vpop.f32.mrb[0].mxu0
      %4262 = vmatprep.mubr.f32.mxu0 0.0
      %4263 = vmatmul.mubr.f32.gmra.mrb[0].mxu0 %v1343
      %v4264 = vpop.f32.mrb[0].mxu0
      %v4265 = vadd.f32 0.0, %v4264
      %v4266 = vpop.f32.mrb[0].mxu0
      %4267 = vmatprep.mubr.f32.mxu0 0.0
      %4268 = vmatmul.mubr.f32.gmra.mrb[0].mxu0 %v1346
      %v4269 = vpop.f32.mrb[0].mxu0
      %v4270 = vadd.f32 0.0, %v4269
      %v4271 = vpop.f32.mrb[0].mxu0
      %4272 = vmatprep.mubr.f32.mxu0 0.0
      %4273 = vmatmul.mubr.f32.gmra.mrb[0].mxu0 %v1349
      %v4274 = vpop.f32.mrb[0].mxu0
      %v4275 = vadd.f32 0.0, %v4274
      %v4276 = vpop.f32.mrb[0].mxu0
      %4277 = vmatprep.mubr.f32.mxu0 0.0
      %4278 = vmatmul.mubr.f32.gmra.mrb[0].mxu0 %v1352
      %v4279 = vpop.f32.mrb[0].mxu0
      %v4280 = vadd.f32 0.0, %v4279
      %v4281 = vpop.f32.mrb[0].mxu0
      %4282 = vdwg.mxu0
      %v4283 = vsel %vm1582, %v4054, 0.0
      %v4284 = vrot.slane %v4283, 4
      %v4285 = vadd.f32 %v4283, %v4284
      %v4286 = vrot.slane %v4285, 2
      %v4287 = vadd.f32 %v4285, %v4286
      %v4288 = vrot.slane %v4287, 1
      %v4289 = vadd.f32 %v4287, %v4288
      %v4290 = vmul.f32 %v4125, 0.04
      %v4291 = vmul.f32 %v4130, 0.04
      %v4292 = vmul.f32 %v4135, 0.04
      %v4293 = vmul.f32 %v4140, 0.04
      %v4294 = vmul.f32 %v4145, 0.04
      %v4295 = vmul.f32 %v4150, 0.04
      %v4296 = vmul.f32 %v4155, 0.04
      %v4297 = vmul.f32 %v4160, 0.04
      %v4298 = vmul.f32 %v4165, 0.04
      %v4299 = vmul.f32 %v4170, 0.04
      %v4300 = vmul.f32 %v4175, 0.04
      %v4301 = vmul.f32 %v4180, 0.04
      %v4302 = vmul.f32 %v4185, 0.04
      %v4303 = vmul.f32 %v4190, 0.04
      %v4304 = vmul.f32 %v4195, 0.04
      %v4305 = vmul.f32 %v4200, 0.04
      %v4306 = vmul.f32 %v4205, 0.04
      %v4307 = vmul.f32 %v4210, 0.04
      %v4308 = vmul.f32 %v4215, 0.04
      %v4309 = vmul.f32 %v4220, 0.04
      %v4310 = vmul.f32 %v4225, 0.04
      %v4311 = vmul.f32 %v4230, 0.04
      %v4312 = vmul.f32 %v4235, 0.04
      %v4313 = vmul.f32 %v4240, 0.04
      %v4314 = vmul.f32 %v4245, 0.04
      %v4315 = vmul.f32 %v4250, 0.04
      %v4316 = vmul.f32 %v4255, 0.04
      %v4317 = vmul.f32 %v4260, 0.04
      %v4318 = vmul.f32 %v4265, 0.04
      %v4319 = vmul.f32 %v4270, 0.04
      %v4320 = vmul.f32 %v4275, 0.04
      %v4321 = vmul.f32 %v4280, 0.04
      %v4322 = vsub.f32 %v3422, %v4290
      %v4323 = vsub.f32 %v3423, %v4291
      %v4324 = vsub.f32 %v3424, %v4292
      %v4325 = vsub.f32 %v3425, %v4293
      %v4326 = vsub.f32 %v3426, %v4294
      %v4327 = vsub.f32 %v3427, %v4295
      %v4328 = vsub.f32 %v3428, %v4296
      %v4329 = vsub.f32 %v3429, %v4297
      %v4330 = vsub.f32 %v3430, %v4298
      %v4331 = vsub.f32 %v3431, %v4299
      %v4332 = vsub.f32 %v3432, %v4300
      %v4333 = vsub.f32 %v3433, %v4301
      %v4334 = vsub.f32 %v3434, %v4302
      %v4335 = vsub.f32 %v3435, %v4303
      %v4336 = vsub.f32 %v3436, %v4304
      %v4337 = vsub.f32 %v3437, %v4305
      %v4338 = vsub.f32 %v3438, %v4306
      %v4339 = vsub.f32 %v3439, %v4307
      %v4340 = vsub.f32 %v3440, %v4308
      %v4341 = vsub.f32 %v3441, %v4309
      %v4342 = vsub.f32 %v3442, %v4310
      %v4343 = vsub.f32 %v3443, %v4311
      %v4344 = vsub.f32 %v3444, %v4312
      %v4345 = vsub.f32 %v3445, %v4313
      %v4346 = vsub.f32 %v3446, %v4314
      %v4347 = vsub.f32 %v3447, %v4315
      %v4348 = vsub.f32 %v3448, %v4316
      %v4349 = vsub.f32 %v3449, %v4317
      %v4350 = vsub.f32 %v3450, %v4318
      %v4351 = vsub.f32 %v3451, %v4319
      %v4352 = vsub.f32 %v3452, %v4320
      %v4353 = vsub.f32 %v3453, %v4321
      %v4354 = vmul.f32 %v4289, 0.04
      %v4355 = vsub.f32 %v3455, %v4354
      %v4356 = vmul.f32 %v3944, 0.04
      %v4357 = vmul.f32 %v3949, 0.04
      %v4358 = vmul.f32 %v3954, 0.04
      %v4359 = vmul.f32 %v3959, 0.04
      %v4360 = vsub.f32 %v3460, %v4356
      %v4361 = vsub.f32 %v3461, %v4357
      %v4362 = vsub.f32 %v3462, %v4358
      %v4363 = vsub.f32 %v3463, %v4359
      %v4364 = vmul.f32 %v3968, 0.04
      %v4365 = vsub.f32 %v3465, %v4364
      %v4367 = vlaneseq
      %v4368 = vshrl.u32 %v4367, 7
      %v4369 = vsub.s32 0, %v4368
      %v4370 = vrot.slane %v4355, %v4369
      %4372 = vmatprep.subr.mxu0 0.0
      %4373 = vmatpush1.msra.mxu0 %v4322
      %4374 = vmatprep.subr.mxu0 0.0
      %4375 = vmatpush1.msra.mxu0 %v4323
      %4376 = vmatprep.subr.mxu0 0.0
      %4377 = vmatpush1.msra.mxu0 %v4324
      %4378 = vmatprep.subr.mxu0 0.0
      %4379 = vmatpush1.msra.mxu0 %v4325
      %4380 = vmatprep.subr.mxu0 0.0
      %4381 = vmatpush1.msra.mxu0 %v4326
      %4382 = vmatprep.subr.mxu0 0.0
      %4383 = vmatpush1.msra.mxu0 %v4327
      %4384 = vmatprep.subr.mxu0 0.0
      %4385 = vmatpush1.msra.mxu0 %v4328
      %4386 = vmatprep.subr.mxu0 0.0
      %4387 = vmatpush1.msra.mxu0 %v4329
      %4388 = vmatprep.subr.mxu0 0.0
      %4389 = vmatpush1.msra.mxu0 %v4330
      %4390 = vmatprep.subr.mxu0 0.0
      %4391 = vmatpush1.msra.mxu0 %v4331
      %4392 = vmatprep.subr.mxu0 0.0
      %4393 = vmatpush1.msra.mxu0 %v4332
      %4394 = vmatprep.subr.mxu0 0.0
      %4395 = vmatpush1.msra.mxu0 %v4333
      %4396 = vmatprep.subr.mxu0 0.0
      %4397 = vmatpush1.msra.mxu0 %v4334
      %4398 = vmatprep.subr.mxu0 0.0
      %4399 = vmatpush1.msra.mxu0 %v4335
      %4400 = vmatprep.subr.mxu0 0.0
      %4401 = vmatpush1.msra.mxu0 %v4336
      %4402 = vmatprep.subr.mxu0 0.0
      %4403 = vmatpush1.msra.mxu0 %v4337
      %4404 = vmatprep.subr.mxu0 0.0
      %4405 = vmatpush1.msra.mxu0 %v4338
      %4406 = vmatprep.subr.mxu0 0.0
      %4407 = vmatpush1.msra.mxu0 %v4339
      %4408 = vmatprep.subr.mxu0 0.0
      %4409 = vmatpush1.msra.mxu0 %v4340
      %4410 = vmatprep.subr.mxu0 0.0
      %4411 = vmatpush1.msra.mxu0 %v4341
      %4412 = vmatprep.subr.mxu0 0.0
      %4413 = vmatpush1.msra.mxu0 %v4342
      %4414 = vmatprep.subr.mxu0 0.0
      %4415 = vmatpush1.msra.mxu0 %v4343
      %4416 = vmatprep.subr.mxu0 0.0
      %4417 = vmatpush1.msra.mxu0 %v4344
      %4418 = vmatprep.subr.mxu0 0.0
      %4419 = vmatpush1.msra.mxu0 %v4345
      %4420 = vmatprep.subr.mxu0 0.0
      %4421 = vmatpush1.msra.mxu0 %v4346
      %4422 = vmatprep.subr.mxu0 0.0
      %4423 = vmatpush1.msra.mxu0 %v4347
      %4424 = vmatprep.subr.mxu0 0.0
      %4425 = vmatpush1.msra.mxu0 %v4348
      %4426 = vmatprep.subr.mxu0 0.0
      %4427 = vmatpush1.msra.mxu0 %v4349
      %4428 = vmatprep.subr.mxu0 0.0
      %4429 = vmatpush1.msra.mxu0 %v4350
      %4430 = vmatprep.subr.mxu0 0.0
      %4431 = vmatpush1.msra.mxu0 %v4351
      %4432 = vmatprep.subr.mxu0 0.0
      %4433 = vmatpush1.msra.mxu0 %v4352
      %4434 = vmatprep.subr.mxu0 0.0
      %4435 = vmatpush1.msra.mxu0 %v4353
      %4436 = vmatprep.mubr.f32.mxu0 %v543
      %4437 = vmatmul.mubr.f32.gmra.mrb[0].mxu0 %v542
      %v4438 = vpop.f32.mrb[0].mxu0
      %v4439 = vadd.f32 %v4370, %v4438
      %v4440 = vpop.f32.mrb[0].mxu0
      %4441 = vdwg.mxu0
      %v4442 = vmax.f32 %v4439, 0.0
      %v4444 = vlaneseq
      %v4445 = vshrl.u32 %v4444, 7
      %v4446 = vsub.s32 0, %v4445
      %v4447 = vrot.slane %v4365, %v4446
      %v4450 = vsel %vm680, %v4442, 0
      %4452 = vmatprep.subr.mxu0 0.0
      %4453 = vmatpush1.msra.mxu0 %v4360
      %4454 = vmatprep.subr.mxu0 0.0
      %4455 = vmatpush1.msra.mxu0 %v4361
      %4456 = vmatprep.subr.mxu0 0.0
      %4457 = vmatpush1.msra.mxu0 %v4362
      %4458 = vmatprep.subr.mxu0 0.0
      %4459 = vmatpush1.msra.mxu0 %v4363
      %4460 = vmatprep.subr.mxu0 0.0
      %4461 = vmatpush1.msra.mxu0 0.0
      %4462 = vmatprep.subr.mxu0 0.0
      %4463 = vmatpush1.msra.mxu0 0.0
      %4464 = vmatprep.subr.mxu0 0.0
      %4465 = vmatpush1.msra.mxu0 0.0
      %4466 = vmatprep.subr.mxu0 0.0
      %4467 = vmatpush1.msra.mxu0 0.0
      %4468 = vmatprep.subr.mxu0 0.0
      %4469 = vmatpush1.msra.mxu0 0.0
      %4470 = vmatprep.subr.mxu0 0.0
      %4471 = vmatpush1.msra.mxu0 0.0
      %4472 = vmatprep.subr.mxu0 0.0
      %4473 = vmatpush1.msra.mxu0 0.0
      %4474 = vmatprep.subr.mxu0 0.0
      %4475 = vmatpush1.msra.mxu0 0.0
      %4476 = vmatprep.subr.mxu0 0.0
      %4477 = vmatpush1.msra.mxu0 0.0
      %4478 = vmatprep.subr.mxu0 0.0
      %4479 = vmatpush1.msra.mxu0 0.0
      %4480 = vmatprep.subr.mxu0 0.0
      %4481 = vmatpush1.msra.mxu0 0.0
      %4482 = vmatprep.subr.mxu0 0.0
      %4483 = vmatpush1.msra.mxu0 0.0
      %4484 = vmatprep.subr.mxu0 0.0
      %4485 = vmatpush1.msra.mxu0 0.0
      %4486 = vmatprep.subr.mxu0 0.0
      %4487 = vmatpush1.msra.mxu0 0.0
      %4488 = vmatprep.subr.mxu0 0.0
      %4489 = vmatpush1.msra.mxu0 0.0
      %4490 = vmatprep.subr.mxu0 0.0
      %4491 = vmatpush1.msra.mxu0 0.0
      %4492 = vmatprep.subr.mxu0 0.0
      %4493 = vmatpush1.msra.mxu0 0.0
      %4494 = vmatprep.subr.mxu0 0.0
      %4495 = vmatpush1.msra.mxu0 0.0
      %4496 = vmatprep.subr.mxu0 0.0
      %4497 = vmatpush1.msra.mxu0 0.0
      %4498 = vmatprep.subr.mxu0 0.0
      %4499 = vmatpush1.msra.mxu0 0.0
      %4500 = vmatprep.subr.mxu0 0.0
      %4501 = vmatpush1.msra.mxu0 0.0
      %4502 = vmatprep.subr.mxu0 0.0
      %4503 = vmatpush1.msra.mxu0 0.0
      %4504 = vmatprep.subr.mxu0 0.0
      %4505 = vmatpush1.msra.mxu0 0.0
      %4506 = vmatprep.subr.mxu0 0.0
      %4507 = vmatpush1.msra.mxu0 0.0
      %4508 = vmatprep.subr.mxu0 0.0
      %4509 = vmatpush1.msra.mxu0 0.0
      %4510 = vmatprep.subr.mxu0 0.0
      %4511 = vmatpush1.msra.mxu0 0.0
      %4512 = vmatprep.subr.mxu0 0.0
      %4513 = vmatpush1.msra.mxu0 0.0
      %4514 = vmatprep.subr.mxu0 0.0
      %4515 = vmatpush1.msra.mxu0 0.0
      %4516 = vmatprep.mubr.f32.mxu0 0.0
      %4517 = vmatmul.mubr.f32.gmra.mrb[0].mxu0 %v4450
      %v4518 = vpop.f32.mrb[0].mxu0
      %v4519 = vadd.f32 %v4447, %v4518
      %v4520 = vpop.f32.mrb[0].mxu0
      %4521 = vdwg.mxu0
      %v4522 = vsel %vm754, %v4519, -inf
      %4523 = vmax.xlane.f32.xlu0 %v4522
      %v4524 = vpop.xlane.xlu0 %4523
      %v4525 = vsub.f32 %v4519, %v4524
      %v4526 = vmul.f32 %v4525, 1.442695
      %v4527 = vpow.pop %v4526
      %v4528 = vsel %vm754, %v4527, 0.0
      %4529 = vadd.xlane.f32.xlu0 %v4528
      %v4530 = vpop.xlane.xlu0 %4529
      %v4531 = vlog2.pop %v4530
      %v4532 = vmul.f32 %v4531, 0.6931472
      %v4533 = vadd.f32 %v4532, %v4524
      %v4534 = vmul.f32 %v596, %v4519
      %v4535 = vsel %vm754, %v4534, 0.0
      %4536 = vadd.xlane.f32.xlu0 %v4535
      %v4537 = vpop.xlane.xlu0 %4536
      %v4538 = vsub.f32 %v4533, %v4537
      %v4539 = vrot.slane %v4538, 4
      %v4540 = vadd.f32 %v4538, %v4539
      %v4541 = vrot.slane %v4540, 2
      %v4542 = vadd.f32 %v4540, %v4541
      %v4543 = vrot.slane %v4542, 1
      %v4544 = vadd.f32 %v4542, %v4543
      %v4545 = vmul.f32 %v4544, 0.125
      %vm4546 = vcmp.eq.f32.partialorder %v4519, %v4524
      %v4547 = vsel %vm4546, %v584, 4
      %v4548 = vsel %vm754, %v4547, 2147483647
      %v4549 = vand.u32 %v4548, 65535
      %v4550 = vshra.s32 %v4548, 16
      %v4551 = vcvt.s32.f32 %v4549
      %v4552 = vcvt.s32.f32 %v4550
      %4553 = vmin.xlane.f32.xlu0 %v4552
      %v4554 = vpop.xlane.xlu0 %4553
      %vm4555 = vcmp.eq.f32.partialorder %v4552, %v4554
      %v4556 = vsel %vm4555, %v4551, inf
      %4557 = vmin.xlane.f32.xlu0 %v4556
      %v4558 = vpop.xlane.xlu0 %4557
      %v4559 = vcvt.f32.s32 %v4558
      %v4560 = vcvt.f32.s32 %v4554
      %v4561 = vshll.u32 %v4560, 16
      %v4562 = vadd.s32 %v4561, %v4559
      %vm4563 = vcmp.eq.s32.totalorder %v4562, %v544
      %v4564 = vsel %vm4563, 1, 0
      %v4565 = vcvt.s32.f32 %v4564
      %v4566 = vsel %vm799, %v4565, 0.0
      %v4567 = vrot.slane %v4566, 4
      %v4568 = vadd.f32 %v4566, %v4567
      %v4569 = vrot.slane %v4568, 2
      %v4570 = vadd.f32 %v4568, %v4569
      %v4571 = vrot.slane %v4570, 1
      %v4572 = vadd.f32 %v4570, %v4571
      %4573 = vmatprep.subr.mxu0 0.0
      %4574 = vmatpush1.msra.mxu0 %v4322
      %4575 = vmatprep.subr.mxu0 0.0
      %4576 = vmatpush1.msra.mxu0 %v4323
      %4577 = vmatprep.subr.mxu0 0.0
      %4578 = vmatpush1.msra.mxu0 %v4324
      %4579 = vmatprep.subr.mxu0 0.0
      %4580 = vmatpush1.msra.mxu0 %v4325
      %4581 = vmatprep.subr.mxu0 0.0
      %4582 = vmatpush1.msra.mxu0 %v4326
      %4583 = vmatprep.subr.mxu0 0.0
      %4584 = vmatpush1.msra.mxu0 %v4327
      %4585 = vmatprep.subr.mxu0 0.0
      %4586 = vmatpush1.msra.mxu0 %v4328
      %4587 = vmatprep.subr.mxu0 0.0
      %4588 = vmatpush1.msra.mxu0 %v4329
      %4589 = vmatprep.subr.mxu0 0.0
      %4590 = vmatpush1.msra.mxu0 %v4330
      %4591 = vmatprep.subr.mxu0 0.0
      %4592 = vmatpush1.msra.mxu0 %v4331
      %4593 = vmatprep.subr.mxu0 0.0
      %4594 = vmatpush1.msra.mxu0 %v4332
      %4595 = vmatprep.subr.mxu0 0.0
      %4596 = vmatpush1.msra.mxu0 %v4333
      %4597 = vmatprep.subr.mxu0 0.0
      %4598 = vmatpush1.msra.mxu0 %v4334
      %4599 = vmatprep.subr.mxu0 0.0
      %4600 = vmatpush1.msra.mxu0 %v4335
      %4601 = vmatprep.subr.mxu0 0.0
      %4602 = vmatpush1.msra.mxu0 %v4336
      %4603 = vmatprep.subr.mxu0 0.0
      %4604 = vmatpush1.msra.mxu0 %v4337
      %4605 = vmatprep.subr.mxu0 0.0
      %4606 = vmatpush1.msra.mxu0 %v4338
      %4607 = vmatprep.subr.mxu0 0.0
      %4608 = vmatpush1.msra.mxu0 %v4339
      %4609 = vmatprep.subr.mxu0 0.0
      %4610 = vmatpush1.msra.mxu0 %v4340
      %4611 = vmatprep.subr.mxu0 0.0
      %4612 = vmatpush1.msra.mxu0 %v4341
      %4613 = vmatprep.subr.mxu0 0.0
      %4614 = vmatpush1.msra.mxu0 %v4342
      %4615 = vmatprep.subr.mxu0 0.0
      %4616 = vmatpush1.msra.mxu0 %v4343
      %4617 = vmatprep.subr.mxu0 0.0
      %4618 = vmatpush1.msra.mxu0 %v4344
      %4619 = vmatprep.subr.mxu0 0.0
      %4620 = vmatpush1.msra.mxu0 %v4345
      %4621 = vmatprep.subr.mxu0 0.0
      %4622 = vmatpush1.msra.mxu0 %v4346
      %4623 = vmatprep.subr.mxu0 0.0
      %4624 = vmatpush1.msra.mxu0 %v4347
      %4625 = vmatprep.subr.mxu0 0.0
      %4626 = vmatpush1.msra.mxu0 %v4348
      %4627 = vmatprep.subr.mxu0 0.0
      %4628 = vmatpush1.msra.mxu0 %v4349
      %4629 = vmatprep.subr.mxu0 0.0
      %4630 = vmatpush1.msra.mxu0 %v4350
      %4631 = vmatprep.subr.mxu0 0.0
      %4632 = vmatpush1.msra.mxu0 %v4351
      %4633 = vmatprep.subr.mxu0 0.0
      %4634 = vmatpush1.msra.mxu0 %v4352
      %4635 = vmatprep.subr.mxu0 0.0
      %4636 = vmatpush1.msra.mxu0 %v4353
      %4637 = vmatprep.mubr.f32.mxu0 %v808
      %4638 = vmatmul.mubr.f32.gmra.mrb[0].mxu0 %v540
      %v4639 = vpop.f32.mrb[0].mxu0
      %v4640 = vadd.f32 %v4370, %v4639
      %v4641 = vpop.f32.mrb[0].mxu0
      %4642 = vdwg.mxu0
      %v4643 = vmax.f32 %v4640, 0.0
      %v4645 = vsel %vm680, %v4643, 0
      %4647 = vmatprep.subr.mxu0 0.0
      %4648 = vmatpush1.msra.mxu0 %v4360
      %4649 = vmatprep.subr.mxu0 0.0
      %4650 = vmatpush1.msra.mxu0 %v4361
      %4651 = vmatprep.subr.mxu0 0.0
      %4652 = vmatpush1.msra.mxu0 %v4362
      %4653 = vmatprep.subr.mxu0 0.0
      %4654 = vmatpush1.msra.mxu0 %v4363
      %4655 = vmatprep.subr.mxu0 0.0
      %4656 = vmatpush1.msra.mxu0 0.0
      %4657 = vmatprep.subr.mxu0 0.0
      %4658 = vmatpush1.msra.mxu0 0.0
      %4659 = vmatprep.subr.mxu0 0.0
      %4660 = vmatpush1.msra.mxu0 0.0
      %4661 = vmatprep.subr.mxu0 0.0
      %4662 = vmatpush1.msra.mxu0 0.0
      %4663 = vmatprep.subr.mxu0 0.0
      %4664 = vmatpush1.msra.mxu0 0.0
      %4665 = vmatprep.subr.mxu0 0.0
      %4666 = vmatpush1.msra.mxu0 0.0
      %4667 = vmatprep.subr.mxu0 0.0
      %4668 = vmatpush1.msra.mxu0 0.0
      %4669 = vmatprep.subr.mxu0 0.0
      %4670 = vmatpush1.msra.mxu0 0.0
      %4671 = vmatprep.subr.mxu0 0.0
      %4672 = vmatpush1.msra.mxu0 0.0
      %4673 = vmatprep.subr.mxu0 0.0
      %4674 = vmatpush1.msra.mxu0 0.0
      %4675 = vmatprep.subr.mxu0 0.0
      %4676 = vmatpush1.msra.mxu0 0.0
      %4677 = vmatprep.subr.mxu0 0.0
      %4678 = vmatpush1.msra.mxu0 0.0
      %4679 = vmatprep.subr.mxu0 0.0
      %4680 = vmatpush1.msra.mxu0 0.0
      %4681 = vmatprep.subr.mxu0 0.0
      %4682 = vmatpush1.msra.mxu0 0.0
      %4683 = vmatprep.subr.mxu0 0.0
      %4684 = vmatpush1.msra.mxu0 0.0
      %4685 = vmatprep.subr.mxu0 0.0
      %4686 = vmatpush1.msra.mxu0 0.0
      %4687 = vmatprep.subr.mxu0 0.0
      %4688 = vmatpush1.msra.mxu0 0.0
      %4689 = vmatprep.subr.mxu0 0.0
      %4690 = vmatpush1.msra.mxu0 0.0
      %4691 = vmatprep.subr.mxu0 0.0
      %4692 = vmatpush1.msra.mxu0 0.0
      %4693 = vmatprep.subr.mxu0 0.0
      %4694 = vmatpush1.msra.mxu0 0.0
      %4695 = vmatprep.subr.mxu0 0.0
      %4696 = vmatpush1.msra.mxu0 0.0
      %4697 = vmatprep.subr.mxu0 0.0
      %4698 = vmatpush1.msra.mxu0 0.0
      %4699 = vmatprep.subr.mxu0 0.0
      %4700 = vmatpush1.msra.mxu0 0.0
      %4701 = vmatprep.subr.mxu0 0.0
      %4702 = vmatpush1.msra.mxu0 0.0
      %4703 = vmatprep.subr.mxu0 0.0
      %4704 = vmatpush1.msra.mxu0 0.0
      %4705 = vmatprep.subr.mxu0 0.0
      %4706 = vmatpush1.msra.mxu0 0.0
      %4707 = vmatprep.subr.mxu0 0.0
      %4708 = vmatpush1.msra.mxu0 0.0
      %4709 = vmatprep.subr.mxu0 0.0
      %4710 = vmatpush1.msra.mxu0 0.0
      %4711 = vmatprep.mubr.f32.mxu0 0.0
      %4712 = vmatmul.mubr.f32.gmra.mrb[0].mxu0 %v4645
      %v4713 = vpop.f32.mrb[0].mxu0
      %v4714 = vadd.f32 %v4447, %v4713
      %v4715 = vpop.f32.mrb[0].mxu0
      %4716 = vdwg.mxu0
      %v4717 = vsel %vm954, %v4714, -inf
      %4718 = vmax.xlane.f32.xlu0 %v4717
      %v4719 = vpop.xlane.xlu0 %4718
      %v4720 = vsub.f32 %v4714, %v4719
      %v4721 = vmul.f32 %v4720, 1.442695
      %v4722 = vpow.pop %v4721
      %v4723 = vsel %vm954, %v4722, 0.0
      %4724 = vadd.xlane.f32.xlu0 %v4723
      %v4725 = vpop.xlane.xlu0 %4724
      %v4726 = vrcp.pop %v4725
      %v4727 = vmul.f32 %v4722, %v4726
      %v4728 = vsub.f32 %v4727, %v590
      %v4729 = vmul.f32 %v4728, 0.25
      %4730 = vxpose.xlu0.b32.start [1/16] %v4643, 128
      %4731 = vxpose.xlu0.b32.cont [2/16] 0.0, 128
      %4732 = vxpose.xlu0.b32.cont [3/16] 0.0, 128
      %4733 = vxpose.xlu0.b32.cont [4/16] 0.0, 128
      %4734 = vxpose.xlu0.b32.cont [5/16] 0.0, 128
      %4735 = vxpose.xlu0.b32.cont [6/16] 0.0, 128
      %4736 = vxpose.xlu0.b32.cont [7/16] 0.0, 128
      %4737 = vxpose.xlu0.b32.cont [8/16] 0.0, 128
      %4738 = vxpose.xlu0.b32.cont [9/16] 0.0, 128
      %4739 = vxpose.xlu0.b32.cont [10/16] 0.0, 128
      %4740 = vxpose.xlu0.b32.cont [11/16] 0.0, 128
      %4741 = vxpose.xlu0.b32.cont [12/16] 0.0, 128
      %4742 = vxpose.xlu0.b32.cont [13/16] 0.0, 128
      %4743 = vxpose.xlu0.b32.cont [14/16] 0.0, 128
      %4744 = vxpose.xlu0.b32.cont [15/16] 0.0, 128
      %4745 = vxpose.xlu0.b32.end [16/16] 0.0, 128
      %v4746 = vpop.trf.xlu0
      %v4747 = vpop.trf.xlu0
      %v4748 = vpop.trf.xlu0
      %v4749 = vpop.trf.xlu0
      %v4750 = vpop.trf.xlu0
      %v4751 = vpop.trf.xlu0
      %v4752 = vpop.trf.xlu0
      %v4753 = vpop.trf.xlu0
      %v4754 = vpop.trf.xlu0
      %v4755 = vpop.trf.xlu0
      %v4756 = vpop.trf.xlu0
      %v4757 = vpop.trf.xlu0
      %v4758 = vpop.trf.xlu0
      %v4759 = vpop.trf.xlu0
      %v4760 = vpop.trf.xlu0
      %v4761 = vpop.trf.xlu0
      %v4763 = vsel %vm754, %v4746, 0
      %v4766 = vsel %vm754, %v4747, 0
      %v4769 = vsel %vm754, %v4748, 0
      %v4772 = vsel %vm754, %v4749, 0
      %v4775 = vsel %vm1012, %v4729, 0
      %4777 = vmatprep.subr.mxu0 0.0
      %4778 = vmatpush1.msra.mxu0 %v4775
      %4779 = vmatprep.subr.mxu0 0.0
      %4780 = vmatpush1.msra.mxu0 0.0
      %4781 = vmatprep.subr.mxu0 0.0
      %4782 = vmatpush1.msra.mxu0 0.0
      %4783 = vmatprep.subr.mxu0 0.0
      %4784 = vmatpush1.msra.mxu0 0.0
      %4785 = vmatprep.subr.mxu0 0.0
      %4786 = vmatpush1.msra.mxu0 0.0
      %4787 = vmatprep.subr.mxu0 0.0
      %4788 = vmatpush1.msra.mxu0 0.0
      %4789 = vmatprep.subr.mxu0 0.0
      %4790 = vmatpush1.msra.mxu0 0.0
      %4791 = vmatprep.subr.mxu0 0.0
      %4792 = vmatpush1.msra.mxu0 0.0
      %4793 = vmatprep.subr.mxu0 0.0
      %4794 = vmatpush1.msra.mxu0 0.0
      %4795 = vmatprep.subr.mxu0 0.0
      %4796 = vmatpush1.msra.mxu0 0.0
      %4797 = vmatprep.subr.mxu0 0.0
      %4798 = vmatpush1.msra.mxu0 0.0
      %4799 = vmatprep.subr.mxu0 0.0
      %4800 = vmatpush1.msra.mxu0 0.0
      %4801 = vmatprep.subr.mxu0 0.0
      %4802 = vmatpush1.msra.mxu0 0.0
      %4803 = vmatprep.subr.mxu0 0.0
      %4804 = vmatpush1.msra.mxu0 0.0
      %4805 = vmatprep.subr.mxu0 0.0
      %4806 = vmatpush1.msra.mxu0 0.0
      %4807 = vmatprep.subr.mxu0 0.0
      %4808 = vmatpush1.msra.mxu0 0.0
      %4809 = vmatprep.subr.mxu0 0.0
      %4810 = vmatpush1.msra.mxu0 0.0
      %4811 = vmatprep.subr.mxu0 0.0
      %4812 = vmatpush1.msra.mxu0 0.0
      %4813 = vmatprep.subr.mxu0 0.0
      %4814 = vmatpush1.msra.mxu0 0.0
      %4815 = vmatprep.subr.mxu0 0.0
      %4816 = vmatpush1.msra.mxu0 0.0
      %4817 = vmatprep.subr.mxu0 0.0
      %4818 = vmatpush1.msra.mxu0 0.0
      %4819 = vmatprep.subr.mxu0 0.0
      %4820 = vmatpush1.msra.mxu0 0.0
      %4821 = vmatprep.subr.mxu0 0.0
      %4822 = vmatpush1.msra.mxu0 0.0
      %4823 = vmatprep.subr.mxu0 0.0
      %4824 = vmatpush1.msra.mxu0 0.0
      %4825 = vmatprep.subr.mxu0 0.0
      %4826 = vmatpush1.msra.mxu0 0.0
      %4827 = vmatprep.subr.mxu0 0.0
      %4828 = vmatpush1.msra.mxu0 0.0
      %4829 = vmatprep.subr.mxu0 0.0
      %4830 = vmatpush1.msra.mxu0 0.0
      %4831 = vmatprep.subr.mxu0 0.0
      %4832 = vmatpush1.msra.mxu0 0.0
      %4833 = vmatprep.subr.mxu0 0.0
      %4834 = vmatpush1.msra.mxu0 0.0
      %4835 = vmatprep.subr.mxu0 0.0
      %4836 = vmatpush1.msra.mxu0 0.0
      %4837 = vmatprep.subr.mxu0 0.0
      %4838 = vmatpush1.msra.mxu0 0.0
      %4839 = vmatprep.subr.mxu0 0.0
      %4840 = vmatpush1.msra.mxu0 0.0
      %4841 = vmatprep.mubr.f32.mxu0 0.0
      %4842 = vmatmul.mubr.f32.gmra.mrb[0].mxu0 %v4763
      %v4843 = vpop.f32.mrb[0].mxu0
      %v4844 = vadd.f32 0.0, %v4843
      %v4845 = vpop.f32.mrb[0].mxu0
      %4846 = vmatprep.mubr.f32.mxu0 0.0
      %4847 = vmatmul.mubr.f32.gmra.mrb[0].mxu0 %v4766
      %v4848 = vpop.f32.mrb[0].mxu0
      %v4849 = vadd.f32 0.0, %v4848
      %v4850 = vpop.f32.mrb[0].mxu0
      %4851 = vmatprep.mubr.f32.mxu0 0.0
      %4852 = vmatmul.mubr.f32.gmra.mrb[0].mxu0 %v4769
      %v4853 = vpop.f32.mrb[0].mxu0
      %v4854 = vadd.f32 0.0, %v4853
      %v4855 = vpop.f32.mrb[0].mxu0
      %4856 = vmatprep.mubr.f32.mxu0 0.0
      %4857 = vmatmul.mubr.f32.gmra.mrb[0].mxu0 %v4772
      %v4858 = vpop.f32.mrb[0].mxu0
      %v4859 = vadd.f32 0.0, %v4858
      %v4860 = vpop.f32.mrb[0].mxu0
      %4861 = vdwg.mxu0
      %v4862 = vsel %vm954, %v4729, 0.0
      %v4863 = vrot.slane %v4862, 4
      %v4864 = vadd.f32 %v4862, %v4863
      %v4865 = vrot.slane %v4864, 2
      %v4866 = vadd.f32 %v4864, %v4865
      %v4867 = vrot.slane %v4866, 1
      %v4868 = vadd.f32 %v4866, %v4867
      %v4869 = vsel %vm754, %v4729, 0
      %v4872 = vsel %vm754, %v4360, 0
      %v4875 = vsel %vm754, %v4361, 0
      %v4878 = vsel %vm754, %v4362, 0
      %v4881 = vsel %vm754, %v4363, 0
      %4883 = vmatprep.subr.mxu0 0.0
      %4884 = vmatpush1.xpose.msra.mxu0 %v4872
      %4885 = vmatprep.subr.mxu0 0.0
      %4886 = vmatpush1.xpose.msra.mxu0 %v4875
      %4887 = vmatprep.subr.mxu0 0.0
      %4888 = vmatpush1.xpose.msra.mxu0 %v4878
      %4889 = vmatprep.subr.mxu0 0.0
      %4890 = vmatpush1.xpose.msra.mxu0 %v4881
      %4891 = vmatprep.subr.mxu0 0.0
      %4892 = vmatpush1.xpose.msra.mxu0 0.0
      %4893 = vmatprep.subr.mxu0 0.0
      %4894 = vmatpush1.xpose.msra.mxu0 0.0
      %4895 = vmatprep.subr.mxu0 0.0
      %4896 = vmatpush1.xpose.msra.mxu0 0.0
      %4897 = vmatprep.subr.mxu0 0.0
      %4898 = vmatpush1.xpose.msra.mxu0 0.0
      %4899 = vmatprep.subr.mxu0 0.0
      %4900 = vmatpush1.xpose.msra.mxu0 0.0
      %4901 = vmatprep.subr.mxu0 0.0
      %4902 = vmatpush1.xpose.msra.mxu0 0.0
      %4903 = vmatprep.subr.mxu0 0.0
      %4904 = vmatpush1.xpose.msra.mxu0 0.0
      %4905 = vmatprep.subr.mxu0 0.0
      %4906 = vmatpush1.xpose.msra.mxu0 0.0
      %4907 = vmatprep.subr.mxu0 0.0
      %4908 = vmatpush1.xpose.msra.mxu0 0.0
      %4909 = vmatprep.subr.mxu0 0.0
      %4910 = vmatpush1.xpose.msra.mxu0 0.0
      %4911 = vmatprep.subr.mxu0 0.0
      %4912 = vmatpush1.xpose.msra.mxu0 0.0
      %4913 = vmatprep.subr.mxu0 0.0
      %4914 = vmatpush1.xpose.msra.mxu0 0.0
      %4915 = vmatprep.subr.mxu0 0.0
      %4916 = vmatpush1.xpose.msra.mxu0 0.0
      %4917 = vmatprep.subr.mxu0 0.0
      %4918 = vmatpush1.xpose.msra.mxu0 0.0
      %4919 = vmatprep.subr.mxu0 0.0
      %4920 = vmatpush1.xpose.msra.mxu0 0.0
      %4921 = vmatprep.subr.mxu0 0.0
      %4922 = vmatpush1.xpose.msra.mxu0 0.0
      %4923 = vmatprep.subr.mxu0 0.0
      %4924 = vmatpush1.xpose.msra.mxu0 0.0
      %4925 = vmatprep.subr.mxu0 0.0
      %4926 = vmatpush1.xpose.msra.mxu0 0.0
      %4927 = vmatprep.subr.mxu0 0.0
      %4928 = vmatpush1.xpose.msra.mxu0 0.0
      %4929 = vmatprep.subr.mxu0 0.0
      %4930 = vmatpush1.xpose.msra.mxu0 0.0
      %4931 = vmatprep.subr.mxu0 0.0
      %4932 = vmatpush1.xpose.msra.mxu0 0.0
      %4933 = vmatprep.subr.mxu0 0.0
      %4934 = vmatpush1.xpose.msra.mxu0 0.0
      %4935 = vmatprep.subr.mxu0 0.0
      %4936 = vmatpush1.xpose.msra.mxu0 0.0
      %4937 = vmatprep.subr.mxu0 0.0
      %4938 = vmatpush1.xpose.msra.mxu0 0.0
      %4939 = vmatprep.subr.mxu0 0.0
      %4940 = vmatpush1.xpose.msra.mxu0 0.0
      %4941 = vmatprep.subr.mxu0 0.0
      %4942 = vmatpush1.xpose.msra.mxu0 0.0
      %4943 = vmatprep.subr.mxu0 0.0
      %4944 = vmatpush1.xpose.msra.mxu0 0.0
      %4945 = vmatprep.subr.mxu0 0.0
      %4946 = vmatpush1.xpose.msra.mxu0 0.0
      %4947 = vmatprep.mubr.f32.mxu0 0.0
      %4948 = vmatmul.mubr.f32.gmra.mrb[0].mxu0 %v4869
      %v4949 = vpop.f32.mrb[0].mxu0
      %v4950 = vadd.f32 0.0, %v4949
      %v4951 = vpop.f32.mrb[0].mxu0
      %4952 = vdwg.mxu0
      %vm4953 = vcmp.gt.f32.partialorder %v4640, 0.0
      %v4954 = vsel %vm4953, %v4950, 0.0
      %v4956 = vsel %vm1012, %v4954, 0
      %4958 = vmatprep.subr.mxu0 0.0
      %4959 = vmatpush1.msra.mxu0 %v4956
      %4960 = vmatprep.subr.mxu0 0.0
      %4961 = vmatpush1.msra.mxu0 0.0
      %4962 = vmatprep.subr.mxu0 0.0
      %4963 = vmatpush1.msra.mxu0 0.0
      %4964 = vmatprep.subr.mxu0 0.0
      %4965 = vmatpush1.msra.mxu0 0.0
      %4966 = vmatprep.subr.mxu0 0.0
      %4967 = vmatpush1.msra.mxu0 0.0
      %4968 = vmatprep.subr.mxu0 0.0
      %4969 = vmatpush1.msra.mxu0 0.0
      %4970 = vmatprep.subr.mxu0 0.0
      %4971 = vmatpush1.msra.mxu0 0.0
      %4972 = vmatprep.subr.mxu0 0.0
      %4973 = vmatpush1.msra.mxu0 0.0
      %4974 = vmatprep.subr.mxu0 0.0
      %4975 = vmatpush1.msra.mxu0 0.0
      %4976 = vmatprep.subr.mxu0 0.0
      %4977 = vmatpush1.msra.mxu0 0.0
      %4978 = vmatprep.subr.mxu0 0.0
      %4979 = vmatpush1.msra.mxu0 0.0
      %4980 = vmatprep.subr.mxu0 0.0
      %4981 = vmatpush1.msra.mxu0 0.0
      %4982 = vmatprep.subr.mxu0 0.0
      %4983 = vmatpush1.msra.mxu0 0.0
      %4984 = vmatprep.subr.mxu0 0.0
      %4985 = vmatpush1.msra.mxu0 0.0
      %4986 = vmatprep.subr.mxu0 0.0
      %4987 = vmatpush1.msra.mxu0 0.0
      %4988 = vmatprep.subr.mxu0 0.0
      %4989 = vmatpush1.msra.mxu0 0.0
      %4990 = vmatprep.subr.mxu0 0.0
      %4991 = vmatpush1.msra.mxu0 0.0
      %4992 = vmatprep.subr.mxu0 0.0
      %4993 = vmatpush1.msra.mxu0 0.0
      %4994 = vmatprep.subr.mxu0 0.0
      %4995 = vmatpush1.msra.mxu0 0.0
      %4996 = vmatprep.subr.mxu0 0.0
      %4997 = vmatpush1.msra.mxu0 0.0
      %4998 = vmatprep.subr.mxu0 0.0
      %4999 = vmatpush1.msra.mxu0 0.0
      %5000 = vmatprep.subr.mxu0 0.0
      %5001 = vmatpush1.msra.mxu0 0.0
      %5002 = vmatprep.subr.mxu0 0.0
      %5003 = vmatpush1.msra.mxu0 0.0
      %5004 = vmatprep.subr.mxu0 0.0
      %5005 = vmatpush1.msra.mxu0 0.0
      %5006 = vmatprep.subr.mxu0 0.0
      %5007 = vmatpush1.msra.mxu0 0.0
      %5008 = vmatprep.subr.mxu0 0.0
      %5009 = vmatpush1.msra.mxu0 0.0
      %5010 = vmatprep.subr.mxu0 0.0
      %5011 = vmatpush1.msra.mxu0 0.0
      %5012 = vmatprep.subr.mxu0 0.0
      %5013 = vmatpush1.msra.mxu0 0.0
      %5014 = vmatprep.subr.mxu0 0.0
      %5015 = vmatpush1.msra.mxu0 0.0
      %5016 = vmatprep.subr.mxu0 0.0
      %5017 = vmatpush1.msra.mxu0 0.0
      %5018 = vmatprep.subr.mxu0 0.0
      %5019 = vmatpush1.msra.mxu0 0.0
      %5020 = vmatprep.subr.mxu0 0.0
      %5021 = vmatpush1.msra.mxu0 0.0
      %5022 = vmatprep.mubr.f32.mxu0 0.0
      %5023 = vmatmul.mubr.f32.gmra.mrb[0].mxu0 %v1259
      %v5024 = vpop.f32.mrb[0].mxu0
      %v5025 = vadd.f32 0.0, %v5024
      %v5026 = vpop.f32.mrb[0].mxu0
      %5027 = vmatprep.mubr.f32.mxu0 0.0
      %5028 = vmatmul.mubr.f32.gmra.mrb[0].mxu0 %v1262
      %v5029 = vpop.f32.mrb[0].mxu0
      %v5030 = vadd.f32 0.0, %v5029
      %v5031 = vpop.f32.mrb[0].mxu0
      %5032 = vmatprep.mubr.f32.mxu0 0.0
      %5033 = vmatmul.mubr.f32.gmra.mrb[0].mxu0 %v1265
      %v5034 = vpop.f32.mrb[0].mxu0
      %v5035 = vadd.f32 0.0, %v5034
      %v5036 = vpop.f32.mrb[0].mxu0
      %5037 = vmatprep.mubr.f32.mxu0 0.0
      %5038 = vmatmul.mubr.f32.gmra.mrb[0].mxu0 %v1268
      %v5039 = vpop.f32.mrb[0].mxu0
      %v5040 = vadd.f32 0.0, %v5039
      %v5041 = vpop.f32.mrb[0].mxu0
      %5042 = vmatprep.mubr.f32.mxu0 0.0
      %5043 = vmatmul.mubr.f32.gmra.mrb[0].mxu0 %v1271
      %v5044 = vpop.f32.mrb[0].mxu0
      %v5045 = vadd.f32 0.0, %v5044
      %v5046 = vpop.f32.mrb[0].mxu0
      %5047 = vmatprep.mubr.f32.mxu0 0.0
      %5048 = vmatmul.mubr.f32.gmra.mrb[0].mxu0 %v1274
      %v5049 = vpop.f32.mrb[0].mxu0
      %v5050 = vadd.f32 0.0, %v5049
      %v5051 = vpop.f32.mrb[0].mxu0
      %5052 = vmatprep.mubr.f32.mxu0 0.0
      %5053 = vmatmul.mubr.f32.gmra.mrb[0].mxu0 %v1277
      %v5054 = vpop.f32.mrb[0].mxu0
      %v5055 = vadd.f32 0.0, %v5054
      %v5056 = vpop.f32.mrb[0].mxu0
      %5057 = vmatprep.mubr.f32.mxu0 0.0
      %5058 = vmatmul.mubr.f32.gmra.mrb[0].mxu0 %v1280
      %v5059 = vpop.f32.mrb[0].mxu0
      %v5060 = vadd.f32 0.0, %v5059
      %v5061 = vpop.f32.mrb[0].mxu0
      %5062 = vmatprep.mubr.f32.mxu0 0.0
      %5063 = vmatmul.mubr.f32.gmra.mrb[0].mxu0 %v1283
      %v5064 = vpop.f32.mrb[0].mxu0
      %v5065 = vadd.f32 0.0, %v5064
      %v5066 = vpop.f32.mrb[0].mxu0
      %5067 = vmatprep.mubr.f32.mxu0 0.0
      %5068 = vmatmul.mubr.f32.gmra.mrb[0].mxu0 %v1286
      %v5069 = vpop.f32.mrb[0].mxu0
      %v5070 = vadd.f32 0.0, %v5069
      %v5071 = vpop.f32.mrb[0].mxu0
      %5072 = vmatprep.mubr.f32.mxu0 0.0
      %5073 = vmatmul.mubr.f32.gmra.mrb[0].mxu0 %v1289
      %v5074 = vpop.f32.mrb[0].mxu0
      %v5075 = vadd.f32 0.0, %v5074
      %v5076 = vpop.f32.mrb[0].mxu0
      %5077 = vmatprep.mubr.f32.mxu0 0.0
      %5078 = vmatmul.mubr.f32.gmra.mrb[0].mxu0 %v1292
      %v5079 = vpop.f32.mrb[0].mxu0
      %v5080 = vadd.f32 0.0, %v5079
      %v5081 = vpop.f32.mrb[0].mxu0
      %5082 = vmatprep.mubr.f32.mxu0 0.0
      %5083 = vmatmul.mubr.f32.gmra.mrb[0].mxu0 %v1295
      %v5084 = vpop.f32.mrb[0].mxu0
      %v5085 = vadd.f32 0.0, %v5084
      %v5086 = vpop.f32.mrb[0].mxu0
      %5087 = vmatprep.mubr.f32.mxu0 0.0
      %5088 = vmatmul.mubr.f32.gmra.mrb[0].mxu0 %v1298
      %v5089 = vpop.f32.mrb[0].mxu0
      %v5090 = vadd.f32 0.0, %v5089
      %v5091 = vpop.f32.mrb[0].mxu0
      %5092 = vmatprep.mubr.f32.mxu0 0.0
      %5093 = vmatmul.mubr.f32.gmra.mrb[0].mxu0 %v1301
      %v5094 = vpop.f32.mrb[0].mxu0
      %v5095 = vadd.f32 0.0, %v5094
      %v5096 = vpop.f32.mrb[0].mxu0
      %5097 = vmatprep.mubr.f32.mxu0 0.0
      %5098 = vmatmul.mubr.f32.gmra.mrb[0].mxu0 %v1304
      %v5099 = vpop.f32.mrb[0].mxu0
      %v5100 = vadd.f32 0.0, %v5099
      %v5101 = vpop.f32.mrb[0].mxu0
      %5102 = vmatprep.mubr.f32.mxu0 0.0
      %5103 = vmatmul.mubr.f32.gmra.mrb[0].mxu0 %v1307
      %v5104 = vpop.f32.mrb[0].mxu0
      %v5105 = vadd.f32 0.0, %v5104
      %v5106 = vpop.f32.mrb[0].mxu0
      %5107 = vmatprep.mubr.f32.mxu0 0.0
      %5108 = vmatmul.mubr.f32.gmra.mrb[0].mxu0 %v1310
      %v5109 = vpop.f32.mrb[0].mxu0
      %v5110 = vadd.f32 0.0, %v5109
      %v5111 = vpop.f32.mrb[0].mxu0
      %5112 = vmatprep.mubr.f32.mxu0 0.0
      %5113 = vmatmul.mubr.f32.gmra.mrb[0].mxu0 %v1313
      %v5114 = vpop.f32.mrb[0].mxu0
      %v5115 = vadd.f32 0.0, %v5114
      %v5116 = vpop.f32.mrb[0].mxu0
      %5117 = vmatprep.mubr.f32.mxu0 0.0
      %5118 = vmatmul.mubr.f32.gmra.mrb[0].mxu0 %v1316
      %v5119 = vpop.f32.mrb[0].mxu0
      %v5120 = vadd.f32 0.0, %v5119
      %v5121 = vpop.f32.mrb[0].mxu0
      %5122 = vmatprep.mubr.f32.mxu0 0.0
      %5123 = vmatmul.mubr.f32.gmra.mrb[0].mxu0 %v1319
      %v5124 = vpop.f32.mrb[0].mxu0
      %v5125 = vadd.f32 0.0, %v5124
      %v5126 = vpop.f32.mrb[0].mxu0
      %5127 = vmatprep.mubr.f32.mxu0 0.0
      %5128 = vmatmul.mubr.f32.gmra.mrb[0].mxu0 %v1322
      %v5129 = vpop.f32.mrb[0].mxu0
      %v5130 = vadd.f32 0.0, %v5129
      %v5131 = vpop.f32.mrb[0].mxu0
      %5132 = vmatprep.mubr.f32.mxu0 0.0
      %5133 = vmatmul.mubr.f32.gmra.mrb[0].mxu0 %v1325
      %v5134 = vpop.f32.mrb[0].mxu0
      %v5135 = vadd.f32 0.0, %v5134
      %v5136 = vpop.f32.mrb[0].mxu0
      %5137 = vmatprep.mubr.f32.mxu0 0.0
      %5138 = vmatmul.mubr.f32.gmra.mrb[0].mxu0 %v1328
      %v5139 = vpop.f32.mrb[0].mxu0
      %v5140 = vadd.f32 0.0, %v5139
      %v5141 = vpop.f32.mrb[0].mxu0
      %5142 = vmatprep.mubr.f32.mxu0 0.0
      %5143 = vmatmul.mubr.f32.gmra.mrb[0].mxu0 %v1331
      %v5144 = vpop.f32.mrb[0].mxu0
      %v5145 = vadd.f32 0.0, %v5144
      %v5146 = vpop.f32.mrb[0].mxu0
      %5147 = vmatprep.mubr.f32.mxu0 0.0
      %5148 = vmatmul.mubr.f32.gmra.mrb[0].mxu0 %v1334
      %v5149 = vpop.f32.mrb[0].mxu0
      %v5150 = vadd.f32 0.0, %v5149
      %v5151 = vpop.f32.mrb[0].mxu0
      %5152 = vmatprep.mubr.f32.mxu0 0.0
      %5153 = vmatmul.mubr.f32.gmra.mrb[0].mxu0 %v1337
      %v5154 = vpop.f32.mrb[0].mxu0
      %v5155 = vadd.f32 0.0, %v5154
      %v5156 = vpop.f32.mrb[0].mxu0
      %5157 = vmatprep.mubr.f32.mxu0 0.0
      %5158 = vmatmul.mubr.f32.gmra.mrb[0].mxu0 %v1340
      %v5159 = vpop.f32.mrb[0].mxu0
      %v5160 = vadd.f32 0.0, %v5159
      %v5161 = vpop.f32.mrb[0].mxu0
      %5162 = vmatprep.mubr.f32.mxu0 0.0
      %5163 = vmatmul.mubr.f32.gmra.mrb[0].mxu0 %v1343
      %v5164 = vpop.f32.mrb[0].mxu0
      %v5165 = vadd.f32 0.0, %v5164
      %v5166 = vpop.f32.mrb[0].mxu0
      %5167 = vmatprep.mubr.f32.mxu0 0.0
      %5168 = vmatmul.mubr.f32.gmra.mrb[0].mxu0 %v1346
      %v5169 = vpop.f32.mrb[0].mxu0
      %v5170 = vadd.f32 0.0, %v5169
      %v5171 = vpop.f32.mrb[0].mxu0
      %5172 = vmatprep.mubr.f32.mxu0 0.0
      %5173 = vmatmul.mubr.f32.gmra.mrb[0].mxu0 %v1349
      %v5174 = vpop.f32.mrb[0].mxu0
      %v5175 = vadd.f32 0.0, %v5174
      %v5176 = vpop.f32.mrb[0].mxu0
      %5177 = vmatprep.mubr.f32.mxu0 0.0
      %5178 = vmatmul.mubr.f32.gmra.mrb[0].mxu0 %v1352
      %v5179 = vpop.f32.mrb[0].mxu0
      %v5180 = vadd.f32 0.0, %v5179
      %v5181 = vpop.f32.mrb[0].mxu0
      %5182 = vdwg.mxu0
      %v5183 = vsel %vm1582, %v4954, 0.0
      %v5184 = vrot.slane %v5183, 4
      %v5185 = vadd.f32 %v5183, %v5184
      %v5186 = vrot.slane %v5185, 2
      %v5187 = vadd.f32 %v5185, %v5186
      %v5188 = vrot.slane %v5187, 1
      %v5189 = vadd.f32 %v5187, %v5188
      %v5190 = vmul.f32 %v5025, 0.04
      %v5191 = vmul.f32 %v5030, 0.04
      %v5192 = vmul.f32 %v5035, 0.04
      %v5193 = vmul.f32 %v5040, 0.04
      %v5194 = vmul.f32 %v5045, 0.04
      %v5195 = vmul.f32 %v5050, 0.04
      %v5196 = vmul.f32 %v5055, 0.04
      %v5197 = vmul.f32 %v5060, 0.04
      %v5198 = vmul.f32 %v5065, 0.04
      %v5199 = vmul.f32 %v5070, 0.04
      %v5200 = vmul.f32 %v5075, 0.04
      %v5201 = vmul.f32 %v5080, 0.04
      %v5202 = vmul.f32 %v5085, 0.04
      %v5203 = vmul.f32 %v5090, 0.04
      %v5204 = vmul.f32 %v5095, 0.04
      %v5205 = vmul.f32 %v5100, 0.04
      %v5206 = vmul.f32 %v5105, 0.04
      %v5207 = vmul.f32 %v5110, 0.04
      %v5208 = vmul.f32 %v5115, 0.04
      %v5209 = vmul.f32 %v5120, 0.04
      %v5210 = vmul.f32 %v5125, 0.04
      %v5211 = vmul.f32 %v5130, 0.04
      %v5212 = vmul.f32 %v5135, 0.04
      %v5213 = vmul.f32 %v5140, 0.04
      %v5214 = vmul.f32 %v5145, 0.04
      %v5215 = vmul.f32 %v5150, 0.04
      %v5216 = vmul.f32 %v5155, 0.04
      %v5217 = vmul.f32 %v5160, 0.04
      %v5218 = vmul.f32 %v5165, 0.04
      %v5219 = vmul.f32 %v5170, 0.04
      %v5220 = vmul.f32 %v5175, 0.04
      %v5221 = vmul.f32 %v5180, 0.04
      %v5222 = vsub.f32 %v4322, %v5190
      %v5223 = vsub.f32 %v4323, %v5191
      %v5224 = vsub.f32 %v4324, %v5192
      %v5225 = vsub.f32 %v4325, %v5193
      %v5226 = vsub.f32 %v4326, %v5194
      %v5227 = vsub.f32 %v4327, %v5195
      %v5228 = vsub.f32 %v4328, %v5196
      %v5229 = vsub.f32 %v4329, %v5197
      %v5230 = vsub.f32 %v4330, %v5198
      %v5231 = vsub.f32 %v4331, %v5199
      %v5232 = vsub.f32 %v4332, %v5200
      %v5233 = vsub.f32 %v4333, %v5201
      %v5234 = vsub.f32 %v4334, %v5202
      %v5235 = vsub.f32 %v4335, %v5203
      %v5236 = vsub.f32 %v4336, %v5204
      %v5237 = vsub.f32 %v4337, %v5205
      %v5238 = vsub.f32 %v4338, %v5206
      %v5239 = vsub.f32 %v4339, %v5207
      %v5240 = vsub.f32 %v4340, %v5208
      %v5241 = vsub.f32 %v4341, %v5209
      %v5242 = vsub.f32 %v4342, %v5210
      %v5243 = vsub.f32 %v4343, %v5211
      %v5244 = vsub.f32 %v4344, %v5212
      %v5245 = vsub.f32 %v4345, %v5213
      %v5246 = vsub.f32 %v4346, %v5214
      %v5247 = vsub.f32 %v4347, %v5215
      %v5248 = vsub.f32 %v4348, %v5216
      %v5249 = vsub.f32 %v4349, %v5217
      %v5250 = vsub.f32 %v4350, %v5218
      %v5251 = vsub.f32 %v4351, %v5219
      %v5252 = vsub.f32 %v4352, %v5220
      %v5253 = vsub.f32 %v4353, %v5221
      %v5254 = vmul.f32 %v5189, 0.04
      %v5255 = vsub.f32 %v4355, %v5254
      %v5256 = vmul.f32 %v4844, 0.04
      %v5257 = vmul.f32 %v4849, 0.04
      %v5258 = vmul.f32 %v4854, 0.04
      %v5259 = vmul.f32 %v4859, 0.04
      %v5260 = vsub.f32 %v4360, %v5256
      %v5261 = vsub.f32 %v4361, %v5257
      %v5262 = vsub.f32 %v4362, %v5258
      %v5263 = vsub.f32 %v4363, %v5259
      %v5264 = vmul.f32 %v4868, 0.04
      %v5265 = vsub.f32 %v4365, %v5264
      %v5267 = vlaneseq
      %v5268 = vshrl.u32 %v5267, 7
      %v5269 = vsub.s32 0, %v5268
      %v5270 = vrot.slane %v5255, %v5269
      %5272 = vmatprep.subr.mxu0 0.0
      %5273 = vmatpush1.msra.mxu0 %v5222
      %5274 = vmatprep.subr.mxu0 0.0
      %5275 = vmatpush1.msra.mxu0 %v5223
      %5276 = vmatprep.subr.mxu0 0.0
      %5277 = vmatpush1.msra.mxu0 %v5224
      %5278 = vmatprep.subr.mxu0 0.0
      %5279 = vmatpush1.msra.mxu0 %v5225
      %5280 = vmatprep.subr.mxu0 0.0
      %5281 = vmatpush1.msra.mxu0 %v5226
      %5282 = vmatprep.subr.mxu0 0.0
      %5283 = vmatpush1.msra.mxu0 %v5227
      %5284 = vmatprep.subr.mxu0 0.0
      %5285 = vmatpush1.msra.mxu0 %v5228
      %5286 = vmatprep.subr.mxu0 0.0
      %5287 = vmatpush1.msra.mxu0 %v5229
      %5288 = vmatprep.subr.mxu0 0.0
      %5289 = vmatpush1.msra.mxu0 %v5230
      %5290 = vmatprep.subr.mxu0 0.0
      %5291 = vmatpush1.msra.mxu0 %v5231
      %5292 = vmatprep.subr.mxu0 0.0
      %5293 = vmatpush1.msra.mxu0 %v5232
      %5294 = vmatprep.subr.mxu0 0.0
      %5295 = vmatpush1.msra.mxu0 %v5233
      %5296 = vmatprep.subr.mxu0 0.0
      %5297 = vmatpush1.msra.mxu0 %v5234
      %5298 = vmatprep.subr.mxu0 0.0
      %5299 = vmatpush1.msra.mxu0 %v5235
      %5300 = vmatprep.subr.mxu0 0.0
      %5301 = vmatpush1.msra.mxu0 %v5236
      %5302 = vmatprep.subr.mxu0 0.0
      %5303 = vmatpush1.msra.mxu0 %v5237
      %5304 = vmatprep.subr.mxu0 0.0
      %5305 = vmatpush1.msra.mxu0 %v5238
      %5306 = vmatprep.subr.mxu0 0.0
      %5307 = vmatpush1.msra.mxu0 %v5239
      %5308 = vmatprep.subr.mxu0 0.0
      %5309 = vmatpush1.msra.mxu0 %v5240
      %5310 = vmatprep.subr.mxu0 0.0
      %5311 = vmatpush1.msra.mxu0 %v5241
      %5312 = vmatprep.subr.mxu0 0.0
      %5313 = vmatpush1.msra.mxu0 %v5242
      %5314 = vmatprep.subr.mxu0 0.0
      %5315 = vmatpush1.msra.mxu0 %v5243
      %5316 = vmatprep.subr.mxu0 0.0
      %5317 = vmatpush1.msra.mxu0 %v5244
      %5318 = vmatprep.subr.mxu0 0.0
      %5319 = vmatpush1.msra.mxu0 %v5245
      %5320 = vmatprep.subr.mxu0 0.0
      %5321 = vmatpush1.msra.mxu0 %v5246
      %5322 = vmatprep.subr.mxu0 0.0
      %5323 = vmatpush1.msra.mxu0 %v5247
      %5324 = vmatprep.subr.mxu0 0.0
      %5325 = vmatpush1.msra.mxu0 %v5248
      %5326 = vmatprep.subr.mxu0 0.0
      %5327 = vmatpush1.msra.mxu0 %v5249
      %5328 = vmatprep.subr.mxu0 0.0
      %5329 = vmatpush1.msra.mxu0 %v5250
      %5330 = vmatprep.subr.mxu0 0.0
      %5331 = vmatpush1.msra.mxu0 %v5251
      %5332 = vmatprep.subr.mxu0 0.0
      %5333 = vmatpush1.msra.mxu0 %v5252
      %5334 = vmatprep.subr.mxu0 0.0
      %5335 = vmatpush1.msra.mxu0 %v5253
      %5336 = vmatprep.mubr.f32.mxu0 %v543
      %5337 = vmatmul.mubr.f32.gmra.mrb[0].mxu0 %v542
      %v5338 = vpop.f32.mrb[0].mxu0
      %v5339 = vadd.f32 %v5270, %v5338
      %v5340 = vpop.f32.mrb[0].mxu0
      %5341 = vdwg.mxu0
      %v5342 = vmax.f32 %v5339, 0.0
      %v5344 = vlaneseq
      %v5345 = vshrl.u32 %v5344, 7
      %v5346 = vsub.s32 0, %v5345
      %v5347 = vrot.slane %v5265, %v5346
      %v5350 = vsel %vm680, %v5342, 0
      %5352 = vmatprep.subr.mxu0 0.0
      %5353 = vmatpush1.msra.mxu0 %v5260
      %5354 = vmatprep.subr.mxu0 0.0
      %5355 = vmatpush1.msra.mxu0 %v5261
      %5356 = vmatprep.subr.mxu0 0.0
      %5357 = vmatpush1.msra.mxu0 %v5262
      %5358 = vmatprep.subr.mxu0 0.0
      %5359 = vmatpush1.msra.mxu0 %v5263
      %5360 = vmatprep.subr.mxu0 0.0
      %5361 = vmatpush1.msra.mxu0 0.0
      %5362 = vmatprep.subr.mxu0 0.0
      %5363 = vmatpush1.msra.mxu0 0.0
      %5364 = vmatprep.subr.mxu0 0.0
      %5365 = vmatpush1.msra.mxu0 0.0
      %5366 = vmatprep.subr.mxu0 0.0
      %5367 = vmatpush1.msra.mxu0 0.0
      %5368 = vmatprep.subr.mxu0 0.0
      %5369 = vmatpush1.msra.mxu0 0.0
      %5370 = vmatprep.subr.mxu0 0.0
      %5371 = vmatpush1.msra.mxu0 0.0
      %5372 = vmatprep.subr.mxu0 0.0
      %5373 = vmatpush1.msra.mxu0 0.0
      %5374 = vmatprep.subr.mxu0 0.0
      %5375 = vmatpush1.msra.mxu0 0.0
      %5376 = vmatprep.subr.mxu0 0.0
      %5377 = vmatpush1.msra.mxu0 0.0
      %5378 = vmatprep.subr.mxu0 0.0
      %5379 = vmatpush1.msra.mxu0 0.0
      %5380 = vmatprep.subr.mxu0 0.0
      %5381 = vmatpush1.msra.mxu0 0.0
      %5382 = vmatprep.subr.mxu0 0.0
      %5383 = vmatpush1.msra.mxu0 0.0
      %5384 = vmatprep.subr.mxu0 0.0
      %5385 = vmatpush1.msra.mxu0 0.0
      %5386 = vmatprep.subr.mxu0 0.0
      %5387 = vmatpush1.msra.mxu0 0.0
      %5388 = vmatprep.subr.mxu0 0.0
      %5389 = vmatpush1.msra.mxu0 0.0
      %5390 = vmatprep.subr.mxu0 0.0
      %5391 = vmatpush1.msra.mxu0 0.0
      %5392 = vmatprep.subr.mxu0 0.0
      %5393 = vmatpush1.msra.mxu0 0.0
      %5394 = vmatprep.subr.mxu0 0.0
      %5395 = vmatpush1.msra.mxu0 0.0
      %5396 = vmatprep.subr.mxu0 0.0
      %5397 = vmatpush1.msra.mxu0 0.0
      %5398 = vmatprep.subr.mxu0 0.0
      %5399 = vmatpush1.msra.mxu0 0.0
      %5400 = vmatprep.subr.mxu0 0.0
      %5401 = vmatpush1.msra.mxu0 0.0
      %5402 = vmatprep.subr.mxu0 0.0
      %5403 = vmatpush1.msra.mxu0 0.0
      %5404 = vmatprep.subr.mxu0 0.0
      %5405 = vmatpush1.msra.mxu0 0.0
      %5406 = vmatprep.subr.mxu0 0.0
      %5407 = vmatpush1.msra.mxu0 0.0
      %5408 = vmatprep.subr.mxu0 0.0
      %5409 = vmatpush1.msra.mxu0 0.0
      %5410 = vmatprep.subr.mxu0 0.0
      %5411 = vmatpush1.msra.mxu0 0.0
      %5412 = vmatprep.subr.mxu0 0.0
      %5413 = vmatpush1.msra.mxu0 0.0
      %5414 = vmatprep.subr.mxu0 0.0
      %5415 = vmatpush1.msra.mxu0 0.0
      %5416 = vmatprep.mubr.f32.mxu0 0.0
      %5417 = vmatmul.mubr.f32.gmra.mrb[0].mxu0 %v5350
      %v5418 = vpop.f32.mrb[0].mxu0
      %v5419 = vadd.f32 %v5347, %v5418
      %v5420 = vpop.f32.mrb[0].mxu0
      %5421 = vdwg.mxu0
      %v5422 = vsel %vm754, %v5419, -inf
      %5423 = vmax.xlane.f32.xlu0 %v5422
      %v5424 = vpop.xlane.xlu0 %5423
      %v5425 = vsub.f32 %v5419, %v5424
      %v5426 = vmul.f32 %v5425, 1.442695
      %v5427 = vpow.pop %v5426
      %v5428 = vsel %vm754, %v5427, 0.0
      %5429 = vadd.xlane.f32.xlu0 %v5428
      %v5430 = vpop.xlane.xlu0 %5429
      %v5431 = vrcp.pop %v5430
      %v5432 = vmul.f32 %v5427, %v5431
      %v5433 = vlog2.pop %v5430
      %v5434 = vmul.f32 %v5433, 0.6931472
      %v5435 = vadd.f32 %v5434, %v5424
      %v5436 = vmul.f32 %v596, %v5419
      %v5437 = vsel %vm754, %v5436, 0.0
      %5438 = vadd.xlane.f32.xlu0 %v5437
      %v5439 = vpop.xlane.xlu0 %5438
      %v5440 = vsub.f32 %v5435, %v5439
      %v5441 = vrot.slane %v5440, 4
      %v5442 = vadd.f32 %v5440, %v5441
      %v5443 = vrot.slane %v5442, 2
      %v5444 = vadd.f32 %v5442, %v5443
      %v5445 = vrot.slane %v5444, 1
      %v5446 = vadd.f32 %v5444, %v5445
      %v5447 = vmul.f32 %v5446, 0.125
      %v5448 = vsub.f32 %v5432, %v596
      %v5449 = vmul.f32 %v5448, 0.125
      %vm5450 = vcmp.eq.f32.partialorder %v5419, %v5424
      %v5451 = vsel %vm5450, %v584, 4
      %v5452 = vsel %vm754, %v5451, 2147483647
      %v5453 = vand.u32 %v5452, 65535
      %v5454 = vshra.s32 %v5452, 16
      %v5455 = vcvt.s32.f32 %v5453
      %v5456 = vcvt.s32.f32 %v5454
      %5457 = vmin.xlane.f32.xlu0 %v5456
      %v5458 = vpop.xlane.xlu0 %5457
      %vm5459 = vcmp.eq.f32.partialorder %v5456, %v5458
      %v5460 = vsel %vm5459, %v5455, inf
      %5461 = vmin.xlane.f32.xlu0 %v5460
      %v5462 = vpop.xlane.xlu0 %5461
      %v5463 = vcvt.f32.s32 %v5462
      %v5464 = vcvt.f32.s32 %v5458
      %v5465 = vshll.u32 %v5464, 16
      %v5466 = vadd.s32 %v5465, %v5463
      %vm5467 = vcmp.eq.s32.totalorder %v5466, %v544
      %v5468 = vsel %vm5467, 1, 0
      %v5469 = vcvt.s32.f32 %v5468
      %v5470 = vsel %vm799, %v5469, 0.0
      %v5471 = vrot.slane %v5470, 4
      %v5472 = vadd.f32 %v5470, %v5471
      %v5473 = vrot.slane %v5472, 2
      %v5474 = vadd.f32 %v5472, %v5473
      %v5475 = vrot.slane %v5474, 1
      %v5476 = vadd.f32 %v5474, %v5475
      %5477 = vxpose.xlu0.b32.start [1/16] %v5342, 128
      %5478 = vxpose.xlu0.b32.cont [2/16] 0.0, 128
      %5479 = vxpose.xlu0.b32.cont [3/16] 0.0, 128
      %5480 = vxpose.xlu0.b32.cont [4/16] 0.0, 128
      %5481 = vxpose.xlu0.b32.cont [5/16] 0.0, 128
      %5482 = vxpose.xlu0.b32.cont [6/16] 0.0, 128
      %5483 = vxpose.xlu0.b32.cont [7/16] 0.0, 128
      %5484 = vxpose.xlu0.b32.cont [8/16] 0.0, 128
      %5485 = vxpose.xlu0.b32.cont [9/16] 0.0, 128
      %5486 = vxpose.xlu0.b32.cont [10/16] 0.0, 128
      %5487 = vxpose.xlu0.b32.cont [11/16] 0.0, 128
      %5488 = vxpose.xlu0.b32.cont [12/16] 0.0, 128
      %5489 = vxpose.xlu0.b32.cont [13/16] 0.0, 128
      %5490 = vxpose.xlu0.b32.cont [14/16] 0.0, 128
      %5491 = vxpose.xlu0.b32.cont [15/16] 0.0, 128
      %5492 = vxpose.xlu0.b32.end [16/16] 0.0, 128
      %v5493 = vpop.trf.xlu0
      %v5494 = vpop.trf.xlu0
      %v5495 = vpop.trf.xlu0
      %v5496 = vpop.trf.xlu0
      %v5497 = vpop.trf.xlu0
      %v5498 = vpop.trf.xlu0
      %v5499 = vpop.trf.xlu0
      %v5500 = vpop.trf.xlu0
      %v5501 = vpop.trf.xlu0
      %v5502 = vpop.trf.xlu0
      %v5503 = vpop.trf.xlu0
      %v5504 = vpop.trf.xlu0
      %v5505 = vpop.trf.xlu0
      %v5506 = vpop.trf.xlu0
      %v5507 = vpop.trf.xlu0
      %v5508 = vpop.trf.xlu0
      %vm5509 = vcmask 64512
      %v5511 = vsel %vm5509, %v5493, 0
      %v5514 = vsel %vm5509, %v5494, 0
      %v5517 = vsel %vm5509, %v5495, 0
      %v5520 = vsel %vm5509, %v5496, 0
      %5522 = vmatprep.subr.mxu0 0.0
      %5523 = vmatpush1.msra.mxu0 %v5449
      %5524 = vmatprep.subr.mxu0 0.0
      %5525 = vmatpush1.msra.mxu0 0.0
      %5526 = vmatprep.subr.mxu0 0.0
      %5527 = vmatpush1.msra.mxu0 0.0
      %5528 = vmatprep.subr.mxu0 0.0
      %5529 = vmatpush1.msra.mxu0 0.0
      %5530 = vmatprep.subr.mxu0 0.0
      %5531 = vmatpush1.msra.mxu0 0.0
      %5532 = vmatprep.subr.mxu0 0.0
      %5533 = vmatpush1.msra.mxu0 0.0
      %5534 = vmatprep.subr.mxu0 0.0
      %5535 = vmatpush1.msra.mxu0 0.0
      %5536 = vmatprep.subr.mxu0 0.0
      %5537 = vmatpush1.msra.mxu0 0.0
      %5538 = vmatprep.subr.mxu0 0.0
      %5539 = vmatpush1.msra.mxu0 0.0
      %5540 = vmatprep.subr.mxu0 0.0
      %5541 = vmatpush1.msra.mxu0 0.0
      %5542 = vmatprep.subr.mxu0 0.0
      %5543 = vmatpush1.msra.mxu0 0.0
      %5544 = vmatprep.subr.mxu0 0.0
      %5545 = vmatpush1.msra.mxu0 0.0
      %5546 = vmatprep.subr.mxu0 0.0
      %5547 = vmatpush1.msra.mxu0 0.0
      %5548 = vmatprep.subr.mxu0 0.0
      %5549 = vmatpush1.msra.mxu0 0.0
      %5550 = vmatprep.subr.mxu0 0.0
      %5551 = vmatpush1.msra.mxu0 0.0
      %5552 = vmatprep.subr.mxu0 0.0
      %5553 = vmatpush1.msra.mxu0 0.0
      %5554 = vmatprep.subr.mxu0 0.0
      %5555 = vmatpush1.msra.mxu0 0.0
      %5556 = vmatprep.subr.mxu0 0.0
      %5557 = vmatpush1.msra.mxu0 0.0
      %5558 = vmatprep.subr.mxu0 0.0
      %5559 = vmatpush1.msra.mxu0 0.0
      %5560 = vmatprep.subr.mxu0 0.0
      %5561 = vmatpush1.msra.mxu0 0.0
      %5562 = vmatprep.subr.mxu0 0.0
      %5563 = vmatpush1.msra.mxu0 0.0
      %5564 = vmatprep.subr.mxu0 0.0
      %5565 = vmatpush1.msra.mxu0 0.0
      %5566 = vmatprep.subr.mxu0 0.0
      %5567 = vmatpush1.msra.mxu0 0.0
      %5568 = vmatprep.subr.mxu0 0.0
      %5569 = vmatpush1.msra.mxu0 0.0
      %5570 = vmatprep.subr.mxu0 0.0
      %5571 = vmatpush1.msra.mxu0 0.0
      %5572 = vmatprep.subr.mxu0 0.0
      %5573 = vmatpush1.msra.mxu0 0.0
      %5574 = vmatprep.subr.mxu0 0.0
      %5575 = vmatpush1.msra.mxu0 0.0
      %5576 = vmatprep.subr.mxu0 0.0
      %5577 = vmatpush1.msra.mxu0 0.0
      %5578 = vmatprep.subr.mxu0 0.0
      %5579 = vmatpush1.msra.mxu0 0.0
      %5580 = vmatprep.subr.mxu0 0.0
      %5581 = vmatpush1.msra.mxu0 0.0
      %5582 = vmatprep.subr.mxu0 0.0
      %5583 = vmatpush1.msra.mxu0 0.0
      %5584 = vmatprep.subr.mxu0 0.0
      %5585 = vmatpush1.msra.mxu0 0.0
      %5586 = vmatprep.mubr.f32.mxu0 0.0
      %5587 = vmatmul.mubr.f32.gmra.mrb[0].mxu0 %v5511
      %v5588 = vpop.f32.mrb[0].mxu0
      %v5589 = vadd.f32 0.0, %v5588
      %v5590 = vpop.f32.mrb[0].mxu0
      %5591 = vmatprep.mubr.f32.mxu0 0.0
      %5592 = vmatmul.mubr.f32.gmra.mrb[0].mxu0 %v5514
      %v5593 = vpop.f32.mrb[0].mxu0
      %v5594 = vadd.f32 0.0, %v5593
      %v5595 = vpop.f32.mrb[0].mxu0
      %5596 = vmatprep.mubr.f32.mxu0 0.0
      %5597 = vmatmul.mubr.f32.gmra.mrb[0].mxu0 %v5517
      %v5598 = vpop.f32.mrb[0].mxu0
      %v5599 = vadd.f32 0.0, %v5598
      %v5600 = vpop.f32.mrb[0].mxu0
      %5601 = vmatprep.mubr.f32.mxu0 0.0
      %5602 = vmatmul.mubr.f32.gmra.mrb[0].mxu0 %v5520
      %v5603 = vpop.f32.mrb[0].mxu0
      %v5604 = vadd.f32 0.0, %v5603
      %v5605 = vpop.f32.mrb[0].mxu0
      %5606 = vdwg.mxu0
      %v5607 = vsel %vm754, %v5449, 0.0
      %v5608 = vrot.slane %v5607, 4
      %v5609 = vadd.f32 %v5607, %v5608
      %v5610 = vrot.slane %v5609, 2
      %v5611 = vadd.f32 %v5609, %v5610
      %v5612 = vrot.slane %v5611, 1
      %v5613 = vadd.f32 %v5611, %v5612
      %v5615 = vsel %vm754, %v5449, 0
      %v5618 = vsel %vm754, %v5260, 0
      %v5621 = vsel %vm754, %v5261, 0
      %v5624 = vsel %vm754, %v5262, 0
      %v5627 = vsel %vm754, %v5263, 0
      %5629 = vmatprep.subr.mxu0 0.0
      %5630 = vmatpush1.xpose.msra.mxu0 %v5618
      %5631 = vmatprep.subr.mxu0 0.0
      %5632 = vmatpush1.xpose.msra.mxu0 %v5621
      %5633 = vmatprep.subr.mxu0 0.0
      %5634 = vmatpush1.xpose.msra.mxu0 %v5624
      %5635 = vmatprep.subr.mxu0 0.0
      %5636 = vmatpush1.xpose.msra.mxu0 %v5627
      %5637 = vmatprep.subr.mxu0 0.0
      %5638 = vmatpush1.xpose.msra.mxu0 0.0
      %5639 = vmatprep.subr.mxu0 0.0
      %5640 = vmatpush1.xpose.msra.mxu0 0.0
      %5641 = vmatprep.subr.mxu0 0.0
      %5642 = vmatpush1.xpose.msra.mxu0 0.0
      %5643 = vmatprep.subr.mxu0 0.0
      %5644 = vmatpush1.xpose.msra.mxu0 0.0
      %5645 = vmatprep.subr.mxu0 0.0
      %5646 = vmatpush1.xpose.msra.mxu0 0.0
      %5647 = vmatprep.subr.mxu0 0.0
      %5648 = vmatpush1.xpose.msra.mxu0 0.0
      %5649 = vmatprep.subr.mxu0 0.0
      %5650 = vmatpush1.xpose.msra.mxu0 0.0
      %5651 = vmatprep.subr.mxu0 0.0
      %5652 = vmatpush1.xpose.msra.mxu0 0.0
      %5653 = vmatprep.subr.mxu0 0.0
      %5654 = vmatpush1.xpose.msra.mxu0 0.0
      %5655 = vmatprep.subr.mxu0 0.0
      %5656 = vmatpush1.xpose.msra.mxu0 0.0
      %5657 = vmatprep.subr.mxu0 0.0
      %5658 = vmatpush1.xpose.msra.mxu0 0.0
      %5659 = vmatprep.subr.mxu0 0.0
      %5660 = vmatpush1.xpose.msra.mxu0 0.0
      %5661 = vmatprep.subr.mxu0 0.0
      %5662 = vmatpush1.xpose.msra.mxu0 0.0
      %5663 = vmatprep.subr.mxu0 0.0
      %5664 = vmatpush1.xpose.msra.mxu0 0.0
      %5665 = vmatprep.subr.mxu0 0.0
      %5666 = vmatpush1.xpose.msra.mxu0 0.0
      %5667 = vmatprep.subr.mxu0 0.0
      %5668 = vmatpush1.xpose.msra.mxu0 0.0
      %5669 = vmatprep.subr.mxu0 0.0
      %5670 = vmatpush1.xpose.msra.mxu0 0.0
      %5671 = vmatprep.subr.mxu0 0.0
      %5672 = vmatpush1.xpose.msra.mxu0 0.0
      %5673 = vmatprep.subr.mxu0 0.0
      %5674 = vmatpush1.xpose.msra.mxu0 0.0
      %5675 = vmatprep.subr.mxu0 0.0
      %5676 = vmatpush1.xpose.msra.mxu0 0.0
      %5677 = vmatprep.subr.mxu0 0.0
      %5678 = vmatpush1.xpose.msra.mxu0 0.0
      %5679 = vmatprep.subr.mxu0 0.0
      %5680 = vmatpush1.xpose.msra.mxu0 0.0
      %5681 = vmatprep.subr.mxu0 0.0
      %5682 = vmatpush1.xpose.msra.mxu0 0.0
      %5683 = vmatprep.subr.mxu0 0.0
      %5684 = vmatpush1.xpose.msra.mxu0 0.0
      %5685 = vmatprep.subr.mxu0 0.0
      %5686 = vmatpush1.xpose.msra.mxu0 0.0
      %5687 = vmatprep.subr.mxu0 0.0
      %5688 = vmatpush1.xpose.msra.mxu0 0.0
      %5689 = vmatprep.subr.mxu0 0.0
      %5690 = vmatpush1.xpose.msra.mxu0 0.0
      %5691 = vmatprep.subr.mxu0 0.0
      %5692 = vmatpush1.xpose.msra.mxu0 0.0
      %5693 = vmatprep.mubr.f32.mxu0 0.0
      %5694 = vmatmul.mubr.f32.gmra.mrb[0].mxu0 %v5615
      %v5695 = vpop.f32.mrb[0].mxu0
      %v5696 = vadd.f32 0.0, %v5695
      %v5697 = vpop.f32.mrb[0].mxu0
      %5698 = vdwg.mxu0
      %vm5699 = vcmp.gt.f32.partialorder %v5339, 0.0
      %v5700 = vsel %vm5699, %v5696, 0.0
      %5701 = vxpose.xlu0.b32.start [1/16] %v542, 128
      %5702 = vxpose.xlu0.b32.cont [2/16] 0.0, 128
      %5703 = vxpose.xlu0.b32.cont [3/16] 0.0, 128
      %5704 = vxpose.xlu0.b32.cont [4/16] 0.0, 128
      %5705 = vxpose.xlu0.b32.cont [5/16] 0.0, 128
      %5706 = vxpose.xlu0.b32.cont [6/16] 0.0, 128
      %5707 = vxpose.xlu0.b32.cont [7/16] 0.0, 128
      %5708 = vxpose.xlu0.b32.cont [8/16] 0.0, 128
      %5709 = vxpose.xlu0.b32.cont [9/16] 0.0, 128
      %5710 = vxpose.xlu0.b32.cont [10/16] 0.0, 128
      %5711 = vxpose.xlu0.b32.cont [11/16] 0.0, 128
      %5712 = vxpose.xlu0.b32.cont [12/16] 0.0, 128
      %5713 = vxpose.xlu0.b32.cont [13/16] 0.0, 128
      %5714 = vxpose.xlu0.b32.cont [14/16] 0.0, 128
      %5715 = vxpose.xlu0.b32.cont [15/16] 0.0, 128
      %5716 = vxpose.xlu0.b32.end [16/16] 0.0, 128
      %v5717 = vpop.trf.xlu0
      %v5718 = vpop.trf.xlu0
      %v5719 = vpop.trf.xlu0
      %v5720 = vpop.trf.xlu0
      %v5721 = vpop.trf.xlu0
      %v5722 = vpop.trf.xlu0
      %v5723 = vpop.trf.xlu0
      %v5724 = vpop.trf.xlu0
      %v5725 = vpop.trf.xlu0
      %v5726 = vpop.trf.xlu0
      %v5727 = vpop.trf.xlu0
      %v5728 = vpop.trf.xlu0
      %v5729 = vpop.trf.xlu0
      %v5730 = vpop.trf.xlu0
      %v5731 = vpop.trf.xlu0
      %v5732 = vpop.trf.xlu0
      %5733 = vxpose.xlu0.b32.start [1/16] %v543, 128
      %5734 = vxpose.xlu0.b32.cont [2/16] 0.0, 128
      %5735 = vxpose.xlu0.b32.cont [3/16] 0.0, 128
      %5736 = vxpose.xlu0.b32.cont [4/16] 0.0, 128
      %5737 = vxpose.xlu0.b32.cont [5/16] 0.0, 128
      %5738 = vxpose.xlu0.b32.cont [6/16] 0.0, 128
      %5739 = vxpose.xlu0.b32.cont [7/16] 0.0, 128
      %5740 = vxpose.xlu0.b32.cont [8/16] 0.0, 128
      %5741 = vxpose.xlu0.b32.cont [9/16] 0.0, 128
      %5742 = vxpose.xlu0.b32.cont [10/16] 0.0, 128
      %5743 = vxpose.xlu0.b32.cont [11/16] 0.0, 128
      %5744 = vxpose.xlu0.b32.cont [12/16] 0.0, 128
      %5745 = vxpose.xlu0.b32.cont [13/16] 0.0, 128
      %5746 = vxpose.xlu0.b32.cont [14/16] 0.0, 128
      %5747 = vxpose.xlu0.b32.cont [15/16] 0.0, 128
      %5748 = vxpose.xlu0.b32.end [16/16] 0.0, 128
      %v5749 = vpop.trf.xlu0
      %v5750 = vpop.trf.xlu0
      %v5751 = vpop.trf.xlu0
      %v5752 = vpop.trf.xlu0
      %v5753 = vpop.trf.xlu0
      %v5754 = vpop.trf.xlu0
      %v5755 = vpop.trf.xlu0
      %v5756 = vpop.trf.xlu0
      %v5757 = vpop.trf.xlu0
      %v5758 = vpop.trf.xlu0
      %v5759 = vpop.trf.xlu0
      %v5760 = vpop.trf.xlu0
      %v5761 = vpop.trf.xlu0
      %v5762 = vpop.trf.xlu0
      %v5763 = vpop.trf.xlu0
      %v5764 = vpop.trf.xlu0
      %v5766 = vsel %vm5509, %v5717, 0
      %v5769 = vsel %vm5509, %v5718, 0
      %v5772 = vsel %vm5509, %v5719, 0
      %v5775 = vsel %vm5509, %v5720, 0
      %v5778 = vsel %vm5509, %v5721, 0
      %v5781 = vsel %vm5509, %v5722, 0
      %v5784 = vsel %vm5509, %v5723, 0
      %v5787 = vsel %vm5509, %v5724, 0
      %v5790 = vsel %vm5509, %v5725, 0
      %v5793 = vsel %vm5509, %v5726, 0
      %v5796 = vsel %vm5509, %v5727, 0
      %v5799 = vsel %vm5509, %v5728, 0
      %v5802 = vsel %vm5509, %v5729, 0
      %v5805 = vsel %vm5509, %v5730, 0
      %v5808 = vsel %vm5509, %v5731, 0
      %v5811 = vsel %vm5509, %v5732, 0
      %v5814 = vsel %vm5509, %v5749, 0
      %v5817 = vsel %vm5509, %v5750, 0
      %v5820 = vsel %vm5509, %v5751, 0
      %v5823 = vsel %vm5509, %v5752, 0
      %v5826 = vsel %vm5509, %v5753, 0
      %v5829 = vsel %vm5509, %v5754, 0
      %v5832 = vsel %vm5509, %v5755, 0
      %v5835 = vsel %vm5509, %v5756, 0
      %v5838 = vsel %vm5509, %v5757, 0
      %v5841 = vsel %vm5509, %v5758, 0
      %v5844 = vsel %vm5509, %v5759, 0
      %v5847 = vsel %vm5509, %v5760, 0
      %v5850 = vsel %vm5509, %v5761, 0
      %v5853 = vsel %vm5509, %v5762, 0
      %v5856 = vsel %vm5509, %v5763, 0
      %v5859 = vsel %vm5509, %v5764, 0
      %5861 = vmatprep.subr.mxu0 0.0
      %5862 = vmatpush1.msra.mxu0 %v5700
      %5863 = vmatprep.subr.mxu0 0.0
      %5864 = vmatpush1.msra.mxu0 0.0
      %5865 = vmatprep.subr.mxu0 0.0
      %5866 = vmatpush1.msra.mxu0 0.0
      %5867 = vmatprep.subr.mxu0 0.0
      %5868 = vmatpush1.msra.mxu0 0.0
      %5869 = vmatprep.subr.mxu0 0.0
      %5870 = vmatpush1.msra.mxu0 0.0
      %5871 = vmatprep.subr.mxu0 0.0
      %5872 = vmatpush1.msra.mxu0 0.0
      %5873 = vmatprep.subr.mxu0 0.0
      %5874 = vmatpush1.msra.mxu0 0.0
      %5875 = vmatprep.subr.mxu0 0.0
      %5876 = vmatpush1.msra.mxu0 0.0
      %5877 = vmatprep.subr.mxu0 0.0
      %5878 = vmatpush1.msra.mxu0 0.0
      %5879 = vmatprep.subr.mxu0 0.0
      %5880 = vmatpush1.msra.mxu0 0.0
      %5881 = vmatprep.subr.mxu0 0.0
      %5882 = vmatpush1.msra.mxu0 0.0
      %5883 = vmatprep.subr.mxu0 0.0
      %5884 = vmatpush1.msra.mxu0 0.0
      %5885 = vmatprep.subr.mxu0 0.0
      %5886 = vmatpush1.msra.mxu0 0.0
      %5887 = vmatprep.subr.mxu0 0.0
      %5888 = vmatpush1.msra.mxu0 0.0
      %5889 = vmatprep.subr.mxu0 0.0
      %5890 = vmatpush1.msra.mxu0 0.0
      %5891 = vmatprep.subr.mxu0 0.0
      %5892 = vmatpush1.msra.mxu0 0.0
      %5893 = vmatprep.subr.mxu0 0.0
      %5894 = vmatpush1.msra.mxu0 0.0
      %5895 = vmatprep.subr.mxu0 0.0
      %5896 = vmatpush1.msra.mxu0 0.0
      %5897 = vmatprep.subr.mxu0 0.0
      %5898 = vmatpush1.msra.mxu0 0.0
      %5899 = vmatprep.subr.mxu0 0.0
      %5900 = vmatpush1.msra.mxu0 0.0
      %5901 = vmatprep.subr.mxu0 0.0
      %5902 = vmatpush1.msra.mxu0 0.0
      %5903 = vmatprep.subr.mxu0 0.0
      %5904 = vmatpush1.msra.mxu0 0.0
      %5905 = vmatprep.subr.mxu0 0.0
      %5906 = vmatpush1.msra.mxu0 0.0
      %5907 = vmatprep.subr.mxu0 0.0
      %5908 = vmatpush1.msra.mxu0 0.0
      %5909 = vmatprep.subr.mxu0 0.0
      %5910 = vmatpush1.msra.mxu0 0.0
      %5911 = vmatprep.subr.mxu0 0.0
      %5912 = vmatpush1.msra.mxu0 0.0
      %5913 = vmatprep.subr.mxu0 0.0
      %5914 = vmatpush1.msra.mxu0 0.0
      %5915 = vmatprep.subr.mxu0 0.0
      %5916 = vmatpush1.msra.mxu0 0.0
      %5917 = vmatprep.subr.mxu0 0.0
      %5918 = vmatpush1.msra.mxu0 0.0
      %5919 = vmatprep.subr.mxu0 0.0
      %5920 = vmatpush1.msra.mxu0 0.0
      %5921 = vmatprep.subr.mxu0 0.0
      %5922 = vmatpush1.msra.mxu0 0.0
      %5923 = vmatprep.subr.mxu0 0.0
      %5924 = vmatpush1.msra.mxu0 0.0
      %5925 = vmatprep.mubr.f32.mxu0 0.0
      %5926 = vmatmul.mubr.f32.gmra.mrb[0].mxu0 %v5766
      %v5927 = vpop.f32.mrb[0].mxu0
      %v5928 = vadd.f32 0.0, %v5927
      %v5929 = vpop.f32.mrb[0].mxu0
      %5930 = vmatprep.mubr.f32.mxu0 0.0
      %5931 = vmatmul.mubr.f32.gmra.mrb[0].mxu0 %v5769
      %v5932 = vpop.f32.mrb[0].mxu0
      %v5933 = vadd.f32 0.0, %v5932
      %v5934 = vpop.f32.mrb[0].mxu0
      %5935 = vmatprep.mubr.f32.mxu0 0.0
      %5936 = vmatmul.mubr.f32.gmra.mrb[0].mxu0 %v5772
      %v5937 = vpop.f32.mrb[0].mxu0
      %v5938 = vadd.f32 0.0, %v5937
      %v5939 = vpop.f32.mrb[0].mxu0
      %5940 = vmatprep.mubr.f32.mxu0 0.0
      %5941 = vmatmul.mubr.f32.gmra.mrb[0].mxu0 %v5775
      %v5942 = vpop.f32.mrb[0].mxu0
      %v5943 = vadd.f32 0.0, %v5942
      %v5944 = vpop.f32.mrb[0].mxu0
      %5945 = vmatprep.mubr.f32.mxu0 0.0
      %5946 = vmatmul.mubr.f32.gmra.mrb[0].mxu0 %v5778
      %v5947 = vpop.f32.mrb[0].mxu0
      %v5948 = vadd.f32 0.0, %v5947
      %v5949 = vpop.f32.mrb[0].mxu0
      %5950 = vmatprep.mubr.f32.mxu0 0.0
      %5951 = vmatmul.mubr.f32.gmra.mrb[0].mxu0 %v5781
      %v5952 = vpop.f32.mrb[0].mxu0
      %v5953 = vadd.f32 0.0, %v5952
      %v5954 = vpop.f32.mrb[0].mxu0
      %5955 = vmatprep.mubr.f32.mxu0 0.0
      %5956 = vmatmul.mubr.f32.gmra.mrb[0].mxu0 %v5784
      %v5957 = vpop.f32.mrb[0].mxu0
      %v5958 = vadd.f32 0.0, %v5957
      %v5959 = vpop.f32.mrb[0].mxu0
      %5960 = vmatprep.mubr.f32.mxu0 0.0
      %5961 = vmatmul.mubr.f32.gmra.mrb[0].mxu0 %v5787
      %v5962 = vpop.f32.mrb[0].mxu0
      %v5963 = vadd.f32 0.0, %v5962
      %v5964 = vpop.f32.mrb[0].mxu0
      %5965 = vmatprep.mubr.f32.mxu0 0.0
      %5966 = vmatmul.mubr.f32.gmra.mrb[0].mxu0 %v5790
      %v5967 = vpop.f32.mrb[0].mxu0
      %v5968 = vadd.f32 0.0, %v5967
      %v5969 = vpop.f32.mrb[0].mxu0
      %5970 = vmatprep.mubr.f32.mxu0 0.0
      %5971 = vmatmul.mubr.f32.gmra.mrb[0].mxu0 %v5793
      %v5972 = vpop.f32.mrb[0].mxu0
      %v5973 = vadd.f32 0.0, %v5972
      %v5974 = vpop.f32.mrb[0].mxu0
      %5975 = vmatprep.mubr.f32.mxu0 0.0
      %5976 = vmatmul.mubr.f32.gmra.mrb[0].mxu0 %v5796
      %v5977 = vpop.f32.mrb[0].mxu0
      %v5978 = vadd.f32 0.0, %v5977
      %v5979 = vpop.f32.mrb[0].mxu0
      %5980 = vmatprep.mubr.f32.mxu0 0.0
      %5981 = vmatmul.mubr.f32.gmra.mrb[0].mxu0 %v5799
      %v5982 = vpop.f32.mrb[0].mxu0
      %v5983 = vadd.f32 0.0, %v5982
      %v5984 = vpop.f32.mrb[0].mxu0
      %5985 = vmatprep.mubr.f32.mxu0 0.0
      %5986 = vmatmul.mubr.f32.gmra.mrb[0].mxu0 %v5802
      %v5987 = vpop.f32.mrb[0].mxu0
      %v5988 = vadd.f32 0.0, %v5987
      %v5989 = vpop.f32.mrb[0].mxu0
      %5990 = vmatprep.mubr.f32.mxu0 0.0
      %5991 = vmatmul.mubr.f32.gmra.mrb[0].mxu0 %v5805
      %v5992 = vpop.f32.mrb[0].mxu0
      %v5993 = vadd.f32 0.0, %v5992
      %v5994 = vpop.f32.mrb[0].mxu0
      %5995 = vmatprep.mubr.f32.mxu0 0.0
      %5996 = vmatmul.mubr.f32.gmra.mrb[0].mxu0 %v5808
      %v5997 = vpop.f32.mrb[0].mxu0
      %v5998 = vadd.f32 0.0, %v5997
      %v5999 = vpop.f32.mrb[0].mxu0
      %6000 = vmatprep.mubr.f32.mxu0 0.0
      %6001 = vmatmul.mubr.f32.gmra.mrb[0].mxu0 %v5811
      %v6002 = vpop.f32.mrb[0].mxu0
      %v6003 = vadd.f32 0.0, %v6002
      %v6004 = vpop.f32.mrb[0].mxu0
      %6005 = vmatprep.mubr.f32.mxu0 0.0
      %6006 = vmatmul.mubr.f32.gmra.mrb[0].mxu0 %v5814
      %v6007 = vpop.f32.mrb[0].mxu0
      %v6008 = vadd.f32 0.0, %v6007
      %v6009 = vpop.f32.mrb[0].mxu0
      %6010 = vmatprep.mubr.f32.mxu0 0.0
      %6011 = vmatmul.mubr.f32.gmra.mrb[0].mxu0 %v5817
      %v6012 = vpop.f32.mrb[0].mxu0
      %v6013 = vadd.f32 0.0, %v6012
      %v6014 = vpop.f32.mrb[0].mxu0
      %6015 = vmatprep.mubr.f32.mxu0 0.0
      %6016 = vmatmul.mubr.f32.gmra.mrb[0].mxu0 %v5820
      %v6017 = vpop.f32.mrb[0].mxu0
      %v6018 = vadd.f32 0.0, %v6017
      %v6019 = vpop.f32.mrb[0].mxu0
      %6020 = vmatprep.mubr.f32.mxu0 0.0
      %6021 = vmatmul.mubr.f32.gmra.mrb[0].mxu0 %v5823
      %v6022 = vpop.f32.mrb[0].mxu0
      %v6023 = vadd.f32 0.0, %v6022
      %v6024 = vpop.f32.mrb[0].mxu0
      %6025 = vmatprep.mubr.f32.mxu0 0.0
      %6026 = vmatmul.mubr.f32.gmra.mrb[0].mxu0 %v5826
      %v6027 = vpop.f32.mrb[0].mxu0
      %v6028 = vadd.f32 0.0, %v6027
      %v6029 = vpop.f32.mrb[0].mxu0
      %6030 = vmatprep.mubr.f32.mxu0 0.0
      %6031 = vmatmul.mubr.f32.gmra.mrb[0].mxu0 %v5829
      %v6032 = vpop.f32.mrb[0].mxu0
      %v6033 = vadd.f32 0.0, %v6032
      %v6034 = vpop.f32.mrb[0].mxu0
      %6035 = vmatprep.mubr.f32.mxu0 0.0
      %6036 = vmatmul.mubr.f32.gmra.mrb[0].mxu0 %v5832
      %v6037 = vpop.f32.mrb[0].mxu0
      %v6038 = vadd.f32 0.0, %v6037
      %v6039 = vpop.f32.mrb[0].mxu0
      %6040 = vmatprep.mubr.f32.mxu0 0.0
      %6041 = vmatmul.mubr.f32.gmra.mrb[0].mxu0 %v5835
      %v6042 = vpop.f32.mrb[0].mxu0
      %v6043 = vadd.f32 0.0, %v6042
      %v6044 = vpop.f32.mrb[0].mxu0
      %6045 = vmatprep.mubr.f32.mxu0 0.0
      %6046 = vmatmul.mubr.f32.gmra.mrb[0].mxu0 %v5838
      %v6047 = vpop.f32.mrb[0].mxu0
      %v6048 = vadd.f32 0.0, %v6047
      %v6049 = vpop.f32.mrb[0].mxu0
      %6050 = vmatprep.mubr.f32.mxu0 0.0
      %6051 = vmatmul.mubr.f32.gmra.mrb[0].mxu0 %v5841
      %v6052 = vpop.f32.mrb[0].mxu0
      %v6053 = vadd.f32 0.0, %v6052
      %v6054 = vpop.f32.mrb[0].mxu0
      %6055 = vmatprep.mubr.f32.mxu0 0.0
      %6056 = vmatmul.mubr.f32.gmra.mrb[0].mxu0 %v5844
      %v6057 = vpop.f32.mrb[0].mxu0
      %v6058 = vadd.f32 0.0, %v6057
      %v6059 = vpop.f32.mrb[0].mxu0
      %6060 = vmatprep.mubr.f32.mxu0 0.0
      %6061 = vmatmul.mubr.f32.gmra.mrb[0].mxu0 %v5847
      %v6062 = vpop.f32.mrb[0].mxu0
      %v6063 = vadd.f32 0.0, %v6062
      %v6064 = vpop.f32.mrb[0].mxu0
      %6065 = vmatprep.mubr.f32.mxu0 0.0
      %6066 = vmatmul.mubr.f32.gmra.mrb[0].mxu0 %v5850
      %v6067 = vpop.f32.mrb[0].mxu0
      %v6068 = vadd.f32 0.0, %v6067
      %v6069 = vpop.f32.mrb[0].mxu0
      %6070 = vmatprep.mubr.f32.mxu0 0.0
      %6071 = vmatmul.mubr.f32.gmra.mrb[0].mxu0 %v5853
      %v6072 = vpop.f32.mrb[0].mxu0
      %v6073 = vadd.f32 0.0, %v6072
      %v6074 = vpop.f32.mrb[0].mxu0
      %6075 = vmatprep.mubr.f32.mxu0 0.0
      %6076 = vmatmul.mubr.f32.gmra.mrb[0].mxu0 %v5856
      %v6077 = vpop.f32.mrb[0].mxu0
      %v6078 = vadd.f32 0.0, %v6077
      %v6079 = vpop.f32.mrb[0].mxu0
      %6080 = vmatprep.mubr.f32.mxu0 0.0
      %6081 = vmatmul.mubr.f32.gmra.mrb[0].mxu0 %v5859
      %v6082 = vpop.f32.mrb[0].mxu0
      %v6083 = vadd.f32 0.0, %v6082
      %v6084 = vpop.f32.mrb[0].mxu0
      %6085 = vdwg.mxu0
      %v6086 = vsel %vm680, %v5700, 0.0
      %v6087 = vrot.slane %v6086, 4
      %v6088 = vadd.f32 %v6086, %v6087
      %v6089 = vrot.slane %v6088, 2
      %v6090 = vadd.f32 %v6088, %v6089
      %v6091 = vrot.slane %v6090, 1
      %v6092 = vadd.f32 %v6090, %v6091
      %6093 = vst.msk [vmem:[%s528] sm:$0xff] %vm680, %v5928
      %6094 = vst.msk [vmem:[%s528 + $0x8] sm:$0xff] %vm680, %v5933
      %6095 = vst.msk [vmem:[%s528 + $0x10] sm:$0xff] %vm680, %v5938
      %6096 = vst.msk [vmem:[%s528 + $0x18] sm:$0xff] %vm680, %v5943
      %6097 = vst.msk [vmem:[%s528 + $0x20] sm:$0xff] %vm680, %v5948
      %6098 = vst.msk [vmem:[%s528 + $0x28] sm:$0xff] %vm680, %v5953
      %6099 = vst.msk [vmem:[%s528 + $0x30] sm:$0xff] %vm680, %v5958
      %6100 = vst.msk [vmem:[%s528 + $0x38] sm:$0xff] %vm680, %v5963
      %6101 = vst.msk [vmem:[%s528 + $0x40] sm:$0xff] %vm680, %v5968
      %6102 = vst.msk [vmem:[%s528 + $0x48] sm:$0xff] %vm680, %v5973
      %6103 = vst.msk [vmem:[%s528 + $0x50] sm:$0xff] %vm680, %v5978
      %6104 = vst.msk [vmem:[%s528 + $0x58] sm:$0xff] %vm680, %v5983
      %6105 = vst.msk [vmem:[%s528 + $0x60] sm:$0xff] %vm680, %v5988
      %6106 = vst.msk [vmem:[%s528 + $0x68] sm:$0xff] %vm680, %v5993
      %6107 = vst.msk [vmem:[%s528 + $0x70] sm:$0xff] %vm680, %v5998
      %6108 = vst.msk [vmem:[%s528 + $0x78] sm:$0xff] %vm680, %v6003
      %6109 = vst.msk [vmem:[%s528 + $0x80] sm:$0xff] %vm680, %v6008
      %6110 = vst.msk [vmem:[%s528 + $0x88] sm:$0xff] %vm680, %v6013
      %6111 = vst.msk [vmem:[%s528 + $0x90] sm:$0xff] %vm680, %v6018
      %6112 = vst.msk [vmem:[%s528 + $0x98] sm:$0xff] %vm680, %v6023
      %6113 = vst.msk [vmem:[%s528 + $0xa0] sm:$0xff] %vm680, %v6028
      %6114 = vst.msk [vmem:[%s528 + $0xa8] sm:$0xff] %vm680, %v6033
      %6115 = vst.msk [vmem:[%s528 + $0xb0] sm:$0xff] %vm680, %v6038
      %6116 = vst.msk [vmem:[%s528 + $0xb8] sm:$0xff] %vm680, %v6043
      %6117 = vst.msk [vmem:[%s528 + $0xc0] sm:$0xff] %vm680, %v6048
      %6118 = vst.msk [vmem:[%s528 + $0xc8] sm:$0xff] %vm680, %v6053
      %6119 = vst.msk [vmem:[%s528 + $0xd0] sm:$0xff] %vm680, %v6058
      %6120 = vst.msk [vmem:[%s528 + $0xd8] sm:$0xff] %vm680, %v6063
      %6121 = vst.msk [vmem:[%s528 + $0xe0] sm:$0xff] %vm680, %v6068
      %6122 = vst.msk [vmem:[%s528 + $0xe8] sm:$0xff] %vm680, %v6073
      %6123 = vst.msk [vmem:[%s528 + $0xf0] sm:$0xff] %vm680, %v6078
      %6124 = vst.msk [vmem:[%s528 + $0xf8] sm:$0xff] %vm680, %v6083
      %vm6125 = vcmask 253952
      %6126 = vst.msk [vmem:[%s531] sm:$0x1] %vm6125, %v6092
      %6127 = vst.msk [vmem:[%s536] sm:$0xff] %vm754, %v5589
      %6128 = vst.msk [vmem:[%s536 + $0x8] sm:$0xff] %vm754, %v5594
      %6129 = vst.msk [vmem:[%s536 + $0x10] sm:$0xff] %vm754, %v5599
      %6130 = vst.msk [vmem:[%s536 + $0x18] sm:$0xff] %vm754, %v5604
      %vm6131 = vcmask 24576
      %6132 = vst.msk [vmem:[%s539] sm:$0x1] %vm6131, %v5613
      %vm6133 = vcmp.eq.s32.totalorder %v584, 0
      %v6134 = vsel %vm6133, 1, 0
      %v6135 = vcvt.s32.f32 %v6134
      %v6136 = vmul.f32 %v778, %v6135
      %v6137 = vadd.f32 %v6136, 0.0
      %6139 = vset.pattern.permute.xlu0 0
      %6140 = vperm.xlu0 %6139, %v806
      %v6141 = vpop.permute.xlu0 %6140
      %v6143 = vmul.f32 %v6141, %v6135
      %v6144 = vadd.f32 %v6143, 0.0
      %vm6145 = vcmp.eq.s32.totalorder %v584, 1
      %v6146 = vsel %vm6145, 1, 0
      %v6147 = vcvt.s32.f32 %v6146
      %v6148 = vmul.f32 %v1845, %v6147
      %v6149 = vadd.f32 %v6137, %v6148
      %6151 = vset.pattern.permute.xlu0 0
      %6152 = vperm.xlu0 %6151, %v1872
      %v6153 = vpop.permute.xlu0 %6152
      %v6155 = vmul.f32 %v6153, %v6147
      %v6156 = vadd.f32 %v6144, %v6155
      %vm6157 = vcmp.eq.s32.totalorder %v584, 2
      %v6158 = vsel %vm6157, 1, 0
      %v6159 = vcvt.s32.f32 %v6158
      %v6160 = vmul.f32 %v2745, %v6159
      %v6161 = vadd.f32 %v6149, %v6160
      %6163 = vset.pattern.permute.xlu0 0
      %6164 = vperm.xlu0 %6163, %v2772
      %v6165 = vpop.permute.xlu0 %6164
      %v6167 = vmul.f32 %v6165, %v6159
      %v6168 = vadd.f32 %v6156, %v6167
      %vm6169 = vcmp.eq.s32.totalorder %v584, 3
      %v6170 = vsel %vm6169, 1, 0
      %v6171 = vcvt.s32.f32 %v6170
      %v6172 = vmul.f32 %v3645, %v6171
      %v6173 = vadd.f32 %v6161, %v6172
      %6175 = vset.pattern.permute.xlu0 0
      %6176 = vperm.xlu0 %6175, %v3672
      %v6177 = vpop.permute.xlu0 %6176
      %v6179 = vmul.f32 %v6177, %v6171
      %v6180 = vadd.f32 %v6168, %v6179
      %vm6181 = vcmp.eq.s32.totalorder %v584, 4
      %v6182 = vsel %vm6181, 1, 0
      %v6183 = vcvt.s32.f32 %v6182
      %v6184 = vmul.f32 %v4545, %v6183
      %v6185 = vadd.f32 %v6173, %v6184
      %6187 = vset.pattern.permute.xlu0 0
      %6188 = vperm.xlu0 %6187, %v4572
      %v6189 = vpop.permute.xlu0 %6188
      %v6191 = vmul.f32 %v6189, %v6183
      %v6192 = vadd.f32 %v6180, %v6191
      %vm6193 = vcmp.eq.s32.totalorder %v584, 5
      %v6194 = vsel %vm6193, 1, 0
      %v6195 = vcvt.s32.f32 %v6194
      %v6196 = vmul.f32 %v5447, %v6195
      %v6197 = vadd.f32 %v6185, %v6196
      %6199 = vset.pattern.permute.xlu0 0
      %6200 = vperm.xlu0 %6199, %v5476
      %v6201 = vpop.permute.xlu0 %6200
      %v6203 = vmul.f32 %v6201, %v6195
      %v6204 = vadd.f32 %v6192, %v6203
      %vm6205 = vcmask 40960
      %6206 = vst.msk [vmem:[%s520] sm:$0x1] %vm6205, %v6197
      %6207 = vst.msk [vmem:[%s523] sm:$0x1] %vm6205, %v6204
      %p6208 = scmp.lt.s32.totalorder %s25, 1
      %s6209 = scalar_select %p6208, %s25, 1
      %s6210 = scalar_lea.vmem %s8, %s6209
      %p6211 = scmp.lt.s32.totalorder %s25, 1
      %s6212 = scalar_select %p6211, %s25, 1
      %s6213 = scalar_lea.vmem %s9, %s6212
      %p6214 = scmp.lt.s32.totalorder %s25, 1
      %s6215 = scalar_select %p6214, %s25, 1
      %s6216 = smul.addr %s6215, 32
      %s6217 = smul.addr %s6216, 8
      %s6218 = scalar_lea.vmem %s10, %s6217
      %p6219 = scmp.lt.s32.totalorder %s25, 1
      %s6220 = scalar_select %p6219, %s25, 1
      %s6221 = scalar_lea.vmem %s11, %s6220
      %p6222 = scmp.lt.s32.totalorder %s25, 1
      %s6223 = scalar_select %p6222, %s25, 1
      %s6224 = smul.addr %s6223, 4
      %s6225 = smul.addr %s6224, 8
      %s6226 = scalar_lea.vmem %s12, %s6225
      %p6227 = scmp.lt.s32.totalorder %s25, 1
      %s6228 = scalar_select %p6227, %s25, 1
      %s6229 = scalar_lea.vmem %s13, %s6228
      // Predicated region
      $region53: #{meta_learner_step.1} parent=51 // pred_check
        %p6230 = pneg %p231
      $region54: #{meta_learner_step.1} parent=51 // pred_check_branch
        %6232 = sbr.rel (%p6230) target = $region56
      $region55: #{meta_learner_step.1} parent=51 // pred_region
        _
      $region56: #{meta_learner_step.1} parent=51 // pred_fallthru
        _
      // Predicated region
      $region57: #{meta_learner_step.1} parent=51 // pred_check
        %p6233 = pneg %p257
      $region58: #{meta_learner_step.1} parent=51 // pred_check_branch
        %6235 = sbr.rel (%p6233) target = $region60
      $region59: #{meta_learner_step.1} parent=51 // pred_region
        _
      $region60: #{meta_learner_step.1} parent=51 // pred_fallthru
        _
      // Predicated region
      $region61: #{meta_learner_step.1} parent=51 // pred_check
        %p6236 = pneg %p283
      $region62: #{meta_learner_step.1} parent=51 // pred_check_branch
        %6238 = sbr.rel (%p6236) target = $region64
      $region63: #{meta_learner_step.1} parent=51 // pred_region
        _
      $region64: #{meta_learner_step.1} parent=51 // pred_fallthru
        _
      // Predicated region
      $region65: #{meta_learner_step.1} parent=51 // pred_check
        %p6239 = pneg %p309
      $region66: #{meta_learner_step.1} parent=51 // pred_check_branch
        %6241 = sbr.rel (%p6239) target = $region68
      $region67: #{meta_learner_step.1} parent=51 // pred_region
        _
      $region68: #{meta_learner_step.1} parent=51 // pred_fallthru
        _
      // Predicated region
      $region69: #{meta_learner_step.1} parent=51 // pred_check
        %p6242 = pneg %p335
      $region70: #{meta_learner_step.1} parent=51 // pred_check_branch
        %6244 = sbr.rel (%p6242) target = $region72
      $region71: #{meta_learner_step.1} parent=51 // pred_region
        _
      $region72: #{meta_learner_step.1} parent=51 // pred_fallthru
        _
      // Predicated region
      $region73: #{meta_learner_step.1} parent=51 // pred_check
        %p6245 = pneg %p361
      $region74: #{meta_learner_step.1} parent=51 // pred_check_branch
        %6247 = sbr.rel (%p6245) target = $region76
      $region75: #{meta_learner_step.1} parent=51 // pred_region
        _
      $region76: #{meta_learner_step.1} parent=51 // pred_fallthru
        _
    $region52: #{meta_learner_step.1} parent=5 // pred_fallthru
      _
    %p6248 = scmp.le.s32.totalorder 2, %s20
    // Predicated region
    $region77: #{meta_learner_step.1} parent=5 // pred_check
      %p6249 = pneg %p6248
    $region78: #{meta_learner_step.1} parent=5 // pred_check_branch
      %6251 = sbr.rel (%p6249) target = $region80
    $region79: #{meta_learner_step.1} parent=5 // pred_region
      %s6252 = ssub.s32 %s20, 2
      // Predicated region
      $region81: #{meta_learner_step.1} parent=79 // pred_check
        %p6253 = pneg %p237
      $region82: #{meta_learner_step.1} parent=79 // pred_check_branch
        %6255 = sbr.rel (%p6253) target = $region84
      $region83: #{meta_learner_step.1} parent=79 // pred_region
        %p6256 = scmp.lt.s32.totalorder %s26, 1
        %s6257 = scalar_select %p6256, %s26, 1
        %s6258 = scalar_lea.vmem %s8, %s6257
      $region84: #{meta_learner_step.1} parent=79 // pred_fallthru
        _
      // Predicated region
      $region85: #{meta_learner_step.1} parent=79 // pred_check
        %p6259 = pneg %p263
      $region86: #{meta_learner_step.1} parent=79 // pred_check_branch
        %6261 = sbr.rel (%p6259) target = $region88
      $region87: #{meta_learner_step.1} parent=79 // pred_region
        %p6262 = scmp.lt.s32.totalorder %s26, 1
        %s6263 = scalar_select %p6262, %s26, 1
        %s6264 = scalar_lea.vmem %s9, %s6263
      $region88: #{meta_learner_step.1} parent=79 // pred_fallthru
        _
      // Predicated region
      $region89: #{meta_learner_step.1} parent=79 // pred_check
        %p6265 = pneg %p289
      $region90: #{meta_learner_step.1} parent=79 // pred_check_branch
        %6267 = sbr.rel (%p6265) target = $region92
      $region91: #{meta_learner_step.1} parent=79 // pred_region
        %p6268 = scmp.lt.s32.totalorder %s26, 1
        %s6269 = scalar_select %p6268, %s26, 1
        %s6270 = smul.addr %s6269, 32
        %s6271 = smul.addr %s6270, 8
        %s6272 = scalar_lea.vmem %s10, %s6271
      $region92: #{meta_learner_step.1} parent=79 // pred_fallthru
        _
      // Predicated region
      $region93: #{meta_learner_step.1} parent=79 // pred_check
        %p6273 = pneg %p315
      $region94: #{meta_learner_step.1} parent=79 // pred_check_branch
        %6275 = sbr.rel (%p6273) target = $region96
      $region95: #{meta_learner_step.1} parent=79 // pred_region
        %p6276 = scmp.lt.s32.totalorder %s26, 1
        %s6277 = scalar_select %p6276, %s26, 1
        %s6278 = scalar_lea.vmem %s11, %s6277
      $region96: #{meta_learner_step.1} parent=79 // pred_fallthru
        _
      // Predicated region
      $region97: #{meta_learner_step.1} parent=79 // pred_check
        %p6279 = pneg %p341
      $region98: #{meta_learner_step.1} parent=79 // pred_check_branch
        %6281 = sbr.rel (%p6279) target = $region100
      $region99: #{meta_learner_step.1} parent=79 // pred_region
        %p6282 = scmp.lt.s32.totalorder %s26, 1
        %s6283 = scalar_select %p6282, %s26, 1
        %s6284 = smul.addr %s6283, 4
        %s6285 = smul.addr %s6284, 8
        %s6286 = scalar_lea.vmem %s12, %s6285
      $region100: #{meta_learner_step.1} parent=79 // pred_fallthru
        _
      // Predicated region
      $region101: #{meta_learner_step.1} parent=79 // pred_check
        %p6287 = pneg %p367
      $region102: #{meta_learner_step.1} parent=79 // pred_check_branch
        %6289 = sbr.rel (%p6287) target = $region104
      $region103: #{meta_learner_step.1} parent=79 // pred_region
        %p6290 = scmp.lt.s32.totalorder %s26, 1
        %s6291 = scalar_select %p6290, %s26, 1
        %s6292 = scalar_lea.vmem %s13, %s6291
      $region104: #{meta_learner_step.1} parent=79 // pred_fallthru
        _
    $region80: #{meta_learner_step.1} parent=5 // pred_fallthru
      _
  $region6: #{meta_learner_step.1} parent=0 // loop_footer
    %s24 = sadd.s32 1, %s20
  $region7: #{meta_learner_step.1} parent=0 // loop_footer_branch
    %19 = sbr.rel target = $region3
  $region8: #{meta_learner_step.1} parent=0 // loop_exit
    _

</llo_original>
